<compile_context>
chip_gen: v7x
topology: tpu7x:2x2x1
jax: 0.10.0
libtpu: 0.0.40
codegen_flags: <defaults>
</compile_context>

<pallas_src>
import functools

import jax
import jax.numpy as jnp
from jax.experimental import pallas as pl
from jax.experimental.pallas import tpu as pltpu


NP = 128  # MXU lane width used for conv output channels


def _round_up(x, m):
    return (x + m - 1) // m * m


# ----------------------------- Pallas kernels ------------------------------ #

def conv_relu_pool_kernel(p_ref, w_ref, b_ref, o_ref, *, oh, ow, c_keep):
    """One image: o = maxpool2x2(relu(patches @ w + b)).

    p_ref: (1, oh*ow, K) bf16   im2col patches, row index = oh_i*ow + ow_i
    w_ref: (K, NP)       bf16   (kh,kw,cin)-flattened weights, zero-padded cols
    b_ref: (1, NP)       f32
    o_ref: (1, oh//2, ow//2, c_keep) bf16
    """
    m = oh * ow
    oh2, ow2 = oh // 2, ow // 2
    np_ = w_ref.shape[1]

    y = jnp.dot(p_ref[0], w_ref[...], preferred_element_type=jnp.float32)   # (m, NP)
    y = jnp.maximum(y + b_ref[...], 0.0)

    # 2x2 max-pool entirely on-chip (pre-pool activation never hits HBM).
    # W-pairs are adjacent rows (ow is even); H-pairs are row-blocks of width ow//2.
    a = y.reshape(m // 2, 2, np_)
    yw = jnp.maximum(a[:, 0, :], a[:, 1, :])             # (oh*ow2, NP)
    hb = yw.reshape(oh2, 2 * ow2, np_)
    yh = jnp.maximum(hb[:, :ow2, :], hb[:, ow2:, :])     # (oh2, ow2, NP)

    o_ref[0] = yh[:, :, :c_keep].astype(o_ref.dtype)


def fused_mlp_kernel(x_ref, w1_ref, b1_ref, w2_ref, b2_ref, w3_ref, b3_ref, o_ref):
    """o = relu(relu(x@w1+b1)@w2+b2)@w3+b3; weights VMEM-resident, bf16 MXU, f32 acc."""
    h = jnp.dot(x_ref[...], w1_ref[...], preferred_element_type=jnp.float32) + b1_ref[...]
    h = jnp.maximum(h, 0.0).astype(jnp.bfloat16)
    h = jnp.dot(h, w2_ref[...], preferred_element_type=jnp.float32) + b2_ref[...]
    h = jnp.maximum(h, 0.0).astype(jnp.bfloat16)
    h = jnp.dot(h, w3_ref[...], preferred_element_type=jnp.float32) + b3_ref[...]
    o_ref[...] = h.astype(o_ref.dtype)


# ------------------------------ Pallas wrappers ----------------------------- #

def conv2d_relu_pool(x, wmat, bvec, *, kh, kw, c_keep):
    """Conv2d(stride 1, no padding) + ReLU + MaxPool2d(2,2) on NHWC bf16 activations.

    x:    (B, H, W, Cx) bf16 (Cx may include zero-padded channels, matched by zero
          weight rows baked in at prep time)
    wmat: (kh*kw*Cx, NP) bf16 ;  bvec: (1, NP) f32
    returns (B, (H-kh+1)//2, (W-kw+1)//2, c_keep) bf16
    """
    B, H, W, Cx = x.shape
    K, Np = wmat.shape
    assert K == kh * kw * Cx
    OH, OW = H - kh + 1, W - kw + 1
    OH2, OW2 = OH // 2, OW // 2
    M = OH * OW

    # im2col (cheap XLA glue at these sizes).
    # TODO(synk): fuse im2col into the kernel (shifted-slice matmuls) for large batch.
    cols = [x[:, i:i + OH, j:j + OW, :] for i in range(kh) for j in range(kw)]
    patches = jnp.concatenate(cols, axis=-1).reshape(B, M, K)

    kernel = functools.partial(conv_relu_pool_kernel, oh=OH, ow=OW, c_keep=c_keep)
    return pl.pallas_call(
        kernel,
        out_shape=jax.ShapeDtypeStruct((B, OH2, OW2, c_keep), jnp.bfloat16),
        grid=(B,),
        in_specs=[
            pl.BlockSpec((1, M, K), lambda i: (i, 0, 0)),
            pl.BlockSpec((K, Np), lambda i: (0, 0)),
            pl.BlockSpec((1, Np), lambda i: (0, 0)),
        ],
        out_specs=pl.BlockSpec((1, OH2, OW2, c_keep), lambda i: (i, 0, 0, 0)),
        compiler_params=pltpu.CompilerParams(
            dimension_semantics=("parallel",),      # megacore-shardable on v7x
            vmem_limit_bytes=32 * 1024 * 1024,      # safe on v5e/v6e/v7x
        ),
        cost_estimate=pl.CostEstimate(
            flops=2 * B * M * K * Np,
            transcendentals=0,
            bytes_accessed=2 * (B * M * K + K * Np + B * OH2 * OW2 * c_keep) + 4 * Np,
        ),
    )(patches, wmat, bvec)


def fused_mlp(x, w1, b1, w2, b2, w3, b3, *, tb=512):
    """relu(relu(x@w1+b1)@w2+b2)@w3+b3 in one Pallas kernel (weights stay in VMEM)."""
    B, K1 = x.shape
    N3 = w3.shape[1]
    if B <= tb:
        tb_eff, Bp, xp = B, B, x                   # single block, no batch padding
    else:
        tb_eff = tb
        Bp = _round_up(B, tb_eff)
        xp = jnp.pad(x, ((0, Bp - B), (0, 0)))

    out = pl.pallas_call(
        fused_mlp_kernel,
        out_shape=jax.ShapeDtypeStruct((Bp, N3), jnp.float32),
        grid=(Bp // tb_eff,),
        in_specs=[
            pl.BlockSpec((tb_eff, K1), lambda i: (i, 0)),
            pl.BlockSpec(w1.shape, lambda i: (0, 0)),
            pl.BlockSpec(b1.shape, lambda i: (0, 0)),
            pl.BlockSpec(w2.shape, lambda i: (0, 0)),
            pl.BlockSpec(b2.shape, lambda i: (0, 0)),
            pl.BlockSpec(w3.shape, lambda i: (0, 0)),
            pl.BlockSpec(b3.shape, lambda i: (0, 0)),
        ],
        out_specs=pl.BlockSpec((tb_eff, N3), lambda i: (i, 0)),
        compiler_params=pltpu.CompilerParams(
            dimension_semantics=("parallel",),
            vmem_limit_bytes=32 * 1024 * 1024,
        ),
    )(xp, w1, b1, w2, b2, w3, b3)
    return out if Bp == B else out[:B]


# ------------------------------ parameters ---------------------------------- #

def init_params(key):
    """PyTorch-default-style init; fc weights stored as (in, out)."""
    def linear_init(key, fan_in, shape_w, shape_b):
        kw_, kb_ = jax.random.split(key)
        bound = 1.0 / jnp.sqrt(float(fan_in))
        w = jax.random.uniform(kw_, shape_w, jnp.float32, -bound, bound)
        b = jax.random.uniform(kb_, shape_b, jnp.float32, -bound, bound)
        return w, b

    keys = jax.random.split(key, 5)
    params = {}
    params["conv1_w"], params["conv1_b"] = linear_init(keys[0], 3 * 5 * 5, (6, 3, 5, 5), (6,))
    params["conv2_w"], params["conv2_b"] = linear_init(keys[1], 6 * 5 * 5, (16, 6, 5, 5), (16,))
    params["fc1_w"], params["fc1_b"] = linear_init(keys[2], 400, (400, 120), (120,))
    params["fc2_w"], params["fc2_b"] = linear_init(keys[3], 120, (120, 84), (84,))
    params["fc3_w"], params["fc3_b"] = linear_init(keys[4], 84, (84, 10), (10,))
    return params


def prepare_params(params):
    """One-time weight preprocessing, hoisted out of the per-call forward path."""
    def prep_conv(w, b, cin_act):
        c_out, c_in, kh, kw_ = w.shape
        if cin_act > c_in:                       # match zero-padded activation channels
            w = jnp.pad(w, ((0, 0), (0, cin_act - c_in), (0, 0), (0, 0)))
        k = kh * kw_ * cin_act
        wmat = jnp.transpose(w, (2, 3, 1, 0)).reshape(k, c_out)     # (kh,kw,cin)-ordered K
        wmat = jnp.pad(wmat, ((0, 0), (0, NP - c_out))).astype(jnp.bfloat16)
        bvec = jnp.pad(b, (0, NP - c_out)).astype(jnp.float32).reshape(1, NP)
        return wmat, bvec

    def pad2(w, rows, cols):
        return jnp.pad(w, ((0, rows - w.shape[0]), (0, cols - w.shape[1]))).astype(jnp.bfloat16)

    p = {}
    p["conv1_w"], p["conv1_b"] = prep_conv(params["conv1_w"], params["conv1_b"], 3)
    p["conv2_w"], p["conv2_b"] = prep_conv(params["conv2_w"], params["conv2_b"], 8)

    # PyTorch flattens 'b c h w -> b (c h w)'; the NHWC pipeline flattens (h, w, c).
    # Permute fc1's rows once here instead of gathering on every forward call.
    hh, ww, cc = jnp.arange(5), jnp.arange(5), jnp.arange(16)
    perm = (cc[None, None, :] * 25 + hh[:, None, None] * 5 + ww[None, :, None]).reshape(-1)
    w1 = params["fc1_w"][perm]                                       # (400, 120)

    p["fc1_w"] = pad2(w1, 400, 128)
    p["fc2_w"] = pad2(params["fc2_w"], 128, 128)
    p["fc3_w"] = pad2(params["fc3_w"], 128, 10)
    p["fc1_b"] = jnp.pad(params["fc1_b"], (0, 128 - 120)).reshape(1, 128).astype(jnp.float32)
    p["fc2_b"] = jnp.pad(params["fc2_b"], (0, 128 - 84)).reshape(1, 128).astype(jnp.float32)
    p["fc3_b"] = params["fc3_b"].reshape(1, 10).astype(jnp.float32)
    return p


# ------------------------------ model forward -------------------------------- #

def cnn_forward(prepped, x):
    # x: (B, 3, 32, 32) NCHW float32 (PyTorch layout); NHWC + bf16 internally.
    x = jnp.transpose(x, (0, 2, 3, 1)).astype(jnp.bfloat16)                  # (B,32,32,3)
    x = conv2d_relu_pool(x, prepped["conv1_w"], prepped["conv1_b"],
                         kh=5, kw=5, c_keep=8)                               # (B,14,14,8)
    x = conv2d_relu_pool(x, prepped["conv2_w"], prepped["conv2_b"],
                         kh=5, kw=5, c_keep=16)                              # (B,5,5,16)
    x = x.reshape(x.shape[0], -1)                                            # (B,400), (h,w,c) order
    return fused_mlp(x, prepped["fc1_w"], prepped["fc1_b"],
                     prepped["fc2_w"], prepped["fc2_b"],
                     prepped["fc3_w"], prepped["fc3_b"])                     # (B,10) f32


if __name__ == "__main__":
    key = jax.random.PRNGKey(0)
    k_params, k_x = jax.random.split(key)
    params = init_params(k_params)
    prepped = prepare_params(params)      # one-time weight prep, outside the jitted forward
    # Input must be 3x32x32 so that 16*5*5 = 400 matches fc1 (LeNet/CIFAR shape).
    x = jax.random.normal(k_x, (2, 3, 32, 32), jnp.float32)

    out = jax.block_until_ready(jax.jit(cnn_forward)(prepped, x))
    assert out.shape == (2, 10) and out.dtype == jnp.float32
    print("KERNEL_OK")
</pallas_src>

<mosaic_0001>
module attributes {stable_mosaic.version = 11 : i64} {
  func.func @conv_relu_pool_kernel(%arg0: i32, %arg1: memref<1x784x75xbf16, #tpu.memory_space<vmem>>, %arg2: memref<75x128xbf16, #tpu.memory_space<vmem>>, %arg3: memref<1x128xf32, #tpu.memory_space<vmem>>, %arg4: memref<1x14x14x8xbf16, #tpu.memory_space<vmem>>) attributes {dimension_semantics = [#tpu.dimension_semantics<parallel>], iteration_bounds = array<i64: 2>, scalar_prefetch = 0 : i64, scratch_operands = 0 : i64, tpu.core_type = #tpu.core_type<tc>, window_params = [{transform_indices = @transform_0, window_bounds = array<i64: 1, 784, 75>}, {pipeline_mode = #tpu.pipeline_mode<synchronous>, transform_indices = @transform_1, window_bounds = array<i64: 75, 128>}, {pipeline_mode = #tpu.pipeline_mode<synchronous>, transform_indices = @transform_2, window_bounds = array<i64: 1, 128>}, {transform_indices = @transform_3, window_bounds = array<i64: 1, 14, 14, 8>}]} {
    %c0 = arith.constant 0 : index
    %c0_0 = arith.constant 0 : index
    %c0_1 = arith.constant 0 : index
    %0 = vector.load %arg1[%c0, %c0_0, %c0_1] : memref<1x784x75xbf16, #tpu.memory_space<vmem>>, vector<1x784x75xbf16>
    %1 = vector.shape_cast %0 : vector<1x784x75xbf16> to vector<784x75xbf16>
    %c0_2 = arith.constant 0 : index
    %c0_3 = arith.constant 0 : index
    %2 = vector.load %arg2[%c0_2, %c0_3] : memref<75x128xbf16, #tpu.memory_space<vmem>>, vector<75x128xbf16>
    %cst = arith.constant dense<0.000000e+00> : vector<784x128xf32>
    %3 = tpu.matmul %1, %2, %cst {dimension_numbers = #tpu.dot_dimension_numbers<[1], [0], [0], [1], [0, 0, 1, 1], [], []>} : vector<784x75xbf16>, vector<75x128xbf16>, vector<784x128xf32> -> vector<784x128xf32>
    %c0_4 = arith.constant 0 : index
    %c0_5 = arith.constant 0 : index
    %4 = vector.load %arg3[%c0_4, %c0_5] : memref<1x128xf32, #tpu.memory_space<vmem>>, vector<1x128xf32>
    %5 = vector.broadcast %4 : vector<1x128xf32> to vector<784x128xf32>
    %6 = arith.addf %3, %5 : vector<784x128xf32>
    %cst_6 = arith.constant 0.000000e+00 : f32
    %7 = vector.broadcast %cst_6 : f32 to vector<784x128xf32>
    %8 = arith.maximumf %6, %7 : vector<784x128xf32>
    %9 = vector.shape_cast %8 : vector<784x128xf32> to vector<392x2x128xf32>
    %10 = vector.extract_strided_slice %9 {offsets = [0, 0, 0], sizes = [392, 1, 128], strides = [1, 1, 1]} : vector<392x2x128xf32> to vector<392x1x128xf32>
    %11 = vector.shape_cast %10 : vector<392x1x128xf32> to vector<392x128xf32>
    %12 = vector.extract_strided_slice %9 {offsets = [0, 1, 0], sizes = [392, 1, 128], strides = [1, 1, 1]} : vector<392x2x128xf32> to vector<392x1x128xf32>
    %13 = vector.shape_cast %12 : vector<392x1x128xf32> to vector<392x128xf32>
    %14 = arith.maximumf %11, %13 : vector<392x128xf32>
    %15 = vector.shape_cast %14 : vector<392x128xf32> to vector<14x28x128xf32>
    %16 = vector.extract_strided_slice %15 {offsets = [0, 0, 0], sizes = [14, 14, 128], strides = [1, 1, 1]} : vector<14x28x128xf32> to vector<14x14x128xf32>
    %17 = vector.extract_strided_slice %15 {offsets = [0, 14, 0], sizes = [14, 14, 128], strides = [1, 1, 1]} : vector<14x28x128xf32> to vector<14x14x128xf32>
    %18 = arith.maximumf %16, %17 : vector<14x14x128xf32>
    %19 = vector.extract_strided_slice %18 {offsets = [0, 0, 0], sizes = [14, 14, 8], strides = [1, 1, 1]} : vector<14x14x128xf32> to vector<14x14x8xf32>
    %20 = arith.truncf %19 : vector<14x14x8xf32> to vector<14x14x8xbf16>
    %c0_7 = arith.constant 0 : index
    %c0_8 = arith.constant 0 : index
    %c0_9 = arith.constant 0 : index
    %c0_10 = arith.constant 0 : index
    %21 = vector.load %arg4[%c0_7, %c0_8, %c0_9, %c0_10] : memref<1x14x14x8xbf16, #tpu.memory_space<vmem>>, vector<1x14x14x8xbf16>
    %22 = vector.shape_cast %21 : vector<1x14x14x8xbf16> to vector<14x14x8xbf16>
    %23 = vector.shape_cast %20 : vector<14x14x8xbf16> to vector<1x14x14x8xbf16>
    tpu.vector_store %arg4[%c0_7, %c0_8, %c0_9, %c0_10], %23 {strides = array<i32>} : memref<1x14x14x8xbf16, #tpu.memory_space<vmem>>, vector<1x14x14x8xbf16>,
    return
  }
  func.func @transform_0(%arg0: i32) -> (i32, i32, i32) {
    %c0_i32 = arith.constant 0 : i32
    %c0_i32_0 = arith.constant 0 : i32
    %c0_i32_1 = arith.constant 0 : i32
    return %arg0, %c0_i32, %c0_i32_0 : i32, i32, i32
  }
  func.func @transform_1(%arg0: i32) -> (i32, i32) {
    %c0_i32 = arith.constant 0 : i32
    %c0_i32_0 = arith.constant 0 : i32
    %c0_i32_1 = arith.constant 0 : i32
    return %c0_i32, %c0_i32_0 : i32, i32
  }
  func.func @transform_2(%arg0: i32) -> (i32, i32) {
    %c0_i32 = arith.constant 0 : i32
    %c0_i32_0 = arith.constant 0 : i32
    %c0_i32_1 = arith.constant 0 : i32
    return %c0_i32, %c0_i32_0 : i32, i32
  }
  func.func @transform_3(%arg0: i32) -> (i32, i32, i32, i32) {
    %c0_i32 = arith.constant 0 : i32
    %c0_i32_0 = arith.constant 0 : i32
    %c0_i32_1 = arith.constant 0 : i32
    %c0_i32_2 = arith.constant 0 : i32
    return %arg0, %c0_i32, %c0_i32_0, %c0_i32_1 : i32, i32, i32, i32
  }
}

module attributes {stable_mosaic.version = 11 : i64} {
  func.func @conv_relu_pool_kernel(%arg0: i32, %arg1: memref<1x100x200xbf16, #tpu.memory_space<vmem>>, %arg2: memref<200x128xbf16, #tpu.memory_space<vmem>>, %arg3: memref<1x128xf32, #tpu.memory_space<vmem>>, %arg4: memref<1x5x5x16xbf16, #tpu.memory_space<vmem>>) attributes {dimension_semantics = [#tpu.dimension_semantics<parallel>], iteration_bounds = array<i64: 2>, scalar_prefetch = 0 : i64, scratch_operands = 0 : i64, tpu.core_type = #tpu.core_type<tc>, window_params = [{transform_indices = @transform_0, window_bounds = array<i64: 1, 100, 200>}, {pipeline_mode = #tpu.pipeline_mode<synchronous>, transform_indices = @transform_1, window_bounds = array<i64: 200, 128>}, {pipeline_mode = #tpu.pipeline_mode<synchronous>, transform_indices = @transform_2, window_bounds = array<i64: 1, 128>}, {transform_indices = @transform_3, window_bounds = array<i64: 1, 5, 5, 16>}]} {
    %c0 = arith.constant 0 : index
    %c0_0 = arith.constant 0 : index
    %c0_1 = arith.constant 0 : index
    %0 = vector.load %arg1[%c0, %c0_0, %c0_1] : memref<1x100x200xbf16, #tpu.memory_space<vmem>>, vector<1x100x200xbf16>
    %1 = vector.shape_cast %0 : vector<1x100x200xbf16> to vector<100x200xbf16>
    %c0_2 = arith.constant 0 : index
    %c0_3 = arith.constant 0 : index
    %2 = vector.load %arg2[%c0_2, %c0_3] : memref<200x128xbf16, #tpu.memory_space<vmem>>, vector<200x128xbf16>
    %cst = arith.constant dense<0.000000e+00> : vector<100x128xf32>
    %3 = tpu.matmul %1, %2, %cst {dimension_numbers = #tpu.dot_dimension_numbers<[1], [0], [0], [1], [0, 0, 1, 1], [], []>} : vector<100x200xbf16>, vector<200x128xbf16>, vector<100x128xf32> -> vector<100x128xf32>
    %c0_4 = arith.constant 0 : index
    %c0_5 = arith.constant 0 : index
    %4 = vector.load %arg3[%c0_4, %c0_5] : memref<1x128xf32, #tpu.memory_space<vmem>>, vector<1x128xf32>
    %5 = vector.broadcast %4 : vector<1x128xf32> to vector<100x128xf32>
    %6 = arith.addf %3, %5 : vector<100x128xf32>
    %cst_6 = arith.constant 0.000000e+00 : f32
    %7 = vector.broadcast %cst_6 : f32 to vector<100x128xf32>
    %8 = arith.maximumf %6, %7 : vector<100x128xf32>
    %9 = vector.shape_cast %8 : vector<100x128xf32> to vector<50x2x128xf32>
    %10 = vector.extract_strided_slice %9 {offsets = [0, 0, 0], sizes = [50, 1, 128], strides = [1, 1, 1]} : vector<50x2x128xf32> to vector<50x1x128xf32>
    %11 = vector.shape_cast %10 : vector<50x1x128xf32> to vector<50x128xf32>
    %12 = vector.extract_strided_slice %9 {offsets = [0, 1, 0], sizes = [50, 1, 128], strides = [1, 1, 1]} : vector<50x2x128xf32> to vector<50x1x128xf32>
    %13 = vector.shape_cast %12 : vector<50x1x128xf32> to vector<50x128xf32>
    %14 = arith.maximumf %11, %13 : vector<50x128xf32>
    %15 = vector.shape_cast %14 : vector<50x128xf32> to vector<5x10x128xf32>
    %16 = vector.extract_strided_slice %15 {offsets = [0, 0, 0], sizes = [5, 5, 128], strides = [1, 1, 1]} : vector<5x10x128xf32> to vector<5x5x128xf32>
    %17 = vector.extract_strided_slice %15 {offsets = [0, 5, 0], sizes = [5, 5, 128], strides = [1, 1, 1]} : vector<5x10x128xf32> to vector<5x5x128xf32>
    %18 = arith.maximumf %16, %17 : vector<5x5x128xf32>
    %19 = vector.extract_strided_slice %18 {offsets = [0, 0, 0], sizes = [5, 5, 16], strides = [1, 1, 1]} : vector<5x5x128xf32> to vector<5x5x16xf32>
    %20 = arith.truncf %19 : vector<5x5x16xf32> to vector<5x5x16xbf16>
    %c0_7 = arith.constant 0 : index
    %c0_8 = arith.constant 0 : index
    %c0_9 = arith.constant 0 : index
    %c0_10 = arith.constant 0 : index
    %21 = vector.load %arg4[%c0_7, %c0_8, %c0_9, %c0_10] : memref<1x5x5x16xbf16, #tpu.memory_space<vmem>>, vector<1x5x5x16xbf16>
    %22 = vector.shape_cast %21 : vector<1x5x5x16xbf16> to vector<5x5x16xbf16>
    %23 = vector.shape_cast %20 : vector<5x5x16xbf16> to vector<1x5x5x16xbf16>
    tpu.vector_store %arg4[%c0_7, %c0_8, %c0_9, %c0_10], %23 {strides = array<i32>} : memref<1x5x5x16xbf16, #tpu.memory_space<vmem>>, vector<1x5x5x16xbf16>,
    return
  }
  func.func @transform_0(%arg0: i32) -> (i32, i32, i32) {
    %c0_i32 = arith.constant 0 : i32
    %c0_i32_0 = arith.constant 0 : i32
    %c0_i32_1 = arith.constant 0 : i32
    return %arg0, %c0_i32, %c0_i32_0 : i32, i32, i32
  }
  func.func @transform_1(%arg0: i32) -> (i32, i32) {
    %c0_i32 = arith.constant 0 : i32
    %c0_i32_0 = arith.constant 0 : i32
    %c0_i32_1 = arith.constant 0 : i32
    return %c0_i32, %c0_i32_0 : i32, i32
  }
  func.func @transform_2(%arg0: i32) -> (i32, i32) {
    %c0_i32 = arith.constant 0 : i32
    %c0_i32_0 = arith.constant 0 : i32
    %c0_i32_1 = arith.constant 0 : i32
    return %c0_i32, %c0_i32_0 : i32, i32
  }
  func.func @transform_3(%arg0: i32) -> (i32, i32, i32, i32) {
    %c0_i32 = arith.constant 0 : i32
    %c0_i32_0 = arith.constant 0 : i32
    %c0_i32_1 = arith.constant 0 : i32
    %c0_i32_2 = arith.constant 0 : i32
    return %arg0, %c0_i32, %c0_i32_0, %c0_i32_1 : i32, i32, i32, i32
  }
}

module attributes {stable_mosaic.version = 11 : i64} {
  func.func @fused_mlp_kernel(%arg0: i32, %arg1: memref<2x400xbf16, #tpu.memory_space<vmem>>, %arg2: memref<400x128xbf16, #tpu.memory_space<vmem>>, %arg3: memref<1x128xf32, #tpu.memory_space<vmem>>, %arg4: memref<128x128xbf16, #tpu.memory_space<vmem>>, %arg5: memref<1x128xf32, #tpu.memory_space<vmem>>, %arg6: memref<128x10xbf16, #tpu.memory_space<vmem>>, %arg7: memref<1x10xf32, #tpu.memory_space<vmem>>, %arg8: memref<2x10xf32, #tpu.memory_space<vmem>>) attributes {dimension_semantics = [#tpu.dimension_semantics<parallel>], iteration_bounds = array<i64: 1>, scalar_prefetch = 0 : i64, scratch_operands = 0 : i64, tpu.core_type = #tpu.core_type<tc>, window_params = [{transform_indices = @transform_0, window_bounds = array<i64: 2, 400>}, {pipeline_mode = #tpu.pipeline_mode<synchronous>, transform_indices = @transform_1, window_bounds = array<i64: 400, 128>}, {pipeline_mode = #tpu.pipeline_mode<synchronous>, transform_indices = @transform_2, window_bounds = array<i64: 1, 128>}, {pipeline_mode = #tpu.pipeline_mode<synchronous>, transform_indices = @transform_3, window_bounds = array<i64: 128, 128>}, {pipeline_mode = #tpu.pipeline_mode<synchronous>, transform_indices = @transform_4, window_bounds = array<i64: 1, 128>}, {pipeline_mode = #tpu.pipeline_mode<synchronous>, transform_indices = @transform_5, window_bounds = array<i64: 128, 10>}, {pipeline_mode = #tpu.pipeline_mode<synchronous>, transform_indices = @transform_6, window_bounds = array<i64: 1, 10>}, {transform_indices = @transform_7, window_bounds = array<i64: 2, 10>}]} {
    %c0 = arith.constant 0 : index
    %c0_0 = arith.constant 0 : index
    %0 = vector.load %arg1[%c0, %c0_0] : memref<2x400xbf16, #tpu.memory_space<vmem>>, vector<2x400xbf16>
    %c0_1 = arith.constant 0 : index
    %c0_2 = arith.constant 0 : index
    %1 = vector.load %arg2[%c0_1, %c0_2] : memref<400x128xbf16, #tpu.memory_space<vmem>>, vector<400x128xbf16>
    %cst = arith.constant dense<0.000000e+00> : vector<2x128xf32>
    %2 = tpu.matmul %0, %1, %cst {dimension_numbers = #tpu.dot_dimension_numbers<[1], [0], [0], [1], [0, 0, 1, 1], [], []>} : vector<2x400xbf16>, vector<400x128xbf16>, vector<2x128xf32> -> vector<2x128xf32>
    %c0_3 = arith.constant 0 : index
    %c0_4 = arith.constant 0 : index
    %3 = vector.load %arg3[%c0_3, %c0_4] : memref<1x128xf32, #tpu.memory_space<vmem>>, vector<1x128xf32>
    %4 = vector.broadcast %3 : vector<1x128xf32> to vector<2x128xf32>
    %5 = arith.addf %2, %4 : vector<2x128xf32>
    %cst_5 = arith.constant 0.000000e+00 : f32
    %6 = vector.broadcast %cst_5 : f32 to vector<2x128xf32>
    %7 = arith.maximumf %5, %6 : vector<2x128xf32>
    %8 = arith.truncf %7 : vector<2x128xf32> to vector<2x128xbf16>
    %c0_6 = arith.constant 0 : index
    %c0_7 = arith.constant 0 : index
    %9 = vector.load %arg4[%c0_6, %c0_7] : memref<128x128xbf16, #tpu.memory_space<vmem>>, vector<128x128xbf16>
    %cst_8 = arith.constant dense<0.000000e+00> : vector<2x128xf32>
    %10 = tpu.matmul %8, %9, %cst_8 {dimension_numbers = #tpu.dot_dimension_numbers<[1], [0], [0], [1], [0, 0, 1, 1], [], []>} : vector<2x128xbf16>, vector<128x128xbf16>, vector<2x128xf32> -> vector<2x128xf32>
    %c0_9 = arith.constant 0 : index
    %c0_10 = arith.constant 0 : index
    %11 = vector.load %arg5[%c0_9, %c0_10] : memref<1x128xf32, #tpu.memory_space<vmem>>, vector<1x128xf32>
    %12 = vector.broadcast %11 : vector<1x128xf32> to vector<2x128xf32>
    %13 = arith.addf %10, %12 : vector<2x128xf32>
    %cst_11 = arith.constant 0.000000e+00 : f32
    %14 = vector.broadcast %cst_11 : f32 to vector<2x128xf32>
    %15 = arith.maximumf %13, %14 : vector<2x128xf32>
    %16 = arith.truncf %15 : vector<2x128xf32> to vector<2x128xbf16>
    %c0_12 = arith.constant 0 : index
    %c0_13 = arith.constant 0 : index
    %17 = vector.load %arg6[%c0_12, %c0_13] : memref<128x10xbf16, #tpu.memory_space<vmem>>, vector<128x10xbf16>
    %cst_14 = arith.constant dense<0.000000e+00> : vector<2x10xf32>
    %18 = tpu.matmul %16, %17, %cst_14 {dimension_numbers = #tpu.dot_dimension_numbers<[1], [0], [0], [1], [0, 0, 1, 1], [], []>} : vector<2x128xbf16>, vector<128x10xbf16>, vector<2x10xf32> -> vector<2x10xf32>
    %c0_15 = arith.constant 0 : index
    %c0_16 = arith.constant 0 : index
    %19 = vector.load %arg7[%c0_15, %c0_16] : memref<1x10xf32, #tpu.memory_space<vmem>>, vector<1x10xf32>
    %20 = vector.broadcast %19 : vector<1x10xf32> to vector<2x10xf32>
    %21 = arith.addf %18, %20 : vector<2x10xf32>
    %c0_17 = arith.constant 0 : index
    %c0_18 = arith.constant 0 : index
    %22 = vector.load %arg8[%c0_17, %c0_18] : memref<2x10xf32, #tpu.memory_space<vmem>>, vector<2x10xf32>
    tpu.vector_store %arg8[%c0_17, %c0_18], %21 {strides = array<i32>} : memref<2x10xf32, #tpu.memory_space<vmem>>, vector<2x10xf32>,
    return
  }
  func.func @transform_0(%arg0: i32) -> (i32, i32) {
    %c0_i32 = arith.constant 0 : i32
    %c0_i32_0 = arith.constant 0 : i32
    return %arg0, %c0_i32 : i32, i32
  }
  func.func @transform_1(%arg0: i32) -> (i32, i32) {
    %c0_i32 = arith.constant 0 : i32
    %c0_i32_0 = arith.constant 0 : i32
    %c0_i32_1 = arith.constant 0 : i32
    return %c0_i32, %c0_i32_0 : i32, i32
  }
  func.func @transform_2(%arg0: i32) -> (i32, i32) {
    %c0_i32 = arith.constant 0 : i32
    %c0_i32_0 = arith.constant 0 : i32
    %c0_i32_1 = arith.constant 0 : i32
    return %c0_i32, %c0_i32_0 : i32, i32
  }
  func.func @transform_3(%arg0: i32) -> (i32, i32) {
    %c0_i32 = arith.constant 0 : i32
    %c0_i32_0 = arith.constant 0 : i32
    %c0_i32_1 = arith.constant 0 : i32
    return %c0_i32, %c0_i32_0 : i32, i32
  }
  func.func @transform_4(%arg0: i32) -> (i32, i32) {
    %c0_i32 = arith.constant 0 : i32
    %c0_i32_0 = arith.constant 0 : i32
    %c0_i32_1 = arith.constant 0 : i32
    return %c0_i32, %c0_i32_0 : i32, i32
  }
  func.func @transform_5(%arg0: i32) -> (i32, i32) {
    %c0_i32 = arith.constant 0 : i32
    %c0_i32_0 = arith.constant 0 : i32
    %c0_i32_1 = arith.constant 0 : i32
    return %c0_i32, %c0_i32_0 : i32, i32
  }
  func.func @transform_6(%arg0: i32) -> (i32, i32) {
    %c0_i32 = arith.constant 0 : i32
    %c0_i32_0 = arith.constant 0 : i32
    %c0_i32_1 = arith.constant 0 : i32
    return %c0_i32, %c0_i32_0 : i32, i32
  }
  func.func @transform_7(%arg0: i32) -> (i32, i32) {
    %c0_i32 = arith.constant 0 : i32
    %c0_i32_0 = arith.constant 0 : i32
    return %arg0, %c0_i32 : i32, i32
  }
}

</mosaic_0001>

<llo_original>
// kernel: cnn_forward.3
$region0: #{cnn_forward.3}
  #allocation0 [shape = 'u32[]', space=smem, size = 0x4, offset = 0x4, fixed_abs, tag = 'smem constant byte address 0x4 - core index']
  #allocation1 [shape = 'u32[144,128]{1,0:T(1,128)}', space=vmem, size = 0x12000, scoped, tag = 'internal scratch']
  %s0 = inlined_call_operand.vmem [shape: bf16[2,784,75], index: 0, kind: input, shape index: {}]
  %s1 = inlined_call_operand.vmem [shape: bf16[75,128], index: 1, kind: input, shape index: {}]
  %s2 = inlined_call_operand.vmem [shape: f32[1,128], index: 2, kind: input, shape index: {}]
  %s3 = inlined_call_operand.vmem [shape: bf16[2,14,14,8], index: 3, kind: output, shape index: {}]
  %s4 = sld [smem:[#allocation0]]
  $region45: #{cnn_forward.3} parent=0
    _
  %s6 = ssub.s32 1, %s4
  %s7 = scalar_select 0, %s6, %s4
  loop: start=0, step=1, limit=4
  $region2: #{cnn_forward.3} parent=0 // loop_pre_header
    _
  $region3: #{cnn_forward.3} parent=0 // loop_header
    %s9 = sphi 0, %s13
    %p10 = scmp.ge.s32.totalorder %s9, 4
    %s19 = sphi 0, %s21
    %s22 = sphi 0, %s19
    %s23 = sphi 0, %s22
    %s39 = sphi 0, %s23
    %s43 = sphi 0, %s43
    %s45 = sphi 0, %s43
    %s46 = sphi 0, %s45
    %s60 = sphi 0, %s46
    %s64 = sphi 0, %s64
    %s66 = sphi 0, %s64
    %s67 = sphi 0, %s66
    %s81 = sphi 0, %s67
    %s87 = sphi 0, %s89
    %s90 = sphi 0, %s87
    %s91 = sphi 0, %s90
    %s107 = sphi 0, %s91
  $region4: #{cnn_forward.3} parent=0 // loop_header_branch
    %12 = sbr.rel (%p10) target = $region8
  $region5: #{cnn_forward.3} parent=0 // loop_body
    %s14 = ssub.s32 %s9, 1
    %s15 = ssub.s32 %s9, 2
    %s16 = sadd.s32 %s9, 1
    %s17 = ssub.s32 %s9, %s16
    %p18 = scmp.eq.s32.totalorder %s17, 0
    %s20 = sadd.s32 %s19, 1
    %s21 = scalar_select %p18, %s19, %s20
    %p24 = pneg %p18
    %p25 = scmp.eq.s32.totalorder %s9, 1
    %p26 = por %p24, %p25
    %p27 = scmp.ne.s32.totalorder %s19, %s22
    %p28 = scmp.eq.s32.totalorder %s9, 0
    %p29 = por %p27, %p28
    %p30 = scmp.ne.s32.totalorder %s19, %s22
    %p31 = scmp.eq.s32.totalorder %s14, 1
    %p32 = por %p30, %p31
    %p33 = scmp.ne.s32.totalorder %s22, %s23
    %p34 = scmp.eq.s32.totalorder %s14, 0
    %p35 = por %p33, %p34
    %p36 = scmp.ne.s32.totalorder %s22, %s23
    %p37 = scmp.eq.s32.totalorder %s15, 1
    %p38 = por %p36, %p37
    %p40 = scmp.ne.s32.totalorder %s23, %s39
    %p41 = scmp.eq.s32.totalorder %s15, 0
    %p42 = por %p40, %p41
    %s44 = sadd.s32 %s43, 1
    %p47 = scmp.eq.s32.totalorder %s9, 1
    %p48 = scmp.ne.s32.totalorder %s43, %s45
    %p49 = scmp.eq.s32.totalorder %s9, 0
    %p50 = por %p48, %p49
    %p51 = scmp.ne.s32.totalorder %s43, %s45
    %p52 = scmp.eq.s32.totalorder %s14, 1
    %p53 = por %p51, %p52
    %p54 = scmp.ne.s32.totalorder %s45, %s46
    %p55 = scmp.eq.s32.totalorder %s14, 0
    %p56 = por %p54, %p55
    %p57 = scmp.ne.s32.totalorder %s45, %s46
    %p58 = scmp.eq.s32.totalorder %s15, 1
    %p59 = por %p57, %p58
    %p61 = scmp.ne.s32.totalorder %s46, %s60
    %p62 = scmp.eq.s32.totalorder %s15, 0
    %p63 = por %p61, %p62
    %s65 = sadd.s32 %s64, 1
    %p68 = scmp.eq.s32.totalorder %s9, 1
    %p69 = scmp.ne.s32.totalorder %s64, %s66
    %p70 = scmp.eq.s32.totalorder %s9, 0
    %p71 = por %p69, %p70
    %p72 = scmp.ne.s32.totalorder %s64, %s66
    %p73 = scmp.eq.s32.totalorder %s14, 1
    %p74 = por %p72, %p73
    %p75 = scmp.ne.s32.totalorder %s66, %s67
    %p76 = scmp.eq.s32.totalorder %s14, 0
    %p77 = por %p75, %p76
    %p78 = scmp.ne.s32.totalorder %s66, %s67
    %p79 = scmp.eq.s32.totalorder %s15, 1
    %p80 = por %p78, %p79
    %p82 = scmp.ne.s32.totalorder %s67, %s81
    %p83 = scmp.eq.s32.totalorder %s15, 0
    %p84 = por %p82, %p83
    %s85 = ssub.s32 %s9, %s16
    %p86 = scmp.eq.s32.totalorder %s85, 0
    %s88 = sadd.s32 %s87, 1
    %s89 = scalar_select %p86, %s87, %s88
    %p92 = pneg %p86
    %p93 = scmp.eq.s32.totalorder %s9, 1
    %p94 = por %p92, %p93
    %p95 = scmp.ne.s32.totalorder %s87, %s90
    %p96 = scmp.eq.s32.totalorder %s9, 0
    %p97 = por %p95, %p96
    %p98 = scmp.ne.s32.totalorder %s87, %s90
    %p99 = scmp.eq.s32.totalorder %s14, 1
    %p100 = por %p98, %p99
    %p101 = scmp.ne.s32.totalorder %s90, %s91
    %p102 = scmp.eq.s32.totalorder %s14, 0
    %p103 = por %p101, %p102
    %p104 = scmp.ne.s32.totalorder %s90, %s91
    %p105 = scmp.eq.s32.totalorder %s15, 1
    %p106 = por %p104, %p105
    %p108 = scmp.ne.s32.totalorder %s91, %s107
    %p109 = scmp.eq.s32.totalorder %s15, 0
    %p110 = por %p108, %p109
    %p111 = scmp.le.s32.totalorder 1, %s9
    %p112 = scmp.lt.s32.totalorder %s9, 3
    %p113 = pnand %p111, %p112
    %p114 = pneg %p113
    // Predicated region
    $region9: #{cnn_forward.3} parent=5 // pred_check
      _
    $region10: #{cnn_forward.3} parent=5 // pred_check_branch
      %116 = sbr.rel (%p113) target = $region12
    $region11: #{cnn_forward.3} parent=5 // pred_region
      %s117 = ssub.s32 %s9, 1
      // Predicated region
      $region13: #{cnn_forward.3} parent=11 // pred_check
        %p118 = pneg %p56
      $region14: #{cnn_forward.3} parent=11 // pred_check_branch
        %120 = sbr.rel (%p118) target = $region16
      $region15: #{cnn_forward.3} parent=11 // pred_region
        _
      $region16: #{cnn_forward.3} parent=11 // pred_fallthru
        _
      // Predicated region
      $region17: #{cnn_forward.3} parent=11 // pred_check
        %p121 = pneg %p77
      $region18: #{cnn_forward.3} parent=11 // pred_check_branch
        %123 = sbr.rel (%p121) target = $region20
      $region19: #{cnn_forward.3} parent=11 // pred_region
        _
      $region20: #{cnn_forward.3} parent=11 // pred_fallthru
        _
    $region12: #{cnn_forward.3} parent=5 // pred_fallthru
      _
    %p124 = scmp.lt.s32.totalorder %s9, 2
    // Predicated region
    $region21: #{cnn_forward.3} parent=5 // pred_check
      %p125 = pneg %p124
    $region22: #{cnn_forward.3} parent=5 // pred_check_branch
      %127 = sbr.rel (%p125) target = $region24
    $region23: #{cnn_forward.3} parent=5 // pred_region
      // Predicated region
      $region25: #{cnn_forward.3} parent=23 // pred_check
        %p128 = pneg %p29
      $region26: #{cnn_forward.3} parent=23 // pred_check_branch
        %130 = sbr.rel (%p128) target = $region28
      $region27: #{cnn_forward.3} parent=23 // pred_region
        %p131 = scmp.lt.s32.totalorder %s9, 1
        %s132 = scalar_select %p131, %s9, 1
        %s133 = smul.addr %s132, 98
        %s134 = smul.addr %s133, 4
        %s135 = scalar_lea.vmem %s0, %s134
      $region28: #{cnn_forward.3} parent=23 // pred_fallthru
        _
    $region24: #{cnn_forward.3} parent=5 // pred_fallthru
      _
    %p136 = scmp.le.s32.totalorder 1, %s9
    %p137 = scmp.lt.s32.totalorder %s9, 3
    %p138 = pnand %p136, %p137
    %p139 = pneg %p138
    // Predicated region
    $region29: #{cnn_forward.3} parent=5 // pred_check
      _
    $region30: #{cnn_forward.3} parent=5 // pred_check_branch
      %141 = sbr.rel (%p138) target = $region32
    $region31: #{cnn_forward.3} parent=5 // pred_region
      %s142 = ssub.s32 %s9, 1
      %p143 = scmp.lt.s32.totalorder %s14, 1
      %s144 = scalar_select %p143, %s14, 1
      %s145 = smul.addr %s144, 98
      %s146 = smul.addr %s145, 4
      %s147 = scalar_lea.vmem %s0, %s146
      %p148 = pneg %p35
      %p149 = pneg %p32
      %p150 = pneg %p56
      %p151 = pneg %p53
      %p152 = pneg %p77
      %p153 = pneg %p74
      %p154 = pneg %p103
      %p155 = pneg %p100
      %p156 = scmp.lt.s32.totalorder %s14, 1
      %s157 = scalar_select %p156, %s14, 1
      %s158 = smul.addr %s157, 28
      %s159 = smul.addr %s158, 4
      %s160 = scalar_lea.vmem %s3, %s159
      %p161 = scmp.lt.s32.totalorder %s14, 1
      %s162 = scalar_select %p161, %s14, 1
      %s163 = smul.addr %s162, 98
      %s164 = smul.addr %s163, 4
      %s165 = scalar_lea.vmem %s0, %s164
      %p166 = scmp.lt.s32.totalorder %s14, 1
      %s167 = scalar_select %p166, %s14, 1
      %s168 = smul.addr %s167, 28
      %s169 = smul.addr %s168, 4
      %s170 = scalar_lea.vmem %s3, %s169
      %v172 = vld [vmem:[%s165] sm:$0xf]
      %v173 = vld [vmem:[%s165 + $0x4] sm:$0xf]
      %v174 = vld [vmem:[%s165 + $0x8] sm:$0xf]
      %v175 = vld [vmem:[%s165 + $0xc] sm:$0xf]
      %v176 = vld [vmem:[%s165 + $0x10] sm:$0xf]
      %v177 = vld [vmem:[%s165 + $0x14] sm:$0xf]
      %v178 = vld [vmem:[%s165 + $0x18] sm:$0xf]
      %v179 = vld [vmem:[%s165 + $0x1c] sm:$0xf]
      %v180 = vld [vmem:[%s165 + $0x20] sm:$0xf]
      %v181 = vld [vmem:[%s165 + $0x24] sm:$0xf]
      %v182 = vld [vmem:[%s165 + $0x28] sm:$0xf]
      %v183 = vld [vmem:[%s165 + $0x2c] sm:$0xf]
      %v184 = vld [vmem:[%s165 + $0x30] sm:$0xf]
      %v185 = vld [vmem:[%s165 + $0x34] sm:$0xf]
      %v186 = vld [vmem:[%s165 + $0x38] sm:$0xf]
      %v187 = vld [vmem:[%s165 + $0x3c] sm:$0xf]
      %v188 = vld [vmem:[%s165 + $0x40] sm:$0xf]
      %v189 = vld [vmem:[%s165 + $0x44] sm:$0xf]
      %v190 = vld [vmem:[%s165 + $0x48] sm:$0xf]
      %v191 = vld [vmem:[%s165 + $0x4c] sm:$0xf]
      %v192 = vld [vmem:[%s165 + $0x50] sm:$0xf]
      %v193 = vld [vmem:[%s165 + $0x54] sm:$0xf]
      %v194 = vld [vmem:[%s165 + $0x58] sm:$0xf]
      %v195 = vld [vmem:[%s165 + $0x5c] sm:$0xf]
      %v196 = vld [vmem:[%s165 + $0x60] sm:$0xf]
      %v197 = vld [vmem:[%s165 + $0x64] sm:$0xf]
      %v198 = vld [vmem:[%s165 + $0x68] sm:$0xf]
      %v199 = vld [vmem:[%s165 + $0x6c] sm:$0xf]
      %v200 = vld [vmem:[%s165 + $0x70] sm:$0xf]
      %v201 = vld [vmem:[%s165 + $0x74] sm:$0xf]
      %v202 = vld [vmem:[%s165 + $0x78] sm:$0xf]
      %v203 = vld [vmem:[%s165 + $0x7c] sm:$0xf]
      %v204 = vld [vmem:[%s165 + $0x80] sm:$0xf]
      %v205 = vld [vmem:[%s165 + $0x84] sm:$0xf]
      %v206 = vld [vmem:[%s165 + $0x88] sm:$0xf]
      %v207 = vld [vmem:[%s165 + $0x8c] sm:$0xf]
      %v208 = vld [vmem:[%s165 + $0x90] sm:$0xf]
      %v209 = vld [vmem:[%s165 + $0x94] sm:$0xf]
      %v210 = vld [vmem:[%s165 + $0x98] sm:$0xf]
      %v211 = vld [vmem:[%s165 + $0x9c] sm:$0xf]
      %v212 = vld [vmem:[%s165 + $0xa0] sm:$0xf]
      %v213 = vld [vmem:[%s165 + $0xa4] sm:$0xf]
      %v214 = vld [vmem:[%s165 + $0xa8] sm:$0xf]
      %v215 = vld [vmem:[%s165 + $0xac] sm:$0xf]
      %v216 = vld [vmem:[%s165 + $0xb0] sm:$0xf]
      %v217 = vld [vmem:[%s165 + $0xb4] sm:$0xf]
      %v218 = vld [vmem:[%s165 + $0xb8] sm:$0xf]
      %v219 = vld [vmem:[%s165 + $0xbc] sm:$0xf]
      %v220 = vld [vmem:[%s165 + $0xc0] sm:$0xf]
      %v221 = vld [vmem:[%s165 + $0xc4] sm:$0xf]
      %v222 = vld [vmem:[%s165 + $0xc8] sm:$0xf]
      %v223 = vld [vmem:[%s165 + $0xcc] sm:$0xf]
      %v224 = vld [vmem:[%s165 + $0xd0] sm:$0xf]
      %v225 = vld [vmem:[%s165 + $0xd4] sm:$0xf]
      %v226 = vld [vmem:[%s165 + $0xd8] sm:$0xf]
      %v227 = vld [vmem:[%s165 + $0xdc] sm:$0xf]
      %v228 = vld [vmem:[%s165 + $0xe0] sm:$0xf]
      %v229 = vld [vmem:[%s165 + $0xe4] sm:$0xf]
      %v230 = vld [vmem:[%s165 + $0xe8] sm:$0xf]
      %v231 = vld [vmem:[%s165 + $0xec] sm:$0xf]
      %v232 = vld [vmem:[%s165 + $0xf0] sm:$0xf]
      %v233 = vld [vmem:[%s165 + $0xf4] sm:$0xf]
      %v234 = vld [vmem:[%s165 + $0xf8] sm:$0xf]
      %v235 = vld [vmem:[%s165 + $0xfc] sm:$0xf]
      %v236 = vld [vmem:[%s165 + $0x100] sm:$0xf]
      %v237 = vld [vmem:[%s165 + $0x104] sm:$0xf]
      %v238 = vld [vmem:[%s165 + $0x108] sm:$0xf]
      %v239 = vld [vmem:[%s165 + $0x10c] sm:$0xf]
      %v240 = vld [vmem:[%s165 + $0x110] sm:$0xf]
      %v241 = vld [vmem:[%s165 + $0x114] sm:$0xf]
      %v242 = vld [vmem:[%s165 + $0x118] sm:$0xf]
      %v243 = vld [vmem:[%s165 + $0x11c] sm:$0xf]
      %v244 = vld [vmem:[%s165 + $0x120] sm:$0xf]
      %v245 = vld [vmem:[%s165 + $0x124] sm:$0xf]
      %v246 = vld [vmem:[%s165 + $0x128] sm:$0xf]
      %v247 = vld [vmem:[%s165 + $0x12c] sm:$0xf]
      %v248 = vld [vmem:[%s165 + $0x130] sm:$0xf]
      %v249 = vld [vmem:[%s165 + $0x134] sm:$0xf]
      %v250 = vld [vmem:[%s165 + $0x138] sm:$0xf]
      %v251 = vld [vmem:[%s165 + $0x13c] sm:$0xf]
      %v252 = vld [vmem:[%s165 + $0x140] sm:$0xf]
      %v253 = vld [vmem:[%s165 + $0x144] sm:$0xf]
      %v254 = vld [vmem:[%s165 + $0x148] sm:$0xf]
      %v255 = vld [vmem:[%s165 + $0x14c] sm:$0xf]
      %v256 = vld [vmem:[%s165 + $0x150] sm:$0xf]
      %v257 = vld [vmem:[%s165 + $0x154] sm:$0xf]
      %v258 = vld [vmem:[%s165 + $0x158] sm:$0xf]
      %v259 = vld [vmem:[%s165 + $0x15c] sm:$0xf]
      %v260 = vld [vmem:[%s165 + $0x160] sm:$0xf]
      %v261 = vld [vmem:[%s165 + $0x164] sm:$0xf]
      %v262 = vld [vmem:[%s165 + $0x168] sm:$0xf]
      %v263 = vld [vmem:[%s165 + $0x16c] sm:$0xf]
      %v264 = vld [vmem:[%s165 + $0x170] sm:$0xf]
      %v265 = vld [vmem:[%s165 + $0x174] sm:$0xf]
      %v266 = vld [vmem:[%s165 + $0x178] sm:$0xf]
      %v267 = vld [vmem:[%s165 + $0x17c] sm:$0xf]
      %v268 = vld [vmem:[%s165 + $0x180] sm:$0xf]
      %v269 = vld [vmem:[%s165 + $0x184] sm:$0xf]
      %v270 = vld [vmem:[%s1] sm:$0xf]
      %v271 = vld [vmem:[%s1 + $0x4] sm:$0xf]
      %v272 = vld [vmem:[%s1 + $0x8] sm:$0xf]
      %v273 = vld [vmem:[%s1 + $0xc] sm:$0xf]
      %v274 = vld [vmem:[%s1 + $0x10] sm:$0xf]
      %v275 = vld [vmem:[%s1 + $0x14] sm:$0xf]
      %v276 = vld [vmem:[%s1 + $0x18] sm:$0xf]
      %v277 = vld [vmem:[%s1 + $0x1c] sm:$0xf]
      %v278 = vld [vmem:[%s1 + $0x20] sm:$0xf]
      %v279 = vld [vmem:[%s1 + $0x24] sm:$0x3]
      %v280 = vld [vmem:[%s2] sm:$0x1]
      %v282 = vlaneseq
      %v283 = vshrl.u32 %v282, 7
      %v284 = vsub.s32 0, %v283
      %v285 = vrot.slane %v280, %v284
      %v385 = vunpack.c.l.b16 %v172
      %v386 = vunpack.c.l.b16 %v173
      %v387 = vunpack.c.l.b16 %v174
      %v388 = vunpack.c.l.b16 %v175
      %v389 = vunpack.c.l.b16 %v176
      %v390 = vunpack.c.l.b16 %v177
      %v391 = vunpack.c.l.b16 %v178
      %v392 = vunpack.c.l.b16 %v179
      %v393 = vunpack.c.l.b16 %v180
      %v394 = vunpack.c.l.b16 %v181
      %v395 = vunpack.c.l.b16 %v182
      %v396 = vunpack.c.l.b16 %v183
      %v397 = vunpack.c.l.b16 %v184
      %v398 = vunpack.c.l.b16 %v185
      %v399 = vunpack.c.l.b16 %v186
      %v400 = vunpack.c.l.b16 %v187
      %v401 = vunpack.c.l.b16 %v188
      %v402 = vunpack.c.l.b16 %v189
      %v403 = vunpack.c.l.b16 %v190
      %v404 = vunpack.c.l.b16 %v191
      %v405 = vunpack.c.l.b16 %v192
      %v406 = vunpack.c.l.b16 %v193
      %v407 = vunpack.c.l.b16 %v194
      %v408 = vunpack.c.l.b16 %v195
      %v409 = vunpack.c.l.b16 %v196
      %v410 = vunpack.c.l.b16 %v197
      %v411 = vunpack.c.l.b16 %v198
      %v412 = vunpack.c.l.b16 %v199
      %v413 = vunpack.c.l.b16 %v200
      %v414 = vunpack.c.l.b16 %v201
      %v415 = vunpack.c.l.b16 %v202
      %v416 = vunpack.c.l.b16 %v203
      %v417 = vunpack.c.l.b16 %v204
      %v418 = vunpack.c.l.b16 %v205
      %v419 = vunpack.c.l.b16 %v206
      %v420 = vunpack.c.l.b16 %v207
      %v421 = vunpack.c.l.b16 %v208
      %v422 = vunpack.c.l.b16 %v209
      %v423 = vunpack.c.l.b16 %v210
      %v424 = vunpack.c.l.b16 %v211
      %v425 = vunpack.c.l.b16 %v212
      %v426 = vunpack.c.l.b16 %v213
      %v427 = vunpack.c.l.b16 %v214
      %v428 = vunpack.c.l.b16 %v215
      %v429 = vunpack.c.l.b16 %v216
      %v430 = vunpack.c.l.b16 %v217
      %v431 = vunpack.c.l.b16 %v218
      %v432 = vunpack.c.l.b16 %v219
      %v433 = vunpack.c.l.b16 %v220
      %v434 = vunpack.c.l.b16 %v221
      %v435 = vunpack.c.l.b16 %v222
      %v436 = vunpack.c.l.b16 %v223
      %v437 = vunpack.c.l.b16 %v224
      %v438 = vunpack.c.l.b16 %v225
      %v439 = vunpack.c.l.b16 %v226
      %v440 = vunpack.c.l.b16 %v227
      %v441 = vunpack.c.l.b16 %v228
      %v442 = vunpack.c.l.b16 %v229
      %v443 = vunpack.c.l.b16 %v230
      %v444 = vunpack.c.l.b16 %v231
      %v445 = vunpack.c.l.b16 %v232
      %v446 = vunpack.c.l.b16 %v233
      %v447 = vunpack.c.l.b16 %v234
      %v448 = vunpack.c.l.b16 %v235
      %v449 = vunpack.c.l.b16 %v236
      %v450 = vunpack.c.l.b16 %v237
      %v451 = vunpack.c.l.b16 %v238
      %v452 = vunpack.c.l.b16 %v239
      %v453 = vunpack.c.l.b16 %v240
      %v454 = vunpack.c.l.b16 %v241
      %v455 = vunpack.c.l.b16 %v242
      %v456 = vunpack.c.l.b16 %v243
      %v457 = vunpack.c.l.b16 %v244
      %v458 = vunpack.c.l.b16 %v245
      %v459 = vunpack.c.l.b16 %v246
      %v460 = vunpack.c.l.b16 %v247
      %v461 = vunpack.c.l.b16 %v248
      %v462 = vunpack.c.l.b16 %v249
      %v463 = vunpack.c.l.b16 %v250
      %v464 = vunpack.c.l.b16 %v251
      %v465 = vunpack.c.l.b16 %v252
      %v466 = vunpack.c.l.b16 %v253
      %v467 = vunpack.c.l.b16 %v254
      %v468 = vunpack.c.l.b16 %v255
      %v469 = vunpack.c.l.b16 %v256
      %v470 = vunpack.c.l.b16 %v257
      %v471 = vunpack.c.l.b16 %v258
      %v472 = vunpack.c.l.b16 %v259
      %v473 = vunpack.c.l.b16 %v260
      %v474 = vunpack.c.l.b16 %v261
      %v475 = vunpack.c.l.b16 %v262
      %v476 = vunpack.c.l.b16 %v263
      %v477 = vunpack.c.l.b16 %v264
      %v478 = vunpack.c.l.b16 %v265
      %v479 = vunpack.c.l.b16 %v266
      %v480 = vunpack.c.l.b16 %v267
      %v481 = vunpack.c.l.b16 %v268
      %v482 = vunpack.c.l.b16 %v269
      %v483 = vpack.c.b16 %v386, %v385
      %v484 = vpack.c.b16 %v388, %v387
      %v485 = vpack.c.b16 %v390, %v389
      %v486 = vpack.c.b16 %v392, %v391
      %v487 = vpack.c.b16 %v394, %v393
      %v488 = vpack.c.b16 %v396, %v395
      %v489 = vpack.c.b16 %v398, %v397
      %v490 = vpack.c.b16 %v400, %v399
      %v491 = vpack.c.b16 %v402, %v401
      %v492 = vpack.c.b16 %v404, %v403
      %v493 = vpack.c.b16 %v406, %v405
      %v494 = vpack.c.b16 %v408, %v407
      %v495 = vpack.c.b16 %v410, %v409
      %v496 = vpack.c.b16 %v412, %v411
      %v497 = vpack.c.b16 %v414, %v413
      %v498 = vpack.c.b16 %v416, %v415
      %v499 = vpack.c.b16 %v418, %v417
      %v500 = vpack.c.b16 %v420, %v419
      %v501 = vpack.c.b16 %v422, %v421
      %v502 = vpack.c.b16 %v424, %v423
      %v503 = vpack.c.b16 %v426, %v425
      %v504 = vpack.c.b16 %v428, %v427
      %v505 = vpack.c.b16 %v430, %v429
      %v506 = vpack.c.b16 %v432, %v431
      %v507 = vpack.c.b16 %v434, %v433
      %v508 = vpack.c.b16 %v436, %v435
      %v509 = vpack.c.b16 %v438, %v437
      %v510 = vpack.c.b16 %v440, %v439
      %v511 = vpack.c.b16 %v442, %v441
      %v512 = vpack.c.b16 %v444, %v443
      %v513 = vpack.c.b16 %v446, %v445
      %v514 = vpack.c.b16 %v448, %v447
      %v515 = vpack.c.b16 %v450, %v449
      %v516 = vpack.c.b16 %v452, %v451
      %v517 = vpack.c.b16 %v454, %v453
      %v518 = vpack.c.b16 %v456, %v455
      %v519 = vpack.c.b16 %v458, %v457
      %v520 = vpack.c.b16 %v460, %v459
      %v521 = vpack.c.b16 %v462, %v461
      %v522 = vpack.c.b16 %v464, %v463
      %v523 = vpack.c.b16 %v466, %v465
      %v524 = vpack.c.b16 %v468, %v467
      %v525 = vpack.c.b16 %v470, %v469
      %v526 = vpack.c.b16 %v472, %v471
      %v527 = vpack.c.b16 %v474, %v473
      %v528 = vpack.c.b16 %v476, %v475
      %v529 = vpack.c.b16 %v478, %v477
      %v530 = vpack.c.b16 %v480, %v479
      %v531 = vpack.c.b16 %v482, %v481
      %v542 = vunpack.c.l.b16 %v270
      %v543 = vunpack.c.l.b16 %v271
      %v544 = vunpack.c.l.b16 %v272
      %v545 = vunpack.c.l.b16 %v273
      %v546 = vunpack.c.l.b16 %v274
      %v547 = vunpack.c.l.b16 %v275
      %v548 = vunpack.c.l.b16 %v276
      %v549 = vunpack.c.l.b16 %v277
      %v550 = vunpack.c.l.b16 %v278
      %v551 = vunpack.c.l.b16 %v279
      %v552 = vpack.c.b16 %v543, %v542
      %v553 = vpack.c.b16 %v545, %v544
      %v554 = vpack.c.b16 %v547, %v546
      %v555 = vpack.c.b16 %v549, %v548
      %v556 = vpack.c.b16 %v551, %v550
      %vm561 = vcmask 613376
      %v563 = vsel %vm561, %v483, 0
      %v566 = vsel %vm561, %v484, 0
      %v569 = vsel %vm561, %v485, 0
      %v572 = vsel %vm561, %v486, 0
      %v575 = vsel %vm561, %v487, 0
      %v578 = vsel %vm561, %v488, 0
      %v581 = vsel %vm561, %v489, 0
      %v584 = vsel %vm561, %v490, 0
      %v587 = vsel %vm561, %v491, 0
      %v590 = vsel %vm561, %v492, 0
      %v593 = vsel %vm561, %v493, 0
      %v596 = vsel %vm561, %v494, 0
      %v599 = vsel %vm561, %v495, 0
      %v602 = vsel %vm561, %v496, 0
      %v605 = vsel %vm561, %v497, 0
      %v608 = vsel %vm561, %v498, 0
      %v611 = vsel %vm561, %v499, 0
      %v614 = vsel %vm561, %v500, 0
      %v617 = vsel %vm561, %v501, 0
      %v620 = vsel %vm561, %v502, 0
      %v623 = vsel %vm561, %v503, 0
      %v626 = vsel %vm561, %v504, 0
      %v629 = vsel %vm561, %v505, 0
      %v632 = vsel %vm561, %v506, 0
      %v635 = vsel %vm561, %v507, 0
      %v638 = vsel %vm561, %v508, 0
      %v641 = vsel %vm561, %v509, 0
      %v644 = vsel %vm561, %v510, 0
      %v647 = vsel %vm561, %v511, 0
      %v650 = vsel %vm561, %v512, 0
      %v653 = vsel %vm561, %v513, 0
      %v656 = vsel %vm561, %v514, 0
      %v659 = vsel %vm561, %v515, 0
      %v662 = vsel %vm561, %v516, 0
      %v665 = vsel %vm561, %v517, 0
      %v668 = vsel %vm561, %v518, 0
      %v671 = vsel %vm561, %v519, 0
      %v674 = vsel %vm561, %v520, 0
      %v677 = vsel %vm561, %v521, 0
      %v680 = vsel %vm561, %v522, 0
      %v683 = vsel %vm561, %v523, 0
      %v686 = vsel %vm561, %v524, 0
      %v689 = vsel %vm561, %v525, 0
      %v692 = vsel %vm561, %v526, 0
      %v695 = vsel %vm561, %v527, 0
      %v698 = vsel %vm561, %v528, 0
      %v701 = vsel %vm561, %v529, 0
      %v704 = vsel %vm561, %v530, 0
      %v707 = vsel %vm561, %v531, 0
      %vm709 = vcmask 1044480
      %vm710 = vcmask 1045504
      %v711 = vsel %vm709, 4294967295, 65535
      %v712 = vsel %vm710, %v711, 0
      %v714 = vand.u32 %v556, %v712
      %716 = vmatprep.subr.bf16.mxu0 0
      %717 = vmatpush1.bf16.msra.mxu0 %v552
      %718 = vmatprep.subr.bf16.mxu0 0
      %719 = vmatpush1.bf16.msra.mxu0 %v553
      %720 = vmatprep.subr.bf16.mxu0 0
      %721 = vmatpush1.bf16.msra.mxu0 %v554
      %722 = vmatprep.subr.bf16.mxu0 0
      %723 = vmatpush1.bf16.msra.mxu0 %v555
      %724 = vmatprep.subr.bf16.mxu0 0
      %725 = vmatpush1.bf16.msra.mxu0 %v714
      %726 = vmatprep.subr.bf16.mxu0 0
      %727 = vmatpush1.bf16.msra.mxu0 0
      %728 = vmatprep.subr.bf16.mxu0 0
      %729 = vmatpush1.bf16.msra.mxu0 0
      %730 = vmatprep.subr.bf16.mxu0 0
      %731 = vmatpush1.bf16.msra.mxu0 0
      %732 = vmatprep.subr.bf16.mxu0 0
      %733 = vmatpush1.bf16.msra.mxu0 0
      %734 = vmatprep.subr.bf16.mxu0 0
      %735 = vmatpush1.bf16.msra.mxu0 0
      %736 = vmatprep.subr.bf16.mxu0 0
      %737 = vmatpush1.bf16.msra.mxu0 0
      %738 = vmatprep.subr.bf16.mxu0 0
      %739 = vmatpush1.bf16.msra.mxu0 0
      %740 = vmatprep.subr.bf16.mxu0 0
      %741 = vmatpush1.bf16.msra.mxu0 0
      %742 = vmatprep.subr.bf16.mxu0 0
      %743 = vmatpush1.bf16.msra.mxu0 0
      %744 = vmatprep.subr.bf16.mxu0 0
      %745 = vmatpush1.bf16.msra.mxu0 0
      %746 = vmatprep.subr.bf16.mxu0 0
      %747 = vmatpush1.bf16.msra.mxu0 0
      %748 = vmatprep.mubr.bf16.mxu0 0
      %749 = vmatmul.mubr.bf16.gmra.mrb[0].mxu0 %v563
      %v750 = vpop.f32.mrb[0].mxu0
      %v751 = vadd.f32 %v285, %v750
      %v752 = vpop.f32.mrb[0].mxu0
      %v753 = vpop.f32.mrb[0].mxu0
      %v754 = vadd.f32 %v285, %v753
      %v755 = vpop.f32.mrb[0].mxu0
      %756 = vmatprep.mubr.bf16.mxu0 0
      %757 = vmatmul.mubr.bf16.gmra.mrb[0].mxu0 %v566
      %v758 = vpop.f32.mrb[0].mxu0
      %v759 = vadd.f32 %v285, %v758
      %v760 = vpop.f32.mrb[0].mxu0
      %v761 = vpop.f32.mrb[0].mxu0
      %v762 = vadd.f32 %v285, %v761
      %v763 = vpop.f32.mrb[0].mxu0
      %764 = vmatprep.mubr.bf16.mxu0 0
      %765 = vmatmul.mubr.bf16.gmra.mrb[0].mxu0 %v569
      %v766 = vpop.f32.mrb[0].mxu0
      %v767 = vadd.f32 %v285, %v766
      %v768 = vpop.f32.mrb[0].mxu0
      %v769 = vpop.f32.mrb[0].mxu0
      %v770 = vadd.f32 %v285, %v769
      %v771 = vpop.f32.mrb[0].mxu0
      %772 = vmatprep.mubr.bf16.mxu0 0
      %773 = vmatmul.mubr.bf16.gmra.mrb[0].mxu0 %v572
      %v774 = vpop.f32.mrb[0].mxu0
      %v775 = vadd.f32 %v285, %v774
      %v776 = vpop.f32.mrb[0].mxu0
      %v777 = vpop.f32.mrb[0].mxu0
      %v778 = vadd.f32 %v285, %v777
      %v779 = vpop.f32.mrb[0].mxu0
      %780 = vmatprep.mubr.bf16.mxu0 0
      %781 = vmatmul.mubr.bf16.gmra.mrb[0].mxu0 %v575
      %v782 = vpop.f32.mrb[0].mxu0
      %v783 = vadd.f32 %v285, %v782
      %v784 = vpop.f32.mrb[0].mxu0
      %v785 = vpop.f32.mrb[0].mxu0
      %v786 = vadd.f32 %v285, %v785
      %v787 = vpop.f32.mrb[0].mxu0
      %788 = vmatprep.mubr.bf16.mxu0 0
      %789 = vmatmul.mubr.bf16.gmra.mrb[0].mxu0 %v578
      %v790 = vpop.f32.mrb[0].mxu0
      %v791 = vadd.f32 %v285, %v790
      %v792 = vpop.f32.mrb[0].mxu0
      %v793 = vpop.f32.mrb[0].mxu0
      %v794 = vadd.f32 %v285, %v793
      %v795 = vpop.f32.mrb[0].mxu0
      %796 = vmatprep.mubr.bf16.mxu0 0
      %797 = vmatmul.mubr.bf16.gmra.mrb[0].mxu0 %v581
      %v798 = vpop.f32.mrb[0].mxu0
      %v799 = vadd.f32 %v285, %v798
      %v800 = vpop.f32.mrb[0].mxu0
      %v801 = vpop.f32.mrb[0].mxu0
      %v802 = vadd.f32 %v285, %v801
      %v803 = vpop.f32.mrb[0].mxu0
      %804 = vmatprep.mubr.bf16.mxu0 0
      %805 = vmatmul.mubr.bf16.gmra.mrb[0].mxu0 %v584
      %v806 = vpop.f32.mrb[0].mxu0
      %v807 = vadd.f32 %v285, %v806
      %v808 = vpop.f32.mrb[0].mxu0
      %v809 = vpop.f32.mrb[0].mxu0
      %v810 = vadd.f32 %v285, %v809
      %v811 = vpop.f32.mrb[0].mxu0
      %812 = vmatprep.mubr.bf16.mxu0 0
      %813 = vmatmul.mubr.bf16.gmra.mrb[0].mxu0 %v587
      %v814 = vpop.f32.mrb[0].mxu0
      %v815 = vadd.f32 %v285, %v814
      %v816 = vpop.f32.mrb[0].mxu0
      %v817 = vpop.f32.mrb[0].mxu0
      %v818 = vadd.f32 %v285, %v817
      %v819 = vpop.f32.mrb[0].mxu0
      %820 = vmatprep.mubr.bf16.mxu0 0
      %821 = vmatmul.mubr.bf16.gmra.mrb[0].mxu0 %v590
      %v822 = vpop.f32.mrb[0].mxu0
      %v823 = vadd.f32 %v285, %v822
      %v824 = vpop.f32.mrb[0].mxu0
      %v825 = vpop.f32.mrb[0].mxu0
      %v826 = vadd.f32 %v285, %v825
      %v827 = vpop.f32.mrb[0].mxu0
      %828 = vmatprep.mubr.bf16.mxu0 0
      %829 = vmatmul.mubr.bf16.gmra.mrb[0].mxu0 %v593
      %v830 = vpop.f32.mrb[0].mxu0
      %v831 = vadd.f32 %v285, %v830
      %v832 = vpop.f32.mrb[0].mxu0
      %v833 = vpop.f32.mrb[0].mxu0
      %v834 = vadd.f32 %v285, %v833
      %v835 = vpop.f32.mrb[0].mxu0
      %836 = vmatprep.mubr.bf16.mxu0 0
      %837 = vmatmul.mubr.bf16.gmra.mrb[0].mxu0 %v596
      %v838 = vpop.f32.mrb[0].mxu0
      %v839 = vadd.f32 %v285, %v838
      %v840 = vpop.f32.mrb[0].mxu0
      %v841 = vpop.f32.mrb[0].mxu0
      %v842 = vadd.f32 %v285, %v841
      %v843 = vpop.f32.mrb[0].mxu0
      %844 = vmatprep.mubr.bf16.mxu0 0
      %845 = vmatmul.mubr.bf16.gmra.mrb[0].mxu0 %v599
      %v846 = vpop.f32.mrb[0].mxu0
      %v847 = vadd.f32 %v285, %v846
      %v848 = vpop.f32.mrb[0].mxu0
      %v849 = vpop.f32.mrb[0].mxu0
      %v850 = vadd.f32 %v285, %v849
      %v851 = vpop.f32.mrb[0].mxu0
      %852 = vmatprep.mubr.bf16.mxu0 0
      %853 = vmatmul.mubr.bf16.gmra.mrb[0].mxu0 %v602
      %v854 = vpop.f32.mrb[0].mxu0
      %v855 = vadd.f32 %v285, %v854
      %v856 = vpop.f32.mrb[0].mxu0
      %v857 = vpop.f32.mrb[0].mxu0
      %v858 = vadd.f32 %v285, %v857
      %v859 = vpop.f32.mrb[0].mxu0
      %860 = vmatprep.mubr.bf16.mxu0 0
      %861 = vmatmul.mubr.bf16.gmra.mrb[0].mxu0 %v605
      %v862 = vpop.f32.mrb[0].mxu0
      %v863 = vadd.f32 %v285, %v862
      %v864 = vpop.f32.mrb[0].mxu0
      %v865 = vpop.f32.mrb[0].mxu0
      %v866 = vadd.f32 %v285, %v865
      %v867 = vpop.f32.mrb[0].mxu0
      %868 = vmatprep.mubr.bf16.mxu0 0
      %869 = vmatmul.mubr.bf16.gmra.mrb[0].mxu0 %v608
      %v870 = vpop.f32.mrb[0].mxu0
      %v871 = vadd.f32 %v285, %v870
      %v872 = vpop.f32.mrb[0].mxu0
      %v873 = vpop.f32.mrb[0].mxu0
      %v874 = vadd.f32 %v285, %v873
      %v875 = vpop.f32.mrb[0].mxu0
      %876 = vmatprep.mubr.bf16.mxu0 0
      %877 = vmatmul.mubr.bf16.gmra.mrb[0].mxu0 %v611
      %v878 = vpop.f32.mrb[0].mxu0
      %v879 = vadd.f32 %v285, %v878
      %v880 = vpop.f32.mrb[0].mxu0
      %v881 = vpop.f32.mrb[0].mxu0
      %v882 = vadd.f32 %v285, %v881
      %v883 = vpop.f32.mrb[0].mxu0
      %884 = vmatprep.mubr.bf16.mxu0 0
      %885 = vmatmul.mubr.bf16.gmra.mrb[0].mxu0 %v614
      %v886 = vpop.f32.mrb[0].mxu0
      %v887 = vadd.f32 %v285, %v886
      %v888 = vpop.f32.mrb[0].mxu0
      %v889 = vpop.f32.mrb[0].mxu0
      %v890 = vadd.f32 %v285, %v889
      %v891 = vpop.f32.mrb[0].mxu0
      %892 = vmatprep.mubr.bf16.mxu0 0
      %893 = vmatmul.mubr.bf16.gmra.mrb[0].mxu0 %v617
      %v894 = vpop.f32.mrb[0].mxu0
      %v895 = vadd.f32 %v285, %v894
      %v896 = vpop.f32.mrb[0].mxu0
      %v897 = vpop.f32.mrb[0].mxu0
      %v898 = vadd.f32 %v285, %v897
      %v899 = vpop.f32.mrb[0].mxu0
      %900 = vmatprep.mubr.bf16.mxu0 0
      %901 = vmatmul.mubr.bf16.gmra.mrb[0].mxu0 %v620
      %v902 = vpop.f32.mrb[0].mxu0
      %v903 = vadd.f32 %v285, %v902
      %v904 = vpop.f32.mrb[0].mxu0
      %v905 = vpop.f32.mrb[0].mxu0
      %v906 = vadd.f32 %v285, %v905
      %v907 = vpop.f32.mrb[0].mxu0
      %908 = vmatprep.mubr.bf16.mxu0 0
      %909 = vmatmul.mubr.bf16.gmra.mrb[0].mxu0 %v623
      %v910 = vpop.f32.mrb[0].mxu0
      %v911 = vadd.f32 %v285, %v910
      %v912 = vpop.f32.mrb[0].mxu0
      %v913 = vpop.f32.mrb[0].mxu0
      %v914 = vadd.f32 %v285, %v913
      %v915 = vpop.f32.mrb[0].mxu0
      %916 = vmatprep.mubr.bf16.mxu0 0
      %917 = vmatmul.mubr.bf16.gmra.mrb[0].mxu0 %v626
      %v918 = vpop.f32.mrb[0].mxu0
      %v919 = vadd.f32 %v285, %v918
      %v920 = vpop.f32.mrb[0].mxu0
      %v921 = vpop.f32.mrb[0].mxu0
      %v922 = vadd.f32 %v285, %v921
      %v923 = vpop.f32.mrb[0].mxu0
      %924 = vmatprep.mubr.bf16.mxu0 0
      %925 = vmatmul.mubr.bf16.gmra.mrb[0].mxu0 %v629
      %v926 = vpop.f32.mrb[0].mxu0
      %v927 = vadd.f32 %v285, %v926
      %v928 = vpop.f32.mrb[0].mxu0
      %v929 = vpop.f32.mrb[0].mxu0
      %v930 = vadd.f32 %v285, %v929
      %v931 = vpop.f32.mrb[0].mxu0
      %932 = vmatprep.mubr.bf16.mxu0 0
      %933 = vmatmul.mubr.bf16.gmra.mrb[0].mxu0 %v632
      %v934 = vpop.f32.mrb[0].mxu0
      %v935 = vadd.f32 %v285, %v934
      %v936 = vpop.f32.mrb[0].mxu0
      %v937 = vpop.f32.mrb[0].mxu0
      %v938 = vadd.f32 %v285, %v937
      %v939 = vpop.f32.mrb[0].mxu0
      %940 = vmatprep.mubr.bf16.mxu0 0
      %941 = vmatmul.mubr.bf16.gmra.mrb[0].mxu0 %v635
      %v942 = vpop.f32.mrb[0].mxu0
      %v943 = vadd.f32 %v285, %v942
      %v944 = vpop.f32.mrb[0].mxu0
      %v945 = vpop.f32.mrb[0].mxu0
      %v946 = vadd.f32 %v285, %v945
      %v947 = vpop.f32.mrb[0].mxu0
      %948 = vmatprep.mubr.bf16.mxu0 0
      %949 = vmatmul.mubr.bf16.gmra.mrb[0].mxu0 %v638
      %v950 = vpop.f32.mrb[0].mxu0
      %v951 = vadd.f32 %v285, %v950
      %v952 = vpop.f32.mrb[0].mxu0
      %v953 = vpop.f32.mrb[0].mxu0
      %v954 = vadd.f32 %v285, %v953
      %v955 = vpop.f32.mrb[0].mxu0
      %956 = vmatprep.mubr.bf16.mxu0 0
      %957 = vmatmul.mubr.bf16.gmra.mrb[0].mxu0 %v641
      %v958 = vpop.f32.mrb[0].mxu0
      %v959 = vadd.f32 %v285, %v958
      %v960 = vpop.f32.mrb[0].mxu0
      %v961 = vpop.f32.mrb[0].mxu0
      %v962 = vadd.f32 %v285, %v961
      %v963 = vpop.f32.mrb[0].mxu0
      %964 = vmatprep.mubr.bf16.mxu0 0
      %965 = vmatmul.mubr.bf16.gmra.mrb[0].mxu0 %v644
      %v966 = vpop.f32.mrb[0].mxu0
      %v967 = vadd.f32 %v285, %v966
      %v968 = vpop.f32.mrb[0].mxu0
      %v969 = vpop.f32.mrb[0].mxu0
      %v970 = vadd.f32 %v285, %v969
      %v971 = vpop.f32.mrb[0].mxu0
      %972 = vmatprep.mubr.bf16.mxu0 0
      %973 = vmatmul.mubr.bf16.gmra.mrb[0].mxu0 %v647
      %v974 = vpop.f32.mrb[0].mxu0
      %v975 = vadd.f32 %v285, %v974
      %v976 = vpop.f32.mrb[0].mxu0
      %v977 = vpop.f32.mrb[0].mxu0
      %v978 = vadd.f32 %v285, %v977
      %v979 = vpop.f32.mrb[0].mxu0
      %980 = vmatprep.mubr.bf16.mxu0 0
      %981 = vmatmul.mubr.bf16.gmra.mrb[0].mxu0 %v650
      %v982 = vpop.f32.mrb[0].mxu0
      %v983 = vadd.f32 %v285, %v982
      %v984 = vpop.f32.mrb[0].mxu0
      %v985 = vpop.f32.mrb[0].mxu0
      %v986 = vadd.f32 %v285, %v985
      %v987 = vpop.f32.mrb[0].mxu0
      %988 = vmatprep.mubr.bf16.mxu0 0
      %989 = vmatmul.mubr.bf16.gmra.mrb[0].mxu0 %v653
      %v990 = vpop.f32.mrb[0].mxu0
      %v991 = vadd.f32 %v285, %v990
      %v992 = vpop.f32.mrb[0].mxu0
      %v993 = vpop.f32.mrb[0].mxu0
      %v994 = vadd.f32 %v285, %v993
      %v995 = vpop.f32.mrb[0].mxu0
      %996 = vmatprep.mubr.bf16.mxu0 0
      %997 = vmatmul.mubr.bf16.gmra.mrb[0].mxu0 %v656
      %v998 = vpop.f32.mrb[0].mxu0
      %v999 = vadd.f32 %v285, %v998
      %v1000 = vpop.f32.mrb[0].mxu0
      %v1001 = vpop.f32.mrb[0].mxu0
      %v1002 = vadd.f32 %v285, %v1001
      %v1003 = vpop.f32.mrb[0].mxu0
      %1004 = vmatprep.mubr.bf16.mxu0 0
      %1005 = vmatmul.mubr.bf16.gmra.mrb[0].mxu0 %v659
      %v1006 = vpop.f32.mrb[0].mxu0
      %v1007 = vadd.f32 %v285, %v1006
      %v1008 = vpop.f32.mrb[0].mxu0
      %v1009 = vpop.f32.mrb[0].mxu0
      %v1010 = vadd.f32 %v285, %v1009
      %v1011 = vpop.f32.mrb[0].mxu0
      %1012 = vmatprep.mubr.bf16.mxu0 0
      %1013 = vmatmul.mubr.bf16.gmra.mrb[0].mxu0 %v662
      %v1014 = vpop.f32.mrb[0].mxu0
      %v1015 = vadd.f32 %v285, %v1014
      %v1016 = vpop.f32.mrb[0].mxu0
      %v1017 = vpop.f32.mrb[0].mxu0
      %v1018 = vadd.f32 %v285, %v1017
      %v1019 = vpop.f32.mrb[0].mxu0
      %1020 = vmatprep.mubr.bf16.mxu0 0
      %1021 = vmatmul.mubr.bf16.gmra.mrb[0].mxu0 %v665
      %v1022 = vpop.f32.mrb[0].mxu0
      %v1023 = vadd.f32 %v285, %v1022
      %v1024 = vpop.f32.mrb[0].mxu0
      %v1025 = vpop.f32.mrb[0].mxu0
      %v1026 = vadd.f32 %v285, %v1025
      %v1027 = vpop.f32.mrb[0].mxu0
      %1028 = vmatprep.mubr.bf16.mxu0 0
      %1029 = vmatmul.mubr.bf16.gmra.mrb[0].mxu0 %v668
      %v1030 = vpop.f32.mrb[0].mxu0
      %v1031 = vadd.f32 %v285, %v1030
      %v1032 = vpop.f32.mrb[0].mxu0
      %v1033 = vpop.f32.mrb[0].mxu0
      %v1034 = vadd.f32 %v285, %v1033
      %v1035 = vpop.f32.mrb[0].mxu0
      %1036 = vmatprep.mubr.bf16.mxu0 0
      %1037 = vmatmul.mubr.bf16.gmra.mrb[0].mxu0 %v671
      %v1038 = vpop.f32.mrb[0].mxu0
      %v1039 = vadd.f32 %v285, %v1038
      %v1040 = vpop.f32.mrb[0].mxu0
      %v1041 = vpop.f32.mrb[0].mxu0
      %v1042 = vadd.f32 %v285, %v1041
      %v1043 = vpop.f32.mrb[0].mxu0
      %1044 = vmatprep.mubr.bf16.mxu0 0
      %1045 = vmatmul.mubr.bf16.gmra.mrb[0].mxu0 %v674
      %v1046 = vpop.f32.mrb[0].mxu0
      %v1047 = vadd.f32 %v285, %v1046
      %v1048 = vpop.f32.mrb[0].mxu0
      %v1049 = vpop.f32.mrb[0].mxu0
      %v1050 = vadd.f32 %v285, %v1049
      %v1051 = vpop.f32.mrb[0].mxu0
      %1052 = vmatprep.mubr.bf16.mxu0 0
      %1053 = vmatmul.mubr.bf16.gmra.mrb[0].mxu0 %v677
      %v1054 = vpop.f32.mrb[0].mxu0
      %v1055 = vadd.f32 %v285, %v1054
      %v1056 = vpop.f32.mrb[0].mxu0
      %v1057 = vpop.f32.mrb[0].mxu0
      %v1058 = vadd.f32 %v285, %v1057
      %v1059 = vpop.f32.mrb[0].mxu0
      %1060 = vmatprep.mubr.bf16.mxu0 0
      %1061 = vmatmul.mubr.bf16.gmra.mrb[0].mxu0 %v680
      %v1062 = vpop.f32.mrb[0].mxu0
      %v1063 = vadd.f32 %v285, %v1062
      %v1064 = vpop.f32.mrb[0].mxu0
      %v1065 = vpop.f32.mrb[0].mxu0
      %v1066 = vadd.f32 %v285, %v1065
      %v1067 = vpop.f32.mrb[0].mxu0
      %1068 = vmatprep.mubr.bf16.mxu0 0
      %1069 = vmatmul.mubr.bf16.gmra.mrb[0].mxu0 %v683
      %v1070 = vpop.f32.mrb[0].mxu0
      %v1071 = vadd.f32 %v285, %v1070
      %v1072 = vpop.f32.mrb[0].mxu0
      %v1073 = vpop.f32.mrb[0].mxu0
      %v1074 = vadd.f32 %v285, %v1073
      %v1075 = vpop.f32.mrb[0].mxu0
      %1076 = vmatprep.mubr.bf16.mxu0 0
      %1077 = vmatmul.mubr.bf16.gmra.mrb[0].mxu0 %v686
      %v1078 = vpop.f32.mrb[0].mxu0
      %v1079 = vadd.f32 %v285, %v1078
      %v1080 = vpop.f32.mrb[0].mxu0
      %v1081 = vpop.f32.mrb[0].mxu0
      %v1082 = vadd.f32 %v285, %v1081
      %v1083 = vpop.f32.mrb[0].mxu0
      %1084 = vmatprep.mubr.bf16.mxu0 0
      %1085 = vmatmul.mubr.bf16.gmra.mrb[0].mxu0 %v689
      %v1086 = vpop.f32.mrb[0].mxu0
      %v1087 = vadd.f32 %v285, %v1086
      %v1088 = vpop.f32.mrb[0].mxu0
      %v1089 = vpop.f32.mrb[0].mxu0
      %v1090 = vadd.f32 %v285, %v1089
      %v1091 = vpop.f32.mrb[0].mxu0
      %1092 = vmatprep.mubr.bf16.mxu0 0
      %1093 = vmatmul.mubr.bf16.gmra.mrb[0].mxu0 %v692
      %v1094 = vpop.f32.mrb[0].mxu0
      %v1095 = vadd.f32 %v285, %v1094
      %v1096 = vpop.f32.mrb[0].mxu0
      %v1097 = vpop.f32.mrb[0].mxu0
      %v1098 = vadd.f32 %v285, %v1097
      %v1099 = vpop.f32.mrb[0].mxu0
      %1100 = vmatprep.mubr.bf16.mxu0 0
      %1101 = vmatmul.mubr.bf16.gmra.mrb[0].mxu0 %v695
      %v1102 = vpop.f32.mrb[0].mxu0
      %v1103 = vadd.f32 %v285, %v1102
      %v1104 = vpop.f32.mrb[0].mxu0
      %v1105 = vpop.f32.mrb[0].mxu0
      %v1106 = vadd.f32 %v285, %v1105
      %v1107 = vpop.f32.mrb[0].mxu0
      %1108 = vmatprep.mubr.bf16.mxu0 0
      %1109 = vmatmul.mubr.bf16.gmra.mrb[0].mxu0 %v698
      %v1110 = vpop.f32.mrb[0].mxu0
      %v1111 = vadd.f32 %v285, %v1110
      %v1112 = vpop.f32.mrb[0].mxu0
      %v1113 = vpop.f32.mrb[0].mxu0
      %v1114 = vadd.f32 %v285, %v1113
      %v1115 = vpop.f32.mrb[0].mxu0
      %1116 = vmatprep.mubr.bf16.mxu0 0
      %1117 = vmatmul.mubr.bf16.gmra.mrb[0].mxu0 %v701
      %v1118 = vpop.f32.mrb[0].mxu0
      %v1119 = vadd.f32 %v285, %v1118
      %v1120 = vpop.f32.mrb[0].mxu0
      %v1121 = vpop.f32.mrb[0].mxu0
      %v1122 = vadd.f32 %v285, %v1121
      %v1123 = vpop.f32.mrb[0].mxu0
      %1124 = vmatprep.mubr.bf16.mxu0 0
      %1125 = vmatmul.mubr.bf16.gmra.mrb[0].mxu0 %v704
      %v1126 = vpop.f32.mrb[0].mxu0
      %v1127 = vadd.f32 %v285, %v1126
      %v1128 = vpop.f32.mrb[0].mxu0
      %v1129 = vpop.f32.mrb[0].mxu0
      %v1130 = vadd.f32 %v285, %v1129
      %v1131 = vpop.f32.mrb[0].mxu0
      %1132 = vmatprep.mubr.bf16.mxu0 0
      %1133 = vmatmul.mubr.bf16.gmra.mrb[0].mxu0 %v707
      %v1134 = vpop.f32.mrb[0].mxu0
      %v1135 = vadd.f32 %v285, %v1134
      %v1136 = vpop.f32.mrb[0].mxu0
      %v1137 = vpop.f32.mrb[0].mxu0
      %v1138 = vadd.f32 %v285, %v1137
      %v1139 = vpop.f32.mrb[0].mxu0
      %1140 = vdwg.mxu0
      %v1141 = vmax.f32 %v751, 0.0
      %v1142 = vmax.f32 %v754, 0.0
      %v1143 = vmax.f32 %v759, 0.0
      %v1144 = vmax.f32 %v762, 0.0
      %v1145 = vmax.f32 %v767, 0.0
      %v1146 = vmax.f32 %v770, 0.0
      %v1147 = vmax.f32 %v775, 0.0
      %v1148 = vmax.f32 %v778, 0.0
      %v1149 = vmax.f32 %v783, 0.0
      %v1150 = vmax.f32 %v786, 0.0
      %v1151 = vmax.f32 %v791, 0.0
      %v1152 = vmax.f32 %v794, 0.0
      %v1153 = vmax.f32 %v799, 0.0
      %v1154 = vmax.f32 %v802, 0.0
      %v1155 = vmax.f32 %v807, 0.0
      %v1156 = vmax.f32 %v810, 0.0
      %v1157 = vmax.f32 %v815, 0.0
      %v1158 = vmax.f32 %v818, 0.0
      %v1159 = vmax.f32 %v823, 0.0
      %v1160 = vmax.f32 %v826, 0.0
      %v1161 = vmax.f32 %v831, 0.0
      %v1162 = vmax.f32 %v834, 0.0
      %v1163 = vmax.f32 %v839, 0.0
      %v1164 = vmax.f32 %v842, 0.0
      %v1165 = vmax.f32 %v847, 0.0
      %v1166 = vmax.f32 %v850, 0.0
      %v1167 = vmax.f32 %v855, 0.0
      %v1168 = vmax.f32 %v858, 0.0
      %v1169 = vmax.f32 %v863, 0.0
      %v1170 = vmax.f32 %v866, 0.0
      %v1171 = vmax.f32 %v871, 0.0
      %v1172 = vmax.f32 %v874, 0.0
      %v1173 = vmax.f32 %v879, 0.0
      %v1174 = vmax.f32 %v882, 0.0
      %v1175 = vmax.f32 %v887, 0.0
      %v1176 = vmax.f32 %v890, 0.0
      %v1177 = vmax.f32 %v895, 0.0
      %v1178 = vmax.f32 %v898, 0.0
      %v1179 = vmax.f32 %v903, 0.0
      %v1180 = vmax.f32 %v906, 0.0
      %v1181 = vmax.f32 %v911, 0.0
      %v1182 = vmax.f32 %v914, 0.0
      %v1183 = vmax.f32 %v919, 0.0
      %v1184 = vmax.f32 %v922, 0.0
      %v1185 = vmax.f32 %v927, 0.0
      %v1186 = vmax.f32 %v930, 0.0
      %v1187 = vmax.f32 %v935, 0.0
      %v1188 = vmax.f32 %v938, 0.0
      %v1189 = vmax.f32 %v943, 0.0
      %v1190 = vmax.f32 %v946, 0.0
      %v1191 = vmax.f32 %v951, 0.0
      %v1192 = vmax.f32 %v954, 0.0
      %v1193 = vmax.f32 %v959, 0.0
      %v1194 = vmax.f32 %v962, 0.0
      %v1195 = vmax.f32 %v967, 0.0
      %v1196 = vmax.f32 %v970, 0.0
      %v1197 = vmax.f32 %v975, 0.0
      %v1198 = vmax.f32 %v978, 0.0
      %v1199 = vmax.f32 %v983, 0.0
      %v1200 = vmax.f32 %v986, 0.0
      %v1201 = vmax.f32 %v991, 0.0
      %v1202 = vmax.f32 %v994, 0.0
      %v1203 = vmax.f32 %v999, 0.0
      %v1204 = vmax.f32 %v1002, 0.0
      %v1205 = vmax.f32 %v1007, 0.0
      %v1206 = vmax.f32 %v1010, 0.0
      %v1207 = vmax.f32 %v1015, 0.0
      %v1208 = vmax.f32 %v1018, 0.0
      %v1209 = vmax.f32 %v1023, 0.0
      %v1210 = vmax.f32 %v1026, 0.0
      %v1211 = vmax.f32 %v1031, 0.0
      %v1212 = vmax.f32 %v1034, 0.0
      %v1213 = vmax.f32 %v1039, 0.0
      %v1214 = vmax.f32 %v1042, 0.0
      %v1215 = vmax.f32 %v1047, 0.0
      %v1216 = vmax.f32 %v1050, 0.0
      %v1217 = vmax.f32 %v1055, 0.0
      %v1218 = vmax.f32 %v1058, 0.0
      %v1219 = vmax.f32 %v1063, 0.0
      %v1220 = vmax.f32 %v1066, 0.0
      %v1221 = vmax.f32 %v1071, 0.0
      %v1222 = vmax.f32 %v1074, 0.0
      %v1223 = vmax.f32 %v1079, 0.0
      %v1224 = vmax.f32 %v1082, 0.0
      %v1225 = vmax.f32 %v1087, 0.0
      %v1226 = vmax.f32 %v1090, 0.0
      %v1227 = vmax.f32 %v1095, 0.0
      %v1228 = vmax.f32 %v1098, 0.0
      %v1229 = vmax.f32 %v1103, 0.0
      %v1230 = vmax.f32 %v1106, 0.0
      %v1231 = vmax.f32 %v1111, 0.0
      %v1232 = vmax.f32 %v1114, 0.0
      %v1233 = vmax.f32 %v1119, 0.0
      %v1234 = vmax.f32 %v1122, 0.0
      %v1235 = vmax.f32 %v1127, 0.0
      %v1236 = vmax.f32 %v1130, 0.0
      %v1237 = vmax.f32 %v1135, 0.0
      %v1238 = vmax.f32 %v1138, 0.0
      %v1337 = vcombine.high %v1141, %v1141
      %v1339 = vunpack.c.l.s4 1983009808
      %v1340 = vunpack.c.0.s8 %v1339
      %v1341 = vlaneseq
      %v1342 = vshrl.u32 %v1341, 7
      %v1343 = vsub.s32 %v1340, %v1342
      %v1344 = vrot.slane %v1141, %v1343
      %v1346 = vunpack.c.l.s4 1983009808
      %v1347 = vunpack.c.0.s8 %v1346
      %v1348 = vlaneseq
      %v1349 = vshrl.u32 %v1348, 7
      %v1350 = vsub.s32 %v1347, %v1349
      %v1351 = vrot.slane %v1337, %v1350
      %v1352 = vcombine.high %v1344, %v1344
      %v1353 = vcombine.high %v1351, %v1351
      %v1354 = vcombine.high %v1142, %v1142
      %v1356 = vunpack.c.l.s4 1983009808
      %v1357 = vunpack.c.0.s8 %v1356
      %v1358 = vlaneseq
      %v1359 = vshrl.u32 %v1358, 7
      %v1360 = vsub.s32 %v1357, %v1359
      %v1361 = vrot.slane %v1142, %v1360
      %v1363 = vunpack.c.l.s4 1983009808
      %v1364 = vunpack.c.0.s8 %v1363
      %v1365 = vlaneseq
      %v1366 = vshrl.u32 %v1365, 7
      %v1367 = vsub.s32 %v1364, %v1366
      %v1368 = vrot.slane %v1354, %v1367
      %v1369 = vcombine.high %v1361, %v1361
      %v1370 = vcombine.high %v1368, %v1368
      %v1371 = vcombine.high %v1143, %v1143
      %v1373 = vunpack.c.l.s4 1983009808
      %v1374 = vunpack.c.0.s8 %v1373
      %v1375 = vlaneseq
      %v1376 = vshrl.u32 %v1375, 7
      %v1377 = vsub.s32 %v1374, %v1376
      %v1378 = vrot.slane %v1143, %v1377
      %v1380 = vunpack.c.l.s4 1983009808
      %v1381 = vunpack.c.0.s8 %v1380
      %v1382 = vlaneseq
      %v1383 = vshrl.u32 %v1382, 7
      %v1384 = vsub.s32 %v1381, %v1383
      %v1385 = vrot.slane %v1371, %v1384
      %v1386 = vcombine.high %v1378, %v1378
      %v1387 = vcombine.high %v1385, %v1385
      %v1388 = vcombine.high %v1144, %v1144
      %v1390 = vunpack.c.l.s4 1983009808
      %v1391 = vunpack.c.0.s8 %v1390
      %v1392 = vlaneseq
      %v1393 = vshrl.u32 %v1392, 7
      %v1394 = vsub.s32 %v1391, %v1393
      %v1395 = vrot.slane %v1144, %v1394
      %v1397 = vunpack.c.l.s4 1983009808
      %v1398 = vunpack.c.0.s8 %v1397
      %v1399 = vlaneseq
      %v1400 = vshrl.u32 %v1399, 7
      %v1401 = vsub.s32 %v1398, %v1400
      %v1402 = vrot.slane %v1388, %v1401
      %v1403 = vcombine.high %v1395, %v1395
      %v1404 = vcombine.high %v1402, %v1402
      %v1405 = vcombine.high %v1145, %v1145
      %v1407 = vunpack.c.l.s4 1983009808
      %v1408 = vunpack.c.0.s8 %v1407
      %v1409 = vlaneseq
      %v1410 = vshrl.u32 %v1409, 7
      %v1411 = vsub.s32 %v1408, %v1410
      %v1412 = vrot.slane %v1145, %v1411
      %v1414 = vunpack.c.l.s4 1983009808
      %v1415 = vunpack.c.0.s8 %v1414
      %v1416 = vlaneseq
      %v1417 = vshrl.u32 %v1416, 7
      %v1418 = vsub.s32 %v1415, %v1417
      %v1419 = vrot.slane %v1405, %v1418
      %v1420 = vcombine.high %v1412, %v1412
      %v1421 = vcombine.high %v1419, %v1419
      %v1422 = vcombine.high %v1146, %v1146
      %v1424 = vunpack.c.l.s4 1983009808
      %v1425 = vunpack.c.0.s8 %v1424
      %v1426 = vlaneseq
      %v1427 = vshrl.u32 %v1426, 7
      %v1428 = vsub.s32 %v1425, %v1427
      %v1429 = vrot.slane %v1146, %v1428
      %v1431 = vunpack.c.l.s4 1983009808
      %v1432 = vunpack.c.0.s8 %v1431
      %v1433 = vlaneseq
      %v1434 = vshrl.u32 %v1433, 7
      %v1435 = vsub.s32 %v1432, %v1434
      %v1436 = vrot.slane %v1422, %v1435
      %v1437 = vcombine.high %v1429, %v1429
      %v1438 = vcombine.high %v1436, %v1436
      %v1439 = vcombine.high %v1147, %v1147
      %v1441 = vunpack.c.l.s4 1983009808
      %v1442 = vunpack.c.0.s8 %v1441
      %v1443 = vlaneseq
      %v1444 = vshrl.u32 %v1443, 7
      %v1445 = vsub.s32 %v1442, %v1444
      %v1446 = vrot.slane %v1147, %v1445
      %v1448 = vunpack.c.l.s4 1983009808
      %v1449 = vunpack.c.0.s8 %v1448
      %v1450 = vlaneseq
      %v1451 = vshrl.u32 %v1450, 7
      %v1452 = vsub.s32 %v1449, %v1451
      %v1453 = vrot.slane %v1439, %v1452
      %v1454 = vcombine.high %v1446, %v1446
      %v1455 = vcombine.high %v1453, %v1453
      %v1456 = vcombine.high %v1148, %v1148
      %v1458 = vunpack.c.l.s4 1983009808
      %v1459 = vunpack.c.0.s8 %v1458
      %v1460 = vlaneseq
      %v1461 = vshrl.u32 %v1460, 7
      %v1462 = vsub.s32 %v1459, %v1461
      %v1463 = vrot.slane %v1148, %v1462
      %v1465 = vunpack.c.l.s4 1983009808
      %v1466 = vunpack.c.0.s8 %v1465
      %v1467 = vlaneseq
      %v1468 = vshrl.u32 %v1467, 7
      %v1469 = vsub.s32 %v1466, %v1468
      %v1470 = vrot.slane %v1456, %v1469
      %v1471 = vcombine.high %v1463, %v1463
      %v1472 = vcombine.high %v1470, %v1470
      %v1473 = vcombine.high %v1149, %v1149
      %v1475 = vunpack.c.l.s4 1983009808
      %v1476 = vunpack.c.0.s8 %v1475
      %v1477 = vlaneseq
      %v1478 = vshrl.u32 %v1477, 7
      %v1479 = vsub.s32 %v1476, %v1478
      %v1480 = vrot.slane %v1149, %v1479
      %v1482 = vunpack.c.l.s4 1983009808
      %v1483 = vunpack.c.0.s8 %v1482
      %v1484 = vlaneseq
      %v1485 = vshrl.u32 %v1484, 7
      %v1486 = vsub.s32 %v1483, %v1485
      %v1487 = vrot.slane %v1473, %v1486
      %v1488 = vcombine.high %v1480, %v1480
      %v1489 = vcombine.high %v1487, %v1487
      %v1490 = vcombine.high %v1150, %v1150
      %v1492 = vunpack.c.l.s4 1983009808
      %v1493 = vunpack.c.0.s8 %v1492
      %v1494 = vlaneseq
      %v1495 = vshrl.u32 %v1494, 7
      %v1496 = vsub.s32 %v1493, %v1495
      %v1497 = vrot.slane %v1150, %v1496
      %v1499 = vunpack.c.l.s4 1983009808
      %v1500 = vunpack.c.0.s8 %v1499
      %v1501 = vlaneseq
      %v1502 = vshrl.u32 %v1501, 7
      %v1503 = vsub.s32 %v1500, %v1502
      %v1504 = vrot.slane %v1490, %v1503
      %v1505 = vcombine.high %v1497, %v1497
      %v1506 = vcombine.high %v1504, %v1504
      %v1507 = vcombine.high %v1151, %v1151
      %v1509 = vunpack.c.l.s4 1983009808
      %v1510 = vunpack.c.0.s8 %v1509
      %v1511 = vlaneseq
      %v1512 = vshrl.u32 %v1511, 7
      %v1513 = vsub.s32 %v1510, %v1512
      %v1514 = vrot.slane %v1151, %v1513
      %v1516 = vunpack.c.l.s4 1983009808
      %v1517 = vunpack.c.0.s8 %v1516
      %v1518 = vlaneseq
      %v1519 = vshrl.u32 %v1518, 7
      %v1520 = vsub.s32 %v1517, %v1519
      %v1521 = vrot.slane %v1507, %v1520
      %v1522 = vcombine.high %v1514, %v1514
      %v1523 = vcombine.high %v1521, %v1521
      %v1524 = vcombine.high %v1152, %v1152
      %v1526 = vunpack.c.l.s4 1983009808
      %v1527 = vunpack.c.0.s8 %v1526
      %v1528 = vlaneseq
      %v1529 = vshrl.u32 %v1528, 7
      %v1530 = vsub.s32 %v1527, %v1529
      %v1531 = vrot.slane %v1152, %v1530
      %v1533 = vunpack.c.l.s4 1983009808
      %v1534 = vunpack.c.0.s8 %v1533
      %v1535 = vlaneseq
      %v1536 = vshrl.u32 %v1535, 7
      %v1537 = vsub.s32 %v1534, %v1536
      %v1538 = vrot.slane %v1524, %v1537
      %v1539 = vcombine.high %v1531, %v1531
      %v1540 = vcombine.high %v1538, %v1538
      %v1541 = vcombine.high %v1153, %v1153
      %v1543 = vunpack.c.l.s4 1983009808
      %v1544 = vunpack.c.0.s8 %v1543
      %v1545 = vlaneseq
      %v1546 = vshrl.u32 %v1545, 7
      %v1547 = vsub.s32 %v1544, %v1546
      %v1548 = vrot.slane %v1153, %v1547
      %v1550 = vunpack.c.l.s4 1983009808
      %v1551 = vunpack.c.0.s8 %v1550
      %v1552 = vlaneseq
      %v1553 = vshrl.u32 %v1552, 7
      %v1554 = vsub.s32 %v1551, %v1553
      %v1555 = vrot.slane %v1541, %v1554
      %v1556 = vcombine.high %v1548, %v1548
      %v1557 = vcombine.high %v1555, %v1555
      %v1558 = vcombine.high %v1154, %v1154
      %v1560 = vunpack.c.l.s4 1983009808
      %v1561 = vunpack.c.0.s8 %v1560
      %v1562 = vlaneseq
      %v1563 = vshrl.u32 %v1562, 7
      %v1564 = vsub.s32 %v1561, %v1563
      %v1565 = vrot.slane %v1154, %v1564
      %v1567 = vunpack.c.l.s4 1983009808
      %v1568 = vunpack.c.0.s8 %v1567
      %v1569 = vlaneseq
      %v1570 = vshrl.u32 %v1569, 7
      %v1571 = vsub.s32 %v1568, %v1570
      %v1572 = vrot.slane %v1558, %v1571
      %v1573 = vcombine.high %v1565, %v1565
      %v1574 = vcombine.high %v1572, %v1572
      %v1575 = vcombine.high %v1155, %v1155
      %v1577 = vunpack.c.l.s4 1983009808
      %v1578 = vunpack.c.0.s8 %v1577
      %v1579 = vlaneseq
      %v1580 = vshrl.u32 %v1579, 7
      %v1581 = vsub.s32 %v1578, %v1580
      %v1582 = vrot.slane %v1155, %v1581
      %v1584 = vunpack.c.l.s4 1983009808
      %v1585 = vunpack.c.0.s8 %v1584
      %v1586 = vlaneseq
      %v1587 = vshrl.u32 %v1586, 7
      %v1588 = vsub.s32 %v1585, %v1587
      %v1589 = vrot.slane %v1575, %v1588
      %v1590 = vcombine.high %v1582, %v1582
      %v1591 = vcombine.high %v1589, %v1589
      %v1592 = vcombine.high %v1156, %v1156
      %v1594 = vunpack.c.l.s4 1983009808
      %v1595 = vunpack.c.0.s8 %v1594
      %v1596 = vlaneseq
      %v1597 = vshrl.u32 %v1596, 7
      %v1598 = vsub.s32 %v1595, %v1597
      %v1599 = vrot.slane %v1156, %v1598
      %v1601 = vunpack.c.l.s4 1983009808
      %v1602 = vunpack.c.0.s8 %v1601
      %v1603 = vlaneseq
      %v1604 = vshrl.u32 %v1603, 7
      %v1605 = vsub.s32 %v1602, %v1604
      %v1606 = vrot.slane %v1592, %v1605
      %v1607 = vcombine.high %v1599, %v1599
      %v1608 = vcombine.high %v1606, %v1606
      %v1609 = vcombine.high %v1157, %v1157
      %v1611 = vunpack.c.l.s4 1983009808
      %v1612 = vunpack.c.0.s8 %v1611
      %v1613 = vlaneseq
      %v1614 = vshrl.u32 %v1613, 7
      %v1615 = vsub.s32 %v1612, %v1614
      %v1616 = vrot.slane %v1157, %v1615
      %v1618 = vunpack.c.l.s4 1983009808
      %v1619 = vunpack.c.0.s8 %v1618
      %v1620 = vlaneseq
      %v1621 = vshrl.u32 %v1620, 7
      %v1622 = vsub.s32 %v1619, %v1621
      %v1623 = vrot.slane %v1609, %v1622
      %v1624 = vcombine.high %v1616, %v1616
      %v1625 = vcombine.high %v1623, %v1623
      %v1626 = vcombine.high %v1158, %v1158
      %v1628 = vunpack.c.l.s4 1983009808
      %v1629 = vunpack.c.0.s8 %v1628
      %v1630 = vlaneseq
      %v1631 = vshrl.u32 %v1630, 7
      %v1632 = vsub.s32 %v1629, %v1631
      %v1633 = vrot.slane %v1158, %v1632
      %v1635 = vunpack.c.l.s4 1983009808
      %v1636 = vunpack.c.0.s8 %v1635
      %v1637 = vlaneseq
      %v1638 = vshrl.u32 %v1637, 7
      %v1639 = vsub.s32 %v1636, %v1638
      %v1640 = vrot.slane %v1626, %v1639
      %v1641 = vcombine.high %v1633, %v1633
      %v1642 = vcombine.high %v1640, %v1640
      %v1643 = vcombine.high %v1159, %v1159
      %v1645 = vunpack.c.l.s4 1983009808
      %v1646 = vunpack.c.0.s8 %v1645
      %v1647 = vlaneseq
      %v1648 = vshrl.u32 %v1647, 7
      %v1649 = vsub.s32 %v1646, %v1648
      %v1650 = vrot.slane %v1159, %v1649
      %v1652 = vunpack.c.l.s4 1983009808
      %v1653 = vunpack.c.0.s8 %v1652
      %v1654 = vlaneseq
      %v1655 = vshrl.u32 %v1654, 7
      %v1656 = vsub.s32 %v1653, %v1655
      %v1657 = vrot.slane %v1643, %v1656
      %v1658 = vcombine.high %v1650, %v1650
      %v1659 = vcombine.high %v1657, %v1657
      %v1660 = vcombine.high %v1160, %v1160
      %v1662 = vunpack.c.l.s4 1983009808
      %v1663 = vunpack.c.0.s8 %v1662
      %v1664 = vlaneseq
      %v1665 = vshrl.u32 %v1664, 7
      %v1666 = vsub.s32 %v1663, %v1665
      %v1667 = vrot.slane %v1160, %v1666
      %v1669 = vunpack.c.l.s4 1983009808
      %v1670 = vunpack.c.0.s8 %v1669
      %v1671 = vlaneseq
      %v1672 = vshrl.u32 %v1671, 7
      %v1673 = vsub.s32 %v1670, %v1672
      %v1674 = vrot.slane %v1660, %v1673
      %v1675 = vcombine.high %v1667, %v1667
      %v1676 = vcombine.high %v1674, %v1674
      %v1677 = vcombine.high %v1161, %v1161
      %v1679 = vunpack.c.l.s4 1983009808
      %v1680 = vunpack.c.0.s8 %v1679
      %v1681 = vlaneseq
      %v1682 = vshrl.u32 %v1681, 7
      %v1683 = vsub.s32 %v1680, %v1682
      %v1684 = vrot.slane %v1161, %v1683
      %v1686 = vunpack.c.l.s4 1983009808
      %v1687 = vunpack.c.0.s8 %v1686
      %v1688 = vlaneseq
      %v1689 = vshrl.u32 %v1688, 7
      %v1690 = vsub.s32 %v1687, %v1689
      %v1691 = vrot.slane %v1677, %v1690
      %v1692 = vcombine.high %v1684, %v1684
      %v1693 = vcombine.high %v1691, %v1691
      %v1694 = vcombine.high %v1162, %v1162
      %v1696 = vunpack.c.l.s4 1983009808
      %v1697 = vunpack.c.0.s8 %v1696
      %v1698 = vlaneseq
      %v1699 = vshrl.u32 %v1698, 7
      %v1700 = vsub.s32 %v1697, %v1699
      %v1701 = vrot.slane %v1162, %v1700
      %v1703 = vunpack.c.l.s4 1983009808
      %v1704 = vunpack.c.0.s8 %v1703
      %v1705 = vlaneseq
      %v1706 = vshrl.u32 %v1705, 7
      %v1707 = vsub.s32 %v1704, %v1706
      %v1708 = vrot.slane %v1694, %v1707
      %v1709 = vcombine.high %v1701, %v1701
      %v1710 = vcombine.high %v1708, %v1708
      %v1711 = vcombine.high %v1163, %v1163
      %v1713 = vunpack.c.l.s4 1983009808
      %v1714 = vunpack.c.0.s8 %v1713
      %v1715 = vlaneseq
      %v1716 = vshrl.u32 %v1715, 7
      %v1717 = vsub.s32 %v1714, %v1716
      %v1718 = vrot.slane %v1163, %v1717
      %v1720 = vunpack.c.l.s4 1983009808
      %v1721 = vunpack.c.0.s8 %v1720
      %v1722 = vlaneseq
      %v1723 = vshrl.u32 %v1722, 7
      %v1724 = vsub.s32 %v1721, %v1723
      %v1725 = vrot.slane %v1711, %v1724
      %v1726 = vcombine.high %v1718, %v1718
      %v1727 = vcombine.high %v1725, %v1725
      %v1728 = vcombine.high %v1164, %v1164
      %v1730 = vunpack.c.l.s4 1983009808
      %v1731 = vunpack.c.0.s8 %v1730
      %v1732 = vlaneseq
      %v1733 = vshrl.u32 %v1732, 7
      %v1734 = vsub.s32 %v1731, %v1733
      %v1735 = vrot.slane %v1164, %v1734
      %v1737 = vunpack.c.l.s4 1983009808
      %v1738 = vunpack.c.0.s8 %v1737
      %v1739 = vlaneseq
      %v1740 = vshrl.u32 %v1739, 7
      %v1741 = vsub.s32 %v1738, %v1740
      %v1742 = vrot.slane %v1728, %v1741
      %v1743 = vcombine.high %v1735, %v1735
      %v1744 = vcombine.high %v1742, %v1742
      %v1745 = vcombine.high %v1165, %v1165
      %v1747 = vunpack.c.l.s4 1983009808
      %v1748 = vunpack.c.0.s8 %v1747
      %v1749 = vlaneseq
      %v1750 = vshrl.u32 %v1749, 7
      %v1751 = vsub.s32 %v1748, %v1750
      %v1752 = vrot.slane %v1165, %v1751
      %v1754 = vunpack.c.l.s4 1983009808
      %v1755 = vunpack.c.0.s8 %v1754
      %v1756 = vlaneseq
      %v1757 = vshrl.u32 %v1756, 7
      %v1758 = vsub.s32 %v1755, %v1757
      %v1759 = vrot.slane %v1745, %v1758
      %v1760 = vcombine.high %v1752, %v1752
      %v1761 = vcombine.high %v1759, %v1759
      %v1762 = vcombine.high %v1166, %v1166
      %v1764 = vunpack.c.l.s4 1983009808
      %v1765 = vunpack.c.0.s8 %v1764
      %v1766 = vlaneseq
      %v1767 = vshrl.u32 %v1766, 7
      %v1768 = vsub.s32 %v1765, %v1767
      %v1769 = vrot.slane %v1166, %v1768
      %v1771 = vunpack.c.l.s4 1983009808
      %v1772 = vunpack.c.0.s8 %v1771
      %v1773 = vlaneseq
      %v1774 = vshrl.u32 %v1773, 7
      %v1775 = vsub.s32 %v1772, %v1774
      %v1776 = vrot.slane %v1762, %v1775
      %v1777 = vcombine.high %v1769, %v1769
      %v1778 = vcombine.high %v1776, %v1776
      %v1779 = vcombine.high %v1167, %v1167
      %v1781 = vunpack.c.l.s4 1983009808
      %v1782 = vunpack.c.0.s8 %v1781
      %v1783 = vlaneseq
      %v1784 = vshrl.u32 %v1783, 7
      %v1785 = vsub.s32 %v1782, %v1784
      %v1786 = vrot.slane %v1167, %v1785
      %v1788 = vunpack.c.l.s4 1983009808
      %v1789 = vunpack.c.0.s8 %v1788
      %v1790 = vlaneseq
      %v1791 = vshrl.u32 %v1790, 7
      %v1792 = vsub.s32 %v1789, %v1791
      %v1793 = vrot.slane %v1779, %v1792
      %v1794 = vcombine.high %v1786, %v1786
      %v1795 = vcombine.high %v1793, %v1793
      %v1796 = vcombine.high %v1168, %v1168
      %v1798 = vunpack.c.l.s4 1983009808
      %v1799 = vunpack.c.0.s8 %v1798
      %v1800 = vlaneseq
      %v1801 = vshrl.u32 %v1800, 7
      %v1802 = vsub.s32 %v1799, %v1801
      %v1803 = vrot.slane %v1168, %v1802
      %v1805 = vunpack.c.l.s4 1983009808
      %v1806 = vunpack.c.0.s8 %v1805
      %v1807 = vlaneseq
      %v1808 = vshrl.u32 %v1807, 7
      %v1809 = vsub.s32 %v1806, %v1808
      %v1810 = vrot.slane %v1796, %v1809
      %v1811 = vcombine.high %v1803, %v1803
      %v1812 = vcombine.high %v1810, %v1810
      %v1813 = vcombine.high %v1169, %v1169
      %v1815 = vunpack.c.l.s4 1983009808
      %v1816 = vunpack.c.0.s8 %v1815
      %v1817 = vlaneseq
      %v1818 = vshrl.u32 %v1817, 7
      %v1819 = vsub.s32 %v1816, %v1818
      %v1820 = vrot.slane %v1169, %v1819
      %v1822 = vunpack.c.l.s4 1983009808
      %v1823 = vunpack.c.0.s8 %v1822
      %v1824 = vlaneseq
      %v1825 = vshrl.u32 %v1824, 7
      %v1826 = vsub.s32 %v1823, %v1825
      %v1827 = vrot.slane %v1813, %v1826
      %v1828 = vcombine.high %v1820, %v1820
      %v1829 = vcombine.high %v1827, %v1827
      %v1830 = vcombine.high %v1170, %v1170
      %v1832 = vunpack.c.l.s4 1983009808
      %v1833 = vunpack.c.0.s8 %v1832
      %v1834 = vlaneseq
      %v1835 = vshrl.u32 %v1834, 7
      %v1836 = vsub.s32 %v1833, %v1835
      %v1837 = vrot.slane %v1170, %v1836
      %v1839 = vunpack.c.l.s4 1983009808
      %v1840 = vunpack.c.0.s8 %v1839
      %v1841 = vlaneseq
      %v1842 = vshrl.u32 %v1841, 7
      %v1843 = vsub.s32 %v1840, %v1842
      %v1844 = vrot.slane %v1830, %v1843
      %v1845 = vcombine.high %v1837, %v1837
      %v1846 = vcombine.high %v1844, %v1844
      %v1847 = vcombine.high %v1171, %v1171
      %v1849 = vunpack.c.l.s4 1983009808
      %v1850 = vunpack.c.0.s8 %v1849
      %v1851 = vlaneseq
      %v1852 = vshrl.u32 %v1851, 7
      %v1853 = vsub.s32 %v1850, %v1852
      %v1854 = vrot.slane %v1171, %v1853
      %v1856 = vunpack.c.l.s4 1983009808
      %v1857 = vunpack.c.0.s8 %v1856
      %v1858 = vlaneseq
      %v1859 = vshrl.u32 %v1858, 7
      %v1860 = vsub.s32 %v1857, %v1859
      %v1861 = vrot.slane %v1847, %v1860
      %v1862 = vcombine.high %v1854, %v1854
      %v1863 = vcombine.high %v1861, %v1861
      %v1864 = vcombine.high %v1172, %v1172
      %v1866 = vunpack.c.l.s4 1983009808
      %v1867 = vunpack.c.0.s8 %v1866
      %v1868 = vlaneseq
      %v1869 = vshrl.u32 %v1868, 7
      %v1870 = vsub.s32 %v1867, %v1869
      %v1871 = vrot.slane %v1172, %v1870
      %v1873 = vunpack.c.l.s4 1983009808
      %v1874 = vunpack.c.0.s8 %v1873
      %v1875 = vlaneseq
      %v1876 = vshrl.u32 %v1875, 7
      %v1877 = vsub.s32 %v1874, %v1876
      %v1878 = vrot.slane %v1864, %v1877
      %v1879 = vcombine.high %v1871, %v1871
      %v1880 = vcombine.high %v1878, %v1878
      %v1881 = vcombine.high %v1173, %v1173
      %v1883 = vunpack.c.l.s4 1983009808
      %v1884 = vunpack.c.0.s8 %v1883
      %v1885 = vlaneseq
      %v1886 = vshrl.u32 %v1885, 7
      %v1887 = vsub.s32 %v1884, %v1886
      %v1888 = vrot.slane %v1173, %v1887
      %v1890 = vunpack.c.l.s4 1983009808
      %v1891 = vunpack.c.0.s8 %v1890
      %v1892 = vlaneseq
      %v1893 = vshrl.u32 %v1892, 7
      %v1894 = vsub.s32 %v1891, %v1893
      %v1895 = vrot.slane %v1881, %v1894
      %v1896 = vcombine.high %v1888, %v1888
      %v1897 = vcombine.high %v1895, %v1895
      %v1898 = vcombine.high %v1174, %v1174
      %v1900 = vunpack.c.l.s4 1983009808
      %v1901 = vunpack.c.0.s8 %v1900
      %v1902 = vlaneseq
      %v1903 = vshrl.u32 %v1902, 7
      %v1904 = vsub.s32 %v1901, %v1903
      %v1905 = vrot.slane %v1174, %v1904
      %v1907 = vunpack.c.l.s4 1983009808
      %v1908 = vunpack.c.0.s8 %v1907
      %v1909 = vlaneseq
      %v1910 = vshrl.u32 %v1909, 7
      %v1911 = vsub.s32 %v1908, %v1910
      %v1912 = vrot.slane %v1898, %v1911
      %v1913 = vcombine.high %v1905, %v1905
      %v1914 = vcombine.high %v1912, %v1912
      %v1915 = vcombine.high %v1175, %v1175
      %v1917 = vunpack.c.l.s4 1983009808
      %v1918 = vunpack.c.0.s8 %v1917
      %v1919 = vlaneseq
      %v1920 = vshrl.u32 %v1919, 7
      %v1921 = vsub.s32 %v1918, %v1920
      %v1922 = vrot.slane %v1175, %v1921
      %v1924 = vunpack.c.l.s4 1983009808
      %v1925 = vunpack.c.0.s8 %v1924
      %v1926 = vlaneseq
      %v1927 = vshrl.u32 %v1926, 7
      %v1928 = vsub.s32 %v1925, %v1927
      %v1929 = vrot.slane %v1915, %v1928
      %v1930 = vcombine.high %v1922, %v1922
      %v1931 = vcombine.high %v1929, %v1929
      %v1932 = vcombine.high %v1176, %v1176
      %v1934 = vunpack.c.l.s4 1983009808
      %v1935 = vunpack.c.0.s8 %v1934
      %v1936 = vlaneseq
      %v1937 = vshrl.u32 %v1936, 7
      %v1938 = vsub.s32 %v1935, %v1937
      %v1939 = vrot.slane %v1176, %v1938
      %v1941 = vunpack.c.l.s4 1983009808
      %v1942 = vunpack.c.0.s8 %v1941
      %v1943 = vlaneseq
      %v1944 = vshrl.u32 %v1943, 7
      %v1945 = vsub.s32 %v1942, %v1944
      %v1946 = vrot.slane %v1932, %v1945
      %v1947 = vcombine.high %v1939, %v1939
      %v1948 = vcombine.high %v1946, %v1946
      %v1949 = vcombine.high %v1177, %v1177
      %v1951 = vunpack.c.l.s4 1983009808
      %v1952 = vunpack.c.0.s8 %v1951
      %v1953 = vlaneseq
      %v1954 = vshrl.u32 %v1953, 7
      %v1955 = vsub.s32 %v1952, %v1954
      %v1956 = vrot.slane %v1177, %v1955
      %v1958 = vunpack.c.l.s4 1983009808
      %v1959 = vunpack.c.0.s8 %v1958
      %v1960 = vlaneseq
      %v1961 = vshrl.u32 %v1960, 7
      %v1962 = vsub.s32 %v1959, %v1961
      %v1963 = vrot.slane %v1949, %v1962
      %v1964 = vcombine.high %v1956, %v1956
      %v1965 = vcombine.high %v1963, %v1963
      %v1966 = vcombine.high %v1178, %v1178
      %v1968 = vunpack.c.l.s4 1983009808
      %v1969 = vunpack.c.0.s8 %v1968
      %v1970 = vlaneseq
      %v1971 = vshrl.u32 %v1970, 7
      %v1972 = vsub.s32 %v1969, %v1971
      %v1973 = vrot.slane %v1178, %v1972
      %v1975 = vunpack.c.l.s4 1983009808
      %v1976 = vunpack.c.0.s8 %v1975
      %v1977 = vlaneseq
      %v1978 = vshrl.u32 %v1977, 7
      %v1979 = vsub.s32 %v1976, %v1978
      %v1980 = vrot.slane %v1966, %v1979
      %v1981 = vcombine.high %v1973, %v1973
      %v1982 = vcombine.high %v1980, %v1980
      %v1983 = vcombine.high %v1179, %v1179
      %v1985 = vunpack.c.l.s4 1983009808
      %v1986 = vunpack.c.0.s8 %v1985
      %v1987 = vlaneseq
      %v1988 = vshrl.u32 %v1987, 7
      %v1989 = vsub.s32 %v1986, %v1988
      %v1990 = vrot.slane %v1179, %v1989
      %v1992 = vunpack.c.l.s4 1983009808
      %v1993 = vunpack.c.0.s8 %v1992
      %v1994 = vlaneseq
      %v1995 = vshrl.u32 %v1994, 7
      %v1996 = vsub.s32 %v1993, %v1995
      %v1997 = vrot.slane %v1983, %v1996
      %v1998 = vcombine.high %v1990, %v1990
      %v1999 = vcombine.high %v1997, %v1997
      %v2000 = vcombine.high %v1180, %v1180
      %v2002 = vunpack.c.l.s4 1983009808
      %v2003 = vunpack.c.0.s8 %v2002
      %v2004 = vlaneseq
      %v2005 = vshrl.u32 %v2004, 7
      %v2006 = vsub.s32 %v2003, %v2005
      %v2007 = vrot.slane %v1180, %v2006
      %v2009 = vunpack.c.l.s4 1983009808
      %v2010 = vunpack.c.0.s8 %v2009
      %v2011 = vlaneseq
      %v2012 = vshrl.u32 %v2011, 7
      %v2013 = vsub.s32 %v2010, %v2012
      %v2014 = vrot.slane %v2000, %v2013
      %v2015 = vcombine.high %v2007, %v2007
      %v2016 = vcombine.high %v2014, %v2014
      %v2017 = vcombine.high %v1181, %v1181
      %v2019 = vunpack.c.l.s4 1983009808
      %v2020 = vunpack.c.0.s8 %v2019
      %v2021 = vlaneseq
      %v2022 = vshrl.u32 %v2021, 7
      %v2023 = vsub.s32 %v2020, %v2022
      %v2024 = vrot.slane %v1181, %v2023
      %v2026 = vunpack.c.l.s4 1983009808
      %v2027 = vunpack.c.0.s8 %v2026
      %v2028 = vlaneseq
      %v2029 = vshrl.u32 %v2028, 7
      %v2030 = vsub.s32 %v2027, %v2029
      %v2031 = vrot.slane %v2017, %v2030
      %v2032 = vcombine.high %v2024, %v2024
      %v2033 = vcombine.high %v2031, %v2031
      %v2034 = vcombine.high %v1182, %v1182
      %v2036 = vunpack.c.l.s4 1983009808
      %v2037 = vunpack.c.0.s8 %v2036
      %v2038 = vlaneseq
      %v2039 = vshrl.u32 %v2038, 7
      %v2040 = vsub.s32 %v2037, %v2039
      %v2041 = vrot.slane %v1182, %v2040
      %v2043 = vunpack.c.l.s4 1983009808
      %v2044 = vunpack.c.0.s8 %v2043
      %v2045 = vlaneseq
      %v2046 = vshrl.u32 %v2045, 7
      %v2047 = vsub.s32 %v2044, %v2046
      %v2048 = vrot.slane %v2034, %v2047
      %v2049 = vcombine.high %v2041, %v2041
      %v2050 = vcombine.high %v2048, %v2048
      %v2051 = vcombine.high %v1183, %v1183
      %v2053 = vunpack.c.l.s4 1983009808
      %v2054 = vunpack.c.0.s8 %v2053
      %v2055 = vlaneseq
      %v2056 = vshrl.u32 %v2055, 7
      %v2057 = vsub.s32 %v2054, %v2056
      %v2058 = vrot.slane %v1183, %v2057
      %v2060 = vunpack.c.l.s4 1983009808
      %v2061 = vunpack.c.0.s8 %v2060
      %v2062 = vlaneseq
      %v2063 = vshrl.u32 %v2062, 7
      %v2064 = vsub.s32 %v2061, %v2063
      %v2065 = vrot.slane %v2051, %v2064
      %v2066 = vcombine.high %v2058, %v2058
      %v2067 = vcombine.high %v2065, %v2065
      %v2068 = vcombine.high %v1184, %v1184
      %v2070 = vunpack.c.l.s4 1983009808
      %v2071 = vunpack.c.0.s8 %v2070
      %v2072 = vlaneseq
      %v2073 = vshrl.u32 %v2072, 7
      %v2074 = vsub.s32 %v2071, %v2073
      %v2075 = vrot.slane %v1184, %v2074
      %v2077 = vunpack.c.l.s4 1983009808
      %v2078 = vunpack.c.0.s8 %v2077
      %v2079 = vlaneseq
      %v2080 = vshrl.u32 %v2079, 7
      %v2081 = vsub.s32 %v2078, %v2080
      %v2082 = vrot.slane %v2068, %v2081
      %v2083 = vcombine.high %v2075, %v2075
      %v2084 = vcombine.high %v2082, %v2082
      %v2085 = vcombine.high %v1185, %v1185
      %v2087 = vunpack.c.l.s4 1983009808
      %v2088 = vunpack.c.0.s8 %v2087
      %v2089 = vlaneseq
      %v2090 = vshrl.u32 %v2089, 7
      %v2091 = vsub.s32 %v2088, %v2090
      %v2092 = vrot.slane %v1185, %v2091
      %v2094 = vunpack.c.l.s4 1983009808
      %v2095 = vunpack.c.0.s8 %v2094
      %v2096 = vlaneseq
      %v2097 = vshrl.u32 %v2096, 7
      %v2098 = vsub.s32 %v2095, %v2097
      %v2099 = vrot.slane %v2085, %v2098
      %v2100 = vcombine.high %v2092, %v2092
      %v2101 = vcombine.high %v2099, %v2099
      %v2102 = vcombine.high %v1186, %v1186
      %v2104 = vunpack.c.l.s4 1983009808
      %v2105 = vunpack.c.0.s8 %v2104
      %v2106 = vlaneseq
      %v2107 = vshrl.u32 %v2106, 7
      %v2108 = vsub.s32 %v2105, %v2107
      %v2109 = vrot.slane %v1186, %v2108
      %v2111 = vunpack.c.l.s4 1983009808
      %v2112 = vunpack.c.0.s8 %v2111
      %v2113 = vlaneseq
      %v2114 = vshrl.u32 %v2113, 7
      %v2115 = vsub.s32 %v2112, %v2114
      %v2116 = vrot.slane %v2102, %v2115
      %v2117 = vcombine.high %v2109, %v2109
      %v2118 = vcombine.high %v2116, %v2116
      %v2119 = vcombine.high %v1187, %v1187
      %v2121 = vunpack.c.l.s4 1983009808
      %v2122 = vunpack.c.0.s8 %v2121
      %v2123 = vlaneseq
      %v2124 = vshrl.u32 %v2123, 7
      %v2125 = vsub.s32 %v2122, %v2124
      %v2126 = vrot.slane %v1187, %v2125
      %v2128 = vunpack.c.l.s4 1983009808
      %v2129 = vunpack.c.0.s8 %v2128
      %v2130 = vlaneseq
      %v2131 = vshrl.u32 %v2130, 7
      %v2132 = vsub.s32 %v2129, %v2131
      %v2133 = vrot.slane %v2119, %v2132
      %v2134 = vcombine.high %v2126, %v2126
      %v2135 = vcombine.high %v2133, %v2133
      %v2136 = vcombine.high %v1188, %v1188
      %v2138 = vunpack.c.l.s4 1983009808
      %v2139 = vunpack.c.0.s8 %v2138
      %v2140 = vlaneseq
      %v2141 = vshrl.u32 %v2140, 7
      %v2142 = vsub.s32 %v2139, %v2141
      %v2143 = vrot.slane %v1188, %v2142
      %v2145 = vunpack.c.l.s4 1983009808
      %v2146 = vunpack.c.0.s8 %v2145
      %v2147 = vlaneseq
      %v2148 = vshrl.u32 %v2147, 7
      %v2149 = vsub.s32 %v2146, %v2148
      %v2150 = vrot.slane %v2136, %v2149
      %v2151 = vcombine.high %v2143, %v2143
      %v2152 = vcombine.high %v2150, %v2150
      %v2153 = vcombine.high %v1189, %v1189
      %v2155 = vunpack.c.l.s4 1983009808
      %v2156 = vunpack.c.0.s8 %v2155
      %v2157 = vlaneseq
      %v2158 = vshrl.u32 %v2157, 7
      %v2159 = vsub.s32 %v2156, %v2158
      %v2160 = vrot.slane %v1189, %v2159
      %v2162 = vunpack.c.l.s4 1983009808
      %v2163 = vunpack.c.0.s8 %v2162
      %v2164 = vlaneseq
      %v2165 = vshrl.u32 %v2164, 7
      %v2166 = vsub.s32 %v2163, %v2165
      %v2167 = vrot.slane %v2153, %v2166
      %v2168 = vcombine.high %v2160, %v2160
      %v2169 = vcombine.high %v2167, %v2167
      %v2170 = vcombine.high %v1190, %v1190
      %v2172 = vunpack.c.l.s4 1983009808
      %v2173 = vunpack.c.0.s8 %v2172
      %v2174 = vlaneseq
      %v2175 = vshrl.u32 %v2174, 7
      %v2176 = vsub.s32 %v2173, %v2175
      %v2177 = vrot.slane %v1190, %v2176
      %v2179 = vunpack.c.l.s4 1983009808
      %v2180 = vunpack.c.0.s8 %v2179
      %v2181 = vlaneseq
      %v2182 = vshrl.u32 %v2181, 7
      %v2183 = vsub.s32 %v2180, %v2182
      %v2184 = vrot.slane %v2170, %v2183
      %v2185 = vcombine.high %v2177, %v2177
      %v2186 = vcombine.high %v2184, %v2184
      %v2187 = vcombine.high %v1191, %v1191
      %v2189 = vunpack.c.l.s4 1983009808
      %v2190 = vunpack.c.0.s8 %v2189
      %v2191 = vlaneseq
      %v2192 = vshrl.u32 %v2191, 7
      %v2193 = vsub.s32 %v2190, %v2192
      %v2194 = vrot.slane %v1191, %v2193
      %v2196 = vunpack.c.l.s4 1983009808
      %v2197 = vunpack.c.0.s8 %v2196
      %v2198 = vlaneseq
      %v2199 = vshrl.u32 %v2198, 7
      %v2200 = vsub.s32 %v2197, %v2199
      %v2201 = vrot.slane %v2187, %v2200
      %v2202 = vcombine.high %v2194, %v2194
      %v2203 = vcombine.high %v2201, %v2201
      %v2204 = vcombine.high %v1192, %v1192
      %v2206 = vunpack.c.l.s4 1983009808
      %v2207 = vunpack.c.0.s8 %v2206
      %v2208 = vlaneseq
      %v2209 = vshrl.u32 %v2208, 7
      %v2210 = vsub.s32 %v2207, %v2209
      %v2211 = vrot.slane %v1192, %v2210
      %v2213 = vunpack.c.l.s4 1983009808
      %v2214 = vunpack.c.0.s8 %v2213
      %v2215 = vlaneseq
      %v2216 = vshrl.u32 %v2215, 7
      %v2217 = vsub.s32 %v2214, %v2216
      %v2218 = vrot.slane %v2204, %v2217
      %v2219 = vcombine.high %v2211, %v2211
      %v2220 = vcombine.high %v2218, %v2218
      %v2221 = vcombine.high %v1193, %v1193
      %v2223 = vunpack.c.l.s4 1983009808
      %v2224 = vunpack.c.0.s8 %v2223
      %v2225 = vlaneseq
      %v2226 = vshrl.u32 %v2225, 7
      %v2227 = vsub.s32 %v2224, %v2226
      %v2228 = vrot.slane %v1193, %v2227
      %v2230 = vunpack.c.l.s4 1983009808
      %v2231 = vunpack.c.0.s8 %v2230
      %v2232 = vlaneseq
      %v2233 = vshrl.u32 %v2232, 7
      %v2234 = vsub.s32 %v2231, %v2233
      %v2235 = vrot.slane %v2221, %v2234
      %v2236 = vcombine.high %v2228, %v2228
      %v2237 = vcombine.high %v2235, %v2235
      %v2238 = vcombine.high %v1194, %v1194
      %v2240 = vunpack.c.l.s4 1983009808
      %v2241 = vunpack.c.0.s8 %v2240
      %v2242 = vlaneseq
      %v2243 = vshrl.u32 %v2242, 7
      %v2244 = vsub.s32 %v2241, %v2243
      %v2245 = vrot.slane %v1194, %v2244
      %v2247 = vunpack.c.l.s4 1983009808
      %v2248 = vunpack.c.0.s8 %v2247
      %v2249 = vlaneseq
      %v2250 = vshrl.u32 %v2249, 7
      %v2251 = vsub.s32 %v2248, %v2250
      %v2252 = vrot.slane %v2238, %v2251
      %v2253 = vcombine.high %v2245, %v2245
      %v2254 = vcombine.high %v2252, %v2252
      %v2255 = vcombine.high %v1195, %v1195
      %v2257 = vunpack.c.l.s4 1983009808
      %v2258 = vunpack.c.0.s8 %v2257
      %v2259 = vlaneseq
      %v2260 = vshrl.u32 %v2259, 7
      %v2261 = vsub.s32 %v2258, %v2260
      %v2262 = vrot.slane %v1195, %v2261
      %v2264 = vunpack.c.l.s4 1983009808
      %v2265 = vunpack.c.0.s8 %v2264
      %v2266 = vlaneseq
      %v2267 = vshrl.u32 %v2266, 7
      %v2268 = vsub.s32 %v2265, %v2267
      %v2269 = vrot.slane %v2255, %v2268
      %v2270 = vcombine.high %v2262, %v2262
      %v2271 = vcombine.high %v2269, %v2269
      %v2272 = vcombine.high %v1196, %v1196
      %v2274 = vunpack.c.l.s4 1983009808
      %v2275 = vunpack.c.0.s8 %v2274
      %v2276 = vlaneseq
      %v2277 = vshrl.u32 %v2276, 7
      %v2278 = vsub.s32 %v2275, %v2277
      %v2279 = vrot.slane %v1196, %v2278
      %v2281 = vunpack.c.l.s4 1983009808
      %v2282 = vunpack.c.0.s8 %v2281
      %v2283 = vlaneseq
      %v2284 = vshrl.u32 %v2283, 7
      %v2285 = vsub.s32 %v2282, %v2284
      %v2286 = vrot.slane %v2272, %v2285
      %v2287 = vcombine.high %v2279, %v2279
      %v2288 = vcombine.high %v2286, %v2286
      %v2289 = vcombine.high %v1197, %v1197
      %v2291 = vunpack.c.l.s4 1983009808
      %v2292 = vunpack.c.0.s8 %v2291
      %v2293 = vlaneseq
      %v2294 = vshrl.u32 %v2293, 7
      %v2295 = vsub.s32 %v2292, %v2294
      %v2296 = vrot.slane %v1197, %v2295
      %v2298 = vunpack.c.l.s4 1983009808
      %v2299 = vunpack.c.0.s8 %v2298
      %v2300 = vlaneseq
      %v2301 = vshrl.u32 %v2300, 7
      %v2302 = vsub.s32 %v2299, %v2301
      %v2303 = vrot.slane %v2289, %v2302
      %v2304 = vcombine.high %v2296, %v2296
      %v2305 = vcombine.high %v2303, %v2303
      %v2306 = vcombine.high %v1198, %v1198
      %v2308 = vunpack.c.l.s4 1983009808
      %v2309 = vunpack.c.0.s8 %v2308
      %v2310 = vlaneseq
      %v2311 = vshrl.u32 %v2310, 7
      %v2312 = vsub.s32 %v2309, %v2311
      %v2313 = vrot.slane %v1198, %v2312
      %v2315 = vunpack.c.l.s4 1983009808
      %v2316 = vunpack.c.0.s8 %v2315
      %v2317 = vlaneseq
      %v2318 = vshrl.u32 %v2317, 7
      %v2319 = vsub.s32 %v2316, %v2318
      %v2320 = vrot.slane %v2306, %v2319
      %v2321 = vcombine.high %v2313, %v2313
      %v2322 = vcombine.high %v2320, %v2320
      %v2323 = vcombine.high %v1199, %v1199
      %v2325 = vunpack.c.l.s4 1983009808
      %v2326 = vunpack.c.0.s8 %v2325
      %v2327 = vlaneseq
      %v2328 = vshrl.u32 %v2327, 7
      %v2329 = vsub.s32 %v2326, %v2328
      %v2330 = vrot.slane %v1199, %v2329
      %v2332 = vunpack.c.l.s4 1983009808
      %v2333 = vunpack.c.0.s8 %v2332
      %v2334 = vlaneseq
      %v2335 = vshrl.u32 %v2334, 7
      %v2336 = vsub.s32 %v2333, %v2335
      %v2337 = vrot.slane %v2323, %v2336
      %v2338 = vcombine.high %v2330, %v2330
      %v2339 = vcombine.high %v2337, %v2337
      %v2340 = vcombine.high %v1200, %v1200
      %v2342 = vunpack.c.l.s4 1983009808
      %v2343 = vunpack.c.0.s8 %v2342
      %v2344 = vlaneseq
      %v2345 = vshrl.u32 %v2344, 7
      %v2346 = vsub.s32 %v2343, %v2345
      %v2347 = vrot.slane %v1200, %v2346
      %v2349 = vunpack.c.l.s4 1983009808
      %v2350 = vunpack.c.0.s8 %v2349
      %v2351 = vlaneseq
      %v2352 = vshrl.u32 %v2351, 7
      %v2353 = vsub.s32 %v2350, %v2352
      %v2354 = vrot.slane %v2340, %v2353
      %v2355 = vcombine.high %v2347, %v2347
      %v2356 = vcombine.high %v2354, %v2354
      %v2357 = vcombine.high %v1201, %v1201
      %v2359 = vunpack.c.l.s4 1983009808
      %v2360 = vunpack.c.0.s8 %v2359
      %v2361 = vlaneseq
      %v2362 = vshrl.u32 %v2361, 7
      %v2363 = vsub.s32 %v2360, %v2362
      %v2364 = vrot.slane %v1201, %v2363
      %v2366 = vunpack.c.l.s4 1983009808
      %v2367 = vunpack.c.0.s8 %v2366
      %v2368 = vlaneseq
      %v2369 = vshrl.u32 %v2368, 7
      %v2370 = vsub.s32 %v2367, %v2369
      %v2371 = vrot.slane %v2357, %v2370
      %v2372 = vcombine.high %v2364, %v2364
      %v2373 = vcombine.high %v2371, %v2371
      %v2374 = vcombine.high %v1202, %v1202
      %v2376 = vunpack.c.l.s4 1983009808
      %v2377 = vunpack.c.0.s8 %v2376
      %v2378 = vlaneseq
      %v2379 = vshrl.u32 %v2378, 7
      %v2380 = vsub.s32 %v2377, %v2379
      %v2381 = vrot.slane %v1202, %v2380
      %v2383 = vunpack.c.l.s4 1983009808
      %v2384 = vunpack.c.0.s8 %v2383
      %v2385 = vlaneseq
      %v2386 = vshrl.u32 %v2385, 7
      %v2387 = vsub.s32 %v2384, %v2386
      %v2388 = vrot.slane %v2374, %v2387
      %v2389 = vcombine.high %v2381, %v2381
      %v2390 = vcombine.high %v2388, %v2388
      %v2391 = vcombine.high %v1203, %v1203
      %v2393 = vunpack.c.l.s4 1983009808
      %v2394 = vunpack.c.0.s8 %v2393
      %v2395 = vlaneseq
      %v2396 = vshrl.u32 %v2395, 7
      %v2397 = vsub.s32 %v2394, %v2396
      %v2398 = vrot.slane %v1203, %v2397
      %v2400 = vunpack.c.l.s4 1983009808
      %v2401 = vunpack.c.0.s8 %v2400
      %v2402 = vlaneseq
      %v2403 = vshrl.u32 %v2402, 7
      %v2404 = vsub.s32 %v2401, %v2403
      %v2405 = vrot.slane %v2391, %v2404
      %v2406 = vcombine.high %v2398, %v2398
      %v2407 = vcombine.high %v2405, %v2405
      %v2408 = vcombine.high %v1204, %v1204
      %v2410 = vunpack.c.l.s4 1983009808
      %v2411 = vunpack.c.0.s8 %v2410
      %v2412 = vlaneseq
      %v2413 = vshrl.u32 %v2412, 7
      %v2414 = vsub.s32 %v2411, %v2413
      %v2415 = vrot.slane %v1204, %v2414
      %v2417 = vunpack.c.l.s4 1983009808
      %v2418 = vunpack.c.0.s8 %v2417
      %v2419 = vlaneseq
      %v2420 = vshrl.u32 %v2419, 7
      %v2421 = vsub.s32 %v2418, %v2420
      %v2422 = vrot.slane %v2408, %v2421
      %v2423 = vcombine.high %v2415, %v2415
      %v2424 = vcombine.high %v2422, %v2422
      %v2425 = vcombine.high %v1205, %v1205
      %v2427 = vunpack.c.l.s4 1983009808
      %v2428 = vunpack.c.0.s8 %v2427
      %v2429 = vlaneseq
      %v2430 = vshrl.u32 %v2429, 7
      %v2431 = vsub.s32 %v2428, %v2430
      %v2432 = vrot.slane %v1205, %v2431
      %v2434 = vunpack.c.l.s4 1983009808
      %v2435 = vunpack.c.0.s8 %v2434
      %v2436 = vlaneseq
      %v2437 = vshrl.u32 %v2436, 7
      %v2438 = vsub.s32 %v2435, %v2437
      %v2439 = vrot.slane %v2425, %v2438
      %v2440 = vcombine.high %v2432, %v2432
      %v2441 = vcombine.high %v2439, %v2439
      %v2442 = vcombine.high %v1206, %v1206
      %v2444 = vunpack.c.l.s4 1983009808
      %v2445 = vunpack.c.0.s8 %v2444
      %v2446 = vlaneseq
      %v2447 = vshrl.u32 %v2446, 7
      %v2448 = vsub.s32 %v2445, %v2447
      %v2449 = vrot.slane %v1206, %v2448
      %v2451 = vunpack.c.l.s4 1983009808
      %v2452 = vunpack.c.0.s8 %v2451
      %v2453 = vlaneseq
      %v2454 = vshrl.u32 %v2453, 7
      %v2455 = vsub.s32 %v2452, %v2454
      %v2456 = vrot.slane %v2442, %v2455
      %v2457 = vcombine.high %v2449, %v2449
      %v2458 = vcombine.high %v2456, %v2456
      %v2459 = vcombine.high %v1207, %v1207
      %v2461 = vunpack.c.l.s4 1983009808
      %v2462 = vunpack.c.0.s8 %v2461
      %v2463 = vlaneseq
      %v2464 = vshrl.u32 %v2463, 7
      %v2465 = vsub.s32 %v2462, %v2464
      %v2466 = vrot.slane %v1207, %v2465
      %v2468 = vunpack.c.l.s4 1983009808
      %v2469 = vunpack.c.0.s8 %v2468
      %v2470 = vlaneseq
      %v2471 = vshrl.u32 %v2470, 7
      %v2472 = vsub.s32 %v2469, %v2471
      %v2473 = vrot.slane %v2459, %v2472
      %v2474 = vcombine.high %v2466, %v2466
      %v2475 = vcombine.high %v2473, %v2473
      %v2476 = vcombine.high %v1208, %v1208
      %v2478 = vunpack.c.l.s4 1983009808
      %v2479 = vunpack.c.0.s8 %v2478
      %v2480 = vlaneseq
      %v2481 = vshrl.u32 %v2480, 7
      %v2482 = vsub.s32 %v2479, %v2481
      %v2483 = vrot.slane %v1208, %v2482
      %v2485 = vunpack.c.l.s4 1983009808
      %v2486 = vunpack.c.0.s8 %v2485
      %v2487 = vlaneseq
      %v2488 = vshrl.u32 %v2487, 7
      %v2489 = vsub.s32 %v2486, %v2488
      %v2490 = vrot.slane %v2476, %v2489
      %v2491 = vcombine.high %v2483, %v2483
      %v2492 = vcombine.high %v2490, %v2490
      %v2493 = vcombine.high %v1209, %v1209
      %v2495 = vunpack.c.l.s4 1983009808
      %v2496 = vunpack.c.0.s8 %v2495
      %v2497 = vlaneseq
      %v2498 = vshrl.u32 %v2497, 7
      %v2499 = vsub.s32 %v2496, %v2498
      %v2500 = vrot.slane %v1209, %v2499
      %v2502 = vunpack.c.l.s4 1983009808
      %v2503 = vunpack.c.0.s8 %v2502
      %v2504 = vlaneseq
      %v2505 = vshrl.u32 %v2504, 7
      %v2506 = vsub.s32 %v2503, %v2505
      %v2507 = vrot.slane %v2493, %v2506
      %v2508 = vcombine.high %v2500, %v2500
      %v2509 = vcombine.high %v2507, %v2507
      %v2510 = vcombine.high %v1210, %v1210
      %v2512 = vunpack.c.l.s4 1983009808
      %v2513 = vunpack.c.0.s8 %v2512
      %v2514 = vlaneseq
      %v2515 = vshrl.u32 %v2514, 7
      %v2516 = vsub.s32 %v2513, %v2515
      %v2517 = vrot.slane %v1210, %v2516
      %v2519 = vunpack.c.l.s4 1983009808
      %v2520 = vunpack.c.0.s8 %v2519
      %v2521 = vlaneseq
      %v2522 = vshrl.u32 %v2521, 7
      %v2523 = vsub.s32 %v2520, %v2522
      %v2524 = vrot.slane %v2510, %v2523
      %v2525 = vcombine.high %v2517, %v2517
      %v2526 = vcombine.high %v2524, %v2524
      %v2527 = vcombine.high %v1211, %v1211
      %v2529 = vunpack.c.l.s4 1983009808
      %v2530 = vunpack.c.0.s8 %v2529
      %v2531 = vlaneseq
      %v2532 = vshrl.u32 %v2531, 7
      %v2533 = vsub.s32 %v2530, %v2532
      %v2534 = vrot.slane %v1211, %v2533
      %v2536 = vunpack.c.l.s4 1983009808
      %v2537 = vunpack.c.0.s8 %v2536
      %v2538 = vlaneseq
      %v2539 = vshrl.u32 %v2538, 7
      %v2540 = vsub.s32 %v2537, %v2539
      %v2541 = vrot.slane %v2527, %v2540
      %v2542 = vcombine.high %v2534, %v2534
      %v2543 = vcombine.high %v2541, %v2541
      %v2544 = vcombine.high %v1212, %v1212
      %v2546 = vunpack.c.l.s4 1983009808
      %v2547 = vunpack.c.0.s8 %v2546
      %v2548 = vlaneseq
      %v2549 = vshrl.u32 %v2548, 7
      %v2550 = vsub.s32 %v2547, %v2549
      %v2551 = vrot.slane %v1212, %v2550
      %v2553 = vunpack.c.l.s4 1983009808
      %v2554 = vunpack.c.0.s8 %v2553
      %v2555 = vlaneseq
      %v2556 = vshrl.u32 %v2555, 7
      %v2557 = vsub.s32 %v2554, %v2556
      %v2558 = vrot.slane %v2544, %v2557
      %v2559 = vcombine.high %v2551, %v2551
      %v2560 = vcombine.high %v2558, %v2558
      %v2561 = vcombine.high %v1213, %v1213
      %v2563 = vunpack.c.l.s4 1983009808
      %v2564 = vunpack.c.0.s8 %v2563
      %v2565 = vlaneseq
      %v2566 = vshrl.u32 %v2565, 7
      %v2567 = vsub.s32 %v2564, %v2566
      %v2568 = vrot.slane %v1213, %v2567
      %v2570 = vunpack.c.l.s4 1983009808
      %v2571 = vunpack.c.0.s8 %v2570
      %v2572 = vlaneseq
      %v2573 = vshrl.u32 %v2572, 7
      %v2574 = vsub.s32 %v2571, %v2573
      %v2575 = vrot.slane %v2561, %v2574
      %v2576 = vcombine.high %v2568, %v2568
      %v2577 = vcombine.high %v2575, %v2575
      %v2578 = vcombine.high %v1214, %v1214
      %v2580 = vunpack.c.l.s4 1983009808
      %v2581 = vunpack.c.0.s8 %v2580
      %v2582 = vlaneseq
      %v2583 = vshrl.u32 %v2582, 7
      %v2584 = vsub.s32 %v2581, %v2583
      %v2585 = vrot.slane %v1214, %v2584
      %v2587 = vunpack.c.l.s4 1983009808
      %v2588 = vunpack.c.0.s8 %v2587
      %v2589 = vlaneseq
      %v2590 = vshrl.u32 %v2589, 7
      %v2591 = vsub.s32 %v2588, %v2590
      %v2592 = vrot.slane %v2578, %v2591
      %v2593 = vcombine.high %v2585, %v2585
      %v2594 = vcombine.high %v2592, %v2592
      %v2595 = vcombine.high %v1215, %v1215
      %v2597 = vunpack.c.l.s4 1983009808
      %v2598 = vunpack.c.0.s8 %v2597
      %v2599 = vlaneseq
      %v2600 = vshrl.u32 %v2599, 7
      %v2601 = vsub.s32 %v2598, %v2600
      %v2602 = vrot.slane %v1215, %v2601
      %v2604 = vunpack.c.l.s4 1983009808
      %v2605 = vunpack.c.0.s8 %v2604
      %v2606 = vlaneseq
      %v2607 = vshrl.u32 %v2606, 7
      %v2608 = vsub.s32 %v2605, %v2607
      %v2609 = vrot.slane %v2595, %v2608
      %v2610 = vcombine.high %v2602, %v2602
      %v2611 = vcombine.high %v2609, %v2609
      %v2612 = vcombine.high %v1216, %v1216
      %v2614 = vunpack.c.l.s4 1983009808
      %v2615 = vunpack.c.0.s8 %v2614
      %v2616 = vlaneseq
      %v2617 = vshrl.u32 %v2616, 7
      %v2618 = vsub.s32 %v2615, %v2617
      %v2619 = vrot.slane %v1216, %v2618
      %v2621 = vunpack.c.l.s4 1983009808
      %v2622 = vunpack.c.0.s8 %v2621
      %v2623 = vlaneseq
      %v2624 = vshrl.u32 %v2623, 7
      %v2625 = vsub.s32 %v2622, %v2624
      %v2626 = vrot.slane %v2612, %v2625
      %v2627 = vcombine.high %v2619, %v2619
      %v2628 = vcombine.high %v2626, %v2626
      %v2629 = vcombine.high %v1217, %v1217
      %v2631 = vunpack.c.l.s4 1983009808
      %v2632 = vunpack.c.0.s8 %v2631
      %v2633 = vlaneseq
      %v2634 = vshrl.u32 %v2633, 7
      %v2635 = vsub.s32 %v2632, %v2634
      %v2636 = vrot.slane %v1217, %v2635
      %v2638 = vunpack.c.l.s4 1983009808
      %v2639 = vunpack.c.0.s8 %v2638
      %v2640 = vlaneseq
      %v2641 = vshrl.u32 %v2640, 7
      %v2642 = vsub.s32 %v2639, %v2641
      %v2643 = vrot.slane %v2629, %v2642
      %v2644 = vcombine.high %v2636, %v2636
      %v2645 = vcombine.high %v2643, %v2643
      %v2646 = vcombine.high %v1218, %v1218
      %v2648 = vunpack.c.l.s4 1983009808
      %v2649 = vunpack.c.0.s8 %v2648
      %v2650 = vlaneseq
      %v2651 = vshrl.u32 %v2650, 7
      %v2652 = vsub.s32 %v2649, %v2651
      %v2653 = vrot.slane %v1218, %v2652
      %v2655 = vunpack.c.l.s4 1983009808
      %v2656 = vunpack.c.0.s8 %v2655
      %v2657 = vlaneseq
      %v2658 = vshrl.u32 %v2657, 7
      %v2659 = vsub.s32 %v2656, %v2658
      %v2660 = vrot.slane %v2646, %v2659
      %v2661 = vcombine.high %v2653, %v2653
      %v2662 = vcombine.high %v2660, %v2660
      %v2663 = vcombine.high %v1219, %v1219
      %v2665 = vunpack.c.l.s4 1983009808
      %v2666 = vunpack.c.0.s8 %v2665
      %v2667 = vlaneseq
      %v2668 = vshrl.u32 %v2667, 7
      %v2669 = vsub.s32 %v2666, %v2668
      %v2670 = vrot.slane %v1219, %v2669
      %v2672 = vunpack.c.l.s4 1983009808
      %v2673 = vunpack.c.0.s8 %v2672
      %v2674 = vlaneseq
      %v2675 = vshrl.u32 %v2674, 7
      %v2676 = vsub.s32 %v2673, %v2675
      %v2677 = vrot.slane %v2663, %v2676
      %v2678 = vcombine.high %v2670, %v2670
      %v2679 = vcombine.high %v2677, %v2677
      %v2680 = vcombine.high %v1220, %v1220
      %v2682 = vunpack.c.l.s4 1983009808
      %v2683 = vunpack.c.0.s8 %v2682
      %v2684 = vlaneseq
      %v2685 = vshrl.u32 %v2684, 7
      %v2686 = vsub.s32 %v2683, %v2685
      %v2687 = vrot.slane %v1220, %v2686
      %v2689 = vunpack.c.l.s4 1983009808
      %v2690 = vunpack.c.0.s8 %v2689
      %v2691 = vlaneseq
      %v2692 = vshrl.u32 %v2691, 7
      %v2693 = vsub.s32 %v2690, %v2692
      %v2694 = vrot.slane %v2680, %v2693
      %v2695 = vcombine.high %v2687, %v2687
      %v2696 = vcombine.high %v2694, %v2694
      %v2697 = vcombine.high %v1221, %v1221
      %v2699 = vunpack.c.l.s4 1983009808
      %v2700 = vunpack.c.0.s8 %v2699
      %v2701 = vlaneseq
      %v2702 = vshrl.u32 %v2701, 7
      %v2703 = vsub.s32 %v2700, %v2702
      %v2704 = vrot.slane %v1221, %v2703
      %v2706 = vunpack.c.l.s4 1983009808
      %v2707 = vunpack.c.0.s8 %v2706
      %v2708 = vlaneseq
      %v2709 = vshrl.u32 %v2708, 7
      %v2710 = vsub.s32 %v2707, %v2709
      %v2711 = vrot.slane %v2697, %v2710
      %v2712 = vcombine.high %v2704, %v2704
      %v2713 = vcombine.high %v2711, %v2711
      %v2714 = vcombine.high %v1222, %v1222
      %v2716 = vunpack.c.l.s4 1983009808
      %v2717 = vunpack.c.0.s8 %v2716
      %v2718 = vlaneseq
      %v2719 = vshrl.u32 %v2718, 7
      %v2720 = vsub.s32 %v2717, %v2719
      %v2721 = vrot.slane %v1222, %v2720
      %v2723 = vunpack.c.l.s4 1983009808
      %v2724 = vunpack.c.0.s8 %v2723
      %v2725 = vlaneseq
      %v2726 = vshrl.u32 %v2725, 7
      %v2727 = vsub.s32 %v2724, %v2726
      %v2728 = vrot.slane %v2714, %v2727
      %v2729 = vcombine.high %v2721, %v2721
      %v2730 = vcombine.high %v2728, %v2728
      %v2731 = vcombine.high %v1223, %v1223
      %v2733 = vunpack.c.l.s4 1983009808
      %v2734 = vunpack.c.0.s8 %v2733
      %v2735 = vlaneseq
      %v2736 = vshrl.u32 %v2735, 7
      %v2737 = vsub.s32 %v2734, %v2736
      %v2738 = vrot.slane %v1223, %v2737
      %v2740 = vunpack.c.l.s4 1983009808
      %v2741 = vunpack.c.0.s8 %v2740
      %v2742 = vlaneseq
      %v2743 = vshrl.u32 %v2742, 7
      %v2744 = vsub.s32 %v2741, %v2743
      %v2745 = vrot.slane %v2731, %v2744
      %v2746 = vcombine.high %v2738, %v2738
      %v2747 = vcombine.high %v2745, %v2745
      %v2748 = vcombine.high %v1224, %v1224
      %v2750 = vunpack.c.l.s4 1983009808
      %v2751 = vunpack.c.0.s8 %v2750
      %v2752 = vlaneseq
      %v2753 = vshrl.u32 %v2752, 7
      %v2754 = vsub.s32 %v2751, %v2753
      %v2755 = vrot.slane %v1224, %v2754
      %v2757 = vunpack.c.l.s4 1983009808
      %v2758 = vunpack.c.0.s8 %v2757
      %v2759 = vlaneseq
      %v2760 = vshrl.u32 %v2759, 7
      %v2761 = vsub.s32 %v2758, %v2760
      %v2762 = vrot.slane %v2748, %v2761
      %v2763 = vcombine.high %v2755, %v2755
      %v2764 = vcombine.high %v2762, %v2762
      %v2765 = vcombine.high %v1225, %v1225
      %v2767 = vunpack.c.l.s4 1983009808
      %v2768 = vunpack.c.0.s8 %v2767
      %v2769 = vlaneseq
      %v2770 = vshrl.u32 %v2769, 7
      %v2771 = vsub.s32 %v2768, %v2770
      %v2772 = vrot.slane %v1225, %v2771
      %v2774 = vunpack.c.l.s4 1983009808
      %v2775 = vunpack.c.0.s8 %v2774
      %v2776 = vlaneseq
      %v2777 = vshrl.u32 %v2776, 7
      %v2778 = vsub.s32 %v2775, %v2777
      %v2779 = vrot.slane %v2765, %v2778
      %v2780 = vcombine.high %v2772, %v2772
      %v2781 = vcombine.high %v2779, %v2779
      %v2782 = vcombine.high %v1226, %v1226
      %v2784 = vunpack.c.l.s4 1983009808
      %v2785 = vunpack.c.0.s8 %v2784
      %v2786 = vlaneseq
      %v2787 = vshrl.u32 %v2786, 7
      %v2788 = vsub.s32 %v2785, %v2787
      %v2789 = vrot.slane %v1226, %v2788
      %v2791 = vunpack.c.l.s4 1983009808
      %v2792 = vunpack.c.0.s8 %v2791
      %v2793 = vlaneseq
      %v2794 = vshrl.u32 %v2793, 7
      %v2795 = vsub.s32 %v2792, %v2794
      %v2796 = vrot.slane %v2782, %v2795
      %v2797 = vcombine.high %v2789, %v2789
      %v2798 = vcombine.high %v2796, %v2796
      %v2799 = vcombine.high %v1227, %v1227
      %v2801 = vunpack.c.l.s4 1983009808
      %v2802 = vunpack.c.0.s8 %v2801
      %v2803 = vlaneseq
      %v2804 = vshrl.u32 %v2803, 7
      %v2805 = vsub.s32 %v2802, %v2804
      %v2806 = vrot.slane %v1227, %v2805
      %v2808 = vunpack.c.l.s4 1983009808
      %v2809 = vunpack.c.0.s8 %v2808
      %v2810 = vlaneseq
      %v2811 = vshrl.u32 %v2810, 7
      %v2812 = vsub.s32 %v2809, %v2811
      %v2813 = vrot.slane %v2799, %v2812
      %v2814 = vcombine.high %v2806, %v2806
      %v2815 = vcombine.high %v2813, %v2813
      %v2816 = vcombine.high %v1228, %v1228
      %v2818 = vunpack.c.l.s4 1983009808
      %v2819 = vunpack.c.0.s8 %v2818
      %v2820 = vlaneseq
      %v2821 = vshrl.u32 %v2820, 7
      %v2822 = vsub.s32 %v2819, %v2821
      %v2823 = vrot.slane %v1228, %v2822
      %v2825 = vunpack.c.l.s4 1983009808
      %v2826 = vunpack.c.0.s8 %v2825
      %v2827 = vlaneseq
      %v2828 = vshrl.u32 %v2827, 7
      %v2829 = vsub.s32 %v2826, %v2828
      %v2830 = vrot.slane %v2816, %v2829
      %v2831 = vcombine.high %v2823, %v2823
      %v2832 = vcombine.high %v2830, %v2830
      %v2833 = vcombine.high %v1229, %v1229
      %v2835 = vunpack.c.l.s4 1983009808
      %v2836 = vunpack.c.0.s8 %v2835
      %v2837 = vlaneseq
      %v2838 = vshrl.u32 %v2837, 7
      %v2839 = vsub.s32 %v2836, %v2838
      %v2840 = vrot.slane %v1229, %v2839
      %v2842 = vunpack.c.l.s4 1983009808
      %v2843 = vunpack.c.0.s8 %v2842
      %v2844 = vlaneseq
      %v2845 = vshrl.u32 %v2844, 7
      %v2846 = vsub.s32 %v2843, %v2845
      %v2847 = vrot.slane %v2833, %v2846
      %v2848 = vcombine.high %v2840, %v2840
      %v2849 = vcombine.high %v2847, %v2847
      %v2850 = vcombine.high %v1230, %v1230
      %v2852 = vunpack.c.l.s4 1983009808
      %v2853 = vunpack.c.0.s8 %v2852
      %v2854 = vlaneseq
      %v2855 = vshrl.u32 %v2854, 7
      %v2856 = vsub.s32 %v2853, %v2855
      %v2857 = vrot.slane %v1230, %v2856
      %v2859 = vunpack.c.l.s4 1983009808
      %v2860 = vunpack.c.0.s8 %v2859
      %v2861 = vlaneseq
      %v2862 = vshrl.u32 %v2861, 7
      %v2863 = vsub.s32 %v2860, %v2862
      %v2864 = vrot.slane %v2850, %v2863
      %v2865 = vcombine.high %v2857, %v2857
      %v2866 = vcombine.high %v2864, %v2864
      %v2867 = vcombine.high %v1231, %v1231
      %v2869 = vunpack.c.l.s4 1983009808
      %v2870 = vunpack.c.0.s8 %v2869
      %v2871 = vlaneseq
      %v2872 = vshrl.u32 %v2871, 7
      %v2873 = vsub.s32 %v2870, %v2872
      %v2874 = vrot.slane %v1231, %v2873
      %v2876 = vunpack.c.l.s4 1983009808
      %v2877 = vunpack.c.0.s8 %v2876
      %v2878 = vlaneseq
      %v2879 = vshrl.u32 %v2878, 7
      %v2880 = vsub.s32 %v2877, %v2879
      %v2881 = vrot.slane %v2867, %v2880
      %v2882 = vcombine.high %v2874, %v2874
      %v2883 = vcombine.high %v2881, %v2881
      %v2884 = vcombine.high %v1232, %v1232
      %v2886 = vunpack.c.l.s4 1983009808
      %v2887 = vunpack.c.0.s8 %v2886
      %v2888 = vlaneseq
      %v2889 = vshrl.u32 %v2888, 7
      %v2890 = vsub.s32 %v2887, %v2889
      %v2891 = vrot.slane %v1232, %v2890
      %v2893 = vunpack.c.l.s4 1983009808
      %v2894 = vunpack.c.0.s8 %v2893
      %v2895 = vlaneseq
      %v2896 = vshrl.u32 %v2895, 7
      %v2897 = vsub.s32 %v2894, %v2896
      %v2898 = vrot.slane %v2884, %v2897
      %v2899 = vcombine.high %v2891, %v2891
      %v2900 = vcombine.high %v2898, %v2898
      %v2901 = vcombine.high %v1233, %v1233
      %v2903 = vunpack.c.l.s4 1983009808
      %v2904 = vunpack.c.0.s8 %v2903
      %v2905 = vlaneseq
      %v2906 = vshrl.u32 %v2905, 7
      %v2907 = vsub.s32 %v2904, %v2906
      %v2908 = vrot.slane %v1233, %v2907
      %v2910 = vunpack.c.l.s4 1983009808
      %v2911 = vunpack.c.0.s8 %v2910
      %v2912 = vlaneseq
      %v2913 = vshrl.u32 %v2912, 7
      %v2914 = vsub.s32 %v2911, %v2913
      %v2915 = vrot.slane %v2901, %v2914
      %v2916 = vcombine.high %v2908, %v2908
      %v2917 = vcombine.high %v2915, %v2915
      %v2918 = vcombine.high %v1234, %v1234
      %v2920 = vunpack.c.l.s4 1983009808
      %v2921 = vunpack.c.0.s8 %v2920
      %v2922 = vlaneseq
      %v2923 = vshrl.u32 %v2922, 7
      %v2924 = vsub.s32 %v2921, %v2923
      %v2925 = vrot.slane %v1234, %v2924
      %v2927 = vunpack.c.l.s4 1983009808
      %v2928 = vunpack.c.0.s8 %v2927
      %v2929 = vlaneseq
      %v2930 = vshrl.u32 %v2929, 7
      %v2931 = vsub.s32 %v2928, %v2930
      %v2932 = vrot.slane %v2918, %v2931
      %v2933 = vcombine.high %v2925, %v2925
      %v2934 = vcombine.high %v2932, %v2932
      %v2935 = vcombine.high %v1235, %v1235
      %v2937 = vunpack.c.l.s4 1983009808
      %v2938 = vunpack.c.0.s8 %v2937
      %v2939 = vlaneseq
      %v2940 = vshrl.u32 %v2939, 7
      %v2941 = vsub.s32 %v2938, %v2940
      %v2942 = vrot.slane %v1235, %v2941
      %v2944 = vunpack.c.l.s4 1983009808
      %v2945 = vunpack.c.0.s8 %v2944
      %v2946 = vlaneseq
      %v2947 = vshrl.u32 %v2946, 7
      %v2948 = vsub.s32 %v2945, %v2947
      %v2949 = vrot.slane %v2935, %v2948
      %v2950 = vcombine.high %v2942, %v2942
      %v2951 = vcombine.high %v2949, %v2949
      %v2952 = vcombine.high %v1236, %v1236
      %v2954 = vunpack.c.l.s4 1983009808
      %v2955 = vunpack.c.0.s8 %v2954
      %v2956 = vlaneseq
      %v2957 = vshrl.u32 %v2956, 7
      %v2958 = vsub.s32 %v2955, %v2957
      %v2959 = vrot.slane %v1236, %v2958
      %v2961 = vunpack.c.l.s4 1983009808
      %v2962 = vunpack.c.0.s8 %v2961
      %v2963 = vlaneseq
      %v2964 = vshrl.u32 %v2963, 7
      %v2965 = vsub.s32 %v2962, %v2964
      %v2966 = vrot.slane %v2952, %v2965
      %v2967 = vcombine.high %v2959, %v2959
      %v2968 = vcombine.high %v2966, %v2966
      %v2969 = vcombine.high %v1237, %v1237
      %v2971 = vunpack.c.l.s4 1983009808
      %v2972 = vunpack.c.0.s8 %v2971
      %v2973 = vlaneseq
      %v2974 = vshrl.u32 %v2973, 7
      %v2975 = vsub.s32 %v2972, %v2974
      %v2976 = vrot.slane %v1237, %v2975
      %v2978 = vunpack.c.l.s4 1983009808
      %v2979 = vunpack.c.0.s8 %v2978
      %v2980 = vlaneseq
      %v2981 = vshrl.u32 %v2980, 7
      %v2982 = vsub.s32 %v2979, %v2981
      %v2983 = vrot.slane %v2969, %v2982
      %v2984 = vcombine.high %v2976, %v2976
      %v2985 = vcombine.high %v2983, %v2983
      %v2986 = vcombine.high %v1238, %v1238
      %v2988 = vunpack.c.l.s4 1983009808
      %v2989 = vunpack.c.0.s8 %v2988
      %v2990 = vlaneseq
      %v2991 = vshrl.u32 %v2990, 7
      %v2992 = vsub.s32 %v2989, %v2991
      %v2993 = vrot.slane %v1238, %v2992
      %v2995 = vunpack.c.l.s4 1983009808
      %v2996 = vunpack.c.0.s8 %v2995
      %v2997 = vlaneseq
      %v2998 = vshrl.u32 %v2997, 7
      %v2999 = vsub.s32 %v2996, %v2998
      %v3000 = vrot.slane %v2986, %v2999
      %v3001 = vcombine.high %v2993, %v2993
      %v3002 = vcombine.high %v3000, %v3000
      %v3395 = vrot.slane %v1344, 7
      %v3396 = vrot.slane %v3395, 2
      %v3397 = vrot.slane %v1352, 7
      %v3398 = vrot.slane %v3397, 2
      %v3399 = vrot.slane %v1351, 7
      %v3400 = vrot.slane %v3399, 2
      %v3401 = vrot.slane %v1353, 7
      %v3402 = vrot.slane %v3401, 2
      %v3403 = vrot.slane %v1361, 7
      %v3404 = vrot.slane %v3403, 2
      %v3405 = vrot.slane %v1369, 7
      %v3406 = vrot.slane %v3405, 2
      %v3407 = vrot.slane %v1368, 7
      %v3408 = vrot.slane %v3407, 2
      %v3409 = vrot.slane %v1370, 7
      %v3410 = vrot.slane %v3409, 2
      %v3411 = vrot.slane %v1378, 7
      %v3412 = vrot.slane %v3411, 2
      %v3413 = vrot.slane %v1386, 7
      %v3414 = vrot.slane %v3413, 2
      %v3415 = vrot.slane %v1385, 7
      %v3416 = vrot.slane %v3415, 2
      %v3417 = vrot.slane %v1387, 7
      %v3418 = vrot.slane %v3417, 2
      %v3419 = vrot.slane %v1395, 7
      %v3420 = vrot.slane %v3419, 2
      %v3421 = vrot.slane %v1403, 7
      %v3422 = vrot.slane %v3421, 2
      %v3423 = vrot.slane %v1402, 7
      %v3424 = vrot.slane %v3423, 2
      %v3425 = vrot.slane %v1404, 7
      %v3426 = vrot.slane %v3425, 2
      %v3427 = vrot.slane %v1412, 7
      %v3428 = vrot.slane %v3427, 2
      %v3429 = vrot.slane %v1420, 7
      %v3430 = vrot.slane %v3429, 2
      %v3431 = vrot.slane %v1419, 7
      %v3432 = vrot.slane %v3431, 2
      %v3433 = vrot.slane %v1421, 7
      %v3434 = vrot.slane %v3433, 2
      %v3435 = vrot.slane %v1429, 7
      %v3436 = vrot.slane %v3435, 2
      %v3437 = vrot.slane %v1437, 7
      %v3438 = vrot.slane %v3437, 2
      %v3439 = vrot.slane %v1436, 7
      %v3440 = vrot.slane %v3439, 2
      %v3441 = vrot.slane %v1438, 7
      %v3442 = vrot.slane %v3441, 2
      %v3443 = vrot.slane %v1446, 7
      %v3444 = vrot.slane %v3443, 2
      %v3445 = vrot.slane %v1454, 7
      %v3446 = vrot.slane %v3445, 2
      %v3447 = vrot.slane %v1453, 7
      %v3448 = vrot.slane %v3447, 2
      %v3449 = vrot.slane %v1455, 7
      %v3450 = vrot.slane %v3449, 2
      %v3451 = vrot.slane %v1463, 7
      %v3452 = vrot.slane %v3451, 2
      %v3453 = vrot.slane %v1471, 7
      %v3454 = vrot.slane %v3453, 2
      %v3455 = vrot.slane %v1470, 7
      %v3456 = vrot.slane %v3455, 2
      %v3457 = vrot.slane %v1472, 7
      %v3458 = vrot.slane %v3457, 2
      %v3459 = vrot.slane %v1480, 7
      %v3460 = vrot.slane %v3459, 2
      %v3461 = vrot.slane %v1488, 7
      %v3462 = vrot.slane %v3461, 2
      %v3463 = vrot.slane %v1487, 7
      %v3464 = vrot.slane %v3463, 2
      %v3465 = vrot.slane %v1489, 7
      %v3466 = vrot.slane %v3465, 2
      %v3467 = vrot.slane %v1497, 7
      %v3468 = vrot.slane %v3467, 2
      %v3469 = vrot.slane %v1505, 7
      %v3470 = vrot.slane %v3469, 2
      %v3471 = vrot.slane %v1504, 7
      %v3472 = vrot.slane %v3471, 2
      %v3473 = vrot.slane %v1506, 7
      %v3474 = vrot.slane %v3473, 2
      %v3475 = vrot.slane %v1514, 7
      %v3476 = vrot.slane %v3475, 2
      %v3477 = vrot.slane %v1522, 7
      %v3478 = vrot.slane %v3477, 2
      %v3479 = vrot.slane %v1521, 7
      %v3480 = vrot.slane %v3479, 2
      %v3481 = vrot.slane %v1523, 7
      %v3482 = vrot.slane %v3481, 2
      %v3483 = vrot.slane %v1531, 7
      %v3484 = vrot.slane %v3483, 2
      %v3485 = vrot.slane %v1539, 7
      %v3486 = vrot.slane %v3485, 2
      %v3487 = vrot.slane %v1538, 7
      %v3488 = vrot.slane %v3487, 2
      %v3489 = vrot.slane %v1540, 7
      %v3490 = vrot.slane %v3489, 2
      %v3491 = vrot.slane %v1548, 7
      %v3492 = vrot.slane %v3491, 2
      %v3493 = vrot.slane %v1556, 7
      %v3494 = vrot.slane %v3493, 2
      %v3495 = vrot.slane %v1555, 7
      %v3496 = vrot.slane %v3495, 2
      %v3497 = vrot.slane %v1557, 7
      %v3498 = vrot.slane %v3497, 2
      %v3499 = vrot.slane %v1565, 7
      %v3500 = vrot.slane %v3499, 2
      %v3501 = vrot.slane %v1573, 7
      %v3502 = vrot.slane %v3501, 2
      %v3503 = vrot.slane %v1572, 7
      %v3504 = vrot.slane %v3503, 2
      %v3505 = vrot.slane %v1574, 7
      %v3506 = vrot.slane %v3505, 2
      %v3507 = vrot.slane %v1582, 7
      %v3508 = vrot.slane %v3507, 2
      %v3509 = vrot.slane %v1590, 7
      %v3510 = vrot.slane %v3509, 2
      %v3511 = vrot.slane %v1589, 7
      %v3512 = vrot.slane %v3511, 2
      %v3513 = vrot.slane %v1591, 7
      %v3514 = vrot.slane %v3513, 2
      %v3515 = vrot.slane %v1599, 7
      %v3516 = vrot.slane %v3515, 2
      %v3517 = vrot.slane %v1607, 7
      %v3518 = vrot.slane %v3517, 2
      %v3519 = vrot.slane %v1606, 7
      %v3520 = vrot.slane %v3519, 2
      %v3521 = vrot.slane %v1608, 7
      %v3522 = vrot.slane %v3521, 2
      %v3523 = vrot.slane %v1616, 7
      %v3524 = vrot.slane %v3523, 2
      %v3525 = vrot.slane %v1624, 7
      %v3526 = vrot.slane %v3525, 2
      %v3527 = vrot.slane %v1623, 7
      %v3528 = vrot.slane %v3527, 2
      %v3529 = vrot.slane %v1625, 7
      %v3530 = vrot.slane %v3529, 2
      %v3531 = vrot.slane %v1633, 7
      %v3532 = vrot.slane %v3531, 2
      %v3533 = vrot.slane %v1641, 7
      %v3534 = vrot.slane %v3533, 2
      %v3535 = vrot.slane %v1640, 7
      %v3536 = vrot.slane %v3535, 2
      %v3537 = vrot.slane %v1642, 7
      %v3538 = vrot.slane %v3537, 2
      %v3539 = vrot.slane %v1650, 7
      %v3540 = vrot.slane %v3539, 2
      %v3541 = vrot.slane %v1658, 7
      %v3542 = vrot.slane %v3541, 2
      %v3543 = vrot.slane %v1657, 7
      %v3544 = vrot.slane %v3543, 2
      %v3545 = vrot.slane %v1659, 7
      %v3546 = vrot.slane %v3545, 2
      %v3547 = vrot.slane %v1667, 7
      %v3548 = vrot.slane %v3547, 2
      %v3549 = vrot.slane %v1675, 7
      %v3550 = vrot.slane %v3549, 2
      %v3551 = vrot.slane %v1674, 7
      %v3552 = vrot.slane %v3551, 2
      %v3553 = vrot.slane %v1676, 7
      %v3554 = vrot.slane %v3553, 2
      %v3555 = vrot.slane %v1684, 7
      %v3556 = vrot.slane %v3555, 2
      %v3557 = vrot.slane %v1692, 7
      %v3558 = vrot.slane %v3557, 2
      %v3559 = vrot.slane %v1691, 7
      %v3560 = vrot.slane %v3559, 2
      %v3561 = vrot.slane %v1693, 7
      %v3562 = vrot.slane %v3561, 2
      %v3563 = vrot.slane %v1701, 7
      %v3564 = vrot.slane %v3563, 2
      %v3565 = vrot.slane %v1709, 7
      %v3566 = vrot.slane %v3565, 2
      %v3567 = vrot.slane %v1708, 7
      %v3568 = vrot.slane %v3567, 2
      %v3569 = vrot.slane %v1710, 7
      %v3570 = vrot.slane %v3569, 2
      %v3571 = vrot.slane %v1718, 7
      %v3572 = vrot.slane %v3571, 2
      %v3573 = vrot.slane %v1726, 7
      %v3574 = vrot.slane %v3573, 2
      %v3575 = vrot.slane %v1725, 7
      %v3576 = vrot.slane %v3575, 2
      %v3577 = vrot.slane %v1727, 7
      %v3578 = vrot.slane %v3577, 2
      %v3579 = vrot.slane %v1735, 7
      %v3580 = vrot.slane %v3579, 2
      %v3581 = vrot.slane %v1743, 7
      %v3582 = vrot.slane %v3581, 2
      %v3583 = vrot.slane %v1742, 7
      %v3584 = vrot.slane %v3583, 2
      %v3585 = vrot.slane %v1744, 7
      %v3586 = vrot.slane %v3585, 2
      %v3587 = vrot.slane %v1752, 7
      %v3588 = vrot.slane %v3587, 2
      %v3589 = vrot.slane %v1760, 7
      %v3590 = vrot.slane %v3589, 2
      %v3591 = vrot.slane %v1759, 7
      %v3592 = vrot.slane %v3591, 2
      %v3593 = vrot.slane %v1761, 7
      %v3594 = vrot.slane %v3593, 2
      %v3595 = vrot.slane %v1769, 7
      %v3596 = vrot.slane %v3595, 2
      %v3597 = vrot.slane %v1777, 7
      %v3598 = vrot.slane %v3597, 2
      %v3599 = vrot.slane %v1776, 7
      %v3600 = vrot.slane %v3599, 2
      %v3601 = vrot.slane %v1778, 7
      %v3602 = vrot.slane %v3601, 2
      %v3603 = vrot.slane %v1786, 7
      %v3604 = vrot.slane %v3603, 2
      %v3605 = vrot.slane %v1794, 7
      %v3606 = vrot.slane %v3605, 2
      %v3607 = vrot.slane %v1793, 7
      %v3608 = vrot.slane %v3607, 2
      %v3609 = vrot.slane %v1795, 7
      %v3610 = vrot.slane %v3609, 2
      %v3611 = vrot.slane %v1803, 7
      %v3612 = vrot.slane %v3611, 2
      %v3613 = vrot.slane %v1811, 7
      %v3614 = vrot.slane %v3613, 2
      %v3615 = vrot.slane %v1810, 7
      %v3616 = vrot.slane %v3615, 2
      %v3617 = vrot.slane %v1812, 7
      %v3618 = vrot.slane %v3617, 2
      %v3619 = vrot.slane %v1820, 7
      %v3620 = vrot.slane %v3619, 2
      %v3621 = vrot.slane %v1828, 7
      %v3622 = vrot.slane %v3621, 2
      %v3623 = vrot.slane %v1827, 7
      %v3624 = vrot.slane %v3623, 2
      %v3625 = vrot.slane %v1829, 7
      %v3626 = vrot.slane %v3625, 2
      %v3627 = vrot.slane %v1837, 7
      %v3628 = vrot.slane %v3627, 2
      %v3629 = vrot.slane %v1845, 7
      %v3630 = vrot.slane %v3629, 2
      %v3631 = vrot.slane %v1844, 7
      %v3632 = vrot.slane %v3631, 2
      %v3633 = vrot.slane %v1846, 7
      %v3634 = vrot.slane %v3633, 2
      %v3635 = vrot.slane %v1854, 7
      %v3636 = vrot.slane %v3635, 2
      %v3637 = vrot.slane %v1862, 7
      %v3638 = vrot.slane %v3637, 2
      %v3639 = vrot.slane %v1861, 7
      %v3640 = vrot.slane %v3639, 2
      %v3641 = vrot.slane %v1863, 7
      %v3642 = vrot.slane %v3641, 2
      %v3643 = vrot.slane %v1871, 7
      %v3644 = vrot.slane %v3643, 2
      %v3645 = vrot.slane %v1879, 7
      %v3646 = vrot.slane %v3645, 2
      %v3647 = vrot.slane %v1878, 7
      %v3648 = vrot.slane %v3647, 2
      %v3649 = vrot.slane %v1880, 7
      %v3650 = vrot.slane %v3649, 2
      %v3651 = vrot.slane %v1888, 7
      %v3652 = vrot.slane %v3651, 2
      %v3653 = vrot.slane %v1896, 7
      %v3654 = vrot.slane %v3653, 2
      %v3655 = vrot.slane %v1895, 7
      %v3656 = vrot.slane %v3655, 2
      %v3657 = vrot.slane %v1897, 7
      %v3658 = vrot.slane %v3657, 2
      %v3659 = vrot.slane %v1905, 7
      %v3660 = vrot.slane %v3659, 2
      %v3661 = vrot.slane %v1913, 7
      %v3662 = vrot.slane %v3661, 2
      %v3663 = vrot.slane %v1912, 7
      %v3664 = vrot.slane %v3663, 2
      %v3665 = vrot.slane %v1914, 7
      %v3666 = vrot.slane %v3665, 2
      %v3667 = vrot.slane %v1922, 7
      %v3668 = vrot.slane %v3667, 2
      %v3669 = vrot.slane %v1930, 7
      %v3670 = vrot.slane %v3669, 2
      %v3671 = vrot.slane %v1929, 7
      %v3672 = vrot.slane %v3671, 2
      %v3673 = vrot.slane %v1931, 7
      %v3674 = vrot.slane %v3673, 2
      %v3675 = vrot.slane %v1939, 7
      %v3676 = vrot.slane %v3675, 2
      %v3677 = vrot.slane %v1947, 7
      %v3678 = vrot.slane %v3677, 2
      %v3679 = vrot.slane %v1946, 7
      %v3680 = vrot.slane %v3679, 2
      %v3681 = vrot.slane %v1948, 7
      %v3682 = vrot.slane %v3681, 2
      %v3683 = vrot.slane %v1956, 7
      %v3684 = vrot.slane %v3683, 2
      %v3685 = vrot.slane %v1964, 7
      %v3686 = vrot.slane %v3685, 2
      %v3687 = vrot.slane %v1963, 7
      %v3688 = vrot.slane %v3687, 2
      %v3689 = vrot.slane %v1965, 7
      %v3690 = vrot.slane %v3689, 2
      %v3691 = vrot.slane %v1973, 7
      %v3692 = vrot.slane %v3691, 2
      %v3693 = vrot.slane %v1981, 7
      %v3694 = vrot.slane %v3693, 2
      %v3695 = vrot.slane %v1980, 7
      %v3696 = vrot.slane %v3695, 2
      %v3697 = vrot.slane %v1982, 7
      %v3698 = vrot.slane %v3697, 2
      %v3699 = vrot.slane %v1990, 7
      %v3700 = vrot.slane %v3699, 2
      %v3701 = vrot.slane %v1998, 7
      %v3702 = vrot.slane %v3701, 2
      %v3703 = vrot.slane %v1997, 7
      %v3704 = vrot.slane %v3703, 2
      %v3705 = vrot.slane %v1999, 7
      %v3706 = vrot.slane %v3705, 2
      %v3707 = vrot.slane %v2007, 7
      %v3708 = vrot.slane %v3707, 2
      %v3709 = vrot.slane %v2015, 7
      %v3710 = vrot.slane %v3709, 2
      %v3711 = vrot.slane %v2014, 7
      %v3712 = vrot.slane %v3711, 2
      %v3713 = vrot.slane %v2016, 7
      %v3714 = vrot.slane %v3713, 2
      %v3715 = vrot.slane %v2024, 7
      %v3716 = vrot.slane %v3715, 2
      %v3717 = vrot.slane %v2032, 7
      %v3718 = vrot.slane %v3717, 2
      %v3719 = vrot.slane %v2031, 7
      %v3720 = vrot.slane %v3719, 2
      %v3721 = vrot.slane %v2033, 7
      %v3722 = vrot.slane %v3721, 2
      %v3723 = vrot.slane %v2041, 7
      %v3724 = vrot.slane %v3723, 2
      %v3725 = vrot.slane %v2049, 7
      %v3726 = vrot.slane %v3725, 2
      %v3727 = vrot.slane %v2048, 7
      %v3728 = vrot.slane %v3727, 2
      %v3729 = vrot.slane %v2050, 7
      %v3730 = vrot.slane %v3729, 2
      %v3731 = vrot.slane %v2058, 7
      %v3732 = vrot.slane %v3731, 2
      %v3733 = vrot.slane %v2066, 7
      %v3734 = vrot.slane %v3733, 2
      %v3735 = vrot.slane %v2065, 7
      %v3736 = vrot.slane %v3735, 2
      %v3737 = vrot.slane %v2067, 7
      %v3738 = vrot.slane %v3737, 2
      %v3739 = vrot.slane %v2075, 7
      %v3740 = vrot.slane %v3739, 2
      %v3741 = vrot.slane %v2083, 7
      %v3742 = vrot.slane %v3741, 2
      %v3743 = vrot.slane %v2082, 7
      %v3744 = vrot.slane %v3743, 2
      %v3745 = vrot.slane %v2084, 7
      %v3746 = vrot.slane %v3745, 2
      %v3747 = vrot.slane %v2092, 7
      %v3748 = vrot.slane %v3747, 2
      %v3749 = vrot.slane %v2100, 7
      %v3750 = vrot.slane %v3749, 2
      %v3751 = vrot.slane %v2099, 7
      %v3752 = vrot.slane %v3751, 2
      %v3753 = vrot.slane %v2101, 7
      %v3754 = vrot.slane %v3753, 2
      %v3755 = vrot.slane %v2109, 7
      %v3756 = vrot.slane %v3755, 2
      %v3757 = vrot.slane %v2117, 7
      %v3758 = vrot.slane %v3757, 2
      %v3759 = vrot.slane %v2116, 7
      %v3760 = vrot.slane %v3759, 2
      %v3761 = vrot.slane %v2118, 7
      %v3762 = vrot.slane %v3761, 2
      %v3763 = vrot.slane %v2126, 7
      %v3764 = vrot.slane %v3763, 2
      %v3765 = vrot.slane %v2134, 7
      %v3766 = vrot.slane %v3765, 2
      %v3767 = vrot.slane %v2133, 7
      %v3768 = vrot.slane %v3767, 2
      %v3769 = vrot.slane %v2135, 7
      %v3770 = vrot.slane %v3769, 2
      %v3771 = vrot.slane %v2143, 7
      %v3772 = vrot.slane %v3771, 2
      %v3773 = vrot.slane %v2151, 7
      %v3774 = vrot.slane %v3773, 2
      %v3775 = vrot.slane %v2150, 7
      %v3776 = vrot.slane %v3775, 2
      %v3777 = vrot.slane %v2152, 7
      %v3778 = vrot.slane %v3777, 2
      %v3779 = vrot.slane %v2160, 7
      %v3780 = vrot.slane %v3779, 2
      %v3781 = vrot.slane %v2168, 7
      %v3782 = vrot.slane %v3781, 2
      %v3783 = vrot.slane %v2167, 7
      %v3784 = vrot.slane %v3783, 2
      %v3785 = vrot.slane %v2169, 7
      %v3786 = vrot.slane %v3785, 2
      %v3787 = vrot.slane %v2177, 7
      %v3788 = vrot.slane %v3787, 2
      %v3789 = vrot.slane %v2185, 7
      %v3790 = vrot.slane %v3789, 2
      %v3791 = vrot.slane %v2184, 7
      %v3792 = vrot.slane %v3791, 2
      %v3793 = vrot.slane %v2186, 7
      %v3794 = vrot.slane %v3793, 2
      %v3795 = vrot.slane %v2194, 7
      %v3796 = vrot.slane %v3795, 2
      %v3797 = vrot.slane %v2202, 7
      %v3798 = vrot.slane %v3797, 2
      %v3799 = vrot.slane %v2201, 7
      %v3800 = vrot.slane %v3799, 2
      %v3801 = vrot.slane %v2203, 7
      %v3802 = vrot.slane %v3801, 2
      %v3803 = vrot.slane %v2211, 7
      %v3804 = vrot.slane %v3803, 2
      %v3805 = vrot.slane %v2219, 7
      %v3806 = vrot.slane %v3805, 2
      %v3807 = vrot.slane %v2218, 7
      %v3808 = vrot.slane %v3807, 2
      %v3809 = vrot.slane %v2220, 7
      %v3810 = vrot.slane %v3809, 2
      %v3811 = vrot.slane %v2228, 7
      %v3812 = vrot.slane %v3811, 2
      %v3813 = vrot.slane %v2236, 7
      %v3814 = vrot.slane %v3813, 2
      %v3815 = vrot.slane %v2235, 7
      %v3816 = vrot.slane %v3815, 2
      %v3817 = vrot.slane %v2237, 7
      %v3818 = vrot.slane %v3817, 2
      %v3819 = vrot.slane %v2245, 7
      %v3820 = vrot.slane %v3819, 2
      %v3821 = vrot.slane %v2253, 7
      %v3822 = vrot.slane %v3821, 2
      %v3823 = vrot.slane %v2252, 7
      %v3824 = vrot.slane %v3823, 2
      %v3825 = vrot.slane %v2254, 7
      %v3826 = vrot.slane %v3825, 2
      %v3827 = vrot.slane %v2262, 7
      %v3828 = vrot.slane %v3827, 2
      %v3829 = vrot.slane %v2270, 7
      %v3830 = vrot.slane %v3829, 2
      %v3831 = vrot.slane %v2269, 7
      %v3832 = vrot.slane %v3831, 2
      %v3833 = vrot.slane %v2271, 7
      %v3834 = vrot.slane %v3833, 2
      %v3835 = vrot.slane %v2279, 7
      %v3836 = vrot.slane %v3835, 2
      %v3837 = vrot.slane %v2287, 7
      %v3838 = vrot.slane %v3837, 2
      %v3839 = vrot.slane %v2286, 7
      %v3840 = vrot.slane %v3839, 2
      %v3841 = vrot.slane %v2288, 7
      %v3842 = vrot.slane %v3841, 2
      %v3843 = vrot.slane %v2296, 7
      %v3844 = vrot.slane %v3843, 2
      %v3845 = vrot.slane %v2304, 7
      %v3846 = vrot.slane %v3845, 2
      %v3847 = vrot.slane %v2303, 7
      %v3848 = vrot.slane %v3847, 2
      %v3849 = vrot.slane %v2305, 7
      %v3850 = vrot.slane %v3849, 2
      %v3851 = vrot.slane %v2313, 7
      %v3852 = vrot.slane %v3851, 2
      %v3853 = vrot.slane %v2321, 7
      %v3854 = vrot.slane %v3853, 2
      %v3855 = vrot.slane %v2320, 7
      %v3856 = vrot.slane %v3855, 2
      %v3857 = vrot.slane %v2322, 7
      %v3858 = vrot.slane %v3857, 2
      %v3859 = vrot.slane %v2330, 7
      %v3860 = vrot.slane %v3859, 2
      %v3861 = vrot.slane %v2338, 7
      %v3862 = vrot.slane %v3861, 2
      %v3863 = vrot.slane %v2337, 7
      %v3864 = vrot.slane %v3863, 2
      %v3865 = vrot.slane %v2339, 7
      %v3866 = vrot.slane %v3865, 2
      %v3867 = vrot.slane %v2347, 7
      %v3868 = vrot.slane %v3867, 2
      %v3869 = vrot.slane %v2355, 7
      %v3870 = vrot.slane %v3869, 2
      %v3871 = vrot.slane %v2354, 7
      %v3872 = vrot.slane %v3871, 2
      %v3873 = vrot.slane %v2356, 7
      %v3874 = vrot.slane %v3873, 2
      %v3875 = vrot.slane %v2364, 7
      %v3876 = vrot.slane %v3875, 2
      %v3877 = vrot.slane %v2372, 7
      %v3878 = vrot.slane %v3877, 2
      %v3879 = vrot.slane %v2371, 7
      %v3880 = vrot.slane %v3879, 2
      %v3881 = vrot.slane %v2373, 7
      %v3882 = vrot.slane %v3881, 2
      %v3883 = vrot.slane %v2381, 7
      %v3884 = vrot.slane %v3883, 2
      %v3885 = vrot.slane %v2389, 7
      %v3886 = vrot.slane %v3885, 2
      %v3887 = vrot.slane %v2388, 7
      %v3888 = vrot.slane %v3887, 2
      %v3889 = vrot.slane %v2390, 7
      %v3890 = vrot.slane %v3889, 2
      %v3891 = vrot.slane %v2398, 7
      %v3892 = vrot.slane %v3891, 2
      %v3893 = vrot.slane %v2406, 7
      %v3894 = vrot.slane %v3893, 2
      %v3895 = vrot.slane %v2405, 7
      %v3896 = vrot.slane %v3895, 2
      %v3897 = vrot.slane %v2407, 7
      %v3898 = vrot.slane %v3897, 2
      %v3899 = vrot.slane %v2415, 7
      %v3900 = vrot.slane %v3899, 2
      %v3901 = vrot.slane %v2423, 7
      %v3902 = vrot.slane %v3901, 2
      %v3903 = vrot.slane %v2422, 7
      %v3904 = vrot.slane %v3903, 2
      %v3905 = vrot.slane %v2424, 7
      %v3906 = vrot.slane %v3905, 2
      %v3907 = vrot.slane %v2432, 7
      %v3908 = vrot.slane %v3907, 2
      %v3909 = vrot.slane %v2440, 7
      %v3910 = vrot.slane %v3909, 2
      %v3911 = vrot.slane %v2439, 7
      %v3912 = vrot.slane %v3911, 2
      %v3913 = vrot.slane %v2441, 7
      %v3914 = vrot.slane %v3913, 2
      %v3915 = vrot.slane %v2449, 7
      %v3916 = vrot.slane %v3915, 2
      %v3917 = vrot.slane %v2457, 7
      %v3918 = vrot.slane %v3917, 2
      %v3919 = vrot.slane %v2456, 7
      %v3920 = vrot.slane %v3919, 2
      %v3921 = vrot.slane %v2458, 7
      %v3922 = vrot.slane %v3921, 2
      %v3923 = vrot.slane %v2466, 7
      %v3924 = vrot.slane %v3923, 2
      %v3925 = vrot.slane %v2474, 7
      %v3926 = vrot.slane %v3925, 2
      %v3927 = vrot.slane %v2473, 7
      %v3928 = vrot.slane %v3927, 2
      %v3929 = vrot.slane %v2475, 7
      %v3930 = vrot.slane %v3929, 2
      %v3931 = vrot.slane %v2483, 7
      %v3932 = vrot.slane %v3931, 2
      %v3933 = vrot.slane %v2491, 7
      %v3934 = vrot.slane %v3933, 2
      %v3935 = vrot.slane %v2490, 7
      %v3936 = vrot.slane %v3935, 2
      %v3937 = vrot.slane %v2492, 7
      %v3938 = vrot.slane %v3937, 2
      %v3939 = vrot.slane %v2500, 7
      %v3940 = vrot.slane %v3939, 2
      %v3941 = vrot.slane %v2508, 7
      %v3942 = vrot.slane %v3941, 2
      %v3943 = vrot.slane %v2507, 7
      %v3944 = vrot.slane %v3943, 2
      %v3945 = vrot.slane %v2509, 7
      %v3946 = vrot.slane %v3945, 2
      %v3947 = vrot.slane %v2517, 7
      %v3948 = vrot.slane %v3947, 2
      %v3949 = vrot.slane %v2525, 7
      %v3950 = vrot.slane %v3949, 2
      %v3951 = vrot.slane %v2524, 7
      %v3952 = vrot.slane %v3951, 2
      %v3953 = vrot.slane %v2526, 7
      %v3954 = vrot.slane %v3953, 2
      %v3955 = vrot.slane %v2534, 7
      %v3956 = vrot.slane %v3955, 2
      %v3957 = vrot.slane %v2542, 7
      %v3958 = vrot.slane %v3957, 2
      %v3959 = vrot.slane %v2541, 7
      %v3960 = vrot.slane %v3959, 2
      %v3961 = vrot.slane %v2543, 7
      %v3962 = vrot.slane %v3961, 2
      %v3963 = vrot.slane %v2551, 7
      %v3964 = vrot.slane %v3963, 2
      %v3965 = vrot.slane %v2559, 7
      %v3966 = vrot.slane %v3965, 2
      %v3967 = vrot.slane %v2558, 7
      %v3968 = vrot.slane %v3967, 2
      %v3969 = vrot.slane %v2560, 7
      %v3970 = vrot.slane %v3969, 2
      %v3971 = vrot.slane %v2568, 7
      %v3972 = vrot.slane %v3971, 2
      %v3973 = vrot.slane %v2576, 7
      %v3974 = vrot.slane %v3973, 2
      %v3975 = vrot.slane %v2575, 7
      %v3976 = vrot.slane %v3975, 2
      %v3977 = vrot.slane %v2577, 7
      %v3978 = vrot.slane %v3977, 2
      %v3979 = vrot.slane %v2585, 7
      %v3980 = vrot.slane %v3979, 2
      %v3981 = vrot.slane %v2593, 7
      %v3982 = vrot.slane %v3981, 2
      %v3983 = vrot.slane %v2592, 7
      %v3984 = vrot.slane %v3983, 2
      %v3985 = vrot.slane %v2594, 7
      %v3986 = vrot.slane %v3985, 2
      %v3987 = vrot.slane %v2602, 7
      %v3988 = vrot.slane %v3987, 2
      %v3989 = vrot.slane %v2610, 7
      %v3990 = vrot.slane %v3989, 2
      %v3991 = vrot.slane %v2609, 7
      %v3992 = vrot.slane %v3991, 2
      %v3993 = vrot.slane %v2611, 7
      %v3994 = vrot.slane %v3993, 2
      %v3995 = vrot.slane %v2619, 7
      %v3996 = vrot.slane %v3995, 2
      %v3997 = vrot.slane %v2627, 7
      %v3998 = vrot.slane %v3997, 2
      %v3999 = vrot.slane %v2626, 7
      %v4000 = vrot.slane %v3999, 2
      %v4001 = vrot.slane %v2628, 7
      %v4002 = vrot.slane %v4001, 2
      %v4003 = vrot.slane %v2636, 7
      %v4004 = vrot.slane %v4003, 2
      %v4005 = vrot.slane %v2644, 7
      %v4006 = vrot.slane %v4005, 2
      %v4007 = vrot.slane %v2643, 7
      %v4008 = vrot.slane %v4007, 2
      %v4009 = vrot.slane %v2645, 7
      %v4010 = vrot.slane %v4009, 2
      %v4011 = vrot.slane %v2653, 7
      %v4012 = vrot.slane %v4011, 2
      %v4013 = vrot.slane %v2661, 7
      %v4014 = vrot.slane %v4013, 2
      %v4015 = vrot.slane %v2660, 7
      %v4016 = vrot.slane %v4015, 2
      %v4017 = vrot.slane %v2662, 7
      %v4018 = vrot.slane %v4017, 2
      %v4019 = vrot.slane %v2670, 7
      %v4020 = vrot.slane %v4019, 2
      %v4021 = vrot.slane %v2678, 7
      %v4022 = vrot.slane %v4021, 2
      %v4023 = vrot.slane %v2677, 7
      %v4024 = vrot.slane %v4023, 2
      %v4025 = vrot.slane %v2679, 7
      %v4026 = vrot.slane %v4025, 2
      %v4027 = vrot.slane %v2687, 7
      %v4028 = vrot.slane %v4027, 2
      %v4029 = vrot.slane %v2695, 7
      %v4030 = vrot.slane %v4029, 2
      %v4031 = vrot.slane %v2694, 7
      %v4032 = vrot.slane %v4031, 2
      %v4033 = vrot.slane %v2696, 7
      %v4034 = vrot.slane %v4033, 2
      %v4035 = vrot.slane %v2704, 7
      %v4036 = vrot.slane %v4035, 2
      %v4037 = vrot.slane %v2712, 7
      %v4038 = vrot.slane %v4037, 2
      %v4039 = vrot.slane %v2711, 7
      %v4040 = vrot.slane %v4039, 2
      %v4041 = vrot.slane %v2713, 7
      %v4042 = vrot.slane %v4041, 2
      %v4043 = vrot.slane %v2721, 7
      %v4044 = vrot.slane %v4043, 2
      %v4045 = vrot.slane %v2729, 7
      %v4046 = vrot.slane %v4045, 2
      %v4047 = vrot.slane %v2728, 7
      %v4048 = vrot.slane %v4047, 2
      %v4049 = vrot.slane %v2730, 7
      %v4050 = vrot.slane %v4049, 2
      %v4051 = vrot.slane %v2738, 7
      %v4052 = vrot.slane %v4051, 2
      %v4053 = vrot.slane %v2746, 7
      %v4054 = vrot.slane %v4053, 2
      %v4055 = vrot.slane %v2745, 7
      %v4056 = vrot.slane %v4055, 2
      %v4057 = vrot.slane %v2747, 7
      %v4058 = vrot.slane %v4057, 2
      %v4059 = vrot.slane %v2755, 7
      %v4060 = vrot.slane %v4059, 2
      %v4061 = vrot.slane %v2763, 7
      %v4062 = vrot.slane %v4061, 2
      %v4063 = vrot.slane %v2762, 7
      %v4064 = vrot.slane %v4063, 2
      %v4065 = vrot.slane %v2764, 7
      %v4066 = vrot.slane %v4065, 2
      %v4067 = vrot.slane %v2772, 7
      %v4068 = vrot.slane %v4067, 2
      %v4069 = vrot.slane %v2780, 7
      %v4070 = vrot.slane %v4069, 2
      %v4071 = vrot.slane %v2779, 7
      %v4072 = vrot.slane %v4071, 2
      %v4073 = vrot.slane %v2781, 7
      %v4074 = vrot.slane %v4073, 2
      %v4075 = vrot.slane %v2789, 7
      %v4076 = vrot.slane %v4075, 2
      %v4077 = vrot.slane %v2797, 7
      %v4078 = vrot.slane %v4077, 2
      %v4079 = vrot.slane %v2796, 7
      %v4080 = vrot.slane %v4079, 2
      %v4081 = vrot.slane %v2798, 7
      %v4082 = vrot.slane %v4081, 2
      %v4083 = vrot.slane %v2806, 7
      %v4084 = vrot.slane %v4083, 2
      %v4085 = vrot.slane %v2814, 7
      %v4086 = vrot.slane %v4085, 2
      %v4087 = vrot.slane %v2813, 7
      %v4088 = vrot.slane %v4087, 2
      %v4089 = vrot.slane %v2815, 7
      %v4090 = vrot.slane %v4089, 2
      %v4091 = vrot.slane %v2823, 7
      %v4092 = vrot.slane %v4091, 2
      %v4093 = vrot.slane %v2831, 7
      %v4094 = vrot.slane %v4093, 2
      %v4095 = vrot.slane %v2830, 7
      %v4096 = vrot.slane %v4095, 2
      %v4097 = vrot.slane %v2832, 7
      %v4098 = vrot.slane %v4097, 2
      %v4099 = vrot.slane %v2840, 7
      %v4100 = vrot.slane %v4099, 2
      %v4101 = vrot.slane %v2848, 7
      %v4102 = vrot.slane %v4101, 2
      %v4103 = vrot.slane %v2847, 7
      %v4104 = vrot.slane %v4103, 2
      %v4105 = vrot.slane %v2849, 7
      %v4106 = vrot.slane %v4105, 2
      %v4107 = vrot.slane %v2857, 7
      %v4108 = vrot.slane %v4107, 2
      %v4109 = vrot.slane %v2865, 7
      %v4110 = vrot.slane %v4109, 2
      %v4111 = vrot.slane %v2864, 7
      %v4112 = vrot.slane %v4111, 2
      %v4113 = vrot.slane %v2866, 7
      %v4114 = vrot.slane %v4113, 2
      %v4115 = vrot.slane %v2874, 7
      %v4116 = vrot.slane %v4115, 2
      %v4117 = vrot.slane %v2882, 7
      %v4118 = vrot.slane %v4117, 2
      %v4119 = vrot.slane %v2881, 7
      %v4120 = vrot.slane %v4119, 2
      %v4121 = vrot.slane %v2883, 7
      %v4122 = vrot.slane %v4121, 2
      %v4123 = vrot.slane %v2891, 7
      %v4124 = vrot.slane %v4123, 2
      %v4125 = vrot.slane %v2899, 7
      %v4126 = vrot.slane %v4125, 2
      %v4127 = vrot.slane %v2898, 7
      %v4128 = vrot.slane %v4127, 2
      %v4129 = vrot.slane %v2900, 7
      %v4130 = vrot.slane %v4129, 2
      %v4131 = vrot.slane %v2908, 7
      %v4132 = vrot.slane %v4131, 2
      %v4133 = vrot.slane %v2916, 7
      %v4134 = vrot.slane %v4133, 2
      %v4135 = vrot.slane %v2915, 7
      %v4136 = vrot.slane %v4135, 2
      %v4137 = vrot.slane %v2917, 7
      %v4138 = vrot.slane %v4137, 2
      %v4139 = vrot.slane %v2925, 7
      %v4140 = vrot.slane %v4139, 2
      %v4141 = vrot.slane %v2933, 7
      %v4142 = vrot.slane %v4141, 2
      %v4143 = vrot.slane %v2932, 7
      %v4144 = vrot.slane %v4143, 2
      %v4145 = vrot.slane %v2934, 7
      %v4146 = vrot.slane %v4145, 2
      %v4147 = vrot.slane %v2942, 7
      %v4148 = vrot.slane %v4147, 2
      %v4149 = vrot.slane %v2950, 7
      %v4150 = vrot.slane %v4149, 2
      %v4151 = vrot.slane %v2949, 7
      %v4152 = vrot.slane %v4151, 2
      %v4153 = vrot.slane %v2951, 7
      %v4154 = vrot.slane %v4153, 2
      %v4155 = vrot.slane %v2959, 7
      %v4156 = vrot.slane %v4155, 2
      %v4157 = vrot.slane %v2967, 7
      %v4158 = vrot.slane %v4157, 2
      %v4159 = vrot.slane %v2966, 7
      %v4160 = vrot.slane %v4159, 2
      %v4161 = vrot.slane %v2968, 7
      %v4162 = vrot.slane %v4161, 2
      %v4163 = vrot.slane %v2976, 7
      %v4164 = vrot.slane %v4163, 2
      %v4165 = vrot.slane %v2984, 7
      %v4166 = vrot.slane %v4165, 2
      %v4167 = vrot.slane %v2983, 7
      %v4168 = vrot.slane %v4167, 2
      %v4169 = vrot.slane %v2985, 7
      %v4170 = vrot.slane %v4169, 2
      %v4171 = vrot.slane %v2993, 7
      %v4172 = vrot.slane %v4171, 2
      %v4173 = vrot.slane %v3001, 7
      %v4174 = vrot.slane %v4173, 2
      %v4175 = vrot.slane %v3000, 7
      %v4176 = vrot.slane %v4175, 2
      %v4177 = vrot.slane %v3002, 7
      %v4178 = vrot.slane %v4177, 2
      %v4571 = vmax.f32 %v1344, %v3396
      %v4572 = vmax.f32 %v1352, %v3398
      %v4573 = vmax.f32 %v1351, %v3400
      %v4574 = vmax.f32 %v1353, %v3402
      %v4575 = vmax.f32 %v1361, %v3404
      %v4576 = vmax.f32 %v1369, %v3406
      %v4577 = vmax.f32 %v1368, %v3408
      %v4578 = vmax.f32 %v1370, %v3410
      %v4579 = vmax.f32 %v1378, %v3412
      %v4580 = vmax.f32 %v1386, %v3414
      %v4581 = vmax.f32 %v1385, %v3416
      %v4582 = vmax.f32 %v1387, %v3418
      %v4583 = vmax.f32 %v1395, %v3420
      %v4584 = vmax.f32 %v1403, %v3422
      %v4585 = vmax.f32 %v1402, %v3424
      %v4586 = vmax.f32 %v1404, %v3426
      %v4587 = vmax.f32 %v1412, %v3428
      %v4588 = vmax.f32 %v1420, %v3430
      %v4589 = vmax.f32 %v1419, %v3432
      %v4590 = vmax.f32 %v1421, %v3434
      %v4591 = vmax.f32 %v1429, %v3436
      %v4592 = vmax.f32 %v1437, %v3438
      %v4593 = vmax.f32 %v1436, %v3440
      %v4594 = vmax.f32 %v1438, %v3442
      %v4595 = vmax.f32 %v1446, %v3444
      %v4596 = vmax.f32 %v1454, %v3446
      %v4597 = vmax.f32 %v1453, %v3448
      %v4598 = vmax.f32 %v1455, %v3450
      %v4599 = vmax.f32 %v1463, %v3452
      %v4600 = vmax.f32 %v1471, %v3454
      %v4601 = vmax.f32 %v1470, %v3456
      %v4602 = vmax.f32 %v1472, %v3458
      %v4603 = vmax.f32 %v1480, %v3460
      %v4604 = vmax.f32 %v1488, %v3462
      %v4605 = vmax.f32 %v1487, %v3464
      %v4606 = vmax.f32 %v1489, %v3466
      %v4607 = vmax.f32 %v1497, %v3468
      %v4608 = vmax.f32 %v1505, %v3470
      %v4609 = vmax.f32 %v1504, %v3472
      %v4610 = vmax.f32 %v1506, %v3474
      %v4611 = vmax.f32 %v1514, %v3476
      %v4612 = vmax.f32 %v1522, %v3478
      %v4613 = vmax.f32 %v1521, %v3480
      %v4614 = vmax.f32 %v1523, %v3482
      %v4615 = vmax.f32 %v1531, %v3484
      %v4616 = vmax.f32 %v1539, %v3486
      %v4617 = vmax.f32 %v1538, %v3488
      %v4618 = vmax.f32 %v1540, %v3490
      %v4619 = vmax.f32 %v1548, %v3492
      %v4620 = vmax.f32 %v1556, %v3494
      %v4621 = vmax.f32 %v1555, %v3496
      %v4622 = vmax.f32 %v1557, %v3498
      %v4623 = vmax.f32 %v1565, %v3500
      %v4624 = vmax.f32 %v1573, %v3502
      %v4625 = vmax.f32 %v1572, %v3504
      %v4626 = vmax.f32 %v1574, %v3506
      %v4627 = vmax.f32 %v1582, %v3508
      %v4628 = vmax.f32 %v1590, %v3510
      %v4629 = vmax.f32 %v1589, %v3512
      %v4630 = vmax.f32 %v1591, %v3514
      %v4631 = vmax.f32 %v1599, %v3516
      %v4632 = vmax.f32 %v1607, %v3518
      %v4633 = vmax.f32 %v1606, %v3520
      %v4634 = vmax.f32 %v1608, %v3522
      %v4635 = vmax.f32 %v1616, %v3524
      %v4636 = vmax.f32 %v1624, %v3526
      %v4637 = vmax.f32 %v1623, %v3528
      %v4638 = vmax.f32 %v1625, %v3530
      %v4639 = vmax.f32 %v1633, %v3532
      %v4640 = vmax.f32 %v1641, %v3534
      %v4641 = vmax.f32 %v1640, %v3536
      %v4642 = vmax.f32 %v1642, %v3538
      %v4643 = vmax.f32 %v1650, %v3540
      %v4644 = vmax.f32 %v1658, %v3542
      %v4645 = vmax.f32 %v1657, %v3544
      %v4646 = vmax.f32 %v1659, %v3546
      %v4647 = vmax.f32 %v1667, %v3548
      %v4648 = vmax.f32 %v1675, %v3550
      %v4649 = vmax.f32 %v1674, %v3552
      %v4650 = vmax.f32 %v1676, %v3554
      %v4651 = vmax.f32 %v1684, %v3556
      %v4652 = vmax.f32 %v1692, %v3558
      %v4653 = vmax.f32 %v1691, %v3560
      %v4654 = vmax.f32 %v1693, %v3562
      %v4655 = vmax.f32 %v1701, %v3564
      %v4656 = vmax.f32 %v1709, %v3566
      %v4657 = vmax.f32 %v1708, %v3568
      %v4658 = vmax.f32 %v1710, %v3570
      %v4659 = vmax.f32 %v1718, %v3572
      %v4660 = vmax.f32 %v1726, %v3574
      %v4661 = vmax.f32 %v1725, %v3576
      %v4662 = vmax.f32 %v1727, %v3578
      %v4663 = vmax.f32 %v1735, %v3580
      %v4664 = vmax.f32 %v1743, %v3582
      %v4665 = vmax.f32 %v1742, %v3584
      %v4666 = vmax.f32 %v1744, %v3586
      %v4667 = vmax.f32 %v1752, %v3588
      %v4668 = vmax.f32 %v1760, %v3590
      %v4669 = vmax.f32 %v1759, %v3592
      %v4670 = vmax.f32 %v1761, %v3594
      %v4671 = vmax.f32 %v1769, %v3596
      %v4672 = vmax.f32 %v1777, %v3598
      %v4673 = vmax.f32 %v1776, %v3600
      %v4674 = vmax.f32 %v1778, %v3602
      %v4675 = vmax.f32 %v1786, %v3604
      %v4676 = vmax.f32 %v1794, %v3606
      %v4677 = vmax.f32 %v1793, %v3608
      %v4678 = vmax.f32 %v1795, %v3610
      %v4679 = vmax.f32 %v1803, %v3612
      %v4680 = vmax.f32 %v1811, %v3614
      %v4681 = vmax.f32 %v1810, %v3616
      %v4682 = vmax.f32 %v1812, %v3618
      %v4683 = vmax.f32 %v1820, %v3620
      %v4684 = vmax.f32 %v1828, %v3622
      %v4685 = vmax.f32 %v1827, %v3624
      %v4686 = vmax.f32 %v1829, %v3626
      %v4687 = vmax.f32 %v1837, %v3628
      %v4688 = vmax.f32 %v1845, %v3630
      %v4689 = vmax.f32 %v1844, %v3632
      %v4690 = vmax.f32 %v1846, %v3634
      %v4691 = vmax.f32 %v1854, %v3636
      %v4692 = vmax.f32 %v1862, %v3638
      %v4693 = vmax.f32 %v1861, %v3640
      %v4694 = vmax.f32 %v1863, %v3642
      %v4695 = vmax.f32 %v1871, %v3644
      %v4696 = vmax.f32 %v1879, %v3646
      %v4697 = vmax.f32 %v1878, %v3648
      %v4698 = vmax.f32 %v1880, %v3650
      %v4699 = vmax.f32 %v1888, %v3652
      %v4700 = vmax.f32 %v1896, %v3654
      %v4701 = vmax.f32 %v1895, %v3656
      %v4702 = vmax.f32 %v1897, %v3658
      %v4703 = vmax.f32 %v1905, %v3660
      %v4704 = vmax.f32 %v1913, %v3662
      %v4705 = vmax.f32 %v1912, %v3664
      %v4706 = vmax.f32 %v1914, %v3666
      %v4707 = vmax.f32 %v1922, %v3668
      %v4708 = vmax.f32 %v1930, %v3670
      %v4709 = vmax.f32 %v1929, %v3672
      %v4710 = vmax.f32 %v1931, %v3674
      %v4711 = vmax.f32 %v1939, %v3676
      %v4712 = vmax.f32 %v1947, %v3678
      %v4713 = vmax.f32 %v1946, %v3680
      %v4714 = vmax.f32 %v1948, %v3682
      %v4715 = vmax.f32 %v1956, %v3684
      %v4716 = vmax.f32 %v1964, %v3686
      %v4717 = vmax.f32 %v1963, %v3688
      %v4718 = vmax.f32 %v1965, %v3690
      %v4719 = vmax.f32 %v1973, %v3692
      %v4720 = vmax.f32 %v1981, %v3694
      %v4721 = vmax.f32 %v1980, %v3696
      %v4722 = vmax.f32 %v1982, %v3698
      %v4723 = vmax.f32 %v1990, %v3700
      %v4724 = vmax.f32 %v1998, %v3702
      %v4725 = vmax.f32 %v1997, %v3704
      %v4726 = vmax.f32 %v1999, %v3706
      %v4727 = vmax.f32 %v2007, %v3708
      %v4728 = vmax.f32 %v2015, %v3710
      %v4729 = vmax.f32 %v2014, %v3712
      %v4730 = vmax.f32 %v2016, %v3714
      %v4731 = vmax.f32 %v2024, %v3716
      %v4732 = vmax.f32 %v2032, %v3718
      %v4733 = vmax.f32 %v2031, %v3720
      %v4734 = vmax.f32 %v2033, %v3722
      %v4735 = vmax.f32 %v2041, %v3724
      %v4736 = vmax.f32 %v2049, %v3726
      %v4737 = vmax.f32 %v2048, %v3728
      %v4738 = vmax.f32 %v2050, %v3730
      %v4739 = vmax.f32 %v2058, %v3732
      %v4740 = vmax.f32 %v2066, %v3734
      %v4741 = vmax.f32 %v2065, %v3736
      %v4742 = vmax.f32 %v2067, %v3738
      %v4743 = vmax.f32 %v2075, %v3740
      %v4744 = vmax.f32 %v2083, %v3742
      %v4745 = vmax.f32 %v2082, %v3744
      %v4746 = vmax.f32 %v2084, %v3746
      %v4747 = vmax.f32 %v2092, %v3748
      %v4748 = vmax.f32 %v2100, %v3750
      %v4749 = vmax.f32 %v2099, %v3752
      %v4750 = vmax.f32 %v2101, %v3754
      %v4751 = vmax.f32 %v2109, %v3756
      %v4752 = vmax.f32 %v2117, %v3758
      %v4753 = vmax.f32 %v2116, %v3760
      %v4754 = vmax.f32 %v2118, %v3762
      %v4755 = vmax.f32 %v2126, %v3764
      %v4756 = vmax.f32 %v2134, %v3766
      %v4757 = vmax.f32 %v2133, %v3768
      %v4758 = vmax.f32 %v2135, %v3770
      %v4759 = vmax.f32 %v2143, %v3772
      %v4760 = vmax.f32 %v2151, %v3774
      %v4761 = vmax.f32 %v2150, %v3776
      %v4762 = vmax.f32 %v2152, %v3778
      %v4763 = vmax.f32 %v2160, %v3780
      %v4764 = vmax.f32 %v2168, %v3782
      %v4765 = vmax.f32 %v2167, %v3784
      %v4766 = vmax.f32 %v2169, %v3786
      %v4767 = vmax.f32 %v2177, %v3788
      %v4768 = vmax.f32 %v2185, %v3790
      %v4769 = vmax.f32 %v2184, %v3792
      %v4770 = vmax.f32 %v2186, %v3794
      %v4771 = vmax.f32 %v2194, %v3796
      %v4772 = vmax.f32 %v2202, %v3798
      %v4773 = vmax.f32 %v2201, %v3800
      %v4774 = vmax.f32 %v2203, %v3802
      %v4775 = vmax.f32 %v2211, %v3804
      %v4776 = vmax.f32 %v2219, %v3806
      %v4777 = vmax.f32 %v2218, %v3808
      %v4778 = vmax.f32 %v2220, %v3810
      %v4779 = vmax.f32 %v2228, %v3812
      %v4780 = vmax.f32 %v2236, %v3814
      %v4781 = vmax.f32 %v2235, %v3816
      %v4782 = vmax.f32 %v2237, %v3818
      %v4783 = vmax.f32 %v2245, %v3820
      %v4784 = vmax.f32 %v2253, %v3822
      %v4785 = vmax.f32 %v2252, %v3824
      %v4786 = vmax.f32 %v2254, %v3826
      %v4787 = vmax.f32 %v2262, %v3828
      %v4788 = vmax.f32 %v2270, %v3830
      %v4789 = vmax.f32 %v2269, %v3832
      %v4790 = vmax.f32 %v2271, %v3834
      %v4791 = vmax.f32 %v2279, %v3836
      %v4792 = vmax.f32 %v2287, %v3838
      %v4793 = vmax.f32 %v2286, %v3840
      %v4794 = vmax.f32 %v2288, %v3842
      %v4795 = vmax.f32 %v2296, %v3844
      %v4796 = vmax.f32 %v2304, %v3846
      %v4797 = vmax.f32 %v2303, %v3848
      %v4798 = vmax.f32 %v2305, %v3850
      %v4799 = vmax.f32 %v2313, %v3852
      %v4800 = vmax.f32 %v2321, %v3854
      %v4801 = vmax.f32 %v2320, %v3856
      %v4802 = vmax.f32 %v2322, %v3858
      %v4803 = vmax.f32 %v2330, %v3860
      %v4804 = vmax.f32 %v2338, %v3862
      %v4805 = vmax.f32 %v2337, %v3864
      %v4806 = vmax.f32 %v2339, %v3866
      %v4807 = vmax.f32 %v2347, %v3868
      %v4808 = vmax.f32 %v2355, %v3870
      %v4809 = vmax.f32 %v2354, %v3872
      %v4810 = vmax.f32 %v2356, %v3874
      %v4811 = vmax.f32 %v2364, %v3876
      %v4812 = vmax.f32 %v2372, %v3878
      %v4813 = vmax.f32 %v2371, %v3880
      %v4814 = vmax.f32 %v2373, %v3882
      %v4815 = vmax.f32 %v2381, %v3884
      %v4816 = vmax.f32 %v2389, %v3886
      %v4817 = vmax.f32 %v2388, %v3888
      %v4818 = vmax.f32 %v2390, %v3890
      %v4819 = vmax.f32 %v2398, %v3892
      %v4820 = vmax.f32 %v2406, %v3894
      %v4821 = vmax.f32 %v2405, %v3896
      %v4822 = vmax.f32 %v2407, %v3898
      %v4823 = vmax.f32 %v2415, %v3900
      %v4824 = vmax.f32 %v2423, %v3902
      %v4825 = vmax.f32 %v2422, %v3904
      %v4826 = vmax.f32 %v2424, %v3906
      %v4827 = vmax.f32 %v2432, %v3908
      %v4828 = vmax.f32 %v2440, %v3910
      %v4829 = vmax.f32 %v2439, %v3912
      %v4830 = vmax.f32 %v2441, %v3914
      %v4831 = vmax.f32 %v2449, %v3916
      %v4832 = vmax.f32 %v2457, %v3918
      %v4833 = vmax.f32 %v2456, %v3920
      %v4834 = vmax.f32 %v2458, %v3922
      %v4835 = vmax.f32 %v2466, %v3924
      %v4836 = vmax.f32 %v2474, %v3926
      %v4837 = vmax.f32 %v2473, %v3928
      %v4838 = vmax.f32 %v2475, %v3930
      %v4839 = vmax.f32 %v2483, %v3932
      %v4840 = vmax.f32 %v2491, %v3934
      %v4841 = vmax.f32 %v2490, %v3936
      %v4842 = vmax.f32 %v2492, %v3938
      %v4843 = vmax.f32 %v2500, %v3940
      %v4844 = vmax.f32 %v2508, %v3942
      %v4845 = vmax.f32 %v2507, %v3944
      %v4846 = vmax.f32 %v2509, %v3946
      %v4847 = vmax.f32 %v2517, %v3948
      %v4848 = vmax.f32 %v2525, %v3950
      %v4849 = vmax.f32 %v2524, %v3952
      %v4850 = vmax.f32 %v2526, %v3954
      %v4851 = vmax.f32 %v2534, %v3956
      %v4852 = vmax.f32 %v2542, %v3958
      %v4853 = vmax.f32 %v2541, %v3960
      %v4854 = vmax.f32 %v2543, %v3962
      %v4855 = vmax.f32 %v2551, %v3964
      %v4856 = vmax.f32 %v2559, %v3966
      %v4857 = vmax.f32 %v2558, %v3968
      %v4858 = vmax.f32 %v2560, %v3970
      %v4859 = vmax.f32 %v2568, %v3972
      %v4860 = vmax.f32 %v2576, %v3974
      %v4861 = vmax.f32 %v2575, %v3976
      %v4862 = vmax.f32 %v2577, %v3978
      %v4863 = vmax.f32 %v2585, %v3980
      %v4864 = vmax.f32 %v2593, %v3982
      %v4865 = vmax.f32 %v2592, %v3984
      %v4866 = vmax.f32 %v2594, %v3986
      %v4867 = vmax.f32 %v2602, %v3988
      %v4868 = vmax.f32 %v2610, %v3990
      %v4869 = vmax.f32 %v2609, %v3992
      %v4870 = vmax.f32 %v2611, %v3994
      %v4871 = vmax.f32 %v2619, %v3996
      %v4872 = vmax.f32 %v2627, %v3998
      %v4873 = vmax.f32 %v2626, %v4000
      %v4874 = vmax.f32 %v2628, %v4002
      %v4875 = vmax.f32 %v2636, %v4004
      %v4876 = vmax.f32 %v2644, %v4006
      %v4877 = vmax.f32 %v2643, %v4008
      %v4878 = vmax.f32 %v2645, %v4010
      %v4879 = vmax.f32 %v2653, %v4012
      %v4880 = vmax.f32 %v2661, %v4014
      %v4881 = vmax.f32 %v2660, %v4016
      %v4882 = vmax.f32 %v2662, %v4018
      %v4883 = vmax.f32 %v2670, %v4020
      %v4884 = vmax.f32 %v2678, %v4022
      %v4885 = vmax.f32 %v2677, %v4024
      %v4886 = vmax.f32 %v2679, %v4026
      %v4887 = vmax.f32 %v2687, %v4028
      %v4888 = vmax.f32 %v2695, %v4030
      %v4889 = vmax.f32 %v2694, %v4032
      %v4890 = vmax.f32 %v2696, %v4034
      %v4891 = vmax.f32 %v2704, %v4036
      %v4892 = vmax.f32 %v2712, %v4038
      %v4893 = vmax.f32 %v2711, %v4040
      %v4894 = vmax.f32 %v2713, %v4042
      %v4895 = vmax.f32 %v2721, %v4044
      %v4896 = vmax.f32 %v2729, %v4046
      %v4897 = vmax.f32 %v2728, %v4048
      %v4898 = vmax.f32 %v2730, %v4050
      %v4899 = vmax.f32 %v2738, %v4052
      %v4900 = vmax.f32 %v2746, %v4054
      %v4901 = vmax.f32 %v2745, %v4056
      %v4902 = vmax.f32 %v2747, %v4058
      %v4903 = vmax.f32 %v2755, %v4060
      %v4904 = vmax.f32 %v2763, %v4062
      %v4905 = vmax.f32 %v2762, %v4064
      %v4906 = vmax.f32 %v2764, %v4066
      %v4907 = vmax.f32 %v2772, %v4068
      %v4908 = vmax.f32 %v2780, %v4070
      %v4909 = vmax.f32 %v2779, %v4072
      %v4910 = vmax.f32 %v2781, %v4074
      %v4911 = vmax.f32 %v2789, %v4076
      %v4912 = vmax.f32 %v2797, %v4078
      %v4913 = vmax.f32 %v2796, %v4080
      %v4914 = vmax.f32 %v2798, %v4082
      %v4915 = vmax.f32 %v2806, %v4084
      %v4916 = vmax.f32 %v2814, %v4086
      %v4917 = vmax.f32 %v2813, %v4088
      %v4918 = vmax.f32 %v2815, %v4090
      %v4919 = vmax.f32 %v2823, %v4092
      %v4920 = vmax.f32 %v2831, %v4094
      %v4921 = vmax.f32 %v2830, %v4096
      %v4922 = vmax.f32 %v2832, %v4098
      %v4923 = vmax.f32 %v2840, %v4100
      %v4924 = vmax.f32 %v2848, %v4102
      %v4925 = vmax.f32 %v2847, %v4104
      %v4926 = vmax.f32 %v2849, %v4106
      %v4927 = vmax.f32 %v2857, %v4108
      %v4928 = vmax.f32 %v2865, %v4110
      %v4929 = vmax.f32 %v2864, %v4112
      %v4930 = vmax.f32 %v2866, %v4114
      %v4931 = vmax.f32 %v2874, %v4116
      %v4932 = vmax.f32 %v2882, %v4118
      %v4933 = vmax.f32 %v2881, %v4120
      %v4934 = vmax.f32 %v2883, %v4122
      %v4935 = vmax.f32 %v2891, %v4124
      %v4936 = vmax.f32 %v2899, %v4126
      %v4937 = vmax.f32 %v2898, %v4128
      %v4938 = vmax.f32 %v2900, %v4130
      %v4939 = vmax.f32 %v2908, %v4132
      %v4940 = vmax.f32 %v2916, %v4134
      %v4941 = vmax.f32 %v2915, %v4136
      %v4942 = vmax.f32 %v2917, %v4138
      %v4943 = vmax.f32 %v2925, %v4140
      %v4944 = vmax.f32 %v2933, %v4142
      %v4945 = vmax.f32 %v2932, %v4144
      %v4946 = vmax.f32 %v2934, %v4146
      %v4947 = vmax.f32 %v2942, %v4148
      %v4948 = vmax.f32 %v2950, %v4150
      %v4949 = vmax.f32 %v2949, %v4152
      %v4950 = vmax.f32 %v2951, %v4154
      %v4951 = vmax.f32 %v2959, %v4156
      %v4952 = vmax.f32 %v2967, %v4158
      %v4953 = vmax.f32 %v2966, %v4160
      %v4954 = vmax.f32 %v2968, %v4162
      %v4955 = vmax.f32 %v2976, %v4164
      %v4956 = vmax.f32 %v2984, %v4166
      %v4957 = vmax.f32 %v2983, %v4168
      %v4958 = vmax.f32 %v2985, %v4170
      %v4959 = vmax.f32 %v2993, %v4172
      %v4960 = vmax.f32 %v3001, %v4174
      %v4961 = vmax.f32 %v3000, %v4176
      %v4962 = vmax.f32 %v3002, %v4178
      %v4963 = vmax.f32 %v4571, %v4585
      %v4964 = vmax.f32 %v4572, %v4586
      %v4965 = vmax.f32 %v4573, %v4587
      %v4966 = vmax.f32 %v4574, %v4588
      %v4967 = vmax.f32 %v4575, %v4589
      %v4968 = vmax.f32 %v4576, %v4590
      %v4969 = vmax.f32 %v4577, %v4591
      %v4970 = vmax.f32 %v4578, %v4592
      %v4971 = vmax.f32 %v4579, %v4593
      %v4972 = vmax.f32 %v4580, %v4594
      %v4973 = vmax.f32 %v4581, %v4595
      %v4974 = vmax.f32 %v4582, %v4596
      %v4975 = vmax.f32 %v4583, %v4597
      %v4976 = vmax.f32 %v4584, %v4598
      %v4977 = vmax.f32 %v4599, %v4613
      %v4978 = vmax.f32 %v4600, %v4614
      %v4979 = vmax.f32 %v4601, %v4615
      %v4980 = vmax.f32 %v4602, %v4616
      %v4981 = vmax.f32 %v4603, %v4617
      %v4982 = vmax.f32 %v4604, %v4618
      %v4983 = vmax.f32 %v4605, %v4619
      %v4984 = vmax.f32 %v4606, %v4620
      %v4985 = vmax.f32 %v4607, %v4621
      %v4986 = vmax.f32 %v4608, %v4622
      %v4987 = vmax.f32 %v4609, %v4623
      %v4988 = vmax.f32 %v4610, %v4624
      %v4989 = vmax.f32 %v4611, %v4625
      %v4990 = vmax.f32 %v4612, %v4626
      %v4991 = vmax.f32 %v4627, %v4641
      %v4992 = vmax.f32 %v4628, %v4642
      %v4993 = vmax.f32 %v4629, %v4643
      %v4994 = vmax.f32 %v4630, %v4644
      %v4995 = vmax.f32 %v4631, %v4645
      %v4996 = vmax.f32 %v4632, %v4646
      %v4997 = vmax.f32 %v4633, %v4647
      %v4998 = vmax.f32 %v4634, %v4648
      %v4999 = vmax.f32 %v4635, %v4649
      %v5000 = vmax.f32 %v4636, %v4650
      %v5001 = vmax.f32 %v4637, %v4651
      %v5002 = vmax.f32 %v4638, %v4652
      %v5003 = vmax.f32 %v4639, %v4653
      %v5004 = vmax.f32 %v4640, %v4654
      %v5005 = vmax.f32 %v4655, %v4669
      %v5006 = vmax.f32 %v4656, %v4670
      %v5007 = vmax.f32 %v4657, %v4671
      %v5008 = vmax.f32 %v4658, %v4672
      %v5009 = vmax.f32 %v4659, %v4673
      %v5010 = vmax.f32 %v4660, %v4674
      %v5011 = vmax.f32 %v4661, %v4675
      %v5012 = vmax.f32 %v4662, %v4676
      %v5013 = vmax.f32 %v4663, %v4677
      %v5014 = vmax.f32 %v4664, %v4678
      %v5015 = vmax.f32 %v4665, %v4679
      %v5016 = vmax.f32 %v4666, %v4680
      %v5017 = vmax.f32 %v4667, %v4681
      %v5018 = vmax.f32 %v4668, %v4682
      %v5019 = vmax.f32 %v4683, %v4697
      %v5020 = vmax.f32 %v4684, %v4698
      %v5021 = vmax.f32 %v4685, %v4699
      %v5022 = vmax.f32 %v4686, %v4700
      %v5023 = vmax.f32 %v4687, %v4701
      %v5024 = vmax.f32 %v4688, %v4702
      %v5025 = vmax.f32 %v4689, %v4703
      %v5026 = vmax.f32 %v4690, %v4704
      %v5027 = vmax.f32 %v4691, %v4705
      %v5028 = vmax.f32 %v4692, %v4706
      %v5029 = vmax.f32 %v4693, %v4707
      %v5030 = vmax.f32 %v4694, %v4708
      %v5031 = vmax.f32 %v4695, %v4709
      %v5032 = vmax.f32 %v4696, %v4710
      %v5033 = vmax.f32 %v4711, %v4725
      %v5034 = vmax.f32 %v4712, %v4726
      %v5035 = vmax.f32 %v4713, %v4727
      %v5036 = vmax.f32 %v4714, %v4728
      %v5037 = vmax.f32 %v4715, %v4729
      %v5038 = vmax.f32 %v4716, %v4730
      %v5039 = vmax.f32 %v4717, %v4731
      %v5040 = vmax.f32 %v4718, %v4732
      %v5041 = vmax.f32 %v4719, %v4733
      %v5042 = vmax.f32 %v4720, %v4734
      %v5043 = vmax.f32 %v4721, %v4735
      %v5044 = vmax.f32 %v4722, %v4736
      %v5045 = vmax.f32 %v4723, %v4737
      %v5046 = vmax.f32 %v4724, %v4738
      %v5047 = vmax.f32 %v4739, %v4753
      %v5048 = vmax.f32 %v4740, %v4754
      %v5049 = vmax.f32 %v4741, %v4755
      %v5050 = vmax.f32 %v4742, %v4756
      %v5051 = vmax.f32 %v4743, %v4757
      %v5052 = vmax.f32 %v4744, %v4758
      %v5053 = vmax.f32 %v4745, %v4759
      %v5054 = vmax.f32 %v4746, %v4760
      %v5055 = vmax.f32 %v4747, %v4761
      %v5056 = vmax.f32 %v4748, %v4762
      %v5057 = vmax.f32 %v4749, %v4763
      %v5058 = vmax.f32 %v4750, %v4764
      %v5059 = vmax.f32 %v4751, %v4765
      %v5060 = vmax.f32 %v4752, %v4766
      %v5061 = vmax.f32 %v4767, %v4781
      %v5062 = vmax.f32 %v4768, %v4782
      %v5063 = vmax.f32 %v4769, %v4783
      %v5064 = vmax.f32 %v4770, %v4784
      %v5065 = vmax.f32 %v4771, %v4785
      %v5066 = vmax.f32 %v4772, %v4786
      %v5067 = vmax.f32 %v4773, %v4787
      %v5068 = vmax.f32 %v4774, %v4788
      %v5069 = vmax.f32 %v4775, %v4789
      %v5070 = vmax.f32 %v4776, %v4790
      %v5071 = vmax.f32 %v4777, %v4791
      %v5072 = vmax.f32 %v4778, %v4792
      %v5073 = vmax.f32 %v4779, %v4793
      %v5074 = vmax.f32 %v4780, %v4794
      %v5075 = vmax.f32 %v4795, %v4809
      %v5076 = vmax.f32 %v4796, %v4810
      %v5077 = vmax.f32 %v4797, %v4811
      %v5078 = vmax.f32 %v4798, %v4812
      %v5079 = vmax.f32 %v4799, %v4813
      %v5080 = vmax.f32 %v4800, %v4814
      %v5081 = vmax.f32 %v4801, %v4815
      %v5082 = vmax.f32 %v4802, %v4816
      %v5083 = vmax.f32 %v4803, %v4817
      %v5084 = vmax.f32 %v4804, %v4818
      %v5085 = vmax.f32 %v4805, %v4819
      %v5086 = vmax.f32 %v4806, %v4820
      %v5087 = vmax.f32 %v4807, %v4821
      %v5088 = vmax.f32 %v4808, %v4822
      %v5089 = vmax.f32 %v4823, %v4837
      %v5090 = vmax.f32 %v4824, %v4838
      %v5091 = vmax.f32 %v4825, %v4839
      %v5092 = vmax.f32 %v4826, %v4840
      %v5093 = vmax.f32 %v4827, %v4841
      %v5094 = vmax.f32 %v4828, %v4842
      %v5095 = vmax.f32 %v4829, %v4843
      %v5096 = vmax.f32 %v4830, %v4844
      %v5097 = vmax.f32 %v4831, %v4845
      %v5098 = vmax.f32 %v4832, %v4846
      %v5099 = vmax.f32 %v4833, %v4847
      %v5100 = vmax.f32 %v4834, %v4848
      %v5101 = vmax.f32 %v4835, %v4849
      %v5102 = vmax.f32 %v4836, %v4850
      %v5103 = vmax.f32 %v4851, %v4865
      %v5104 = vmax.f32 %v4852, %v4866
      %v5105 = vmax.f32 %v4853, %v4867
      %v5106 = vmax.f32 %v4854, %v4868
      %v5107 = vmax.f32 %v4855, %v4869
      %v5108 = vmax.f32 %v4856, %v4870
      %v5109 = vmax.f32 %v4857, %v4871
      %v5110 = vmax.f32 %v4858, %v4872
      %v5111 = vmax.f32 %v4859, %v4873
      %v5112 = vmax.f32 %v4860, %v4874
      %v5113 = vmax.f32 %v4861, %v4875
      %v5114 = vmax.f32 %v4862, %v4876
      %v5115 = vmax.f32 %v4863, %v4877
      %v5116 = vmax.f32 %v4864, %v4878
      %v5117 = vmax.f32 %v4879, %v4893
      %v5118 = vmax.f32 %v4880, %v4894
      %v5119 = vmax.f32 %v4881, %v4895
      %v5120 = vmax.f32 %v4882, %v4896
      %v5121 = vmax.f32 %v4883, %v4897
      %v5122 = vmax.f32 %v4884, %v4898
      %v5123 = vmax.f32 %v4885, %v4899
      %v5124 = vmax.f32 %v4886, %v4900
      %v5125 = vmax.f32 %v4887, %v4901
      %v5126 = vmax.f32 %v4888, %v4902
      %v5127 = vmax.f32 %v4889, %v4903
      %v5128 = vmax.f32 %v4890, %v4904
      %v5129 = vmax.f32 %v4891, %v4905
      %v5130 = vmax.f32 %v4892, %v4906
      %v5131 = vmax.f32 %v4907, %v4921
      %v5132 = vmax.f32 %v4908, %v4922
      %v5133 = vmax.f32 %v4909, %v4923
      %v5134 = vmax.f32 %v4910, %v4924
      %v5135 = vmax.f32 %v4911, %v4925
      %v5136 = vmax.f32 %v4912, %v4926
      %v5137 = vmax.f32 %v4913, %v4927
      %v5138 = vmax.f32 %v4914, %v4928
      %v5139 = vmax.f32 %v4915, %v4929
      %v5140 = vmax.f32 %v4916, %v4930
      %v5141 = vmax.f32 %v4917, %v4931
      %v5142 = vmax.f32 %v4918, %v4932
      %v5143 = vmax.f32 %v4919, %v4933
      %v5144 = vmax.f32 %v4920, %v4934
      %v5145 = vmax.f32 %v4935, %v4949
      %v5146 = vmax.f32 %v4936, %v4950
      %v5147 = vmax.f32 %v4937, %v4951
      %v5148 = vmax.f32 %v4938, %v4952
      %v5149 = vmax.f32 %v4939, %v4953
      %v5150 = vmax.f32 %v4940, %v4954
      %v5151 = vmax.f32 %v4941, %v4955
      %v5152 = vmax.f32 %v4942, %v4956
      %v5153 = vmax.f32 %v4943, %v4957
      %v5154 = vmax.f32 %v4944, %v4958
      %v5155 = vmax.f32 %v4945, %v4959
      %v5156 = vmax.f32 %v4946, %v4960
      %v5157 = vmax.f32 %v4947, %v4961
      %v5158 = vmax.f32 %v4948, %v4962
      %v5159 = vpack.c.bf16 %v4963, %v4963
      %v5160 = vpack.c.bf16 %v4964, %v4964
      %v5161 = vpack.c.bf16 %v4965, %v4965
      %v5162 = vpack.c.bf16 %v4966, %v4966
      %v5163 = vpack.c.bf16 %v4967, %v4967
      %v5164 = vpack.c.bf16 %v4968, %v4968
      %v5165 = vpack.c.bf16 %v4969, %v4969
      %v5166 = vpack.c.bf16 %v4970, %v4970
      %v5167 = vpack.c.bf16 %v4971, %v4971
      %v5168 = vpack.c.bf16 %v4972, %v4972
      %v5169 = vpack.c.bf16 %v4973, %v4973
      %v5170 = vpack.c.bf16 %v4974, %v4974
      %v5171 = vpack.c.bf16 %v4975, %v4975
      %v5172 = vpack.c.bf16 %v4976, %v4976
      %v5173 = vpack.c.bf16 %v4977, %v4977
      %v5174 = vpack.c.bf16 %v4978, %v4978
      %v5175 = vpack.c.bf16 %v4979, %v4979
      %v5176 = vpack.c.bf16 %v4980, %v4980
      %v5177 = vpack.c.bf16 %v4981, %v4981
      %v5178 = vpack.c.bf16 %v4982, %v4982
      %v5179 = vpack.c.bf16 %v4983, %v4983
      %v5180 = vpack.c.bf16 %v4984, %v4984
      %v5181 = vpack.c.bf16 %v4985, %v4985
      %v5182 = vpack.c.bf16 %v4986, %v4986
      %v5183 = vpack.c.bf16 %v4987, %v4987
      %v5184 = vpack.c.bf16 %v4988, %v4988
      %v5185 = vpack.c.bf16 %v4989, %v4989
      %v5186 = vpack.c.bf16 %v4990, %v4990
      %v5187 = vpack.c.bf16 %v4991, %v4991
      %v5188 = vpack.c.bf16 %v4992, %v4992
      %v5189 = vpack.c.bf16 %v4993, %v4993
      %v5190 = vpack.c.bf16 %v4994, %v4994
      %v5191 = vpack.c.bf16 %v4995, %v4995
      %v5192 = vpack.c.bf16 %v4996, %v4996
      %v5193 = vpack.c.bf16 %v4997, %v4997
      %v5194 = vpack.c.bf16 %v4998, %v4998
      %v5195 = vpack.c.bf16 %v4999, %v4999
      %v5196 = vpack.c.bf16 %v5000, %v5000
      %v5197 = vpack.c.bf16 %v5001, %v5001
      %v5198 = vpack.c.bf16 %v5002, %v5002
      %v5199 = vpack.c.bf16 %v5003, %v5003
      %v5200 = vpack.c.bf16 %v5004, %v5004
      %v5201 = vpack.c.bf16 %v5005, %v5005
      %v5202 = vpack.c.bf16 %v5006, %v5006
      %v5203 = vpack.c.bf16 %v5007, %v5007
      %v5204 = vpack.c.bf16 %v5008, %v5008
      %v5205 = vpack.c.bf16 %v5009, %v5009
      %v5206 = vpack.c.bf16 %v5010, %v5010
      %v5207 = vpack.c.bf16 %v5011, %v5011
      %v5208 = vpack.c.bf16 %v5012, %v5012
      %v5209 = vpack.c.bf16 %v5013, %v5013
      %v5210 = vpack.c.bf16 %v5014, %v5014
      %v5211 = vpack.c.bf16 %v5015, %v5015
      %v5212 = vpack.c.bf16 %v5016, %v5016
      %v5213 = vpack.c.bf16 %v5017, %v5017
      %v5214 = vpack.c.bf16 %v5018, %v5018
      %v5215 = vpack.c.bf16 %v5019, %v5019
      %v5216 = vpack.c.bf16 %v5020, %v5020
      %v5217 = vpack.c.bf16 %v5021, %v5021
      %v5218 = vpack.c.bf16 %v5022, %v5022
      %v5219 = vpack.c.bf16 %v5023, %v5023
      %v5220 = vpack.c.bf16 %v5024, %v5024
      %v5221 = vpack.c.bf16 %v5025, %v5025
      %v5222 = vpack.c.bf16 %v5026, %v5026
      %v5223 = vpack.c.bf16 %v5027, %v5027
      %v5224 = vpack.c.bf16 %v5028, %v5028
      %v5225 = vpack.c.bf16 %v5029, %v5029
      %v5226 = vpack.c.bf16 %v5030, %v5030
      %v5227 = vpack.c.bf16 %v5031, %v5031
      %v5228 = vpack.c.bf16 %v5032, %v5032
      %v5229 = vpack.c.bf16 %v5033, %v5033
      %v5230 = vpack.c.bf16 %v5034, %v5034
      %v5231 = vpack.c.bf16 %v5035, %v5035
      %v5232 = vpack.c.bf16 %v5036, %v5036
      %v5233 = vpack.c.bf16 %v5037, %v5037
      %v5234 = vpack.c.bf16 %v5038, %v5038
      %v5235 = vpack.c.bf16 %v5039, %v5039
      %v5236 = vpack.c.bf16 %v5040, %v5040
      %v5237 = vpack.c.bf16 %v5041, %v5041
      %v5238 = vpack.c.bf16 %v5042, %v5042
      %v5239 = vpack.c.bf16 %v5043, %v5043
      %v5240 = vpack.c.bf16 %v5044, %v5044
      %v5241 = vpack.c.bf16 %v5045, %v5045
      %v5242 = vpack.c.bf16 %v5046, %v5046
      %v5243 = vpack.c.bf16 %v5047, %v5047
      %v5244 = vpack.c.bf16 %v5048, %v5048
      %v5245 = vpack.c.bf16 %v5049, %v5049
      %v5246 = vpack.c.bf16 %v5050, %v5050
      %v5247 = vpack.c.bf16 %v5051, %v5051
      %v5248 = vpack.c.bf16 %v5052, %v5052
      %v5249 = vpack.c.bf16 %v5053, %v5053
      %v5250 = vpack.c.bf16 %v5054, %v5054
      %v5251 = vpack.c.bf16 %v5055, %v5055
      %v5252 = vpack.c.bf16 %v5056, %v5056
      %v5253 = vpack.c.bf16 %v5057, %v5057
      %v5254 = vpack.c.bf16 %v5058, %v5058
      %v5255 = vpack.c.bf16 %v5059, %v5059
      %v5256 = vpack.c.bf16 %v5060, %v5060
      %v5257 = vpack.c.bf16 %v5061, %v5061
      %v5258 = vpack.c.bf16 %v5062, %v5062
      %v5259 = vpack.c.bf16 %v5063, %v5063
      %v5260 = vpack.c.bf16 %v5064, %v5064
      %v5261 = vpack.c.bf16 %v5065, %v5065
      %v5262 = vpack.c.bf16 %v5066, %v5066
      %v5263 = vpack.c.bf16 %v5067, %v5067
      %v5264 = vpack.c.bf16 %v5068, %v5068
      %v5265 = vpack.c.bf16 %v5069, %v5069
      %v5266 = vpack.c.bf16 %v5070, %v5070
      %v5267 = vpack.c.bf16 %v5071, %v5071
      %v5268 = vpack.c.bf16 %v5072, %v5072
      %v5269 = vpack.c.bf16 %v5073, %v5073
      %v5270 = vpack.c.bf16 %v5074, %v5074
      %v5271 = vpack.c.bf16 %v5075, %v5075
      %v5272 = vpack.c.bf16 %v5076, %v5076
      %v5273 = vpack.c.bf16 %v5077, %v5077
      %v5274 = vpack.c.bf16 %v5078, %v5078
      %v5275 = vpack.c.bf16 %v5079, %v5079
      %v5276 = vpack.c.bf16 %v5080, %v5080
      %v5277 = vpack.c.bf16 %v5081, %v5081
      %v5278 = vpack.c.bf16 %v5082, %v5082
      %v5279 = vpack.c.bf16 %v5083, %v5083
      %v5280 = vpack.c.bf16 %v5084, %v5084
      %v5281 = vpack.c.bf16 %v5085, %v5085
      %v5282 = vpack.c.bf16 %v5086, %v5086
      %v5283 = vpack.c.bf16 %v5087, %v5087
      %v5284 = vpack.c.bf16 %v5088, %v5088
      %v5285 = vpack.c.bf16 %v5089, %v5089
      %v5286 = vpack.c.bf16 %v5090, %v5090
      %v5287 = vpack.c.bf16 %v5091, %v5091
      %v5288 = vpack.c.bf16 %v5092, %v5092
      %v5289 = vpack.c.bf16 %v5093, %v5093
      %v5290 = vpack.c.bf16 %v5094, %v5094
      %v5291 = vpack.c.bf16 %v5095, %v5095
      %v5292 = vpack.c.bf16 %v5096, %v5096
      %v5293 = vpack.c.bf16 %v5097, %v5097
      %v5294 = vpack.c.bf16 %v5098, %v5098
      %v5295 = vpack.c.bf16 %v5099, %v5099
      %v5296 = vpack.c.bf16 %v5100, %v5100
      %v5297 = vpack.c.bf16 %v5101, %v5101
      %v5298 = vpack.c.bf16 %v5102, %v5102
      %v5299 = vpack.c.bf16 %v5103, %v5103
      %v5300 = vpack.c.bf16 %v5104, %v5104
      %v5301 = vpack.c.bf16 %v5105, %v5105
      %v5302 = vpack.c.bf16 %v5106, %v5106
      %v5303 = vpack.c.bf16 %v5107, %v5107
      %v5304 = vpack.c.bf16 %v5108, %v5108
      %v5305 = vpack.c.bf16 %v5109, %v5109
      %v5306 = vpack.c.bf16 %v5110, %v5110
      %v5307 = vpack.c.bf16 %v5111, %v5111
      %v5308 = vpack.c.bf16 %v5112, %v5112
      %v5309 = vpack.c.bf16 %v5113, %v5113
      %v5310 = vpack.c.bf16 %v5114, %v5114
      %v5311 = vpack.c.bf16 %v5115, %v5115
      %v5312 = vpack.c.bf16 %v5116, %v5116
      %v5313 = vpack.c.bf16 %v5117, %v5117
      %v5314 = vpack.c.bf16 %v5118, %v5118
      %v5315 = vpack.c.bf16 %v5119, %v5119
      %v5316 = vpack.c.bf16 %v5120, %v5120
      %v5317 = vpack.c.bf16 %v5121, %v5121
      %v5318 = vpack.c.bf16 %v5122, %v5122
      %v5319 = vpack.c.bf16 %v5123, %v5123
      %v5320 = vpack.c.bf16 %v5124, %v5124
      %v5321 = vpack.c.bf16 %v5125, %v5125
      %v5322 = vpack.c.bf16 %v5126, %v5126
      %v5323 = vpack.c.bf16 %v5127, %v5127
      %v5324 = vpack.c.bf16 %v5128, %v5128
      %v5325 = vpack.c.bf16 %v5129, %v5129
      %v5326 = vpack.c.bf16 %v5130, %v5130
      %v5327 = vpack.c.bf16 %v5131, %v5131
      %v5328 = vpack.c.bf16 %v5132, %v5132
      %v5329 = vpack.c.bf16 %v5133, %v5133
      %v5330 = vpack.c.bf16 %v5134, %v5134
      %v5331 = vpack.c.bf16 %v5135, %v5135
      %v5332 = vpack.c.bf16 %v5136, %v5136
      %v5333 = vpack.c.bf16 %v5137, %v5137
      %v5334 = vpack.c.bf16 %v5138, %v5138
      %v5335 = vpack.c.bf16 %v5139, %v5139
      %v5336 = vpack.c.bf16 %v5140, %v5140
      %v5337 = vpack.c.bf16 %v5141, %v5141
      %v5338 = vpack.c.bf16 %v5142, %v5142
      %v5339 = vpack.c.bf16 %v5143, %v5143
      %v5340 = vpack.c.bf16 %v5144, %v5144
      %v5341 = vpack.c.bf16 %v5145, %v5145
      %v5342 = vpack.c.bf16 %v5146, %v5146
      %v5343 = vpack.c.bf16 %v5147, %v5147
      %v5344 = vpack.c.bf16 %v5148, %v5148
      %v5345 = vpack.c.bf16 %v5149, %v5149
      %v5346 = vpack.c.bf16 %v5150, %v5150
      %v5347 = vpack.c.bf16 %v5151, %v5151
      %v5348 = vpack.c.bf16 %v5152, %v5152
      %v5349 = vpack.c.bf16 %v5153, %v5153
      %v5350 = vpack.c.bf16 %v5154, %v5154
      %v5351 = vpack.c.bf16 %v5155, %v5155
      %v5352 = vpack.c.bf16 %v5156, %v5156
      %v5353 = vpack.c.bf16 %v5157, %v5157
      %v5354 = vpack.c.bf16 %v5158, %v5158
      %v5551 = vunpack.c.l.b16 %v5159
      %v5552 = vunpack.c.l.b16 %v5160
      %v5553 = vunpack.c.l.b16 %v5161
      %v5554 = vunpack.c.l.b16 %v5162
      %v5555 = vunpack.c.l.b16 %v5163
      %v5556 = vunpack.c.l.b16 %v5164
      %v5557 = vunpack.c.l.b16 %v5165
      %v5558 = vunpack.c.l.b16 %v5166
      %v5559 = vunpack.c.l.b16 %v5167
      %v5560 = vunpack.c.l.b16 %v5168
      %v5561 = vunpack.c.l.b16 %v5169
      %v5562 = vunpack.c.l.b16 %v5170
      %v5563 = vunpack.c.l.b16 %v5171
      %v5564 = vunpack.c.l.b16 %v5172
      %v5565 = vunpack.c.l.b16 %v5173
      %v5566 = vunpack.c.l.b16 %v5174
      %v5567 = vunpack.c.l.b16 %v5175
      %v5568 = vunpack.c.l.b16 %v5176
      %v5569 = vunpack.c.l.b16 %v5177
      %v5570 = vunpack.c.l.b16 %v5178
      %v5571 = vunpack.c.l.b16 %v5179
      %v5572 = vunpack.c.l.b16 %v5180
      %v5573 = vunpack.c.l.b16 %v5181
      %v5574 = vunpack.c.l.b16 %v5182
      %v5575 = vunpack.c.l.b16 %v5183
      %v5576 = vunpack.c.l.b16 %v5184
      %v5577 = vunpack.c.l.b16 %v5185
      %v5578 = vunpack.c.l.b16 %v5186
      %v5579 = vunpack.c.l.b16 %v5187
      %v5580 = vunpack.c.l.b16 %v5188
      %v5581 = vunpack.c.l.b16 %v5189
      %v5582 = vunpack.c.l.b16 %v5190
      %v5583 = vunpack.c.l.b16 %v5191
      %v5584 = vunpack.c.l.b16 %v5192
      %v5585 = vunpack.c.l.b16 %v5193
      %v5586 = vunpack.c.l.b16 %v5194
      %v5587 = vunpack.c.l.b16 %v5195
      %v5588 = vunpack.c.l.b16 %v5196
      %v5589 = vunpack.c.l.b16 %v5197
      %v5590 = vunpack.c.l.b16 %v5198
      %v5591 = vunpack.c.l.b16 %v5199
      %v5592 = vunpack.c.l.b16 %v5200
      %v5593 = vunpack.c.l.b16 %v5201
      %v5594 = vunpack.c.l.b16 %v5202
      %v5595 = vunpack.c.l.b16 %v5203
      %v5596 = vunpack.c.l.b16 %v5204
      %v5597 = vunpack.c.l.b16 %v5205
      %v5598 = vunpack.c.l.b16 %v5206
      %v5599 = vunpack.c.l.b16 %v5207
      %v5600 = vunpack.c.l.b16 %v5208
      %v5601 = vunpack.c.l.b16 %v5209
      %v5602 = vunpack.c.l.b16 %v5210
      %v5603 = vunpack.c.l.b16 %v5211
      %v5604 = vunpack.c.l.b16 %v5212
      %v5605 = vunpack.c.l.b16 %v5213
      %v5606 = vunpack.c.l.b16 %v5214
      %v5607 = vunpack.c.l.b16 %v5215
      %v5608 = vunpack.c.l.b16 %v5216
      %v5609 = vunpack.c.l.b16 %v5217
      %v5610 = vunpack.c.l.b16 %v5218
      %v5611 = vunpack.c.l.b16 %v5219
      %v5612 = vunpack.c.l.b16 %v5220
      %v5613 = vunpack.c.l.b16 %v5221
      %v5614 = vunpack.c.l.b16 %v5222
      %v5615 = vunpack.c.l.b16 %v5223
      %v5616 = vunpack.c.l.b16 %v5224
      %v5617 = vunpack.c.l.b16 %v5225
      %v5618 = vunpack.c.l.b16 %v5226
      %v5619 = vunpack.c.l.b16 %v5227
      %v5620 = vunpack.c.l.b16 %v5228
      %v5621 = vunpack.c.l.b16 %v5229
      %v5622 = vunpack.c.l.b16 %v5230
      %v5623 = vunpack.c.l.b16 %v5231
      %v5624 = vunpack.c.l.b16 %v5232
      %v5625 = vunpack.c.l.b16 %v5233
      %v5626 = vunpack.c.l.b16 %v5234
      %v5627 = vunpack.c.l.b16 %v5235
      %v5628 = vunpack.c.l.b16 %v5236
      %v5629 = vunpack.c.l.b16 %v5237
      %v5630 = vunpack.c.l.b16 %v5238
      %v5631 = vunpack.c.l.b16 %v5239
      %v5632 = vunpack.c.l.b16 %v5240
      %v5633 = vunpack.c.l.b16 %v5241
      %v5634 = vunpack.c.l.b16 %v5242
      %v5635 = vunpack.c.l.b16 %v5243
      %v5636 = vunpack.c.l.b16 %v5244
      %v5637 = vunpack.c.l.b16 %v5245
      %v5638 = vunpack.c.l.b16 %v5246
      %v5639 = vunpack.c.l.b16 %v5247
      %v5640 = vunpack.c.l.b16 %v5248
      %v5641 = vunpack.c.l.b16 %v5249
      %v5642 = vunpack.c.l.b16 %v5250
      %v5643 = vunpack.c.l.b16 %v5251
      %v5644 = vunpack.c.l.b16 %v5252
      %v5645 = vunpack.c.l.b16 %v5253
      %v5646 = vunpack.c.l.b16 %v5254
      %v5647 = vunpack.c.l.b16 %v5255
      %v5648 = vunpack.c.l.b16 %v5256
      %v5649 = vunpack.c.l.b16 %v5257
      %v5650 = vunpack.c.l.b16 %v5258
      %v5651 = vunpack.c.l.b16 %v5259
      %v5652 = vunpack.c.l.b16 %v5260
      %v5653 = vunpack.c.l.b16 %v5261
      %v5654 = vunpack.c.l.b16 %v5262
      %v5655 = vunpack.c.l.b16 %v5263
      %v5656 = vunpack.c.l.b16 %v5264
      %v5657 = vunpack.c.l.b16 %v5265
      %v5658 = vunpack.c.l.b16 %v5266
      %v5659 = vunpack.c.l.b16 %v5267
      %v5660 = vunpack.c.l.b16 %v5268
      %v5661 = vunpack.c.l.b16 %v5269
      %v5662 = vunpack.c.l.b16 %v5270
      %v5663 = vunpack.c.l.b16 %v5271
      %v5664 = vunpack.c.l.b16 %v5272
      %v5665 = vunpack.c.l.b16 %v5273
      %v5666 = vunpack.c.l.b16 %v5274
      %v5667 = vunpack.c.l.b16 %v5275
      %v5668 = vunpack.c.l.b16 %v5276
      %v5669 = vunpack.c.l.b16 %v5277
      %v5670 = vunpack.c.l.b16 %v5278
      %v5671 = vunpack.c.l.b16 %v5279
      %v5672 = vunpack.c.l.b16 %v5280
      %v5673 = vunpack.c.l.b16 %v5281
      %v5674 = vunpack.c.l.b16 %v5282
      %v5675 = vunpack.c.l.b16 %v5283
      %v5676 = vunpack.c.l.b16 %v5284
      %v5677 = vunpack.c.l.b16 %v5285
      %v5678 = vunpack.c.l.b16 %v5286
      %v5679 = vunpack.c.l.b16 %v5287
      %v5680 = vunpack.c.l.b16 %v5288
      %v5681 = vunpack.c.l.b16 %v5289
      %v5682 = vunpack.c.l.b16 %v5290
      %v5683 = vunpack.c.l.b16 %v5291
      %v5684 = vunpack.c.l.b16 %v5292
      %v5685 = vunpack.c.l.b16 %v5293
      %v5686 = vunpack.c.l.b16 %v5294
      %v5687 = vunpack.c.l.b16 %v5295
      %v5688 = vunpack.c.l.b16 %v5296
      %v5689 = vunpack.c.l.b16 %v5297
      %v5690 = vunpack.c.l.b16 %v5298
      %v5691 = vunpack.c.l.b16 %v5299
      %v5692 = vunpack.c.l.b16 %v5300
      %v5693 = vunpack.c.l.b16 %v5301
      %v5694 = vunpack.c.l.b16 %v5302
      %v5695 = vunpack.c.l.b16 %v5303
      %v5696 = vunpack.c.l.b16 %v5304
      %v5697 = vunpack.c.l.b16 %v5305
      %v5698 = vunpack.c.l.b16 %v5306
      %v5699 = vunpack.c.l.b16 %v5307
      %v5700 = vunpack.c.l.b16 %v5308
      %v5701 = vunpack.c.l.b16 %v5309
      %v5702 = vunpack.c.l.b16 %v5310
      %v5703 = vunpack.c.l.b16 %v5311
      %v5704 = vunpack.c.l.b16 %v5312
      %v5705 = vunpack.c.l.b16 %v5313
      %v5706 = vunpack.c.l.b16 %v5314
      %v5707 = vunpack.c.l.b16 %v5315
      %v5708 = vunpack.c.l.b16 %v5316
      %v5709 = vunpack.c.l.b16 %v5317
      %v5710 = vunpack.c.l.b16 %v5318
      %v5711 = vunpack.c.l.b16 %v5319
      %v5712 = vunpack.c.l.b16 %v5320
      %v5713 = vunpack.c.l.b16 %v5321
      %v5714 = vunpack.c.l.b16 %v5322
      %v5715 = vunpack.c.l.b16 %v5323
      %v5716 = vunpack.c.l.b16 %v5324
      %v5717 = vunpack.c.l.b16 %v5325
      %v5718 = vunpack.c.l.b16 %v5326
      %v5719 = vunpack.c.l.b16 %v5327
      %v5720 = vunpack.c.l.b16 %v5328
      %v5721 = vunpack.c.l.b16 %v5329
      %v5722 = vunpack.c.l.b16 %v5330
      %v5723 = vunpack.c.l.b16 %v5331
      %v5724 = vunpack.c.l.b16 %v5332
      %v5725 = vunpack.c.l.b16 %v5333
      %v5726 = vunpack.c.l.b16 %v5334
      %v5727 = vunpack.c.l.b16 %v5335
      %v5728 = vunpack.c.l.b16 %v5336
      %v5729 = vunpack.c.l.b16 %v5337
      %v5730 = vunpack.c.l.b16 %v5338
      %v5731 = vunpack.c.l.b16 %v5339
      %v5732 = vunpack.c.l.b16 %v5340
      %v5733 = vunpack.c.l.b16 %v5341
      %v5734 = vunpack.c.l.b16 %v5342
      %v5735 = vunpack.c.l.b16 %v5343
      %v5736 = vunpack.c.l.b16 %v5344
      %v5737 = vunpack.c.l.b16 %v5345
      %v5738 = vunpack.c.l.b16 %v5346
      %v5739 = vunpack.c.l.b16 %v5347
      %v5740 = vunpack.c.l.b16 %v5348
      %v5741 = vunpack.c.l.b16 %v5349
      %v5742 = vunpack.c.l.b16 %v5350
      %v5743 = vunpack.c.l.b16 %v5351
      %v5744 = vunpack.c.l.b16 %v5352
      %v5745 = vunpack.c.l.b16 %v5353
      %v5746 = vunpack.c.l.b16 %v5354
      %v5747 = vpack.c.b16 %v5551, %v5551
      %v5748 = vpack.c.b16 %v5552, %v5552
      %v5749 = vpack.c.b16 %v5553, %v5553
      %v5750 = vpack.c.b16 %v5554, %v5554
      %v5751 = vpack.c.b16 %v5555, %v5555
      %v5752 = vpack.c.b16 %v5556, %v5556
      %v5753 = vpack.c.b16 %v5557, %v5557
      %v5754 = vpack.c.b16 %v5558, %v5558
      %v5755 = vpack.c.b16 %v5559, %v5559
      %v5756 = vpack.c.b16 %v5560, %v5560
      %v5757 = vpack.c.b16 %v5561, %v5561
      %v5758 = vpack.c.b16 %v5562, %v5562
      %v5759 = vpack.c.b16 %v5563, %v5563
      %v5760 = vpack.c.b16 %v5564, %v5564
      %v5761 = vpack.c.b16 %v5565, %v5565
      %v5762 = vpack.c.b16 %v5566, %v5566
      %v5763 = vpack.c.b16 %v5567, %v5567
      %v5764 = vpack.c.b16 %v5568, %v5568
      %v5765 = vpack.c.b16 %v5569, %v5569
      %v5766 = vpack.c.b16 %v5570, %v5570
      %v5767 = vpack.c.b16 %v5571, %v5571
      %v5768 = vpack.c.b16 %v5572, %v5572
      %v5769 = vpack.c.b16 %v5573, %v5573
      %v5770 = vpack.c.b16 %v5574, %v5574
      %v5771 = vpack.c.b16 %v5575, %v5575
      %v5772 = vpack.c.b16 %v5576, %v5576
      %v5773 = vpack.c.b16 %v5577, %v5577
      %v5774 = vpack.c.b16 %v5578, %v5578
      %v5775 = vpack.c.b16 %v5579, %v5579
      %v5776 = vpack.c.b16 %v5580, %v5580
      %v5777 = vpack.c.b16 %v5581, %v5581
      %v5778 = vpack.c.b16 %v5582, %v5582
      %v5779 = vpack.c.b16 %v5583, %v5583
      %v5780 = vpack.c.b16 %v5584, %v5584
      %v5781 = vpack.c.b16 %v5585, %v5585
      %v5782 = vpack.c.b16 %v5586, %v5586
      %v5783 = vpack.c.b16 %v5587, %v5587
      %v5784 = vpack.c.b16 %v5588, %v5588
      %v5785 = vpack.c.b16 %v5589, %v5589
      %v5786 = vpack.c.b16 %v5590, %v5590
      %v5787 = vpack.c.b16 %v5591, %v5591
      %v5788 = vpack.c.b16 %v5592, %v5592
      %v5789 = vpack.c.b16 %v5593, %v5593
      %v5790 = vpack.c.b16 %v5594, %v5594
      %v5791 = vpack.c.b16 %v5595, %v5595
      %v5792 = vpack.c.b16 %v5596, %v5596
      %v5793 = vpack.c.b16 %v5597, %v5597
      %v5794 = vpack.c.b16 %v5598, %v5598
      %v5795 = vpack.c.b16 %v5599, %v5599
      %v5796 = vpack.c.b16 %v5600, %v5600
      %v5797 = vpack.c.b16 %v5601, %v5601
      %v5798 = vpack.c.b16 %v5602, %v5602
      %v5799 = vpack.c.b16 %v5603, %v5603
      %v5800 = vpack.c.b16 %v5604, %v5604
      %v5801 = vpack.c.b16 %v5605, %v5605
      %v5802 = vpack.c.b16 %v5606, %v5606
      %v5803 = vpack.c.b16 %v5607, %v5607
      %v5804 = vpack.c.b16 %v5608, %v5608
      %v5805 = vpack.c.b16 %v5609, %v5609
      %v5806 = vpack.c.b16 %v5610, %v5610
      %v5807 = vpack.c.b16 %v5611, %v5611
      %v5808 = vpack.c.b16 %v5612, %v5612
      %v5809 = vpack.c.b16 %v5613, %v5613
      %v5810 = vpack.c.b16 %v5614, %v5614
      %v5811 = vpack.c.b16 %v5615, %v5615
      %v5812 = vpack.c.b16 %v5616, %v5616
      %v5813 = vpack.c.b16 %v5617, %v5617
      %v5814 = vpack.c.b16 %v5618, %v5618
      %v5815 = vpack.c.b16 %v5619, %v5619
      %v5816 = vpack.c.b16 %v5620, %v5620
      %v5817 = vpack.c.b16 %v5621, %v5621
      %v5818 = vpack.c.b16 %v5622, %v5622
      %v5819 = vpack.c.b16 %v5623, %v5623
      %v5820 = vpack.c.b16 %v5624, %v5624
      %v5821 = vpack.c.b16 %v5625, %v5625
      %v5822 = vpack.c.b16 %v5626, %v5626
      %v5823 = vpack.c.b16 %v5627, %v5627
      %v5824 = vpack.c.b16 %v5628, %v5628
      %v5825 = vpack.c.b16 %v5629, %v5629
      %v5826 = vpack.c.b16 %v5630, %v5630
      %v5827 = vpack.c.b16 %v5631, %v5631
      %v5828 = vpack.c.b16 %v5632, %v5632
      %v5829 = vpack.c.b16 %v5633, %v5633
      %v5830 = vpack.c.b16 %v5634, %v5634
      %v5831 = vpack.c.b16 %v5635, %v5635
      %v5832 = vpack.c.b16 %v5636, %v5636
      %v5833 = vpack.c.b16 %v5637, %v5637
      %v5834 = vpack.c.b16 %v5638, %v5638
      %v5835 = vpack.c.b16 %v5639, %v5639
      %v5836 = vpack.c.b16 %v5640, %v5640
      %v5837 = vpack.c.b16 %v5641, %v5641
      %v5838 = vpack.c.b16 %v5642, %v5642
      %v5839 = vpack.c.b16 %v5643, %v5643
      %v5840 = vpack.c.b16 %v5644, %v5644
      %v5841 = vpack.c.b16 %v5645, %v5645
      %v5842 = vpack.c.b16 %v5646, %v5646
      %v5843 = vpack.c.b16 %v5647, %v5647
      %v5844 = vpack.c.b16 %v5648, %v5648
      %v5845 = vpack.c.b16 %v5649, %v5649
      %v5846 = vpack.c.b16 %v5650, %v5650
      %v5847 = vpack.c.b16 %v5651, %v5651
      %v5848 = vpack.c.b16 %v5652, %v5652
      %v5849 = vpack.c.b16 %v5653, %v5653
      %v5850 = vpack.c.b16 %v5654, %v5654
      %v5851 = vpack.c.b16 %v5655, %v5655
      %v5852 = vpack.c.b16 %v5656, %v5656
      %v5853 = vpack.c.b16 %v5657, %v5657
      %v5854 = vpack.c.b16 %v5658, %v5658
      %v5855 = vpack.c.b16 %v5659, %v5659
      %v5856 = vpack.c.b16 %v5660, %v5660
      %v5857 = vpack.c.b16 %v5661, %v5661
      %v5858 = vpack.c.b16 %v5662, %v5662
      %v5859 = vpack.c.b16 %v5663, %v5663
      %v5860 = vpack.c.b16 %v5664, %v5664
      %v5861 = vpack.c.b16 %v5665, %v5665
      %v5862 = vpack.c.b16 %v5666, %v5666
      %v5863 = vpack.c.b16 %v5667, %v5667
      %v5864 = vpack.c.b16 %v5668, %v5668
      %v5865 = vpack.c.b16 %v5669, %v5669
      %v5866 = vpack.c.b16 %v5670, %v5670
      %v5867 = vpack.c.b16 %v5671, %v5671
      %v5868 = vpack.c.b16 %v5672, %v5672
      %v5869 = vpack.c.b16 %v5673, %v5673
      %v5870 = vpack.c.b16 %v5674, %v5674
      %v5871 = vpack.c.b16 %v5675, %v5675
      %v5872 = vpack.c.b16 %v5676, %v5676
      %v5873 = vpack.c.b16 %v5677, %v5677
      %v5874 = vpack.c.b16 %v5678, %v5678
      %v5875 = vpack.c.b16 %v5679, %v5679
      %v5876 = vpack.c.b16 %v5680, %v5680
      %v5877 = vpack.c.b16 %v5681, %v5681
      %v5878 = vpack.c.b16 %v5682, %v5682
      %v5879 = vpack.c.b16 %v5683, %v5683
      %v5880 = vpack.c.b16 %v5684, %v5684
      %v5881 = vpack.c.b16 %v5685, %v5685
      %v5882 = vpack.c.b16 %v5686, %v5686
      %v5883 = vpack.c.b16 %v5687, %v5687
      %v5884 = vpack.c.b16 %v5688, %v5688
      %v5885 = vpack.c.b16 %v5689, %v5689
      %v5886 = vpack.c.b16 %v5690, %v5690
      %v5887 = vpack.c.b16 %v5691, %v5691
      %v5888 = vpack.c.b16 %v5692, %v5692
      %v5889 = vpack.c.b16 %v5693, %v5693
      %v5890 = vpack.c.b16 %v5694, %v5694
      %v5891 = vpack.c.b16 %v5695, %v5695
      %v5892 = vpack.c.b16 %v5696, %v5696
      %v5893 = vpack.c.b16 %v5697, %v5697
      %v5894 = vpack.c.b16 %v5698, %v5698
      %v5895 = vpack.c.b16 %v5699, %v5699
      %v5896 = vpack.c.b16 %v5700, %v5700
      %v5897 = vpack.c.b16 %v5701, %v5701
      %v5898 = vpack.c.b16 %v5702, %v5702
      %v5899 = vpack.c.b16 %v5703, %v5703
      %v5900 = vpack.c.b16 %v5704, %v5704
      %v5901 = vpack.c.b16 %v5705, %v5705
      %v5902 = vpack.c.b16 %v5706, %v5706
      %v5903 = vpack.c.b16 %v5707, %v5707
      %v5904 = vpack.c.b16 %v5708, %v5708
      %v5905 = vpack.c.b16 %v5709, %v5709
      %v5906 = vpack.c.b16 %v5710, %v5710
      %v5907 = vpack.c.b16 %v5711, %v5711
      %v5908 = vpack.c.b16 %v5712, %v5712
      %v5909 = vpack.c.b16 %v5713, %v5713
      %v5910 = vpack.c.b16 %v5714, %v5714
      %v5911 = vpack.c.b16 %v5715, %v5715
      %v5912 = vpack.c.b16 %v5716, %v5716
      %v5913 = vpack.c.b16 %v5717, %v5717
      %v5914 = vpack.c.b16 %v5718, %v5718
      %v5915 = vpack.c.b16 %v5719, %v5719
      %v5916 = vpack.c.b16 %v5720, %v5720
      %v5917 = vpack.c.b16 %v5721, %v5721
      %v5918 = vpack.c.b16 %v5722, %v5722
      %v5919 = vpack.c.b16 %v5723, %v5723
      %v5920 = vpack.c.b16 %v5724, %v5724
      %v5921 = vpack.c.b16 %v5725, %v5725
      %v5922 = vpack.c.b16 %v5726, %v5726
      %v5923 = vpack.c.b16 %v5727, %v5727
      %v5924 = vpack.c.b16 %v5728, %v5728
      %v5925 = vpack.c.b16 %v5729, %v5729
      %v5926 = vpack.c.b16 %v5730, %v5730
      %v5927 = vpack.c.b16 %v5731, %v5731
      %v5928 = vpack.c.b16 %v5732, %v5732
      %v5929 = vpack.c.b16 %v5733, %v5733
      %v5930 = vpack.c.b16 %v5734, %v5734
      %v5931 = vpack.c.b16 %v5735, %v5735
      %v5932 = vpack.c.b16 %v5736, %v5736
      %v5933 = vpack.c.b16 %v5737, %v5737
      %v5934 = vpack.c.b16 %v5738, %v5738
      %v5935 = vpack.c.b16 %v5739, %v5739
      %v5936 = vpack.c.b16 %v5740, %v5740
      %v5937 = vpack.c.b16 %v5741, %v5741
      %v5938 = vpack.c.b16 %v5742, %v5742
      %v5939 = vpack.c.b16 %v5743, %v5743
      %v5940 = vpack.c.b16 %v5744, %v5744
      %v5941 = vpack.c.b16 %v5745, %v5745
      %v5942 = vpack.c.b16 %v5746, %v5746
      %v5943 = vunpack.c.l.b16 %v5747
      %v5944 = vunpack.c.l.b16 %v5748
      %v5945 = vunpack.c.l.b16 %v5749
      %v5946 = vunpack.c.l.b16 %v5750
      %v5947 = vunpack.c.l.b16 %v5751
      %v5948 = vunpack.c.l.b16 %v5752
      %v5949 = vunpack.c.l.b16 %v5753
      %v5950 = vunpack.c.l.b16 %v5754
      %v5951 = vunpack.c.l.b16 %v5755
      %v5952 = vunpack.c.l.b16 %v5756
      %v5953 = vunpack.c.l.b16 %v5757
      %v5954 = vunpack.c.l.b16 %v5758
      %v5955 = vunpack.c.l.b16 %v5759
      %v5956 = vunpack.c.l.b16 %v5760
      %v5957 = vunpack.c.l.b16 %v5761
      %v5958 = vunpack.c.l.b16 %v5762
      %v5959 = vunpack.c.l.b16 %v5763
      %v5960 = vunpack.c.l.b16 %v5764
      %v5961 = vunpack.c.l.b16 %v5765
      %v5962 = vunpack.c.l.b16 %v5766
      %v5963 = vunpack.c.l.b16 %v5767
      %v5964 = vunpack.c.l.b16 %v5768
      %v5965 = vunpack.c.l.b16 %v5769
      %v5966 = vunpack.c.l.b16 %v5770
      %v5967 = vunpack.c.l.b16 %v5771
      %v5968 = vunpack.c.l.b16 %v5772
      %v5969 = vunpack.c.l.b16 %v5773
      %v5970 = vunpack.c.l.b16 %v5774
      %v5971 = vunpack.c.l.b16 %v5775
      %v5972 = vunpack.c.l.b16 %v5776
      %v5973 = vunpack.c.l.b16 %v5777
      %v5974 = vunpack.c.l.b16 %v5778
      %v5975 = vunpack.c.l.b16 %v5779
      %v5976 = vunpack.c.l.b16 %v5780
      %v5977 = vunpack.c.l.b16 %v5781
      %v5978 = vunpack.c.l.b16 %v5782
      %v5979 = vunpack.c.l.b16 %v5783
      %v5980 = vunpack.c.l.b16 %v5784
      %v5981 = vunpack.c.l.b16 %v5785
      %v5982 = vunpack.c.l.b16 %v5786
      %v5983 = vunpack.c.l.b16 %v5787
      %v5984 = vunpack.c.l.b16 %v5788
      %v5985 = vunpack.c.l.b16 %v5789
      %v5986 = vunpack.c.l.b16 %v5790
      %v5987 = vunpack.c.l.b16 %v5791
      %v5988 = vunpack.c.l.b16 %v5792
      %v5989 = vunpack.c.l.b16 %v5793
      %v5990 = vunpack.c.l.b16 %v5794
      %v5991 = vunpack.c.l.b16 %v5795
      %v5992 = vunpack.c.l.b16 %v5796
      %v5993 = vunpack.c.l.b16 %v5797
      %v5994 = vunpack.c.l.b16 %v5798
      %v5995 = vunpack.c.l.b16 %v5799
      %v5996 = vunpack.c.l.b16 %v5800
      %v5997 = vunpack.c.l.b16 %v5801
      %v5998 = vunpack.c.l.b16 %v5802
      %v5999 = vunpack.c.l.b16 %v5803
      %v6000 = vunpack.c.l.b16 %v5804
      %v6001 = vunpack.c.l.b16 %v5805
      %v6002 = vunpack.c.l.b16 %v5806
      %v6003 = vunpack.c.l.b16 %v5807
      %v6004 = vunpack.c.l.b16 %v5808
      %v6005 = vunpack.c.l.b16 %v5809
      %v6006 = vunpack.c.l.b16 %v5810
      %v6007 = vunpack.c.l.b16 %v5811
      %v6008 = vunpack.c.l.b16 %v5812
      %v6009 = vunpack.c.l.b16 %v5813
      %v6010 = vunpack.c.l.b16 %v5814
      %v6011 = vunpack.c.l.b16 %v5815
      %v6012 = vunpack.c.l.b16 %v5816
      %v6013 = vunpack.c.l.b16 %v5817
      %v6014 = vunpack.c.l.b16 %v5818
      %v6015 = vunpack.c.l.b16 %v5819
      %v6016 = vunpack.c.l.b16 %v5820
      %v6017 = vunpack.c.l.b16 %v5821
      %v6018 = vunpack.c.l.b16 %v5822
      %v6019 = vunpack.c.l.b16 %v5823
      %v6020 = vunpack.c.l.b16 %v5824
      %v6021 = vunpack.c.l.b16 %v5825
      %v6022 = vunpack.c.l.b16 %v5826
      %v6023 = vunpack.c.l.b16 %v5827
      %v6024 = vunpack.c.l.b16 %v5828
      %v6025 = vunpack.c.l.b16 %v5829
      %v6026 = vunpack.c.l.b16 %v5830
      %v6027 = vunpack.c.l.b16 %v5831
      %v6028 = vunpack.c.l.b16 %v5832
      %v6029 = vunpack.c.l.b16 %v5833
      %v6030 = vunpack.c.l.b16 %v5834
      %v6031 = vunpack.c.l.b16 %v5835
      %v6032 = vunpack.c.l.b16 %v5836
      %v6033 = vunpack.c.l.b16 %v5837
      %v6034 = vunpack.c.l.b16 %v5838
      %v6035 = vunpack.c.l.b16 %v5839
      %v6036 = vunpack.c.l.b16 %v5840
      %v6037 = vunpack.c.l.b16 %v5841
      %v6038 = vunpack.c.l.b16 %v5842
      %v6039 = vunpack.c.l.b16 %v5843
      %v6040 = vunpack.c.l.b16 %v5844
      %v6041 = vunpack.c.l.b16 %v5845
      %v6042 = vunpack.c.l.b16 %v5846
      %v6043 = vunpack.c.l.b16 %v5847
      %v6044 = vunpack.c.l.b16 %v5848
      %v6045 = vunpack.c.l.b16 %v5849
      %v6046 = vunpack.c.l.b16 %v5850
      %v6047 = vunpack.c.l.b16 %v5851
      %v6048 = vunpack.c.l.b16 %v5852
      %v6049 = vunpack.c.l.b16 %v5853
      %v6050 = vunpack.c.l.b16 %v5854
      %v6051 = vunpack.c.l.b16 %v5855
      %v6052 = vunpack.c.l.b16 %v5856
      %v6053 = vunpack.c.l.b16 %v5857
      %v6054 = vunpack.c.l.b16 %v5858
      %v6055 = vunpack.c.l.b16 %v5859
      %v6056 = vunpack.c.l.b16 %v5860
      %v6057 = vunpack.c.l.b16 %v5861
      %v6058 = vunpack.c.l.b16 %v5862
      %v6059 = vunpack.c.l.b16 %v5863
      %v6060 = vunpack.c.l.b16 %v5864
      %v6061 = vunpack.c.l.b16 %v5865
      %v6062 = vunpack.c.l.b16 %v5866
      %v6063 = vunpack.c.l.b16 %v5867
      %v6064 = vunpack.c.l.b16 %v5868
      %v6065 = vunpack.c.l.b16 %v5869
      %v6066 = vunpack.c.l.b16 %v5870
      %v6067 = vunpack.c.l.b16 %v5871
      %v6068 = vunpack.c.l.b16 %v5872
      %v6069 = vunpack.c.l.b16 %v5873
      %v6070 = vunpack.c.l.b16 %v5874
      %v6071 = vunpack.c.l.b16 %v5875
      %v6072 = vunpack.c.l.b16 %v5876
      %v6073 = vunpack.c.l.b16 %v5877
      %v6074 = vunpack.c.l.b16 %v5878
      %v6075 = vunpack.c.l.b16 %v5879
      %v6076 = vunpack.c.l.b16 %v5880
      %v6077 = vunpack.c.l.b16 %v5881
      %v6078 = vunpack.c.l.b16 %v5882
      %v6079 = vunpack.c.l.b16 %v5883
      %v6080 = vunpack.c.l.b16 %v5884
      %v6081 = vunpack.c.l.b16 %v5885
      %v6082 = vunpack.c.l.b16 %v5886
      %v6083 = vunpack.c.l.b16 %v5887
      %v6084 = vunpack.c.l.b16 %v5888
      %v6085 = vunpack.c.l.b16 %v5889
      %v6086 = vunpack.c.l.b16 %v5890
      %v6087 = vunpack.c.l.b16 %v5891
      %v6088 = vunpack.c.l.b16 %v5892
      %v6089 = vunpack.c.l.b16 %v5893
      %v6090 = vunpack.c.l.b16 %v5894
      %v6091 = vunpack.c.l.b16 %v5895
      %v6092 = vunpack.c.l.b16 %v5896
      %v6093 = vunpack.c.l.b16 %v5897
      %v6094 = vunpack.c.l.b16 %v5898
      %v6095 = vunpack.c.l.b16 %v5899
      %v6096 = vunpack.c.l.b16 %v5900
      %v6097 = vunpack.c.l.b16 %v5901
      %v6098 = vunpack.c.l.b16 %v5902
      %v6099 = vunpack.c.l.b16 %v5903
      %v6100 = vunpack.c.l.b16 %v5904
      %v6101 = vunpack.c.l.b16 %v5905
      %v6102 = vunpack.c.l.b16 %v5906
      %v6103 = vunpack.c.l.b16 %v5907
      %v6104 = vunpack.c.l.b16 %v5908
      %v6105 = vunpack.c.l.b16 %v5909
      %v6106 = vunpack.c.l.b16 %v5910
      %v6107 = vunpack.c.l.b16 %v5911
      %v6108 = vunpack.c.l.b16 %v5912
      %v6109 = vunpack.c.l.b16 %v5913
      %v6110 = vunpack.c.l.b16 %v5914
      %v6111 = vunpack.c.l.b16 %v5915
      %v6112 = vunpack.c.l.b16 %v5916
      %v6113 = vunpack.c.l.b16 %v5917
      %v6114 = vunpack.c.l.b16 %v5918
      %v6115 = vunpack.c.l.b16 %v5919
      %v6116 = vunpack.c.l.b16 %v5920
      %v6117 = vunpack.c.l.b16 %v5921
      %v6118 = vunpack.c.l.b16 %v5922
      %v6119 = vunpack.c.l.b16 %v5923
      %v6120 = vunpack.c.l.b16 %v5924
      %v6121 = vunpack.c.l.b16 %v5925
      %v6122 = vunpack.c.l.b16 %v5926
      %v6123 = vunpack.c.l.b16 %v5927
      %v6124 = vunpack.c.l.b16 %v5928
      %v6125 = vunpack.c.l.b16 %v5929
      %v6126 = vunpack.c.l.b16 %v5930
      %v6127 = vunpack.c.l.b16 %v5931
      %v6128 = vunpack.c.l.b16 %v5932
      %v6129 = vunpack.c.l.b16 %v5933
      %v6130 = vunpack.c.l.b16 %v5934
      %v6131 = vunpack.c.l.b16 %v5935
      %v6132 = vunpack.c.l.b16 %v5936
      %v6133 = vunpack.c.l.b16 %v5937
      %v6134 = vunpack.c.l.b16 %v5938
      %v6135 = vunpack.c.l.b16 %v5939
      %v6136 = vunpack.c.l.b16 %v5940
      %v6137 = vunpack.c.l.b16 %v5941
      %v6138 = vunpack.c.l.b16 %v5942
      %v6139 = vrot.slane %v5944, 7
      %vm6140 = vcmask 1041409
      %v6141 = vsel %vm6140, %v6139, %v5943
      %v6142 = vrot.slane %v5945, 6
      %vm6143 = vcmask 1042434
      %v6144 = vsel %vm6143, %v6142, %v6141
      %v6145 = vrot.slane %v5946, 5
      %vm6146 = vcmask 1043459
      %v6147 = vsel %vm6146, %v6145, %v6144
      %v6148 = vrot.slane %v5947, 4
      %vm6149 = vcmask 1044484
      %v6150 = vsel %vm6149, %v6148, %v6147
      %v6151 = vrot.slane %v5948, 3
      %vm6152 = vcmask 1045509
      %v6153 = vsel %vm6152, %v6151, %v6150
      %v6154 = vrot.slane %v5949, 2
      %vm6155 = vcmask 1046534
      %v6156 = vsel %vm6155, %v6154, %v6153
      %v6157 = vrot.slane %v5950, 1
      %vm6158 = vcmask 1047559
      %v6159 = vsel %vm6158, %v6157, %v6156
      %v6160 = vrot.slane %v5952, 7
      %v6161 = vsel %vm6140, %v6160, %v5951
      %v6162 = vrot.slane %v5953, 6
      %v6163 = vsel %vm6143, %v6162, %v6161
      %v6164 = vrot.slane %v5954, 5
      %v6165 = vsel %vm6146, %v6164, %v6163
      %v6166 = vrot.slane %v5955, 4
      %v6167 = vsel %vm6149, %v6166, %v6165
      %v6168 = vrot.slane %v5956, 3
      %v6169 = vsel %vm6152, %v6168, %v6167
      %v6170 = vrot.slane %v5958, 7
      %v6171 = vsel %vm6140, %v6170, %v5957
      %v6172 = vrot.slane %v5959, 6
      %v6173 = vsel %vm6143, %v6172, %v6171
      %v6174 = vrot.slane %v5960, 5
      %v6175 = vsel %vm6146, %v6174, %v6173
      %v6176 = vrot.slane %v5961, 4
      %v6177 = vsel %vm6149, %v6176, %v6175
      %v6178 = vrot.slane %v5962, 3
      %v6179 = vsel %vm6152, %v6178, %v6177
      %v6180 = vrot.slane %v5963, 2
      %v6181 = vsel %vm6155, %v6180, %v6179
      %v6182 = vrot.slane %v5964, 1
      %v6183 = vsel %vm6158, %v6182, %v6181
      %v6184 = vrot.slane %v5966, 7
      %v6185 = vsel %vm6140, %v6184, %v5965
      %v6186 = vrot.slane %v5967, 6
      %v6187 = vsel %vm6143, %v6186, %v6185
      %v6188 = vrot.slane %v5968, 5
      %v6189 = vsel %vm6146, %v6188, %v6187
      %v6190 = vrot.slane %v5969, 4
      %v6191 = vsel %vm6149, %v6190, %v6189
      %v6192 = vrot.slane %v5970, 3
      %v6193 = vsel %vm6152, %v6192, %v6191
      %v6194 = vrot.slane %v5972, 7
      %v6195 = vsel %vm6140, %v6194, %v5971
      %v6196 = vrot.slane %v5973, 6
      %v6197 = vsel %vm6143, %v6196, %v6195
      %v6198 = vrot.slane %v5974, 5
      %v6199 = vsel %vm6146, %v6198, %v6197
      %v6200 = vrot.slane %v5975, 4
      %v6201 = vsel %vm6149, %v6200, %v6199
      %v6202 = vrot.slane %v5976, 3
      %v6203 = vsel %vm6152, %v6202, %v6201
      %v6204 = vrot.slane %v5977, 2
      %v6205 = vsel %vm6155, %v6204, %v6203
      %v6206 = vrot.slane %v5978, 1
      %v6207 = vsel %vm6158, %v6206, %v6205
      %v6208 = vrot.slane %v5980, 7
      %v6209 = vsel %vm6140, %v6208, %v5979
      %v6210 = vrot.slane %v5981, 6
      %v6211 = vsel %vm6143, %v6210, %v6209
      %v6212 = vrot.slane %v5982, 5
      %v6213 = vsel %vm6146, %v6212, %v6211
      %v6214 = vrot.slane %v5983, 4
      %v6215 = vsel %vm6149, %v6214, %v6213
      %v6216 = vrot.slane %v5984, 3
      %v6217 = vsel %vm6152, %v6216, %v6215
      %v6218 = vrot.slane %v5986, 7
      %v6219 = vsel %vm6140, %v6218, %v5985
      %v6220 = vrot.slane %v5987, 6
      %v6221 = vsel %vm6143, %v6220, %v6219
      %v6222 = vrot.slane %v5988, 5
      %v6223 = vsel %vm6146, %v6222, %v6221
      %v6224 = vrot.slane %v5989, 4
      %v6225 = vsel %vm6149, %v6224, %v6223
      %v6226 = vrot.slane %v5990, 3
      %v6227 = vsel %vm6152, %v6226, %v6225
      %v6228 = vrot.slane %v5991, 2
      %v6229 = vsel %vm6155, %v6228, %v6227
      %v6230 = vrot.slane %v5992, 1
      %v6231 = vsel %vm6158, %v6230, %v6229
      %v6232 = vrot.slane %v5994, 7
      %v6233 = vsel %vm6140, %v6232, %v5993
      %v6234 = vrot.slane %v5995, 6
      %v6235 = vsel %vm6143, %v6234, %v6233
      %v6236 = vrot.slane %v5996, 5
      %v6237 = vsel %vm6146, %v6236, %v6235
      %v6238 = vrot.slane %v5997, 4
      %v6239 = vsel %vm6149, %v6238, %v6237
      %v6240 = vrot.slane %v5998, 3
      %v6241 = vsel %vm6152, %v6240, %v6239
      %v6242 = vrot.slane %v6000, 7
      %v6243 = vsel %vm6140, %v6242, %v5999
      %v6244 = vrot.slane %v6001, 6
      %v6245 = vsel %vm6143, %v6244, %v6243
      %v6246 = vrot.slane %v6002, 5
      %v6247 = vsel %vm6146, %v6246, %v6245
      %v6248 = vrot.slane %v6003, 4
      %v6249 = vsel %vm6149, %v6248, %v6247
      %v6250 = vrot.slane %v6004, 3
      %v6251 = vsel %vm6152, %v6250, %v6249
      %v6252 = vrot.slane %v6005, 2
      %v6253 = vsel %vm6155, %v6252, %v6251
      %v6254 = vrot.slane %v6006, 1
      %v6255 = vsel %vm6158, %v6254, %v6253
      %v6256 = vrot.slane %v6008, 7
      %v6257 = vsel %vm6140, %v6256, %v6007
      %v6258 = vrot.slane %v6009, 6
      %v6259 = vsel %vm6143, %v6258, %v6257
      %v6260 = vrot.slane %v6010, 5
      %v6261 = vsel %vm6146, %v6260, %v6259
      %v6262 = vrot.slane %v6011, 4
      %v6263 = vsel %vm6149, %v6262, %v6261
      %v6264 = vrot.slane %v6012, 3
      %v6265 = vsel %vm6152, %v6264, %v6263
      %v6266 = vrot.slane %v6014, 7
      %v6267 = vsel %vm6140, %v6266, %v6013
      %v6268 = vrot.slane %v6015, 6
      %v6269 = vsel %vm6143, %v6268, %v6267
      %v6270 = vrot.slane %v6016, 5
      %v6271 = vsel %vm6146, %v6270, %v6269
      %v6272 = vrot.slane %v6017, 4
      %v6273 = vsel %vm6149, %v6272, %v6271
      %v6274 = vrot.slane %v6018, 3
      %v6275 = vsel %vm6152, %v6274, %v6273
      %v6276 = vrot.slane %v6019, 2
      %v6277 = vsel %vm6155, %v6276, %v6275
      %v6278 = vrot.slane %v6020, 1
      %v6279 = vsel %vm6158, %v6278, %v6277
      %v6280 = vrot.slane %v6022, 7
      %v6281 = vsel %vm6140, %v6280, %v6021
      %v6282 = vrot.slane %v6023, 6
      %v6283 = vsel %vm6143, %v6282, %v6281
      %v6284 = vrot.slane %v6024, 5
      %v6285 = vsel %vm6146, %v6284, %v6283
      %v6286 = vrot.slane %v6025, 4
      %v6287 = vsel %vm6149, %v6286, %v6285
      %v6288 = vrot.slane %v6026, 3
      %v6289 = vsel %vm6152, %v6288, %v6287
      %v6290 = vrot.slane %v6028, 7
      %v6291 = vsel %vm6140, %v6290, %v6027
      %v6292 = vrot.slane %v6029, 6
      %v6293 = vsel %vm6143, %v6292, %v6291
      %v6294 = vrot.slane %v6030, 5
      %v6295 = vsel %vm6146, %v6294, %v6293
      %v6296 = vrot.slane %v6031, 4
      %v6297 = vsel %vm6149, %v6296, %v6295
      %v6298 = vrot.slane %v6032, 3
      %v6299 = vsel %vm6152, %v6298, %v6297
      %v6300 = vrot.slane %v6033, 2
      %v6301 = vsel %vm6155, %v6300, %v6299
      %v6302 = vrot.slane %v6034, 1
      %v6303 = vsel %vm6158, %v6302, %v6301
      %v6304 = vrot.slane %v6036, 7
      %v6305 = vsel %vm6140, %v6304, %v6035
      %v6306 = vrot.slane %v6037, 6
      %v6307 = vsel %vm6143, %v6306, %v6305
      %v6308 = vrot.slane %v6038, 5
      %v6309 = vsel %vm6146, %v6308, %v6307
      %v6310 = vrot.slane %v6039, 4
      %v6311 = vsel %vm6149, %v6310, %v6309
      %v6312 = vrot.slane %v6040, 3
      %v6313 = vsel %vm6152, %v6312, %v6311
      %v6314 = vrot.slane %v6042, 7
      %v6315 = vsel %vm6140, %v6314, %v6041
      %v6316 = vrot.slane %v6043, 6
      %v6317 = vsel %vm6143, %v6316, %v6315
      %v6318 = vrot.slane %v6044, 5
      %v6319 = vsel %vm6146, %v6318, %v6317
      %v6320 = vrot.slane %v6045, 4
      %v6321 = vsel %vm6149, %v6320, %v6319
      %v6322 = vrot.slane %v6046, 3
      %v6323 = vsel %vm6152, %v6322, %v6321
      %v6324 = vrot.slane %v6047, 2
      %v6325 = vsel %vm6155, %v6324, %v6323
      %v6326 = vrot.slane %v6048, 1
      %v6327 = vsel %vm6158, %v6326, %v6325
      %v6328 = vrot.slane %v6050, 7
      %v6329 = vsel %vm6140, %v6328, %v6049
      %v6330 = vrot.slane %v6051, 6
      %v6331 = vsel %vm6143, %v6330, %v6329
      %v6332 = vrot.slane %v6052, 5
      %v6333 = vsel %vm6146, %v6332, %v6331
      %v6334 = vrot.slane %v6053, 4
      %v6335 = vsel %vm6149, %v6334, %v6333
      %v6336 = vrot.slane %v6054, 3
      %v6337 = vsel %vm6152, %v6336, %v6335
      %v6338 = vrot.slane %v6056, 7
      %v6339 = vsel %vm6140, %v6338, %v6055
      %v6340 = vrot.slane %v6057, 6
      %v6341 = vsel %vm6143, %v6340, %v6339
      %v6342 = vrot.slane %v6058, 5
      %v6343 = vsel %vm6146, %v6342, %v6341
      %v6344 = vrot.slane %v6059, 4
      %v6345 = vsel %vm6149, %v6344, %v6343
      %v6346 = vrot.slane %v6060, 3
      %v6347 = vsel %vm6152, %v6346, %v6345
      %v6348 = vrot.slane %v6061, 2
      %v6349 = vsel %vm6155, %v6348, %v6347
      %v6350 = vrot.slane %v6062, 1
      %v6351 = vsel %vm6158, %v6350, %v6349
      %v6352 = vrot.slane %v6064, 7
      %v6353 = vsel %vm6140, %v6352, %v6063
      %v6354 = vrot.slane %v6065, 6
      %v6355 = vsel %vm6143, %v6354, %v6353
      %v6356 = vrot.slane %v6066, 5
      %v6357 = vsel %vm6146, %v6356, %v6355
      %v6358 = vrot.slane %v6067, 4
      %v6359 = vsel %vm6149, %v6358, %v6357
      %v6360 = vrot.slane %v6068, 3
      %v6361 = vsel %vm6152, %v6360, %v6359
      %v6362 = vrot.slane %v6070, 7
      %v6363 = vsel %vm6140, %v6362, %v6069
      %v6364 = vrot.slane %v6071, 6
      %v6365 = vsel %vm6143, %v6364, %v6363
      %v6366 = vrot.slane %v6072, 5
      %v6367 = vsel %vm6146, %v6366, %v6365
      %v6368 = vrot.slane %v6073, 4
      %v6369 = vsel %vm6149, %v6368, %v6367
      %v6370 = vrot.slane %v6074, 3
      %v6371 = vsel %vm6152, %v6370, %v6369
      %v6372 = vrot.slane %v6075, 2
      %v6373 = vsel %vm6155, %v6372, %v6371
      %v6374 = vrot.slane %v6076, 1
      %v6375 = vsel %vm6158, %v6374, %v6373
      %v6376 = vrot.slane %v6078, 7
      %v6377 = vsel %vm6140, %v6376, %v6077
      %v6378 = vrot.slane %v6079, 6
      %v6379 = vsel %vm6143, %v6378, %v6377
      %v6380 = vrot.slane %v6080, 5
      %v6381 = vsel %vm6146, %v6380, %v6379
      %v6382 = vrot.slane %v6081, 4
      %v6383 = vsel %vm6149, %v6382, %v6381
      %v6384 = vrot.slane %v6082, 3
      %v6385 = vsel %vm6152, %v6384, %v6383
      %v6386 = vrot.slane %v6084, 7
      %v6387 = vsel %vm6140, %v6386, %v6083
      %v6388 = vrot.slane %v6085, 6
      %v6389 = vsel %vm6143, %v6388, %v6387
      %v6390 = vrot.slane %v6086, 5
      %v6391 = vsel %vm6146, %v6390, %v6389
      %v6392 = vrot.slane %v6087, 4
      %v6393 = vsel %vm6149, %v6392, %v6391
      %v6394 = vrot.slane %v6088, 3
      %v6395 = vsel %vm6152, %v6394, %v6393
      %v6396 = vrot.slane %v6089, 2
      %v6397 = vsel %vm6155, %v6396, %v6395
      %v6398 = vrot.slane %v6090, 1
      %v6399 = vsel %vm6158, %v6398, %v6397
      %v6400 = vrot.slane %v6092, 7
      %v6401 = vsel %vm6140, %v6400, %v6091
      %v6402 = vrot.slane %v6093, 6
      %v6403 = vsel %vm6143, %v6402, %v6401
      %v6404 = vrot.slane %v6094, 5
      %v6405 = vsel %vm6146, %v6404, %v6403
      %v6406 = vrot.slane %v6095, 4
      %v6407 = vsel %vm6149, %v6406, %v6405
      %v6408 = vrot.slane %v6096, 3
      %v6409 = vsel %vm6152, %v6408, %v6407
      %v6410 = vrot.slane %v6098, 7
      %v6411 = vsel %vm6140, %v6410, %v6097
      %v6412 = vrot.slane %v6099, 6
      %v6413 = vsel %vm6143, %v6412, %v6411
      %v6414 = vrot.slane %v6100, 5
      %v6415 = vsel %vm6146, %v6414, %v6413
      %v6416 = vrot.slane %v6101, 4
      %v6417 = vsel %vm6149, %v6416, %v6415
      %v6418 = vrot.slane %v6102, 3
      %v6419 = vsel %vm6152, %v6418, %v6417
      %v6420 = vrot.slane %v6103, 2
      %v6421 = vsel %vm6155, %v6420, %v6419
      %v6422 = vrot.slane %v6104, 1
      %v6423 = vsel %vm6158, %v6422, %v6421
      %v6424 = vrot.slane %v6106, 7
      %v6425 = vsel %vm6140, %v6424, %v6105
      %v6426 = vrot.slane %v6107, 6
      %v6427 = vsel %vm6143, %v6426, %v6425
      %v6428 = vrot.slane %v6108, 5
      %v6429 = vsel %vm6146, %v6428, %v6427
      %v6430 = vrot.slane %v6109, 4
      %v6431 = vsel %vm6149, %v6430, %v6429
      %v6432 = vrot.slane %v6110, 3
      %v6433 = vsel %vm6152, %v6432, %v6431
      %v6434 = vrot.slane %v6112, 7
      %v6435 = vsel %vm6140, %v6434, %v6111
      %v6436 = vrot.slane %v6113, 6
      %v6437 = vsel %vm6143, %v6436, %v6435
      %v6438 = vrot.slane %v6114, 5
      %v6439 = vsel %vm6146, %v6438, %v6437
      %v6440 = vrot.slane %v6115, 4
      %v6441 = vsel %vm6149, %v6440, %v6439
      %v6442 = vrot.slane %v6116, 3
      %v6443 = vsel %vm6152, %v6442, %v6441
      %v6444 = vrot.slane %v6117, 2
      %v6445 = vsel %vm6155, %v6444, %v6443
      %v6446 = vrot.slane %v6118, 1
      %v6447 = vsel %vm6158, %v6446, %v6445
      %v6448 = vrot.slane %v6120, 7
      %v6449 = vsel %vm6140, %v6448, %v6119
      %v6450 = vrot.slane %v6121, 6
      %v6451 = vsel %vm6143, %v6450, %v6449
      %v6452 = vrot.slane %v6122, 5
      %v6453 = vsel %vm6146, %v6452, %v6451
      %v6454 = vrot.slane %v6123, 4
      %v6455 = vsel %vm6149, %v6454, %v6453
      %v6456 = vrot.slane %v6124, 3
      %v6457 = vsel %vm6152, %v6456, %v6455
      %v6458 = vrot.slane %v6126, 7
      %v6459 = vsel %vm6140, %v6458, %v6125
      %v6460 = vrot.slane %v6127, 6
      %v6461 = vsel %vm6143, %v6460, %v6459
      %v6462 = vrot.slane %v6128, 5
      %v6463 = vsel %vm6146, %v6462, %v6461
      %v6464 = vrot.slane %v6129, 4
      %v6465 = vsel %vm6149, %v6464, %v6463
      %v6466 = vrot.slane %v6130, 3
      %v6467 = vsel %vm6152, %v6466, %v6465
      %v6468 = vrot.slane %v6131, 2
      %v6469 = vsel %vm6155, %v6468, %v6467
      %v6470 = vrot.slane %v6132, 1
      %v6471 = vsel %vm6158, %v6470, %v6469
      %v6472 = vrot.slane %v6134, 7
      %v6473 = vsel %vm6140, %v6472, %v6133
      %v6474 = vrot.slane %v6135, 6
      %v6475 = vsel %vm6143, %v6474, %v6473
      %v6476 = vrot.slane %v6136, 5
      %v6477 = vsel %vm6146, %v6476, %v6475
      %v6478 = vrot.slane %v6137, 4
      %v6479 = vsel %vm6149, %v6478, %v6477
      %v6480 = vrot.slane %v6138, 3
      %v6481 = vsel %vm6152, %v6480, %v6479
      %v6482 = vpack.c.b16 %v6159, %v6159
      %v6483 = vpack.c.b16 %v6169, %v6169
      %v6484 = vpack.c.b16 %v6183, %v6183
      %v6485 = vpack.c.b16 %v6193, %v6193
      %v6486 = vpack.c.b16 %v6207, %v6207
      %v6487 = vpack.c.b16 %v6217, %v6217
      %v6488 = vpack.c.b16 %v6231, %v6231
      %v6489 = vpack.c.b16 %v6241, %v6241
      %v6490 = vpack.c.b16 %v6255, %v6255
      %v6491 = vpack.c.b16 %v6265, %v6265
      %v6492 = vpack.c.b16 %v6279, %v6279
      %v6493 = vpack.c.b16 %v6289, %v6289
      %v6494 = vpack.c.b16 %v6303, %v6303
      %v6495 = vpack.c.b16 %v6313, %v6313
      %v6496 = vpack.c.b16 %v6327, %v6327
      %v6497 = vpack.c.b16 %v6337, %v6337
      %v6498 = vpack.c.b16 %v6351, %v6351
      %v6499 = vpack.c.b16 %v6361, %v6361
      %v6500 = vpack.c.b16 %v6375, %v6375
      %v6501 = vpack.c.b16 %v6385, %v6385
      %v6502 = vpack.c.b16 %v6399, %v6399
      %v6503 = vpack.c.b16 %v6409, %v6409
      %v6504 = vpack.c.b16 %v6423, %v6423
      %v6505 = vpack.c.b16 %v6433, %v6433
      %v6506 = vpack.c.b16 %v6447, %v6447
      %v6507 = vpack.c.b16 %v6457, %v6457
      %v6508 = vpack.c.b16 %v6471, %v6471
      %v6509 = vpack.c.b16 %v6481, %v6481
      %vm6538 = vcmask 60416
      %6539 = vst.msk [vmem:[%s170] sm:$0xf] %vm6538, %v6482
      %vm6540 = vcmask 59392
      %6541 = vst.msk [vmem:[%s170 + $0x4] sm:$0x7] %vm6540, %v6483
      %6542 = vst.msk [vmem:[%s170 + $0x8] sm:$0xf] %vm6538, %v6484
      %6543 = vst.msk [vmem:[%s170 + $0xc] sm:$0x7] %vm6540, %v6485
      %6544 = vst.msk [vmem:[%s170 + $0x10] sm:$0xf] %vm6538, %v6486
      %6545 = vst.msk [vmem:[%s170 + $0x14] sm:$0x7] %vm6540, %v6487
      %6546 = vst.msk [vmem:[%s170 + $0x18] sm:$0xf] %vm6538, %v6488
      %6547 = vst.msk [vmem:[%s170 + $0x1c] sm:$0x7] %vm6540, %v6489
      %6548 = vst.msk [vmem:[%s170 + $0x20] sm:$0xf] %vm6538, %v6490
      %6549 = vst.msk [vmem:[%s170 + $0x24] sm:$0x7] %vm6540, %v6491
      %6550 = vst.msk [vmem:[%s170 + $0x28] sm:$0xf] %vm6538, %v6492
      %6551 = vst.msk [vmem:[%s170 + $0x2c] sm:$0x7] %vm6540, %v6493
      %6552 = vst.msk [vmem:[%s170 + $0x30] sm:$0xf] %vm6538, %v6494
      %6553 = vst.msk [vmem:[%s170 + $0x34] sm:$0x7] %vm6540, %v6495
      %6554 = vst.msk [vmem:[%s170 + $0x38] sm:$0xf] %vm6538, %v6496
      %6555 = vst.msk [vmem:[%s170 + $0x3c] sm:$0x7] %vm6540, %v6497
      %6556 = vst.msk [vmem:[%s170 + $0x40] sm:$0xf] %vm6538, %v6498
      %6557 = vst.msk [vmem:[%s170 + $0x44] sm:$0x7] %vm6540, %v6499
      %6558 = vst.msk [vmem:[%s170 + $0x48] sm:$0xf] %vm6538, %v6500
      %6559 = vst.msk [vmem:[%s170 + $0x4c] sm:$0x7] %vm6540, %v6501
      %6560 = vst.msk [vmem:[%s170 + $0x50] sm:$0xf] %vm6538, %v6502
      %6561 = vst.msk [vmem:[%s170 + $0x54] sm:$0x7] %vm6540, %v6503
      %6562 = vst.msk [vmem:[%s170 + $0x58] sm:$0xf] %vm6538, %v6504
      %6563 = vst.msk [vmem:[%s170 + $0x5c] sm:$0x7] %vm6540, %v6505
      %6564 = vst.msk [vmem:[%s170 + $0x60] sm:$0xf] %vm6538, %v6506
      %6565 = vst.msk [vmem:[%s170 + $0x64] sm:$0x7] %vm6540, %v6507
      %6566 = vst.msk [vmem:[%s170 + $0x68] sm:$0xf] %vm6538, %v6508
      %6567 = vst.msk [vmem:[%s170 + $0x6c] sm:$0x7] %vm6540, %v6509
      %p6568 = scmp.lt.s32.totalorder %s14, 1
      %s6569 = scalar_select %p6568, %s14, 1
      %s6570 = smul.addr %s6569, 28
      %s6571 = smul.addr %s6570, 4
      %s6572 = scalar_lea.vmem %s3, %s6571
      // Predicated region
      $region33: #{cnn_forward.3} parent=31 // pred_check
        %p6573 = pneg %p100
      $region34: #{cnn_forward.3} parent=31 // pred_check_branch
        %6575 = sbr.rel (%p6573) target = $region36
      $region35: #{cnn_forward.3} parent=31 // pred_region
        _
      $region36: #{cnn_forward.3} parent=31 // pred_fallthru
        _
    $region32: #{cnn_forward.3} parent=5 // pred_fallthru
      _
    %p6576 = scmp.le.s32.totalorder 2, %s9
    // Predicated region
    $region37: #{cnn_forward.3} parent=5 // pred_check
      %p6577 = pneg %p6576
    $region38: #{cnn_forward.3} parent=5 // pred_check_branch
      %6579 = sbr.rel (%p6577) target = $region40
    $region39: #{cnn_forward.3} parent=5 // pred_region
      %s6580 = ssub.s32 %s9, 2
      // Predicated region
      $region41: #{cnn_forward.3} parent=39 // pred_check
        %p6581 = pneg %p106
      $region42: #{cnn_forward.3} parent=39 // pred_check_branch
        %6583 = sbr.rel (%p6581) target = $region44
      $region43: #{cnn_forward.3} parent=39 // pred_region
        %p6584 = scmp.lt.s32.totalorder %s15, 1
        %s6585 = scalar_select %p6584, %s15, 1
        %s6586 = smul.addr %s6585, 28
        %s6587 = smul.addr %s6586, 4
        %s6588 = scalar_lea.vmem %s3, %s6587
      $region44: #{cnn_forward.3} parent=39 // pred_fallthru
        _
    $region40: #{cnn_forward.3} parent=5 // pred_fallthru
      _
  $region6: #{cnn_forward.3} parent=0 // loop_footer
    %s13 = sadd.s32 1, %s9
  $region7: #{cnn_forward.3} parent=0 // loop_footer_branch
    %8 = sbr.rel target = $region3
  $region8: #{cnn_forward.3} parent=0 // loop_exit
    _

// kernel: cnn_forward.4
$region0: #{cnn_forward.4}
  #allocation0 [shape = 'u32[]', space=smem, size = 0x4, offset = 0x4, fixed_abs, tag = 'smem constant byte address 0x4 - core index']
  #allocation1 [shape = 'u32[144,128]{1,0:T(1,128)}', space=vmem, size = 0x12000, scoped, tag = 'internal scratch']
  %s0 = inlined_call_operand.vmem [shape: bf16[2,100,200], index: 0, kind: input, shape index: {}]
  %s1 = inlined_call_operand.vmem [shape: bf16[200,128], index: 1, kind: input, shape index: {}]
  %s2 = inlined_call_operand.vmem [shape: f32[1,128], index: 2, kind: input, shape index: {}]
  %s3 = inlined_call_operand.vmem [shape: bf16[2,5,5,16], index: 3, kind: output, shape index: {}]
  %s4 = sld [smem:[#allocation0]]
  $region45: #{cnn_forward.4} parent=0
    _
  %s6 = ssub.s32 1, %s4
  %s7 = scalar_select 0, %s6, %s4
  loop: start=0, step=1, limit=4
  $region2: #{cnn_forward.4} parent=0 // loop_pre_header
    _
  $region3: #{cnn_forward.4} parent=0 // loop_header
    %s9 = sphi 0, %s13
    %p10 = scmp.ge.s32.totalorder %s9, 4
    %s19 = sphi 0, %s21
    %s22 = sphi 0, %s19
    %s23 = sphi 0, %s22
    %s39 = sphi 0, %s23
    %s43 = sphi 0, %s43
    %s45 = sphi 0, %s43
    %s46 = sphi 0, %s45
    %s60 = sphi 0, %s46
    %s64 = sphi 0, %s64
    %s66 = sphi 0, %s64
    %s67 = sphi 0, %s66
    %s81 = sphi 0, %s67
    %s87 = sphi 0, %s89
    %s90 = sphi 0, %s87
    %s91 = sphi 0, %s90
    %s107 = sphi 0, %s91
  $region4: #{cnn_forward.4} parent=0 // loop_header_branch
    %12 = sbr.rel (%p10) target = $region8
  $region5: #{cnn_forward.4} parent=0 // loop_body
    %s14 = ssub.s32 %s9, 1
    %s15 = ssub.s32 %s9, 2
    %s16 = sadd.s32 %s9, 1
    %s17 = ssub.s32 %s9, %s16
    %p18 = scmp.eq.s32.totalorder %s17, 0
    %s20 = sadd.s32 %s19, 1
    %s21 = scalar_select %p18, %s19, %s20
    %p24 = pneg %p18
    %p25 = scmp.eq.s32.totalorder %s9, 1
    %p26 = por %p24, %p25
    %p27 = scmp.ne.s32.totalorder %s19, %s22
    %p28 = scmp.eq.s32.totalorder %s9, 0
    %p29 = por %p27, %p28
    %p30 = scmp.ne.s32.totalorder %s19, %s22
    %p31 = scmp.eq.s32.totalorder %s14, 1
    %p32 = por %p30, %p31
    %p33 = scmp.ne.s32.totalorder %s22, %s23
    %p34 = scmp.eq.s32.totalorder %s14, 0
    %p35 = por %p33, %p34
    %p36 = scmp.ne.s32.totalorder %s22, %s23
    %p37 = scmp.eq.s32.totalorder %s15, 1
    %p38 = por %p36, %p37
    %p40 = scmp.ne.s32.totalorder %s23, %s39
    %p41 = scmp.eq.s32.totalorder %s15, 0
    %p42 = por %p40, %p41
    %s44 = sadd.s32 %s43, 1
    %p47 = scmp.eq.s32.totalorder %s9, 1
    %p48 = scmp.ne.s32.totalorder %s43, %s45
    %p49 = scmp.eq.s32.totalorder %s9, 0
    %p50 = por %p48, %p49
    %p51 = scmp.ne.s32.totalorder %s43, %s45
    %p52 = scmp.eq.s32.totalorder %s14, 1
    %p53 = por %p51, %p52
    %p54 = scmp.ne.s32.totalorder %s45, %s46
    %p55 = scmp.eq.s32.totalorder %s14, 0
    %p56 = por %p54, %p55
    %p57 = scmp.ne.s32.totalorder %s45, %s46
    %p58 = scmp.eq.s32.totalorder %s15, 1
    %p59 = por %p57, %p58
    %p61 = scmp.ne.s32.totalorder %s46, %s60
    %p62 = scmp.eq.s32.totalorder %s15, 0
    %p63 = por %p61, %p62
    %s65 = sadd.s32 %s64, 1
    %p68 = scmp.eq.s32.totalorder %s9, 1
    %p69 = scmp.ne.s32.totalorder %s64, %s66
    %p70 = scmp.eq.s32.totalorder %s9, 0
    %p71 = por %p69, %p70
    %p72 = scmp.ne.s32.totalorder %s64, %s66
    %p73 = scmp.eq.s32.totalorder %s14, 1
    %p74 = por %p72, %p73
    %p75 = scmp.ne.s32.totalorder %s66, %s67
    %p76 = scmp.eq.s32.totalorder %s14, 0
    %p77 = por %p75, %p76
    %p78 = scmp.ne.s32.totalorder %s66, %s67
    %p79 = scmp.eq.s32.totalorder %s15, 1
    %p80 = por %p78, %p79
    %p82 = scmp.ne.s32.totalorder %s67, %s81
    %p83 = scmp.eq.s32.totalorder %s15, 0
    %p84 = por %p82, %p83
    %s85 = ssub.s32 %s9, %s16
    %p86 = scmp.eq.s32.totalorder %s85, 0
    %s88 = sadd.s32 %s87, 1
    %s89 = scalar_select %p86, %s87, %s88
    %p92 = pneg %p86
    %p93 = scmp.eq.s32.totalorder %s9, 1
    %p94 = por %p92, %p93
    %p95 = scmp.ne.s32.totalorder %s87, %s90
    %p96 = scmp.eq.s32.totalorder %s9, 0
    %p97 = por %p95, %p96
    %p98 = scmp.ne.s32.totalorder %s87, %s90
    %p99 = scmp.eq.s32.totalorder %s14, 1
    %p100 = por %p98, %p99
    %p101 = scmp.ne.s32.totalorder %s90, %s91
    %p102 = scmp.eq.s32.totalorder %s14, 0
    %p103 = por %p101, %p102
    %p104 = scmp.ne.s32.totalorder %s90, %s91
    %p105 = scmp.eq.s32.totalorder %s15, 1
    %p106 = por %p104, %p105
    %p108 = scmp.ne.s32.totalorder %s91, %s107
    %p109 = scmp.eq.s32.totalorder %s15, 0
    %p110 = por %p108, %p109
    %p111 = scmp.le.s32.totalorder 1, %s9
    %p112 = scmp.lt.s32.totalorder %s9, 3
    %p113 = pnand %p111, %p112
    %p114 = pneg %p113
    // Predicated region
    $region9: #{cnn_forward.4} parent=5 // pred_check
      _
    $region10: #{cnn_forward.4} parent=5 // pred_check_branch
      %116 = sbr.rel (%p113) target = $region12
    $region11: #{cnn_forward.4} parent=5 // pred_region
      %s117 = ssub.s32 %s9, 1
      // Predicated region
      $region13: #{cnn_forward.4} parent=11 // pred_check
        %p118 = pneg %p56
      $region14: #{cnn_forward.4} parent=11 // pred_check_branch
        %120 = sbr.rel (%p118) target = $region16
      $region15: #{cnn_forward.4} parent=11 // pred_region
        _
      $region16: #{cnn_forward.4} parent=11 // pred_fallthru
        _
      // Predicated region
      $region17: #{cnn_forward.4} parent=11 // pred_check
        %p121 = pneg %p77
      $region18: #{cnn_forward.4} parent=11 // pred_check_branch
        %123 = sbr.rel (%p121) target = $region20
      $region19: #{cnn_forward.4} parent=11 // pred_region
        _
      $region20: #{cnn_forward.4} parent=11 // pred_fallthru
        _
    $region12: #{cnn_forward.4} parent=5 // pred_fallthru
      _
    %p124 = scmp.lt.s32.totalorder %s9, 2
    // Predicated region
    $region21: #{cnn_forward.4} parent=5 // pred_check
      %p125 = pneg %p124
    $region22: #{cnn_forward.4} parent=5 // pred_check_branch
      %127 = sbr.rel (%p125) target = $region24
    $region23: #{cnn_forward.4} parent=5 // pred_region
      // Predicated region
      $region25: #{cnn_forward.4} parent=23 // pred_check
        %p128 = pneg %p29
      $region26: #{cnn_forward.4} parent=23 // pred_check_branch
        %130 = sbr.rel (%p128) target = $region28
      $region27: #{cnn_forward.4} parent=23 // pred_region
        %p131 = scmp.lt.s32.totalorder %s9, 1
        %s132 = scalar_select %p131, %s9, 1
        %s133 = smul.addr %s132, 26
        %s134 = smul.addr %s133, 4
        %s135 = scalar_lea.vmem %s0, %s134
      $region28: #{cnn_forward.4} parent=23 // pred_fallthru
        _
    $region24: #{cnn_forward.4} parent=5 // pred_fallthru
      _
    %p136 = scmp.le.s32.totalorder 1, %s9
    %p137 = scmp.lt.s32.totalorder %s9, 3
    %p138 = pnand %p136, %p137
    %p139 = pneg %p138
    // Predicated region
    $region29: #{cnn_forward.4} parent=5 // pred_check
      _
    $region30: #{cnn_forward.4} parent=5 // pred_check_branch
      %141 = sbr.rel (%p138) target = $region32
    $region31: #{cnn_forward.4} parent=5 // pred_region
      %s142 = ssub.s32 %s9, 1
      %p143 = scmp.lt.s32.totalorder %s14, 1
      %s144 = scalar_select %p143, %s14, 1
      %s145 = smul.addr %s144, 26
      %s146 = smul.addr %s145, 4
      %s147 = scalar_lea.vmem %s0, %s146
      %p148 = pneg %p35
      %p149 = pneg %p32
      %p150 = pneg %p56
      %p151 = pneg %p53
      %p152 = pneg %p77
      %p153 = pneg %p74
      %p154 = pneg %p103
      %p155 = pneg %p100
      %p156 = scmp.lt.s32.totalorder %s14, 1
      %s157 = scalar_select %p156, %s14, 1
      %s158 = smul.addr %s157, 5
      %s159 = smul.addr %s158, 4
      %s160 = scalar_lea.vmem %s3, %s159
      %p161 = scmp.lt.s32.totalorder %s14, 1
      %s162 = scalar_select %p161, %s14, 1
      %s163 = smul.addr %s162, 26
      %s164 = smul.addr %s163, 4
      %s165 = scalar_lea.vmem %s0, %s164
      %p166 = scmp.lt.s32.totalorder %s14, 1
      %s167 = scalar_select %p166, %s14, 1
      %s168 = smul.addr %s167, 5
      %s169 = smul.addr %s168, 4
      %s170 = scalar_lea.vmem %s3, %s169
      %v172 = vld [vmem:[%s165] sm:$0xff]
      %v173 = vld [vmem:[%s165 + $0x8] sm:$0xff]
      %v174 = vld [vmem:[%s165 + $0x10] sm:$0xff]
      %v175 = vld [vmem:[%s165 + $0x18] sm:$0xff]
      %v176 = vld [vmem:[%s165 + $0x20] sm:$0xff]
      %v177 = vld [vmem:[%s165 + $0x28] sm:$0xff]
      %v178 = vld [vmem:[%s165 + $0x30] sm:$0xff]
      %v179 = vld [vmem:[%s165 + $0x38] sm:$0xff]
      %v180 = vld [vmem:[%s165 + $0x40] sm:$0xff]
      %v181 = vld [vmem:[%s165 + $0x48] sm:$0xff]
      %v182 = vld [vmem:[%s165 + $0x50] sm:$0xff]
      %v183 = vld [vmem:[%s165 + $0x58] sm:$0xff]
      %v184 = vld [vmem:[%s165 + $0x60] sm:$0x33]
      %v185 = vld [vmem:[%s1] sm:$0xf]
      %v186 = vld [vmem:[%s1 + $0x4] sm:$0xf]
      %v187 = vld [vmem:[%s1 + $0x8] sm:$0xf]
      %v188 = vld [vmem:[%s1 + $0xc] sm:$0xf]
      %v189 = vld [vmem:[%s1 + $0x10] sm:$0xf]
      %v190 = vld [vmem:[%s1 + $0x14] sm:$0xf]
      %v191 = vld [vmem:[%s1 + $0x18] sm:$0xf]
      %v192 = vld [vmem:[%s1 + $0x1c] sm:$0xf]
      %v193 = vld [vmem:[%s1 + $0x20] sm:$0xf]
      %v194 = vld [vmem:[%s1 + $0x24] sm:$0xf]
      %v195 = vld [vmem:[%s1 + $0x28] sm:$0xf]
      %v196 = vld [vmem:[%s1 + $0x2c] sm:$0xf]
      %v197 = vld [vmem:[%s1 + $0x30] sm:$0xf]
      %v198 = vld [vmem:[%s1 + $0x34] sm:$0xf]
      %v199 = vld [vmem:[%s1 + $0x38] sm:$0xf]
      %v200 = vld [vmem:[%s1 + $0x3c] sm:$0xf]
      %v201 = vld [vmem:[%s1 + $0x40] sm:$0xf]
      %v202 = vld [vmem:[%s1 + $0x44] sm:$0xf]
      %v203 = vld [vmem:[%s1 + $0x48] sm:$0xf]
      %v204 = vld [vmem:[%s1 + $0x4c] sm:$0xf]
      %v205 = vld [vmem:[%s1 + $0x50] sm:$0xf]
      %v206 = vld [vmem:[%s1 + $0x54] sm:$0xf]
      %v207 = vld [vmem:[%s1 + $0x58] sm:$0xf]
      %v208 = vld [vmem:[%s1 + $0x5c] sm:$0xf]
      %v209 = vld [vmem:[%s1 + $0x60] sm:$0xf]
      %v210 = vld [vmem:[%s2] sm:$0x1]
      %v212 = vlaneseq
      %v213 = vshrl.u32 %v212, 7
      %v214 = vsub.s32 0, %v213
      %v215 = vrot.slane %v210, %v214
      %v230 = vunpack.c.l.b16 %v172
      %v231 = vunpack.c.h.b16 %v172
      %v232 = vunpack.c.l.b16 %v173
      %v233 = vunpack.c.h.b16 %v173
      %v234 = vunpack.c.l.b16 %v174
      %v235 = vunpack.c.h.b16 %v174
      %v236 = vunpack.c.l.b16 %v175
      %v237 = vunpack.c.h.b16 %v175
      %v238 = vunpack.c.l.b16 %v176
      %v239 = vunpack.c.h.b16 %v176
      %v240 = vunpack.c.l.b16 %v177
      %v241 = vunpack.c.h.b16 %v177
      %v242 = vunpack.c.l.b16 %v178
      %v243 = vunpack.c.h.b16 %v178
      %v244 = vunpack.c.l.b16 %v179
      %v245 = vunpack.c.h.b16 %v179
      %v246 = vunpack.c.l.b16 %v180
      %v247 = vunpack.c.h.b16 %v180
      %v248 = vunpack.c.l.b16 %v181
      %v249 = vunpack.c.h.b16 %v181
      %v250 = vunpack.c.l.b16 %v182
      %v251 = vunpack.c.h.b16 %v182
      %v252 = vunpack.c.l.b16 %v183
      %v253 = vunpack.c.h.b16 %v183
      %v254 = vunpack.c.l.b16 %v184
      %v255 = vunpack.c.h.b16 %v184
      %v256 = vpack.c.b16 %v232, %v230
      %v257 = vpack.c.b16 %v233, %v231
      %v258 = vpack.c.b16 %v236, %v234
      %v259 = vpack.c.b16 %v237, %v235
      %v260 = vpack.c.b16 %v240, %v238
      %v261 = vpack.c.b16 %v241, %v239
      %v262 = vpack.c.b16 %v244, %v242
      %v263 = vpack.c.b16 %v245, %v243
      %v264 = vpack.c.b16 %v248, %v246
      %v265 = vpack.c.b16 %v249, %v247
      %v266 = vpack.c.b16 %v252, %v250
      %v267 = vpack.c.b16 %v253, %v251
      %v268 = vpack.c.b16 %v254, %v254
      %v269 = vpack.c.b16 %v255, %v255
      %v302 = vunpack.c.l.b16 %v185
      %v303 = vunpack.c.l.b16 %v186
      %v304 = vunpack.c.l.b16 %v187
      %v305 = vunpack.c.l.b16 %v188
      %v306 = vunpack.c.l.b16 %v189
      %v307 = vunpack.c.l.b16 %v190
      %v308 = vunpack.c.l.b16 %v191
      %v309 = vunpack.c.l.b16 %v192
      %v310 = vunpack.c.l.b16 %v193
      %v311 = vunpack.c.l.b16 %v194
      %v312 = vunpack.c.l.b16 %v195
      %v313 = vunpack.c.l.b16 %v196
      %v314 = vunpack.c.l.b16 %v197
      %v315 = vunpack.c.l.b16 %v198
      %v316 = vunpack.c.l.b16 %v199
      %v317 = vunpack.c.l.b16 %v200
      %v318 = vunpack.c.l.b16 %v201
      %v319 = vunpack.c.l.b16 %v202
      %v320 = vunpack.c.l.b16 %v203
      %v321 = vunpack.c.l.b16 %v204
      %v322 = vunpack.c.l.b16 %v205
      %v323 = vunpack.c.l.b16 %v206
      %v324 = vunpack.c.l.b16 %v207
      %v325 = vunpack.c.l.b16 %v208
      %v326 = vunpack.c.l.b16 %v209
      %v327 = vpack.c.b16 %v303, %v302
      %v328 = vpack.c.b16 %v305, %v304
      %v329 = vpack.c.b16 %v307, %v306
      %v330 = vpack.c.b16 %v309, %v308
      %v331 = vpack.c.b16 %v311, %v310
      %v332 = vpack.c.b16 %v313, %v312
      %v333 = vpack.c.b16 %v315, %v314
      %v334 = vpack.c.b16 %v317, %v316
      %v335 = vpack.c.b16 %v319, %v318
      %v336 = vpack.c.b16 %v321, %v320
      %v337 = vpack.c.b16 %v323, %v322
      %v338 = vpack.c.b16 %v325, %v324
      %v339 = vpack.c.b16 %v326, %v326
      %vm352 = vcmask 588800
      %v354 = vsel %vm352, %v257, 0
      %v357 = vsel %vm352, %v259, 0
      %v360 = vsel %vm352, %v261, 0
      %v363 = vsel %vm352, %v263, 0
      %v366 = vsel %vm352, %v265, 0
      %v369 = vsel %vm352, %v267, 0
      %v372 = vsel %vm352, %v269, 0
      %vm374 = vcmask 1043456
      %v376 = vsel %vm374, %v339, 0
      %378 = vmatprep.subr.bf16.mxu0 0
      %379 = vmatpush1.bf16.msra.mxu0 %v327
      %380 = vmatprep.subr.bf16.mxu0 0
      %381 = vmatpush1.bf16.msra.mxu0 %v328
      %382 = vmatprep.subr.bf16.mxu0 0
      %383 = vmatpush1.bf16.msra.mxu0 %v329
      %384 = vmatprep.subr.bf16.mxu0 0
      %385 = vmatpush1.bf16.msra.mxu0 %v330
      %386 = vmatprep.subr.bf16.mxu0 0
      %387 = vmatpush1.bf16.msra.mxu0 %v331
      %388 = vmatprep.subr.bf16.mxu0 0
      %389 = vmatpush1.bf16.msra.mxu0 %v332
      %390 = vmatprep.subr.bf16.mxu0 0
      %391 = vmatpush1.bf16.msra.mxu0 %v333
      %392 = vmatprep.subr.bf16.mxu0 0
      %393 = vmatpush1.bf16.msra.mxu0 %v334
      %394 = vmatprep.subr.bf16.mxu0 0
      %395 = vmatpush1.bf16.msra.mxu0 %v335
      %396 = vmatprep.subr.bf16.mxu0 0
      %397 = vmatpush1.bf16.msra.mxu0 %v336
      %398 = vmatprep.subr.bf16.mxu0 0
      %399 = vmatpush1.bf16.msra.mxu0 %v337
      %400 = vmatprep.subr.bf16.mxu0 0
      %401 = vmatpush1.bf16.msra.mxu0 %v338
      %402 = vmatprep.subr.bf16.mxu0 0
      %403 = vmatpush1.bf16.msra.mxu0 %v376
      %404 = vmatprep.subr.bf16.mxu0 0
      %405 = vmatpush1.bf16.msra.mxu0 0
      %406 = vmatprep.subr.bf16.mxu0 0
      %407 = vmatpush1.bf16.msra.mxu0 0
      %408 = vmatprep.subr.bf16.mxu0 0
      %409 = vmatpush1.bf16.msra.mxu0 0
      %410 = vmatprep.mubr.bf16.mxu0 %v354
      %411 = vmatmul.mubr.bf16.gmra.mrb[0].mxu0 %v256
      %v412 = vpop.f32.mrb[0].mxu0
      %v413 = vadd.f32 %v215, %v412
      %v414 = vpop.f32.mrb[0].mxu0
      %v415 = vpop.f32.mrb[0].mxu0
      %v416 = vadd.f32 %v215, %v415
      %v417 = vpop.f32.mrb[0].mxu0
      %418 = vmatprep.mubr.bf16.mxu0 %v357
      %419 = vmatmul.mubr.bf16.gmra.mrb[0].mxu0 %v258
      %v420 = vpop.f32.mrb[0].mxu0
      %v421 = vadd.f32 %v215, %v420
      %v422 = vpop.f32.mrb[0].mxu0
      %v423 = vpop.f32.mrb[0].mxu0
      %v424 = vadd.f32 %v215, %v423
      %v425 = vpop.f32.mrb[0].mxu0
      %426 = vmatprep.mubr.bf16.mxu0 %v360
      %427 = vmatmul.mubr.bf16.gmra.mrb[0].mxu0 %v260
      %v428 = vpop.f32.mrb[0].mxu0
      %v429 = vadd.f32 %v215, %v428
      %v430 = vpop.f32.mrb[0].mxu0
      %v431 = vpop.f32.mrb[0].mxu0
      %v432 = vadd.f32 %v215, %v431
      %v433 = vpop.f32.mrb[0].mxu0
      %434 = vmatprep.mubr.bf16.mxu0 %v363
      %435 = vmatmul.mubr.bf16.gmra.mrb[0].mxu0 %v262
      %v436 = vpop.f32.mrb[0].mxu0
      %v437 = vadd.f32 %v215, %v436
      %v438 = vpop.f32.mrb[0].mxu0
      %v439 = vpop.f32.mrb[0].mxu0
      %v440 = vadd.f32 %v215, %v439
      %v441 = vpop.f32.mrb[0].mxu0
      %442 = vmatprep.mubr.bf16.mxu0 %v366
      %443 = vmatmul.mubr.bf16.gmra.mrb[0].mxu0 %v264
      %v444 = vpop.f32.mrb[0].mxu0
      %v445 = vadd.f32 %v215, %v444
      %v446 = vpop.f32.mrb[0].mxu0
      %v447 = vpop.f32.mrb[0].mxu0
      %v448 = vadd.f32 %v215, %v447
      %v449 = vpop.f32.mrb[0].mxu0
      %450 = vmatprep.mubr.bf16.mxu0 %v369
      %451 = vmatmul.mubr.bf16.gmra.mrb[0].mxu0 %v266
      %v452 = vpop.f32.mrb[0].mxu0
      %v453 = vadd.f32 %v215, %v452
      %v454 = vpop.f32.mrb[0].mxu0
      %v455 = vpop.f32.mrb[0].mxu0
      %v456 = vadd.f32 %v215, %v455
      %v457 = vpop.f32.mrb[0].mxu0
      %458 = vmatprep.mubr.bf16.mxu0 %v372
      %459 = vmatmul.mubr.bf16.gmra.mrb[0].mxu0 %v268
      %v460 = vpop.f32.mrb[0].mxu0
      %v461 = vadd.f32 %v215, %v460
      %v462 = vpop.f32.mrb[0].mxu0
      %v463 = vpop.f32.mrb[0].mxu0
      %v464 = vpop.f32.mrb[0].mxu0
      %465 = vdwg.mxu0
      %v466 = vmax.f32 %v413, 0.0
      %v467 = vmax.f32 %v416, 0.0
      %v468 = vmax.f32 %v421, 0.0
      %v469 = vmax.f32 %v424, 0.0
      %v470 = vmax.f32 %v429, 0.0
      %v471 = vmax.f32 %v432, 0.0
      %v472 = vmax.f32 %v437, 0.0
      %v473 = vmax.f32 %v440, 0.0
      %v474 = vmax.f32 %v445, 0.0
      %v475 = vmax.f32 %v448, 0.0
      %v476 = vmax.f32 %v453, 0.0
      %v477 = vmax.f32 %v456, 0.0
      %v478 = vmax.f32 %v461, 0.0
      %v492 = vcombine.high %v466, %v466
      %v494 = vunpack.c.l.s4 1983009808
      %v495 = vunpack.c.0.s8 %v494
      %v496 = vlaneseq
      %v497 = vshrl.u32 %v496, 7
      %v498 = vsub.s32 %v495, %v497
      %v499 = vrot.slane %v466, %v498
      %v501 = vunpack.c.l.s4 1983009808
      %v502 = vunpack.c.0.s8 %v501
      %v503 = vlaneseq
      %v504 = vshrl.u32 %v503, 7
      %v505 = vsub.s32 %v502, %v504
      %v506 = vrot.slane %v492, %v505
      %v507 = vcombine.high %v499, %v499
      %v508 = vcombine.high %v506, %v506
      %v509 = vcombine.high %v467, %v467
      %v511 = vunpack.c.l.s4 1983009808
      %v512 = vunpack.c.0.s8 %v511
      %v513 = vlaneseq
      %v514 = vshrl.u32 %v513, 7
      %v515 = vsub.s32 %v512, %v514
      %v516 = vrot.slane %v467, %v515
      %v518 = vunpack.c.l.s4 1983009808
      %v519 = vunpack.c.0.s8 %v518
      %v520 = vlaneseq
      %v521 = vshrl.u32 %v520, 7
      %v522 = vsub.s32 %v519, %v521
      %v523 = vrot.slane %v509, %v522
      %v524 = vcombine.high %v516, %v516
      %v525 = vcombine.high %v523, %v523
      %v526 = vcombine.high %v468, %v468
      %v528 = vunpack.c.l.s4 1983009808
      %v529 = vunpack.c.0.s8 %v528
      %v530 = vlaneseq
      %v531 = vshrl.u32 %v530, 7
      %v532 = vsub.s32 %v529, %v531
      %v533 = vrot.slane %v468, %v532
      %v535 = vunpack.c.l.s4 1983009808
      %v536 = vunpack.c.0.s8 %v535
      %v537 = vlaneseq
      %v538 = vshrl.u32 %v537, 7
      %v539 = vsub.s32 %v536, %v538
      %v540 = vrot.slane %v526, %v539
      %v541 = vcombine.high %v533, %v533
      %v542 = vcombine.high %v540, %v540
      %v543 = vcombine.high %v469, %v469
      %v545 = vunpack.c.l.s4 1983009808
      %v546 = vunpack.c.0.s8 %v545
      %v547 = vlaneseq
      %v548 = vshrl.u32 %v547, 7
      %v549 = vsub.s32 %v546, %v548
      %v550 = vrot.slane %v469, %v549
      %v552 = vunpack.c.l.s4 1983009808
      %v553 = vunpack.c.0.s8 %v552
      %v554 = vlaneseq
      %v555 = vshrl.u32 %v554, 7
      %v556 = vsub.s32 %v553, %v555
      %v557 = vrot.slane %v543, %v556
      %v558 = vcombine.high %v550, %v550
      %v559 = vcombine.high %v557, %v557
      %v560 = vcombine.high %v470, %v470
      %v562 = vunpack.c.l.s4 1983009808
      %v563 = vunpack.c.0.s8 %v562
      %v564 = vlaneseq
      %v565 = vshrl.u32 %v564, 7
      %v566 = vsub.s32 %v563, %v565
      %v567 = vrot.slane %v470, %v566
      %v569 = vunpack.c.l.s4 1983009808
      %v570 = vunpack.c.0.s8 %v569
      %v571 = vlaneseq
      %v572 = vshrl.u32 %v571, 7
      %v573 = vsub.s32 %v570, %v572
      %v574 = vrot.slane %v560, %v573
      %v575 = vcombine.high %v567, %v567
      %v576 = vcombine.high %v574, %v574
      %v577 = vcombine.high %v471, %v471
      %v579 = vunpack.c.l.s4 1983009808
      %v580 = vunpack.c.0.s8 %v579
      %v581 = vlaneseq
      %v582 = vshrl.u32 %v581, 7
      %v583 = vsub.s32 %v580, %v582
      %v584 = vrot.slane %v471, %v583
      %v586 = vunpack.c.l.s4 1983009808
      %v587 = vunpack.c.0.s8 %v586
      %v588 = vlaneseq
      %v589 = vshrl.u32 %v588, 7
      %v590 = vsub.s32 %v587, %v589
      %v591 = vrot.slane %v577, %v590
      %v592 = vcombine.high %v584, %v584
      %v593 = vcombine.high %v591, %v591
      %v594 = vcombine.high %v472, %v472
      %v596 = vunpack.c.l.s4 1983009808
      %v597 = vunpack.c.0.s8 %v596
      %v598 = vlaneseq
      %v599 = vshrl.u32 %v598, 7
      %v600 = vsub.s32 %v597, %v599
      %v601 = vrot.slane %v472, %v600
      %v603 = vunpack.c.l.s4 1983009808
      %v604 = vunpack.c.0.s8 %v603
      %v605 = vlaneseq
      %v606 = vshrl.u32 %v605, 7
      %v607 = vsub.s32 %v604, %v606
      %v608 = vrot.slane %v594, %v607
      %v609 = vcombine.high %v601, %v601
      %v610 = vcombine.high %v608, %v608
      %v611 = vcombine.high %v473, %v473
      %v613 = vunpack.c.l.s4 1983009808
      %v614 = vunpack.c.0.s8 %v613
      %v615 = vlaneseq
      %v616 = vshrl.u32 %v615, 7
      %v617 = vsub.s32 %v614, %v616
      %v618 = vrot.slane %v473, %v617
      %v620 = vunpack.c.l.s4 1983009808
      %v621 = vunpack.c.0.s8 %v620
      %v622 = vlaneseq
      %v623 = vshrl.u32 %v622, 7
      %v624 = vsub.s32 %v621, %v623
      %v625 = vrot.slane %v611, %v624
      %v626 = vcombine.high %v618, %v618
      %v627 = vcombine.high %v625, %v625
      %v628 = vcombine.high %v474, %v474
      %v630 = vunpack.c.l.s4 1983009808
      %v631 = vunpack.c.0.s8 %v630
      %v632 = vlaneseq
      %v633 = vshrl.u32 %v632, 7
      %v634 = vsub.s32 %v631, %v633
      %v635 = vrot.slane %v474, %v634
      %v637 = vunpack.c.l.s4 1983009808
      %v638 = vunpack.c.0.s8 %v637
      %v639 = vlaneseq
      %v640 = vshrl.u32 %v639, 7
      %v641 = vsub.s32 %v638, %v640
      %v642 = vrot.slane %v628, %v641
      %v643 = vcombine.high %v635, %v635
      %v644 = vcombine.high %v642, %v642
      %v645 = vcombine.high %v475, %v475
      %v647 = vunpack.c.l.s4 1983009808
      %v648 = vunpack.c.0.s8 %v647
      %v649 = vlaneseq
      %v650 = vshrl.u32 %v649, 7
      %v651 = vsub.s32 %v648, %v650
      %v652 = vrot.slane %v475, %v651
      %v654 = vunpack.c.l.s4 1983009808
      %v655 = vunpack.c.0.s8 %v654
      %v656 = vlaneseq
      %v657 = vshrl.u32 %v656, 7
      %v658 = vsub.s32 %v655, %v657
      %v659 = vrot.slane %v645, %v658
      %v660 = vcombine.high %v652, %v652
      %v661 = vcombine.high %v659, %v659
      %v662 = vcombine.high %v476, %v476
      %v664 = vunpack.c.l.s4 1983009808
      %v665 = vunpack.c.0.s8 %v664
      %v666 = vlaneseq
      %v667 = vshrl.u32 %v666, 7
      %v668 = vsub.s32 %v665, %v667
      %v669 = vrot.slane %v476, %v668
      %v671 = vunpack.c.l.s4 1983009808
      %v672 = vunpack.c.0.s8 %v671
      %v673 = vlaneseq
      %v674 = vshrl.u32 %v673, 7
      %v675 = vsub.s32 %v672, %v674
      %v676 = vrot.slane %v662, %v675
      %v677 = vcombine.high %v669, %v669
      %v678 = vcombine.high %v676, %v676
      %v679 = vcombine.high %v477, %v477
      %v681 = vunpack.c.l.s4 1983009808
      %v682 = vunpack.c.0.s8 %v681
      %v683 = vlaneseq
      %v684 = vshrl.u32 %v683, 7
      %v685 = vsub.s32 %v682, %v684
      %v686 = vrot.slane %v477, %v685
      %v688 = vunpack.c.l.s4 1983009808
      %v689 = vunpack.c.0.s8 %v688
      %v690 = vlaneseq
      %v691 = vshrl.u32 %v690, 7
      %v692 = vsub.s32 %v689, %v691
      %v693 = vrot.slane %v679, %v692
      %v694 = vcombine.high %v686, %v686
      %v695 = vcombine.high %v693, %v693
      %v697 = vunpack.c.l.s4 1983009808
      %v698 = vunpack.c.0.s8 %v697
      %v699 = vlaneseq
      %v700 = vshrl.u32 %v699, 7
      %v701 = vsub.s32 %v698, %v700
      %v702 = vrot.slane %v478, %v701
      %v703 = vcombine.high %v702, %v702
      %v754 = vrot.slane %v499, 7
      %v755 = vrot.slane %v754, 2
      %v756 = vrot.slane %v507, 7
      %v757 = vrot.slane %v756, 2
      %v758 = vrot.slane %v506, 7
      %v759 = vrot.slane %v758, 2
      %v760 = vrot.slane %v508, 7
      %v761 = vrot.slane %v760, 2
      %v762 = vrot.slane %v516, 7
      %v763 = vrot.slane %v762, 2
      %v764 = vrot.slane %v524, 7
      %v765 = vrot.slane %v764, 2
      %v766 = vrot.slane %v523, 7
      %v767 = vrot.slane %v766, 2
      %v768 = vrot.slane %v525, 7
      %v769 = vrot.slane %v768, 2
      %v770 = vrot.slane %v533, 7
      %v771 = vrot.slane %v770, 2
      %v772 = vrot.slane %v541, 7
      %v773 = vrot.slane %v772, 2
      %v774 = vrot.slane %v540, 7
      %v775 = vrot.slane %v774, 2
      %v776 = vrot.slane %v542, 7
      %v777 = vrot.slane %v776, 2
      %v778 = vrot.slane %v550, 7
      %v779 = vrot.slane %v778, 2
      %v780 = vrot.slane %v558, 7
      %v781 = vrot.slane %v780, 2
      %v782 = vrot.slane %v557, 7
      %v783 = vrot.slane %v782, 2
      %v784 = vrot.slane %v559, 7
      %v785 = vrot.slane %v784, 2
      %v786 = vrot.slane %v567, 7
      %v787 = vrot.slane %v786, 2
      %v788 = vrot.slane %v575, 7
      %v789 = vrot.slane %v788, 2
      %v790 = vrot.slane %v574, 7
      %v791 = vrot.slane %v790, 2
      %v792 = vrot.slane %v576, 7
      %v793 = vrot.slane %v792, 2
      %v794 = vrot.slane %v584, 7
      %v795 = vrot.slane %v794, 2
      %v796 = vrot.slane %v592, 7
      %v797 = vrot.slane %v796, 2
      %v798 = vrot.slane %v591, 7
      %v799 = vrot.slane %v798, 2
      %v800 = vrot.slane %v593, 7
      %v801 = vrot.slane %v800, 2
      %v802 = vrot.slane %v601, 7
      %v803 = vrot.slane %v802, 2
      %v804 = vrot.slane %v609, 7
      %v805 = vrot.slane %v804, 2
      %v806 = vrot.slane %v608, 7
      %v807 = vrot.slane %v806, 2
      %v808 = vrot.slane %v610, 7
      %v809 = vrot.slane %v808, 2
      %v810 = vrot.slane %v618, 7
      %v811 = vrot.slane %v810, 2
      %v812 = vrot.slane %v626, 7
      %v813 = vrot.slane %v812, 2
      %v814 = vrot.slane %v625, 7
      %v815 = vrot.slane %v814, 2
      %v816 = vrot.slane %v627, 7
      %v817 = vrot.slane %v816, 2
      %v818 = vrot.slane %v635, 7
      %v819 = vrot.slane %v818, 2
      %v820 = vrot.slane %v643, 7
      %v821 = vrot.slane %v820, 2
      %v822 = vrot.slane %v642, 7
      %v823 = vrot.slane %v822, 2
      %v824 = vrot.slane %v644, 7
      %v825 = vrot.slane %v824, 2
      %v826 = vrot.slane %v652, 7
      %v827 = vrot.slane %v826, 2
      %v828 = vrot.slane %v660, 7
      %v829 = vrot.slane %v828, 2
      %v830 = vrot.slane %v659, 7
      %v831 = vrot.slane %v830, 2
      %v832 = vrot.slane %v661, 7
      %v833 = vrot.slane %v832, 2
      %v834 = vrot.slane %v669, 7
      %v835 = vrot.slane %v834, 2
      %v836 = vrot.slane %v677, 7
      %v837 = vrot.slane %v836, 2
      %v838 = vrot.slane %v676, 7
      %v839 = vrot.slane %v838, 2
      %v840 = vrot.slane %v678, 7
      %v841 = vrot.slane %v840, 2
      %v842 = vrot.slane %v686, 7
      %v843 = vrot.slane %v842, 2
      %v844 = vrot.slane %v694, 7
      %v845 = vrot.slane %v844, 2
      %v846 = vrot.slane %v693, 7
      %v847 = vrot.slane %v846, 2
      %v848 = vrot.slane %v695, 7
      %v849 = vrot.slane %v848, 2
      %v850 = vrot.slane %v702, 7
      %v851 = vrot.slane %v850, 2
      %v852 = vrot.slane %v703, 7
      %v853 = vrot.slane %v852, 2
      %v904 = vmax.f32 %v499, %v755
      %v905 = vmax.f32 %v507, %v757
      %v906 = vmax.f32 %v506, %v759
      %v907 = vmax.f32 %v508, %v761
      %v908 = vmax.f32 %v516, %v763
      %v909 = vmax.f32 %v524, %v765
      %v910 = vmax.f32 %v523, %v767
      %v911 = vmax.f32 %v525, %v769
      %v912 = vmax.f32 %v533, %v771
      %v913 = vmax.f32 %v541, %v773
      %v914 = vmax.f32 %v540, %v775
      %v915 = vmax.f32 %v542, %v777
      %v916 = vmax.f32 %v550, %v779
      %v917 = vmax.f32 %v558, %v781
      %v918 = vmax.f32 %v557, %v783
      %v919 = vmax.f32 %v559, %v785
      %v920 = vmax.f32 %v567, %v787
      %v921 = vmax.f32 %v575, %v789
      %v922 = vmax.f32 %v574, %v791
      %v923 = vmax.f32 %v576, %v793
      %v924 = vmax.f32 %v584, %v795
      %v925 = vmax.f32 %v592, %v797
      %v926 = vmax.f32 %v591, %v799
      %v927 = vmax.f32 %v593, %v801
      %v928 = vmax.f32 %v601, %v803
      %v929 = vmax.f32 %v609, %v805
      %v930 = vmax.f32 %v608, %v807
      %v931 = vmax.f32 %v610, %v809
      %v932 = vmax.f32 %v618, %v811
      %v933 = vmax.f32 %v626, %v813
      %v934 = vmax.f32 %v625, %v815
      %v935 = vmax.f32 %v627, %v817
      %v936 = vmax.f32 %v635, %v819
      %v937 = vmax.f32 %v643, %v821
      %v938 = vmax.f32 %v642, %v823
      %v939 = vmax.f32 %v644, %v825
      %v940 = vmax.f32 %v652, %v827
      %v941 = vmax.f32 %v660, %v829
      %v942 = vmax.f32 %v659, %v831
      %v943 = vmax.f32 %v661, %v833
      %v944 = vmax.f32 %v669, %v835
      %v945 = vmax.f32 %v677, %v837
      %v946 = vmax.f32 %v676, %v839
      %v947 = vmax.f32 %v678, %v841
      %v948 = vmax.f32 %v686, %v843
      %v949 = vmax.f32 %v694, %v845
      %v950 = vmax.f32 %v693, %v847
      %v951 = vmax.f32 %v695, %v849
      %v952 = vmax.f32 %v702, %v851
      %v953 = vmax.f32 %v703, %v853
      %v954 = vmax.f32 %v904, %v909
      %v955 = vmax.f32 %v905, %v910
      %v956 = vmax.f32 %v906, %v911
      %v957 = vmax.f32 %v907, %v912
      %v958 = vmax.f32 %v908, %v913
      %v959 = vmax.f32 %v914, %v919
      %v960 = vmax.f32 %v915, %v920
      %v961 = vmax.f32 %v916, %v921
      %v962 = vmax.f32 %v917, %v922
      %v963 = vmax.f32 %v918, %v923
      %v964 = vmax.f32 %v924, %v929
      %v965 = vmax.f32 %v925, %v930
      %v966 = vmax.f32 %v926, %v931
      %v967 = vmax.f32 %v927, %v932
      %v968 = vmax.f32 %v928, %v933
      %v969 = vmax.f32 %v934, %v939
      %v970 = vmax.f32 %v935, %v940
      %v971 = vmax.f32 %v936, %v941
      %v972 = vmax.f32 %v937, %v942
      %v973 = vmax.f32 %v938, %v943
      %v974 = vmax.f32 %v944, %v949
      %v975 = vmax.f32 %v945, %v950
      %v976 = vmax.f32 %v946, %v951
      %v977 = vmax.f32 %v947, %v952
      %v978 = vmax.f32 %v948, %v953
      %v979 = vpack.c.bf16 %v954, %v954
      %v980 = vpack.c.bf16 %v955, %v955
      %v981 = vpack.c.bf16 %v956, %v956
      %v982 = vpack.c.bf16 %v957, %v957
      %v983 = vpack.c.bf16 %v958, %v958
      %v984 = vpack.c.bf16 %v959, %v959
      %v985 = vpack.c.bf16 %v960, %v960
      %v986 = vpack.c.bf16 %v961, %v961
      %v987 = vpack.c.bf16 %v962, %v962
      %v988 = vpack.c.bf16 %v963, %v963
      %v989 = vpack.c.bf16 %v964, %v964
      %v990 = vpack.c.bf16 %v965, %v965
      %v991 = vpack.c.bf16 %v966, %v966
      %v992 = vpack.c.bf16 %v967, %v967
      %v993 = vpack.c.bf16 %v968, %v968
      %v994 = vpack.c.bf16 %v969, %v969
      %v995 = vpack.c.bf16 %v970, %v970
      %v996 = vpack.c.bf16 %v971, %v971
      %v997 = vpack.c.bf16 %v972, %v972
      %v998 = vpack.c.bf16 %v973, %v973
      %v999 = vpack.c.bf16 %v974, %v974
      %v1000 = vpack.c.bf16 %v975, %v975
      %v1001 = vpack.c.bf16 %v976, %v976
      %v1002 = vpack.c.bf16 %v977, %v977
      %v1003 = vpack.c.bf16 %v978, %v978
      %v1029 = vunpack.c.l.b16 %v979
      %v1030 = vunpack.c.l.b16 %v980
      %v1031 = vunpack.c.l.b16 %v981
      %v1032 = vunpack.c.l.b16 %v982
      %v1033 = vunpack.c.l.b16 %v983
      %v1034 = vunpack.c.l.b16 %v984
      %v1035 = vunpack.c.l.b16 %v985
      %v1036 = vunpack.c.l.b16 %v986
      %v1037 = vunpack.c.l.b16 %v987
      %v1038 = vunpack.c.l.b16 %v988
      %v1039 = vunpack.c.l.b16 %v989
      %v1040 = vunpack.c.l.b16 %v990
      %v1041 = vunpack.c.l.b16 %v991
      %v1042 = vunpack.c.l.b16 %v992
      %v1043 = vunpack.c.l.b16 %v993
      %v1044 = vunpack.c.l.b16 %v994
      %v1045 = vunpack.c.l.b16 %v995
      %v1046 = vunpack.c.l.b16 %v996
      %v1047 = vunpack.c.l.b16 %v997
      %v1048 = vunpack.c.l.b16 %v998
      %v1049 = vunpack.c.l.b16 %v999
      %v1050 = vunpack.c.l.b16 %v1000
      %v1051 = vunpack.c.l.b16 %v1001
      %v1052 = vunpack.c.l.b16 %v1002
      %v1053 = vunpack.c.l.b16 %v1003
      %v1054 = vpack.c.b16 %v1029, %v1029
      %v1055 = vpack.c.b16 %v1030, %v1030
      %v1056 = vpack.c.b16 %v1031, %v1031
      %v1057 = vpack.c.b16 %v1032, %v1032
      %v1058 = vpack.c.b16 %v1033, %v1033
      %v1059 = vpack.c.b16 %v1034, %v1034
      %v1060 = vpack.c.b16 %v1035, %v1035
      %v1061 = vpack.c.b16 %v1036, %v1036
      %v1062 = vpack.c.b16 %v1037, %v1037
      %v1063 = vpack.c.b16 %v1038, %v1038
      %v1064 = vpack.c.b16 %v1039, %v1039
      %v1065 = vpack.c.b16 %v1040, %v1040
      %v1066 = vpack.c.b16 %v1041, %v1041
      %v1067 = vpack.c.b16 %v1042, %v1042
      %v1068 = vpack.c.b16 %v1043, %v1043
      %v1069 = vpack.c.b16 %v1044, %v1044
      %v1070 = vpack.c.b16 %v1045, %v1045
      %v1071 = vpack.c.b16 %v1046, %v1046
      %v1072 = vpack.c.b16 %v1047, %v1047
      %v1073 = vpack.c.b16 %v1048, %v1048
      %v1074 = vpack.c.b16 %v1049, %v1049
      %v1075 = vpack.c.b16 %v1050, %v1050
      %v1076 = vpack.c.b16 %v1051, %v1051
      %v1077 = vpack.c.b16 %v1052, %v1052
      %v1078 = vpack.c.b16 %v1053, %v1053
      %v1079 = vunpack.c.l.b16 %v1054
      %v1080 = vunpack.c.l.b16 %v1055
      %v1081 = vunpack.c.l.b16 %v1056
      %v1082 = vunpack.c.l.b16 %v1057
      %v1083 = vunpack.c.l.b16 %v1058
      %v1084 = vunpack.c.l.b16 %v1059
      %v1085 = vunpack.c.l.b16 %v1060
      %v1086 = vunpack.c.l.b16 %v1061
      %v1087 = vunpack.c.l.b16 %v1062
      %v1088 = vunpack.c.l.b16 %v1063
      %v1089 = vunpack.c.l.b16 %v1064
      %v1090 = vunpack.c.l.b16 %v1065
      %v1091 = vunpack.c.l.b16 %v1066
      %v1092 = vunpack.c.l.b16 %v1067
      %v1093 = vunpack.c.l.b16 %v1068
      %v1094 = vunpack.c.l.b16 %v1069
      %v1095 = vunpack.c.l.b16 %v1070
      %v1096 = vunpack.c.l.b16 %v1071
      %v1097 = vunpack.c.l.b16 %v1072
      %v1098 = vunpack.c.l.b16 %v1073
      %v1099 = vunpack.c.l.b16 %v1074
      %v1100 = vunpack.c.l.b16 %v1075
      %v1101 = vunpack.c.l.b16 %v1076
      %v1102 = vunpack.c.l.b16 %v1077
      %v1103 = vunpack.c.l.b16 %v1078
      %v1104 = vrot.slane %v1080, 7
      %vm1105 = vcmask 1041409
      %v1106 = vsel %vm1105, %v1104, %v1079
      %v1107 = vrot.slane %v1081, 6
      %vm1108 = vcmask 1042434
      %v1109 = vsel %vm1108, %v1107, %v1106
      %v1110 = vrot.slane %v1082, 5
      %vm1111 = vcmask 1043459
      %v1112 = vsel %vm1111, %v1110, %v1109
      %v1113 = vrot.slane %v1083, 4
      %vm1114 = vcmask 1044484
      %v1115 = vsel %vm1114, %v1113, %v1112
      %v1116 = vrot.slane %v1085, 7
      %v1117 = vsel %vm1105, %v1116, %v1084
      %v1118 = vrot.slane %v1086, 6
      %v1119 = vsel %vm1108, %v1118, %v1117
      %v1120 = vrot.slane %v1087, 5
      %v1121 = vsel %vm1111, %v1120, %v1119
      %v1122 = vrot.slane %v1088, 4
      %v1123 = vsel %vm1114, %v1122, %v1121
      %v1124 = vrot.slane %v1090, 7
      %v1125 = vsel %vm1105, %v1124, %v1089
      %v1126 = vrot.slane %v1091, 6
      %v1127 = vsel %vm1108, %v1126, %v1125
      %v1128 = vrot.slane %v1092, 5
      %v1129 = vsel %vm1111, %v1128, %v1127
      %v1130 = vrot.slane %v1093, 4
      %v1131 = vsel %vm1114, %v1130, %v1129
      %v1132 = vrot.slane %v1095, 7
      %v1133 = vsel %vm1105, %v1132, %v1094
      %v1134 = vrot.slane %v1096, 6
      %v1135 = vsel %vm1108, %v1134, %v1133
      %v1136 = vrot.slane %v1097, 5
      %v1137 = vsel %vm1111, %v1136, %v1135
      %v1138 = vrot.slane %v1098, 4
      %v1139 = vsel %vm1114, %v1138, %v1137
      %v1140 = vrot.slane %v1100, 7
      %v1141 = vsel %vm1105, %v1140, %v1099
      %v1142 = vrot.slane %v1101, 6
      %v1143 = vsel %vm1108, %v1142, %v1141
      %v1144 = vrot.slane %v1102, 5
      %v1145 = vsel %vm1111, %v1144, %v1143
      %v1146 = vrot.slane %v1103, 4
      %v1147 = vsel %vm1114, %v1146, %v1145
      %v1148 = vpack.c.b16 %v1115, %v1115
      %v1149 = vpack.c.b16 %v1123, %v1123
      %v1150 = vpack.c.b16 %v1131, %v1131
      %v1151 = vpack.c.b16 %v1139, %v1139
      %v1152 = vpack.c.b16 %v1147, %v1147
      %vm1158 = vcmask 124928
      %vm1159 = vsmask.f32 2304
      %vm1160 = vmand %vm1158, %vm1159
      %v1161 = vld [vmem:[%s170] sm:$0x7]
      %v1162 = vsel %vm1160, %v1148, %v1161
      %1163 = vst [vmem:[%s170] sm:$0x7] %v1162
      %v1164 = vld [vmem:[%s170 + $0x4] sm:$0x7]
      %v1165 = vsel %vm1160, %v1149, %v1164
      %1166 = vst [vmem:[%s170 + $0x4] sm:$0x7] %v1165
      %v1167 = vld [vmem:[%s170 + $0x8] sm:$0x7]
      %v1168 = vsel %vm1160, %v1150, %v1167
      %1169 = vst [vmem:[%s170 + $0x8] sm:$0x7] %v1168
      %v1170 = vld [vmem:[%s170 + $0xc] sm:$0x7]
      %v1171 = vsel %vm1160, %v1151, %v1170
      %1172 = vst [vmem:[%s170 + $0xc] sm:$0x7] %v1171
      %v1173 = vld [vmem:[%s170 + $0x10] sm:$0x7]
      %v1174 = vsel %vm1160, %v1152, %v1173
      %1175 = vst [vmem:[%s170 + $0x10] sm:$0x7] %v1174
      %p1176 = scmp.lt.s32.totalorder %s14, 1
      %s1177 = scalar_select %p1176, %s14, 1
      %s1178 = smul.addr %s1177, 5
      %s1179 = smul.addr %s1178, 4
      %s1180 = scalar_lea.vmem %s3, %s1179
      // Predicated region
      $region33: #{cnn_forward.4} parent=31 // pred_check
        %p1181 = pneg %p100
      $region34: #{cnn_forward.4} parent=31 // pred_check_branch
        %1183 = sbr.rel (%p1181) target = $region36
      $region35: #{cnn_forward.4} parent=31 // pred_region
        _
      $region36: #{cnn_forward.4} parent=31 // pred_fallthru
        _
    $region32: #{cnn_forward.4} parent=5 // pred_fallthru
      _
    %p1184 = scmp.le.s32.totalorder 2, %s9
    // Predicated region
    $region37: #{cnn_forward.4} parent=5 // pred_check
      %p1185 = pneg %p1184
    $region38: #{cnn_forward.4} parent=5 // pred_check_branch
      %1187 = sbr.rel (%p1185) target = $region40
    $region39: #{cnn_forward.4} parent=5 // pred_region
      %s1188 = ssub.s32 %s9, 2
      // Predicated region
      $region41: #{cnn_forward.4} parent=39 // pred_check
        %p1189 = pneg %p106
      $region42: #{cnn_forward.4} parent=39 // pred_check_branch
        %1191 = sbr.rel (%p1189) target = $region44
      $region43: #{cnn_forward.4} parent=39 // pred_region
        %p1192 = scmp.lt.s32.totalorder %s15, 1
        %s1193 = scalar_select %p1192, %s15, 1
        %s1194 = smul.addr %s1193, 5
        %s1195 = smul.addr %s1194, 4
        %s1196 = scalar_lea.vmem %s3, %s1195
      $region44: #{cnn_forward.4} parent=39 // pred_fallthru
        _
    $region40: #{cnn_forward.4} parent=5 // pred_fallthru
      _
  $region6: #{cnn_forward.4} parent=0 // loop_footer
    %s13 = sadd.s32 1, %s9
  $region7: #{cnn_forward.4} parent=0 // loop_footer_branch
    %8 = sbr.rel target = $region3
  $region8: #{cnn_forward.4} parent=0 // loop_exit
    _

// kernel: cnn_forward.5
$region0: #{cnn_forward.5}
  #allocation0 [shape = 'u32[]', space=smem, size = 0x4, offset = 0x4, fixed_abs, tag = 'smem constant byte address 0x4 - core index']
  #allocation1 [shape = 'u32[144,128]{1,0:T(1,128)}', space=vmem, size = 0x12000, scoped, tag = 'internal scratch']
  %s0 = inlined_call_operand.vmem [shape: bf16[2,400], index: 0, kind: input, shape index: {}]
  %s1 = inlined_call_operand.vmem [shape: bf16[400,128], index: 1, kind: input, shape index: {}]
  %s2 = inlined_call_operand.vmem [shape: f32[1,128], index: 2, kind: input, shape index: {}]
  %s3 = inlined_call_operand.vmem [shape: bf16[128,128], index: 3, kind: input, shape index: {}]
  %s4 = inlined_call_operand.vmem [shape: f32[1,128], index: 4, kind: input, shape index: {}]
  %s5 = inlined_call_operand.vmem [shape: bf16[128,10], index: 5, kind: input, shape index: {}]
  %s6 = inlined_call_operand.vmem [shape: f32[1,10], index: 6, kind: input, shape index: {}]
  %s7 = inlined_call_operand.hbm [shape: f32[2,10], index: 7, kind: output, shape index: {}]
  %s8 = sld [smem:[#allocation0]]
  $region38: #{cnn_forward.5} parent=0
    _
  %s10 = ssub.s32 1, %s8
  %s11 = scalar_select 0, %s10, %s8
  $region1: #{cnn_forward.5} parent=0
    #allocation2 [shape = 'u8[1024]{0}', space=vmem, size = 0x400, scoped, tag = 'output window, operand 0, single buffered']
    #allocation3 [shape = 's32[1]{0}', space=sflag, size = 0x4, scoped, tag = 'scoped memory for cnn_forward.5']
    %12 = vsyncpa [#allocation3], 0
    // Predicated region
    $region2: #{cnn_forward.5} parent=1 // pred_check
      _
    $region3: #{cnn_forward.5} parent=1 // pred_check_branch
      %14 = sbr.rel (0) target = $region5
    $region4: #{cnn_forward.5} parent=1 // pred_region
      _
    $region5: #{cnn_forward.5} parent=1 // pred_fallthru
      _
    // Predicated region
    $region6: #{cnn_forward.5} parent=1 // pred_check
      _
    $region7: #{cnn_forward.5} parent=1 // pred_check_branch
      %16 = sbr.rel (0) target = $region9
    $region8: #{cnn_forward.5} parent=1 // pred_region
      _
    $region9: #{cnn_forward.5} parent=1 // pred_fallthru
      _
    // Predicated region
    $region10: #{cnn_forward.5} parent=1 // pred_check
      _
    $region11: #{cnn_forward.5} parent=1 // pred_check_branch
      %18 = sbr.rel (0) target = $region13
    $region12: #{cnn_forward.5} parent=1 // pred_region
      _
    $region13: #{cnn_forward.5} parent=1 // pred_fallthru
      _
    // Predicated region
    $region14: #{cnn_forward.5} parent=1 // pred_check
      _
    $region15: #{cnn_forward.5} parent=1 // pred_check_branch
      %20 = sbr.rel (0) target = $region17
    $region16: #{cnn_forward.5} parent=1 // pred_region
      _
    $region17: #{cnn_forward.5} parent=1 // pred_fallthru
      _
    // Predicated region
    $region18: #{cnn_forward.5} parent=1 // pred_check
      _
    $region19: #{cnn_forward.5} parent=1 // pred_check_branch
      %22 = sbr.rel (0) target = $region21
    $region20: #{cnn_forward.5} parent=1 // pred_region
      _
    $region21: #{cnn_forward.5} parent=1 // pred_fallthru
      _
    // Predicated region
    $region22: #{cnn_forward.5} parent=1 // pred_check
      _
    $region23: #{cnn_forward.5} parent=1 // pred_check_branch
      %24 = sbr.rel (0) target = $region25
    $region24: #{cnn_forward.5} parent=1 // pred_region
      _
    $region25: #{cnn_forward.5} parent=1 // pred_fallthru
      _
    // Predicated region
    $region26: #{cnn_forward.5} parent=1 // pred_check
      _
    $region27: #{cnn_forward.5} parent=1 // pred_check_branch
      %26 = sbr.rel (0) target = $region29
    $region28: #{cnn_forward.5} parent=1 // pred_region
      _
    $region29: #{cnn_forward.5} parent=1 // pred_fallthru
      _
    %v28 = vld [vmem:[%s0] sm:$0xf]
    %v29 = vld [vmem:[%s1] sm:$0xf]
    %v30 = vld [vmem:[%s1 + $0x4] sm:$0xf]
    %v31 = vld [vmem:[%s1 + $0x8] sm:$0xf]
    %v32 = vld [vmem:[%s1 + $0xc] sm:$0xf]
    %v33 = vld [vmem:[%s1 + $0x10] sm:$0xf]
    %v34 = vld [vmem:[%s1 + $0x14] sm:$0xf]
    %v35 = vld [vmem:[%s1 + $0x18] sm:$0xf]
    %v36 = vld [vmem:[%s1 + $0x1c] sm:$0xf]
    %v37 = vld [vmem:[%s1 + $0x20] sm:$0xf]
    %v38 = vld [vmem:[%s1 + $0x24] sm:$0xf]
    %v39 = vld [vmem:[%s1 + $0x28] sm:$0xf]
    %v40 = vld [vmem:[%s1 + $0x2c] sm:$0xf]
    %v41 = vld [vmem:[%s1 + $0x30] sm:$0xf]
    %v42 = vld [vmem:[%s1 + $0x34] sm:$0xf]
    %v43 = vld [vmem:[%s1 + $0x38] sm:$0xf]
    %v44 = vld [vmem:[%s1 + $0x3c] sm:$0xf]
    %v45 = vld [vmem:[%s1 + $0x40] sm:$0xf]
    %v46 = vld [vmem:[%s1 + $0x44] sm:$0xf]
    %v47 = vld [vmem:[%s1 + $0x48] sm:$0xf]
    %v48 = vld [vmem:[%s1 + $0x4c] sm:$0xf]
    %v49 = vld [vmem:[%s1 + $0x50] sm:$0xf]
    %v50 = vld [vmem:[%s1 + $0x54] sm:$0xf]
    %v51 = vld [vmem:[%s1 + $0x58] sm:$0xf]
    %v52 = vld [vmem:[%s1 + $0x5c] sm:$0xf]
    %v53 = vld [vmem:[%s1 + $0x60] sm:$0xf]
    %v54 = vld [vmem:[%s1 + $0x64] sm:$0xf]
    %v55 = vld [vmem:[%s1 + $0x68] sm:$0xf]
    %v56 = vld [vmem:[%s1 + $0x6c] sm:$0xf]
    %v57 = vld [vmem:[%s1 + $0x70] sm:$0xf]
    %v58 = vld [vmem:[%s1 + $0x74] sm:$0xf]
    %v59 = vld [vmem:[%s1 + $0x78] sm:$0xf]
    %v60 = vld [vmem:[%s1 + $0x7c] sm:$0xf]
    %v61 = vld [vmem:[%s1 + $0x80] sm:$0xf]
    %v62 = vld [vmem:[%s1 + $0x84] sm:$0xf]
    %v63 = vld [vmem:[%s1 + $0x88] sm:$0xf]
    %v64 = vld [vmem:[%s1 + $0x8c] sm:$0xf]
    %v65 = vld [vmem:[%s1 + $0x90] sm:$0xf]
    %v66 = vld [vmem:[%s1 + $0x94] sm:$0xf]
    %v67 = vld [vmem:[%s1 + $0x98] sm:$0xf]
    %v68 = vld [vmem:[%s1 + $0x9c] sm:$0xf]
    %v69 = vld [vmem:[%s1 + $0xa0] sm:$0xf]
    %v70 = vld [vmem:[%s1 + $0xa4] sm:$0xf]
    %v71 = vld [vmem:[%s1 + $0xa8] sm:$0xf]
    %v72 = vld [vmem:[%s1 + $0xac] sm:$0xf]
    %v73 = vld [vmem:[%s1 + $0xb0] sm:$0xf]
    %v74 = vld [vmem:[%s1 + $0xb4] sm:$0xf]
    %v75 = vld [vmem:[%s1 + $0xb8] sm:$0xf]
    %v76 = vld [vmem:[%s1 + $0xbc] sm:$0xf]
    %v77 = vld [vmem:[%s1 + $0xc0] sm:$0xf]
    %v78 = vld [vmem:[%s1 + $0xc4] sm:$0xf]
    %v79 = vld [vmem:[%s2] sm:$0x1]
    %v81 = vlaneseq
    %v82 = vshrl.u32 %v81, 7
    %v83 = vsub.s32 0, %v82
    %v84 = vrot.slane %v79, %v83
    %v88 = vunpack.c.l.s4 1966171168
    %v89 = vunpack.c.0.s8 %v88
    %v90 = vlaneseq
    %v91 = vshrl.u32 %v90, 7
    %v92 = vsub.s32 %v89, %v91
    %v93 = vrot.slane %v28, %v92
    %v94 = vcombine.high %v93, %v93
    %v96 = vunpack.c.l.s4 1966171168
    %v97 = vunpack.c.0.s8 %v96
    %v98 = vlaneseq
    %v99 = vshrl.u32 %v98, 7
    %v100 = vsub.s32 %v97, %v99
    %v101 = vrot.slane %v93, %v100
    %v103 = vunpack.c.l.s4 1966171168
    %v104 = vunpack.c.0.s8 %v103
    %v105 = vlaneseq
    %v106 = vshrl.u32 %v105, 7
    %v107 = vsub.s32 %v104, %v106
    %v108 = vrot.slane %v94, %v107
    %v109 = vcombine.high %v101, %v101
    %v110 = vcombine.high %v108, %v108
    %v164 = vunpack.c.l.b16 %v29
    %v165 = vunpack.c.l.b16 %v30
    %v166 = vunpack.c.l.b16 %v31
    %v167 = vunpack.c.l.b16 %v32
    %v168 = vunpack.c.l.b16 %v33
    %v169 = vunpack.c.l.b16 %v34
    %v170 = vunpack.c.l.b16 %v35
    %v171 = vunpack.c.l.b16 %v36
    %v172 = vunpack.c.l.b16 %v37
    %v173 = vunpack.c.l.b16 %v38
    %v174 = vunpack.c.l.b16 %v39
    %v175 = vunpack.c.l.b16 %v40
    %v176 = vunpack.c.l.b16 %v41
    %v177 = vunpack.c.l.b16 %v42
    %v178 = vunpack.c.l.b16 %v43
    %v179 = vunpack.c.l.b16 %v44
    %v180 = vunpack.c.l.b16 %v45
    %v181 = vunpack.c.l.b16 %v46
    %v182 = vunpack.c.l.b16 %v47
    %v183 = vunpack.c.l.b16 %v48
    %v184 = vunpack.c.l.b16 %v49
    %v185 = vunpack.c.l.b16 %v50
    %v186 = vunpack.c.l.b16 %v51
    %v187 = vunpack.c.l.b16 %v52
    %v188 = vunpack.c.l.b16 %v53
    %v189 = vunpack.c.l.b16 %v54
    %v190 = vunpack.c.l.b16 %v55
    %v191 = vunpack.c.l.b16 %v56
    %v192 = vunpack.c.l.b16 %v57
    %v193 = vunpack.c.l.b16 %v58
    %v194 = vunpack.c.l.b16 %v59
    %v195 = vunpack.c.l.b16 %v60
    %v196 = vunpack.c.l.b16 %v61
    %v197 = vunpack.c.l.b16 %v62
    %v198 = vunpack.c.l.b16 %v63
    %v199 = vunpack.c.l.b16 %v64
    %v200 = vunpack.c.l.b16 %v65
    %v201 = vunpack.c.l.b16 %v66
    %v202 = vunpack.c.l.b16 %v67
    %v203 = vunpack.c.l.b16 %v68
    %v204 = vunpack.c.l.b16 %v69
    %v205 = vunpack.c.l.b16 %v70
    %v206 = vunpack.c.l.b16 %v71
    %v207 = vunpack.c.l.b16 %v72
    %v208 = vunpack.c.l.b16 %v73
    %v209 = vunpack.c.l.b16 %v74
    %v210 = vunpack.c.l.b16 %v75
    %v211 = vunpack.c.l.b16 %v76
    %v212 = vunpack.c.l.b16 %v77
    %v213 = vunpack.c.l.b16 %v78
    %v214 = vpack.c.b16 %v165, %v164
    %v215 = vpack.c.b16 %v167, %v166
    %v216 = vpack.c.b16 %v169, %v168
    %v217 = vpack.c.b16 %v171, %v170
    %v218 = vpack.c.b16 %v173, %v172
    %v219 = vpack.c.b16 %v175, %v174
    %v220 = vpack.c.b16 %v177, %v176
    %v221 = vpack.c.b16 %v179, %v178
    %v222 = vpack.c.b16 %v181, %v180
    %v223 = vpack.c.b16 %v183, %v182
    %v224 = vpack.c.b16 %v185, %v184
    %v225 = vpack.c.b16 %v187, %v186
    %v226 = vpack.c.b16 %v189, %v188
    %v227 = vpack.c.b16 %v191, %v190
    %v228 = vpack.c.b16 %v193, %v192
    %v229 = vpack.c.b16 %v195, %v194
    %v230 = vpack.c.b16 %v197, %v196
    %v231 = vpack.c.b16 %v199, %v198
    %v232 = vpack.c.b16 %v201, %v200
    %v233 = vpack.c.b16 %v203, %v202
    %v234 = vpack.c.b16 %v205, %v204
    %v235 = vpack.c.b16 %v207, %v206
    %v236 = vpack.c.b16 %v209, %v208
    %v237 = vpack.c.b16 %v211, %v210
    %v238 = vpack.c.b16 %v213, %v212
    %vm264 = vcmask 130048
    %v266 = vsel %vm264, %v110, 0
    %268 = vmatprep.subr.bf16.mxu0 0
    %269 = vmatpush1.bf16.msra.mxu0 %v214
    %270 = vmatprep.subr.bf16.mxu0 0
    %271 = vmatpush1.bf16.msra.mxu0 %v215
    %272 = vmatprep.subr.bf16.mxu0 0
    %273 = vmatpush1.bf16.msra.mxu0 %v216
    %274 = vmatprep.subr.bf16.mxu0 0
    %275 = vmatpush1.bf16.msra.mxu0 %v217
    %276 = vmatprep.subr.bf16.mxu0 0
    %277 = vmatpush1.bf16.msra.mxu0 %v218
    %278 = vmatprep.subr.bf16.mxu0 0
    %279 = vmatpush1.bf16.msra.mxu0 %v219
    %280 = vmatprep.subr.bf16.mxu0 0
    %281 = vmatpush1.bf16.msra.mxu0 %v220
    %282 = vmatprep.subr.bf16.mxu0 0
    %283 = vmatpush1.bf16.msra.mxu0 %v221
    %284 = vmatprep.subr.bf16.mxu0 0
    %285 = vmatpush1.bf16.msra.mxu0 %v222
    %286 = vmatprep.subr.bf16.mxu0 0
    %287 = vmatpush1.bf16.msra.mxu0 %v223
    %288 = vmatprep.subr.bf16.mxu0 0
    %289 = vmatpush1.bf16.msra.mxu0 %v224
    %290 = vmatprep.subr.bf16.mxu0 0
    %291 = vmatpush1.bf16.msra.mxu0 %v225
    %292 = vmatprep.subr.bf16.mxu0 0
    %293 = vmatpush1.bf16.msra.mxu0 %v226
    %294 = vmatprep.subr.bf16.mxu0 0
    %295 = vmatpush1.bf16.msra.mxu0 %v227
    %296 = vmatprep.subr.bf16.mxu0 0
    %297 = vmatpush1.bf16.msra.mxu0 %v228
    %298 = vmatprep.subr.bf16.mxu0 0
    %299 = vmatpush1.bf16.msra.mxu0 %v229
    %300 = vmatprep.mubr.bf16.mxu0 %v108
    %301 = vmatmul.mubr.bf16.gmra.mrb[0].mxu0 %v101
    %v302 = vpop.f32.mrb[0].mxu0
    %v303 = vadd.f32 %v84, %v302
    %v304 = vpop.f32.mrb[0].mxu0
    %v305 = vpop.f32.mrb[0].mxu0
    %v306 = vpop.f32.mrb[0].mxu0
    %307 = vdwg.mxu0
    %308 = vmatprep.subr.bf16.mxu0 0
    %309 = vmatpush1.bf16.msra.mxu0 %v230
    %310 = vmatprep.subr.bf16.mxu0 0
    %311 = vmatpush1.bf16.msra.mxu0 %v231
    %312 = vmatprep.subr.bf16.mxu0 0
    %313 = vmatpush1.bf16.msra.mxu0 %v232
    %314 = vmatprep.subr.bf16.mxu0 0
    %315 = vmatpush1.bf16.msra.mxu0 %v233
    %316 = vmatprep.subr.bf16.mxu0 0
    %317 = vmatpush1.bf16.msra.mxu0 %v234
    %318 = vmatprep.subr.bf16.mxu0 0
    %319 = vmatpush1.bf16.msra.mxu0 %v235
    %320 = vmatprep.subr.bf16.mxu0 0
    %321 = vmatpush1.bf16.msra.mxu0 %v236
    %322 = vmatprep.subr.bf16.mxu0 0
    %323 = vmatpush1.bf16.msra.mxu0 %v237
    %324 = vmatprep.subr.bf16.mxu0 0
    %325 = vmatpush1.bf16.msra.mxu0 %v238
    %326 = vmatprep.subr.bf16.mxu0 0
    %327 = vmatpush1.bf16.msra.mxu0 0
    %328 = vmatprep.subr.bf16.mxu0 0
    %329 = vmatpush1.bf16.msra.mxu0 0
    %330 = vmatprep.subr.bf16.mxu0 0
    %331 = vmatpush1.bf16.msra.mxu0 0
    %332 = vmatprep.subr.bf16.mxu0 0
    %333 = vmatpush1.bf16.msra.mxu0 0
    %334 = vmatprep.subr.bf16.mxu0 0
    %335 = vmatpush1.bf16.msra.mxu0 0
    %336 = vmatprep.subr.bf16.mxu0 0
    %337 = vmatpush1.bf16.msra.mxu0 0
    %338 = vmatprep.subr.bf16.mxu0 0
    %339 = vmatpush1.bf16.msra.mxu0 0
    %340 = vmatprep.mubr.bf16.mxu0 %v266
    %341 = vmatmul.mubr.bf16.gmra.mrb[0].mxu0 %v109
    %v342 = vpop.f32.mrb[0].mxu0
    %v343 = vadd.f32 %v303, %v342
    %v344 = vpop.f32.mrb[0].mxu0
    %v345 = vpop.f32.mrb[0].mxu0
    %v346 = vpop.f32.mrb[0].mxu0
    %347 = vdwg.mxu0
    %v348 = vmax.f32 %v343, 0.0
    %v349 = vpack.c.bf16 %v348, %v348
    %v350 = vld [vmem:[%s3] sm:$0xf]
    %v351 = vld [vmem:[%s3 + $0x4] sm:$0xf]
    %v352 = vld [vmem:[%s3 + $0x8] sm:$0xf]
    %v353 = vld [vmem:[%s3 + $0xc] sm:$0xf]
    %v354 = vld [vmem:[%s3 + $0x10] sm:$0xf]
    %v355 = vld [vmem:[%s3 + $0x14] sm:$0xf]
    %v356 = vld [vmem:[%s3 + $0x18] sm:$0xf]
    %v357 = vld [vmem:[%s3 + $0x1c] sm:$0xf]
    %v358 = vld [vmem:[%s3 + $0x20] sm:$0xf]
    %v359 = vld [vmem:[%s3 + $0x24] sm:$0xf]
    %v360 = vld [vmem:[%s3 + $0x28] sm:$0xf]
    %v361 = vld [vmem:[%s3 + $0x2c] sm:$0xf]
    %v362 = vld [vmem:[%s3 + $0x30] sm:$0xf]
    %v363 = vld [vmem:[%s3 + $0x34] sm:$0xf]
    %v364 = vld [vmem:[%s3 + $0x38] sm:$0xf]
    %v365 = vld [vmem:[%s3 + $0x3c] sm:$0xf]
    %v366 = vld [vmem:[%s4] sm:$0x1]
    %v368 = vlaneseq
    %v369 = vshrl.u32 %v368, 7
    %v370 = vsub.s32 0, %v369
    %v371 = vrot.slane %v366, %v370
    %v389 = vunpack.c.l.b16 %v350
    %v390 = vunpack.c.l.b16 %v351
    %v391 = vunpack.c.l.b16 %v352
    %v392 = vunpack.c.l.b16 %v353
    %v393 = vunpack.c.l.b16 %v354
    %v394 = vunpack.c.l.b16 %v355
    %v395 = vunpack.c.l.b16 %v356
    %v396 = vunpack.c.l.b16 %v357
    %v397 = vunpack.c.l.b16 %v358
    %v398 = vunpack.c.l.b16 %v359
    %v399 = vunpack.c.l.b16 %v360
    %v400 = vunpack.c.l.b16 %v361
    %v401 = vunpack.c.l.b16 %v362
    %v402 = vunpack.c.l.b16 %v363
    %v403 = vunpack.c.l.b16 %v364
    %v404 = vunpack.c.l.b16 %v365
    %v405 = vpack.c.b16 %v390, %v389
    %v406 = vpack.c.b16 %v392, %v391
    %v407 = vpack.c.b16 %v394, %v393
    %v408 = vpack.c.b16 %v396, %v395
    %v409 = vpack.c.b16 %v398, %v397
    %v410 = vpack.c.b16 %v400, %v399
    %v411 = vpack.c.b16 %v402, %v401
    %v412 = vpack.c.b16 %v404, %v403
    %421 = vmatprep.subr.bf16.mxu0 0
    %422 = vmatpush1.bf16.msra.mxu0 %v405
    %423 = vmatprep.subr.bf16.mxu0 0
    %424 = vmatpush1.bf16.msra.mxu0 %v406
    %425 = vmatprep.subr.bf16.mxu0 0
    %426 = vmatpush1.bf16.msra.mxu0 %v407
    %427 = vmatprep.subr.bf16.mxu0 0
    %428 = vmatpush1.bf16.msra.mxu0 %v408
    %429 = vmatprep.subr.bf16.mxu0 0
    %430 = vmatpush1.bf16.msra.mxu0 %v409
    %431 = vmatprep.subr.bf16.mxu0 0
    %432 = vmatpush1.bf16.msra.mxu0 %v410
    %433 = vmatprep.subr.bf16.mxu0 0
    %434 = vmatpush1.bf16.msra.mxu0 %v411
    %435 = vmatprep.subr.bf16.mxu0 0
    %436 = vmatpush1.bf16.msra.mxu0 %v412
    %437 = vmatprep.subr.bf16.mxu0 0
    %438 = vmatpush1.bf16.msra.mxu0 0
    %439 = vmatprep.subr.bf16.mxu0 0
    %440 = vmatpush1.bf16.msra.mxu0 0
    %441 = vmatprep.subr.bf16.mxu0 0
    %442 = vmatpush1.bf16.msra.mxu0 0
    %443 = vmatprep.subr.bf16.mxu0 0
    %444 = vmatpush1.bf16.msra.mxu0 0
    %445 = vmatprep.subr.bf16.mxu0 0
    %446 = vmatpush1.bf16.msra.mxu0 0
    %447 = vmatprep.subr.bf16.mxu0 0
    %448 = vmatpush1.bf16.msra.mxu0 0
    %449 = vmatprep.subr.bf16.mxu0 0
    %450 = vmatpush1.bf16.msra.mxu0 0
    %451 = vmatprep.subr.bf16.mxu0 0
    %452 = vmatpush1.bf16.msra.mxu0 0
    %453 = vmatprep.mubr.bf16.mxu0 0
    %454 = vmatmul.mubr.bf16.gmra.mrb[0].mxu0 %v349
    %v455 = vpop.f32.mrb[0].mxu0
    %v456 = vadd.f32 %v371, %v455
    %v457 = vpop.f32.mrb[0].mxu0
    %v458 = vpop.f32.mrb[0].mxu0
    %v459 = vpop.f32.mrb[0].mxu0
    %460 = vdwg.mxu0
    %v461 = vmax.f32 %v456, 0.0
    %v462 = vpack.c.bf16 %v461, %v461
    %v463 = vld [vmem:[%s5] sm:$0xf]
    %v464 = vld [vmem:[%s5 + $0x4] sm:$0xf]
    %v465 = vld [vmem:[%s5 + $0x8] sm:$0xf]
    %v466 = vld [vmem:[%s5 + $0xc] sm:$0xf]
    %v467 = vld [vmem:[%s5 + $0x10] sm:$0xf]
    %v468 = vld [vmem:[%s5 + $0x14] sm:$0xf]
    %v469 = vld [vmem:[%s5 + $0x18] sm:$0xf]
    %v470 = vld [vmem:[%s5 + $0x1c] sm:$0xf]
    %v471 = vld [vmem:[%s5 + $0x20] sm:$0xf]
    %v472 = vld [vmem:[%s5 + $0x24] sm:$0xf]
    %v473 = vld [vmem:[%s5 + $0x28] sm:$0xf]
    %v474 = vld [vmem:[%s5 + $0x2c] sm:$0xf]
    %v475 = vld [vmem:[%s5 + $0x30] sm:$0xf]
    %v476 = vld [vmem:[%s5 + $0x34] sm:$0xf]
    %v477 = vld [vmem:[%s5 + $0x38] sm:$0xf]
    %v478 = vld [vmem:[%s5 + $0x3c] sm:$0xf]
    %v479 = vld [vmem:[%s6] sm:$0x1]
    %v481 = vlaneseq
    %v482 = vshrl.u32 %v481, 7
    %v483 = vsub.s32 0, %v482
    %v484 = vrot.slane %v479, %v483
    %v502 = vunpack.c.l.b16 %v463
    %v503 = vunpack.c.l.b16 %v464
    %v504 = vunpack.c.l.b16 %v465
    %v505 = vunpack.c.l.b16 %v466
    %v506 = vunpack.c.l.b16 %v467
    %v507 = vunpack.c.l.b16 %v468
    %v508 = vunpack.c.l.b16 %v469
    %v509 = vunpack.c.l.b16 %v470
    %v510 = vunpack.c.l.b16 %v471
    %v511 = vunpack.c.l.b16 %v472
    %v512 = vunpack.c.l.b16 %v473
    %v513 = vunpack.c.l.b16 %v474
    %v514 = vunpack.c.l.b16 %v475
    %v515 = vunpack.c.l.b16 %v476
    %v516 = vunpack.c.l.b16 %v477
    %v517 = vunpack.c.l.b16 %v478
    %v518 = vpack.c.b16 %v503, %v502
    %v519 = vpack.c.b16 %v505, %v504
    %v520 = vpack.c.b16 %v507, %v506
    %v521 = vpack.c.b16 %v509, %v508
    %v522 = vpack.c.b16 %v511, %v510
    %v523 = vpack.c.b16 %v513, %v512
    %v524 = vpack.c.b16 %v515, %v514
    %v525 = vpack.c.b16 %v517, %v516
    %534 = vmatprep.subr.bf16.mxu0 0
    %535 = vmatpush1.bf16.msra.mxu0 %v518
    %536 = vmatprep.subr.bf16.mxu0 0
    %537 = vmatpush1.bf16.msra.mxu0 %v519
    %538 = vmatprep.subr.bf16.mxu0 0
    %539 = vmatpush1.bf16.msra.mxu0 %v520
    %540 = vmatprep.subr.bf16.mxu0 0
    %541 = vmatpush1.bf16.msra.mxu0 %v521
    %542 = vmatprep.subr.bf16.mxu0 0
    %543 = vmatpush1.bf16.msra.mxu0 %v522
    %544 = vmatprep.subr.bf16.mxu0 0
    %545 = vmatpush1.bf16.msra.mxu0 %v523
    %546 = vmatprep.subr.bf16.mxu0 0
    %547 = vmatpush1.bf16.msra.mxu0 %v524
    %548 = vmatprep.subr.bf16.mxu0 0
    %549 = vmatpush1.bf16.msra.mxu0 %v525
    %550 = vmatprep.subr.bf16.mxu0 0
    %551 = vmatpush1.bf16.msra.mxu0 0
    %552 = vmatprep.subr.bf16.mxu0 0
    %553 = vmatpush1.bf16.msra.mxu0 0
    %554 = vmatprep.subr.bf16.mxu0 0
    %555 = vmatpush1.bf16.msra.mxu0 0
    %556 = vmatprep.subr.bf16.mxu0 0
    %557 = vmatpush1.bf16.msra.mxu0 0
    %558 = vmatprep.subr.bf16.mxu0 0
    %559 = vmatpush1.bf16.msra.mxu0 0
    %560 = vmatprep.subr.bf16.mxu0 0
    %561 = vmatpush1.bf16.msra.mxu0 0
    %562 = vmatprep.subr.bf16.mxu0 0
    %563 = vmatpush1.bf16.msra.mxu0 0
    %564 = vmatprep.subr.bf16.mxu0 0
    %565 = vmatpush1.bf16.msra.mxu0 0
    %566 = vmatprep.mubr.bf16.mxu0 0
    %567 = vmatmul.mubr.bf16.gmra.mrb[0].mxu0 %v462
    %v568 = vpop.f32.mrb[0].mxu0
    %v569 = vadd.f32 %v484, %v568
    %v570 = vpop.f32.mrb[0].mxu0
    %v571 = vpop.f32.mrb[0].mxu0
    %v572 = vpop.f32.mrb[0].mxu0
    %573 = vdwg.mxu0
    %vm574 = vcmask 74752
    %575 = vst.msk [vmem:[#allocation2] sm:$0x3] %vm574, %v569
    // Predicated region
    $region30: #{cnn_forward.5} parent=1 // pred_check
      _
    $region31: #{cnn_forward.5} parent=1 // pred_check_branch
      %577 = sbr.rel (0) target = $region33
    $region32: #{cnn_forward.5} parent=1 // pred_region
      %s579 = ssub.s32 32, 32
      %580 = vsyncadd [#allocation3], %s579
      %s582 = sshll.u32 [#allocation2], 4
      %s583 = int_to_ptr.vmem [resolvable:$true] %s582
      %585 = dma.vmem_to_hbm [thread:$0]  %s583, 32, %s7, [#allocation3]
    $region33: #{cnn_forward.5} parent=1 // pred_fallthru
      _
    // Predicated region
    $region34: #{cnn_forward.5} parent=1 // pred_check
      _
    $region35: #{cnn_forward.5} parent=1 // pred_check_branch
      %587 = sbr.rel (0) target = $region37
    $region36: #{cnn_forward.5} parent=1 // pred_region
      %588 = dma.done [#allocation3], 32
    $region37: #{cnn_forward.5} parent=1 // pred_fallthru
      _
    %589 = vsyncpa [#allocation3], 1

</llo_original>
